<compile_context>
chip_gen: v5e
topology: v5e:2x2
jax: 0.10.0
libtpu: 0.0.40
codegen_flags: <defaults>
</compile_context>

<pallas_src>
import numpy as np
import jax
import jax.numpy as jnp
from jax.experimental import pallas as pl
from jax.experimental.pallas import tpu as pltpu

EXPANSION = 4
BN_EPS = 1e-5
LANE = 128
GUARD = 8  # guard rows above/below the halo so every tap slice is in bounds


def _round_up(x, m):
    return (x + m - 1) // m * m


def _pick_tile_h(H, W, target_rows=512):
    """Largest H-tile (divisor of H) whose row count fits the target budget."""
    cands = [th for th in range(1, H + 1)
             if H % th == 0 and ((th * W) % 8 == 0 or th == H)]
    fit = [th for th in cands if th * W <= target_rows]
    return max(fit) if fit else min(cands)


def _make_kernel(W, TH, Cmid_p):
    THW = TH * W
    G = GUARD
    TOP = G               # start of top halo row
    BODY = G + W          # start of interior rows
    BOT = G + W + THW     # start of bottom halo row

    def kernel(x_ref, xt_ref, xb_ref, w1_ref, t1_ref, w2_ref, t2_ref,
               w3_ref, t3_ref, lm_ref, rm_ref, out_ref, pad_ref, patch_ref):
        j = pl.program_id(1)
        n_tiles = pl.num_programs(1)

        # ---- conv1 (1x1, BN1 scale folded into w1) + shift + ReLU on the body ----
        x = x_ref[0]                                            # (THW, Cin_p) bf16
        y1 = jnp.dot(x, w1_ref[...], preferred_element_type=jnp.float32)
        y1 = jnp.maximum(y1 + t1_ref[...], 0.0)
        pad_ref[BODY:BODY + THW, :] = y1.astype(jnp.bfloat16)

        # guard rows (tiny, only ever read through masked taps) — zero each step
        zg = jnp.zeros((G, Cmid_p), jnp.bfloat16)
        pad_ref[0:G, :] = zg
        pad_ref[BOT + W:BOT + W + G, :] = zg
        zw = jnp.zeros((W, Cmid_p), jnp.bfloat16)

        # ---- 1-row y1 halo: recompute from the pre-sliced halo x rows, or zero
        # (zero padding of conv2 applies at the image top/bottom) ----
        @pl.when(j > 0)
        def _():
            y1t = jnp.dot(xt_ref[0], w1_ref[...], preferred_element_type=jnp.float32)
            pad_ref[TOP:TOP + W, :] = jnp.maximum(
                y1t + t1_ref[...], 0.0).astype(jnp.bfloat16)

        @pl.when(j == 0)
        def _():
            pad_ref[TOP:TOP + W, :] = zw

        @pl.when(j < n_tiles - 1)
        def _():
            y1b = jnp.dot(xb_ref[0], w1_ref[...], preferred_element_type=jnp.float32)
            pad_ref[BOT:BOT + W, :] = jnp.maximum(
                y1b + t1_ref[...], 0.0).astype(jnp.bfloat16)

        @pl.when(j == n_tiles - 1)
        def _():
            pad_ref[BOT:BOT + W, :] = zw

        # ---- conv2 (3x3, stride=1, pad=1) as im2col: mask + store each bf16 tap
        # straight into the patches scratch, then one big-K MXU matmul ----
        lm = lm_ref[...]                                        # (THW, 1) bf16 {0,1}
        rm = rm_ref[...]
        for dy in range(3):
            for dx in range(3):
                start = TOP + dy * W + dx - 1                   # static, in bounds
                tap = pad_ref[pl.ds(start, THW), :]             # (THW, Cmid_p) bf16
                if dx == 0:
                    tap = tap * lm
                elif dx == 2:
                    tap = tap * rm
                k = dy * 3 + dx
                patch_ref[:, k * Cmid_p:(k + 1) * Cmid_p] = tap

        y2 = jnp.dot(patch_ref[...], w2_ref[...], preferred_element_type=jnp.float32)
        y2 = jnp.maximum(y2 + t2_ref[...], 0.0)

        # ---- conv3 (1x1) + shift + residual add + ReLU ----
        y3 = jnp.dot(y2.astype(jnp.bfloat16), w3_ref[...],
                     preferred_element_type=jnp.float32)
        y3 = y3 + t3_ref[...] + x_ref[0].astype(jnp.float32)    # re-read residual
        out_ref[0] = jnp.maximum(y3, 0.0).astype(out_ref.dtype)

    return kernel


def _bn_scale_shift(bias, gamma, beta, mean, var):
    scale = gamma / jnp.sqrt(var + BN_EPS)
    shift = beta + (bias - mean) * scale
    return scale, shift


def _pad_row(v, n):
    return jnp.pad(v, (0, n - v.shape[0]))[None, :].astype(jnp.float32)


def bottleneck_forward(x_nchw, p, tile_h=None):
    N, Cin, H, W = x_nchw.shape
    Cmid = p['w1'].shape[1]
    Cout = p['w3'].shape[1]
    assert Cout == Cin, "residual add requires in_channels == out_channels*expansion"
    HW = H * W

    if tile_h is None:
        tile_h = _pick_tile_h(H, W)
    TH = tile_h
    assert H % TH == 0 and ((TH * W) % 8 == 0 or TH == H)
    n_ht = H // TH
    THW = TH * W

    # pad channel (lane) dims to multiples of 128 so vregs / stores are dense
    Cin_p = _round_up(Cin, LANE)
    Cmid_p = _round_up(Cmid, LANE)
    Cout_p = _round_up(Cout, LANE)

    # fold BN scale into the conv weights (f32, before bf16 cast); keep shifts
    s1, sh1 = _bn_scale_shift(p['b1'], p['g1'], p['be1'], p['m1'], p['v1'])
    s2, sh2 = _bn_scale_shift(p['b2'], p['g2'], p['be2'], p['m2'], p['v2'])
    s3, sh3 = _bn_scale_shift(p['b3'], p['g3'], p['be3'], p['m3'], p['v3'])

    w1p = jnp.pad(p['w1'] * s1[None, :],
                  ((0, Cin_p - Cin), (0, Cmid_p - Cmid))).astype(jnp.bfloat16)
    w2p = jnp.pad(p['w2'] * s2[None, None, None, :],
                  ((0, 0), (0, 0), (0, Cmid_p - Cmid), (0, Cmid_p - Cmid)))
    w2p = w2p.reshape(9 * Cmid_p, Cmid_p).astype(jnp.bfloat16)  # (ky,kx,cin) major
    w3p = jnp.pad(p['w3'] * s3[None, :],
                  ((0, Cmid_p - Cmid), (0, Cout_p - Cout))).astype(jnp.bfloat16)
    t1 = _pad_row(sh1, Cmid_p)
    t2 = _pad_row(sh2, Cmid_p)
    t3 = _pad_row(sh3, Cout_p)

    # NCHW -> NHWC, channel-padded, bf16
    x_img = jnp.transpose(x_nchw, (0, 2, 3, 1))
    x_img = jnp.pad(x_img, ((0, 0), (0, 0), (0, 0), (0, Cin_p - Cin))).astype(jnp.bfloat16)
    x = x_img.reshape(N, HW, Cin_p)

    # pre-sliced 1-row halos per H-tile (zeros at the image top/bottom slots)
    zrow = jnp.zeros((N, 1, W, Cin_p), jnp.bfloat16)
    xtop = jnp.concatenate([zrow, x_img[:, TH - 1:H - 1:TH]], axis=1)
    xbot = jnp.concatenate([x_img[:, TH::TH], zrow], axis=1)
    xtop = xtop.reshape(N, n_ht * W, Cin_p)
    xbot = xbot.reshape(N, n_ht * W, Cin_p)

    # host-side column-validity masks (periodic in W, same for every tile)
    col = jnp.arange(THW, dtype=jnp.int32) % W
    lmask = (col >= 1).astype(jnp.bfloat16)[:, None]          # (THW, 1)
    rmask = (col <= W - 2).astype(jnp.bfloat16)[:, None]

    # ---- VMEM budget: exact per-buffer sum + 25% headroom, generation-aware cap
    bs = 2  # bf16 bytes
    pad_rows = THW + 2 * W + 2 * GUARD
    blocks = (THW * Cin_p + 2 * W * Cin_p + THW * Cout_p) * bs
    weights = (Cin_p * Cmid_p + 9 * Cmid_p * Cmid_p + Cmid_p * Cout_p) * bs
    smalls = (2 * Cmid_p + Cout_p) * 4 + 2 * THW * bs
    scratch = (pad_rows * Cmid_p + THW * 9 * Cmid_p) * bs
    temps = THW * (Cin_p + 2 * Cmid_p + Cout_p) * 4
    vmem_need = 2 * (blocks + weights + smalls) + scratch + temps

    cap = 64 * 1024 * 1024
    try:
        cap = int(getattr(pltpu.get_tpu_info(), 'vmem_capacity_bytes', cap))
    except Exception:
        pass
    cap = int(cap * 0.85)
    vmem_limit = min(max(int(vmem_need * 1.25), 32 * 1024 * 1024), cap)

    flops = int(2 * N * HW * (Cin_p * Cmid_p + 9 * Cmid_p * Cmid_p + Cmid_p * Cout_p))
    bytes_accessed = int(
        N * HW * (Cin_p + Cout_p) * bs + 2 * N * n_ht * W * Cin_p * bs
        + ((Cin_p + 9 * Cmid_p) * Cmid_p + Cmid_p * Cout_p) * bs
        + 4 * (2 * Cmid_p + Cout_p) + 2 * THW * bs)

    def const(shape):
        return pl.BlockSpec(shape, lambda n, j, _s=shape: (0,) * len(_s))

    out = pl.pallas_call(
        _make_kernel(W, TH, Cmid_p),
        out_shape=jax.ShapeDtypeStruct((N, HW, Cout_p), jnp.bfloat16),
        grid=(N, n_ht),
        in_specs=[
            pl.BlockSpec((1, THW, Cin_p), lambda n, j: (n, j, 0)),    # x body tile
            pl.BlockSpec((1, W, Cin_p), lambda n, j: (n, j, 0)),      # top halo row
            pl.BlockSpec((1, W, Cin_p), lambda n, j: (n, j, 0)),      # bottom halo row
            const((Cin_p, Cmid_p)), const((1, Cmid_p)),               # conv1 / shift1
            const((9 * Cmid_p, Cmid_p)), const((1, Cmid_p)),          # conv2 / shift2
            const((Cmid_p, Cout_p)), const((1, Cout_p)),              # conv3 / shift3
            const((THW, 1)), const((THW, 1)),                         # column masks
        ],
        out_specs=pl.BlockSpec((1, THW, Cout_p), lambda n, j: (n, j, 0)),
        scratch_shapes=[
            pltpu.VMEM((pad_rows, Cmid_p), jnp.bfloat16),             # y1 staging (+halo)
            pltpu.VMEM((THW, 9 * Cmid_p), jnp.bfloat16),              # im2col patches
        ],
        compiler_params=pltpu.CompilerParams(
            dimension_semantics=("parallel", "parallel"),
            vmem_limit_bytes=vmem_limit),
        cost_estimate=pl.CostEstimate(
            flops=flops, transcendentals=0, bytes_accessed=bytes_accessed),
    )(x, xtop, xbot, w1p, t1, w2p, t2, w3p, t3, lmask, rmask)

    # drop channel padding, back to NCHW f32
    # TODO(synk): keep activations NHWC end-to-end in a real model to avoid
    # materializing these wrapper transposes around every block.
    out = out[:, :, :Cout].reshape(N, H, W, Cout)
    return jnp.transpose(out, (0, 3, 1, 2)).astype(jnp.float32)


def init_params(key, in_channels, out_channels):
    Cmid = out_channels
    Cout = out_channels * EXPANSION
    ks = jax.random.split(key, 18)
    u = lambda k, c: jax.random.uniform(k, (c,), jnp.float32, 0.5, 1.5)
    n = lambda k, shp, s: s * jax.random.normal(k, shp, jnp.float32)
    p = {
        # conv weights stored directly in (in, out) / HWIO form
        'w1': n(ks[0], (in_channels, Cmid), 0.2), 'b1': n(ks[1], (Cmid,), 0.1),
        'w2': n(ks[2], (3, 3, Cmid, Cmid), 0.2),  'b2': n(ks[3], (Cmid,), 0.1),
        'w3': n(ks[4], (Cmid, Cout), 0.2),        'b3': n(ks[5], (Cout,), 0.1),
        # BN params (eval mode): gamma, beta, running_mean, running_var
        'g1': u(ks[6], Cmid),  'be1': n(ks[7], (Cmid,), 0.1),
        'm1': n(ks[8], (Cmid,), 0.1),  'v1': u(ks[9], Cmid),
        'g2': u(ks[10], Cmid), 'be2': n(ks[11], (Cmid,), 0.1),
        'm2': n(ks[12], (Cmid,), 0.1), 'v2': u(ks[13], Cmid),
        'g3': u(ks[14], Cout), 'be3': n(ks[15], (Cout,), 0.1),
        'm3': n(ks[16], (Cout,), 0.1), 'v3': u(ks[17], Cout),
    }
    return p


def reference_forward(x_nchw, p):
    """Pure-JAX f32 reference (NCHW, like the PyTorch module in eval mode)."""
    def bn(y, g, b, m, v):
        return ((y - m[None, :, None, None]) /
                jnp.sqrt(v[None, :, None, None] + BN_EPS)
                * g[None, :, None, None] + b[None, :, None, None])

    def conv(y, w_oihw, pad):
        return jax.lax.conv_general_dilated(
            y, w_oihw, (1, 1), pad,
            dimension_numbers=('NCHW', 'OIHW', 'NCHW'),
            precision=jax.lax.Precision.HIGHEST)

    w1 = jnp.transpose(p['w1'], (1, 0))[:, :, None, None]
    w2 = jnp.transpose(p['w2'], (3, 2, 0, 1))
    w3 = jnp.transpose(p['w3'], (1, 0))[:, :, None, None]

    y = conv(x_nchw, w1, 'VALID') + p['b1'][None, :, None, None]
    y = jax.nn.relu(bn(y, p['g1'], p['be1'], p['m1'], p['v1']))
    y = conv(y, w2, ((1, 1), (1, 1))) + p['b2'][None, :, None, None]
    y = jax.nn.relu(bn(y, p['g2'], p['be2'], p['m2'], p['v2']))
    y = conv(y, w3, 'VALID') + p['b3'][None, :, None, None]
    y = bn(y, p['g3'], p['be3'], p['m3'], p['v3'])
    return jax.nn.relu(y + x_nchw)


if __name__ == "__main__":
    key = jax.random.PRNGKey(0)
    k_x, k_p = jax.random.split(key)

    N, H, W = 2, 16, 16
    out_channels = 4
    in_channels = out_channels * EXPANSION  # 16, so the residual add is valid

    x = jax.random.normal(k_x, (N, in_channels, H, W), jnp.float32)
    params = init_params(k_p, in_channels, out_channels)

    ref = jax.block_until_ready(reference_forward(x, params))

    # default (single-tile) run and an explicit 4-row H-tile run that exercises
    # the 1-row halo recompute path
    for th in (None, 4):
        out = jax.block_until_ready(bottleneck_forward(x, params, tile_h=th))
        assert out.shape == ref.shape == (N, in_channels, H, W)
        # bf16 activations/weights on the MXU (f32 accumulation) -> relaxed tol
        if not np.allclose(np.asarray(out), np.asarray(ref), atol=5e-2, rtol=5e-2):
            raise AssertionError(
                f"Pallas Bottleneck output mismatch vs JAX reference (tile_h={th})")
    print("KERNEL_OK")
</pallas_src>

<mosaic_0001>
module attributes {stable_mosaic.version = 11 : i64} {
  func.func @kernel(%arg0: i32, %arg1: i32, %arg2: memref<1x256x128xbf16, #tpu.memory_space<vmem>>, %arg3: memref<1x16x128xbf16, #tpu.memory_space<vmem>>, %arg4: memref<1x16x128xbf16, #tpu.memory_space<vmem>>, %arg5: memref<128x128xbf16, #tpu.memory_space<vmem>>, %arg6: memref<1x128xf32, #tpu.memory_space<vmem>>, %arg7: memref<1152x128xbf16, #tpu.memory_space<vmem>>, %arg8: memref<1x128xf32, #tpu.memory_space<vmem>>, %arg9: memref<128x128xbf16, #tpu.memory_space<vmem>>, %arg10: memref<1x128xf32, #tpu.memory_space<vmem>>, %arg11: memref<256x1xbf16, #tpu.memory_space<vmem>>, %arg12: memref<256x1xbf16, #tpu.memory_space<vmem>>, %arg13: memref<1x256x128xbf16, #tpu.memory_space<vmem>>, %arg14: memref<304x128xbf16, #tpu.memory_space<vmem>>, %arg15: memref<256x1152xbf16, #tpu.memory_space<vmem>>) attributes {dimension_semantics = [#tpu.dimension_semantics<parallel>, #tpu.dimension_semantics<parallel>], iteration_bounds = array<i64: 2, 1>, scalar_prefetch = 0 : i64, scratch_operands = 2 : i64, tpu.core_type = #tpu.core_type<tc>, window_params = [{transform_indices = @transform_0, window_bounds = array<i64: 1, 256, 128>}, {transform_indices = @transform_1, window_bounds = array<i64: 1, 16, 128>}, {transform_indices = @transform_2, window_bounds = array<i64: 1, 16, 128>}, {pipeline_mode = #tpu.pipeline_mode<synchronous>, transform_indices = @transform_3, window_bounds = array<i64: 128, 128>}, {pipeline_mode = #tpu.pipeline_mode<synchronous>, transform_indices = @transform_4, window_bounds = array<i64: 1, 128>}, {pipeline_mode = #tpu.pipeline_mode<synchronous>, transform_indices = @transform_5, window_bounds = array<i64: 1152, 128>}, {pipeline_mode = #tpu.pipeline_mode<synchronous>, transform_indices = @transform_6, window_bounds = array<i64: 1, 128>}, {pipeline_mode = #tpu.pipeline_mode<synchronous>, transform_indices = @transform_7, window_bounds = array<i64: 128, 128>}, {pipeline_mode = #tpu.pipeline_mode<synchronous>, transform_indices = @transform_8, window_bounds = array<i64: 1, 128>}, {pipeline_mode = #tpu.pipeline_mode<synchronous>, transform_indices = @transform_9, window_bounds = array<i64: 256, 1>}, {pipeline_mode = #tpu.pipeline_mode<synchronous>, transform_indices = @transform_10, window_bounds = array<i64: 256, 1>}, {transform_indices = @transform_11, window_bounds = array<i64: 1, 256, 128>}]} {
    %c0 = arith.constant 0 : index
    %c0_0 = arith.constant 0 : index
    %c0_1 = arith.constant 0 : index
    %0 = vector.load %arg2[%c0, %c0_0, %c0_1] : memref<1x256x128xbf16, #tpu.memory_space<vmem>>, vector<1x256x128xbf16>
    %1 = vector.shape_cast %0 : vector<1x256x128xbf16> to vector<256x128xbf16>
    %c0_2 = arith.constant 0 : index
    %c0_3 = arith.constant 0 : index
    %2 = vector.load %arg5[%c0_2, %c0_3] : memref<128x128xbf16, #tpu.memory_space<vmem>>, vector<128x128xbf16>
    %cst = arith.constant dense<0.000000e+00> : vector<256x128xf32>
    %3 = tpu.matmul %1, %2, %cst {dimension_numbers = #tpu.dot_dimension_numbers<[1], [0], [0], [1], [0, 0, 1, 1], [], []>} : vector<256x128xbf16>, vector<128x128xbf16>, vector<256x128xf32> -> vector<256x128xf32>
    %c0_4 = arith.constant 0 : index
    %c0_5 = arith.constant 0 : index
    %4 = vector.load %arg6[%c0_4, %c0_5] : memref<1x128xf32, #tpu.memory_space<vmem>>, vector<1x128xf32>
    %5 = vector.broadcast %4 : vector<1x128xf32> to vector<256x128xf32>
    %6 = arith.addf %3, %5 : vector<256x128xf32>
    %cst_6 = arith.constant 0.000000e+00 : f32
    %7 = vector.broadcast %cst_6 : f32 to vector<256x128xf32>
    %8 = arith.maximumf %6, %7 : vector<256x128xf32>
    %9 = arith.truncf %8 : vector<256x128xf32> to vector<256x128xbf16>
    %c24 = arith.constant 24 : index
    %c0_7 = arith.constant 0 : index
    %10 = vector.load %arg14[%c24, %c0_7] : memref<304x128xbf16, #tpu.memory_space<vmem>>, vector<256x128xbf16>
    tpu.vector_store %arg14[%c24, %c0_7], %9 {strides = array<i32>} : memref<304x128xbf16, #tpu.memory_space<vmem>>, vector<256x128xbf16>,
    %cst_8 = arith.constant 0.000000e+00 : bf16
    %11 = vector.broadcast %cst_8 : bf16 to vector<8x128xbf16>
    %c0_9 = arith.constant 0 : index
    %c0_10 = arith.constant 0 : index
    %12 = vector.load %arg14[%c0_9, %c0_10] : memref<304x128xbf16, #tpu.memory_space<vmem>>, vector<8x128xbf16>
    tpu.vector_store %arg14[%c0_9, %c0_10], %11 {strides = array<i32>} : memref<304x128xbf16, #tpu.memory_space<vmem>>, vector<8x128xbf16>,
    %c296 = arith.constant 296 : index
    %c0_11 = arith.constant 0 : index
    %13 = vector.load %arg14[%c296, %c0_11] : memref<304x128xbf16, #tpu.memory_space<vmem>>, vector<8x128xbf16>
    tpu.vector_store %arg14[%c296, %c0_11], %11 {strides = array<i32>} : memref<304x128xbf16, #tpu.memory_space<vmem>>, vector<8x128xbf16>,
    %cst_12 = arith.constant 0.000000e+00 : bf16
    %14 = vector.broadcast %cst_12 : bf16 to vector<16x128xbf16>
    %c0_i32 = arith.constant 0 : i32
    %15 = arith.cmpi sgt, %arg1, %c0_i32 : i32
    %16 = arith.extui %15 : i1 to i32
    %c0_i32_13 = arith.constant 0 : i32
    %17 = arith.cmpi ne, %16, %c0_i32_13 : i32
    scf.if %17 {
      %c0_64 = arith.constant 0 : index
      %c0_65 = arith.constant 0 : index
      %c0_66 = arith.constant 0 : index
      %83 = vector.load %arg3[%c0_64, %c0_65, %c0_66] : memref<1x16x128xbf16, #tpu.memory_space<vmem>>, vector<1x16x128xbf16>
      %84 = vector.shape_cast %83 : vector<1x16x128xbf16> to vector<16x128xbf16>
      %c0_67 = arith.constant 0 : index
      %c0_68 = arith.constant 0 : index
      %85 = vector.load %arg5[%c0_67, %c0_68] : memref<128x128xbf16, #tpu.memory_space<vmem>>, vector<128x128xbf16>
      %cst_69 = arith.constant dense<0.000000e+00> : vector<16x128xf32>
      %86 = tpu.matmul %84, %85, %cst_69 {dimension_numbers = #tpu.dot_dimension_numbers<[1], [0], [0], [1], [0, 0, 1, 1], [], []>} : vector<16x128xbf16>, vector<128x128xbf16>, vector<16x128xf32> -> vector<16x128xf32>
      %c0_70 = arith.constant 0 : index
      %c0_71 = arith.constant 0 : index
      %87 = vector.load %arg6[%c0_70, %c0_71] : memref<1x128xf32, #tpu.memory_space<vmem>>, vector<1x128xf32>
      %88 = vector.broadcast %87 : vector<1x128xf32> to vector<16x128xf32>
      %89 = arith.addf %86, %88 : vector<16x128xf32>
      %cst_72 = arith.constant 0.000000e+00 : f32
      %90 = vector.broadcast %cst_72 : f32 to vector<16x128xf32>
      %91 = arith.maximumf %89, %90 : vector<16x128xf32>
      %92 = arith.truncf %91 : vector<16x128xf32> to vector<16x128xbf16>
      %c8_73 = arith.constant 8 : index
      %c0_74 = arith.constant 0 : index
      %93 = vector.load %arg14[%c8_73, %c0_74] : memref<304x128xbf16, #tpu.memory_space<vmem>>, vector<16x128xbf16>
      tpu.vector_store %arg14[%c8_73, %c0_74], %92 {strides = array<i32>} : memref<304x128xbf16, #tpu.memory_space<vmem>>, vector<16x128xbf16>,
    } else {
    }
    %c0_i32_14 = arith.constant 0 : i32
    %18 = arith.cmpi eq, %arg1, %c0_i32_14 : i32
    %19 = arith.extui %18 : i1 to i32
    %c0_i32_15 = arith.constant 0 : i32
    %20 = arith.cmpi ne, %19, %c0_i32_15 : i32
    scf.if %20 {
      %c8_64 = arith.constant 8 : index
      %c0_65 = arith.constant 0 : index
      %83 = vector.load %arg14[%c8_64, %c0_65] : memref<304x128xbf16, #tpu.memory_space<vmem>>, vector<16x128xbf16>
      tpu.vector_store %arg14[%c8_64, %c0_65], %14 {strides = array<i32>} : memref<304x128xbf16, #tpu.memory_space<vmem>>, vector<16x128xbf16>,
    } else {
    }
    %c0_i32_16 = arith.constant 0 : i32
    %21 = arith.cmpi slt, %arg1, %c0_i32_16 : i32
    %22 = arith.extui %21 : i1 to i32
    %c0_i32_17 = arith.constant 0 : i32
    %23 = arith.cmpi ne, %22, %c0_i32_17 : i32
    scf.if %23 {
      %c0_64 = arith.constant 0 : index
      %c0_65 = arith.constant 0 : index
      %c0_66 = arith.constant 0 : index
      %83 = vector.load %arg4[%c0_64, %c0_65, %c0_66] : memref<1x16x128xbf16, #tpu.memory_space<vmem>>, vector<1x16x128xbf16>
      %84 = vector.shape_cast %83 : vector<1x16x128xbf16> to vector<16x128xbf16>
      %c0_67 = arith.constant 0 : index
      %c0_68 = arith.constant 0 : index
      %85 = vector.load %arg5[%c0_67, %c0_68] : memref<128x128xbf16, #tpu.memory_space<vmem>>, vector<128x128xbf16>
      %cst_69 = arith.constant dense<0.000000e+00> : vector<16x128xf32>
      %86 = tpu.matmul %84, %85, %cst_69 {dimension_numbers = #tpu.dot_dimension_numbers<[1], [0], [0], [1], [0, 0, 1, 1], [], []>} : vector<16x128xbf16>, vector<128x128xbf16>, vector<16x128xf32> -> vector<16x128xf32>
      %c0_70 = arith.constant 0 : index
      %c0_71 = arith.constant 0 : index
      %87 = vector.load %arg6[%c0_70, %c0_71] : memref<1x128xf32, #tpu.memory_space<vmem>>, vector<1x128xf32>
      %88 = vector.broadcast %87 : vector<1x128xf32> to vector<16x128xf32>
      %89 = arith.addf %86, %88 : vector<16x128xf32>
      %cst_72 = arith.constant 0.000000e+00 : f32
      %90 = vector.broadcast %cst_72 : f32 to vector<16x128xf32>
      %91 = arith.maximumf %89, %90 : vector<16x128xf32>
      %92 = arith.truncf %91 : vector<16x128xf32> to vector<16x128xbf16>
      %c280 = arith.constant 280 : index
      %c0_73 = arith.constant 0 : index
      %93 = vector.load %arg14[%c280, %c0_73] : memref<304x128xbf16, #tpu.memory_space<vmem>>, vector<16x128xbf16>
      tpu.vector_store %arg14[%c280, %c0_73], %92 {strides = array<i32>} : memref<304x128xbf16, #tpu.memory_space<vmem>>, vector<16x128xbf16>,
    } else {
    }
    %c0_i32_18 = arith.constant 0 : i32
    %24 = arith.cmpi eq, %arg1, %c0_i32_18 : i32
    %25 = arith.extui %24 : i1 to i32
    %c0_i32_19 = arith.constant 0 : i32
    %26 = arith.cmpi ne, %25, %c0_i32_19 : i32
    scf.if %26 {
      %c280 = arith.constant 280 : index
      %c0_64 = arith.constant 0 : index
      %83 = vector.load %arg14[%c280, %c0_64] : memref<304x128xbf16, #tpu.memory_space<vmem>>, vector<16x128xbf16>
      tpu.vector_store %arg14[%c280, %c0_64], %14 {strides = array<i32>} : memref<304x128xbf16, #tpu.memory_space<vmem>>, vector<16x128xbf16>,
    } else {
    }
    %c0_20 = arith.constant 0 : index
    %c0_21 = arith.constant 0 : index
    %27 = vector.load %arg11[%c0_20, %c0_21] : memref<256x1xbf16, #tpu.memory_space<vmem>>, vector<256x1xbf16>
    %c0_22 = arith.constant 0 : index
    %c0_23 = arith.constant 0 : index
    %28 = vector.load %arg12[%c0_22, %c0_23] : memref<256x1xbf16, #tpu.memory_space<vmem>>, vector<256x1xbf16>
    %c7 = arith.constant 7 : index
    %c0_24 = arith.constant 0 : index
    %29 = vector.load %arg14[%c7, %c0_24] : memref<304x128xbf16, #tpu.memory_space<vmem>>, vector<256x128xbf16>
    %30 = vector.broadcast %27 : vector<256x1xbf16> to vector<256x128xbf16>
    %31 = arith.mulf %29, %30 : vector<256x128xbf16>
    %c0_25 = arith.constant 0 : index
    %c0_26 = arith.constant 0 : index
    %32 = vector.load %arg15[%c0_25, %c0_26] : memref<256x1152xbf16, #tpu.memory_space<vmem>>, vector<256x128xbf16>
    tpu.vector_store %arg15[%c0_25, %c0_26], %31 {strides = array<i32>} : memref<256x1152xbf16, #tpu.memory_space<vmem>>, vector<256x128xbf16>,
    %c8 = arith.constant 8 : index
    %c0_27 = arith.constant 0 : index
    %33 = vector.load %arg14[%c8, %c0_27] : memref<304x128xbf16, #tpu.memory_space<vmem>>, vector<256x128xbf16>
    %c0_28 = arith.constant 0 : index
    %c128 = arith.constant 128 : index
    %34 = vector.load %arg15[%c0_28, %c128] : memref<256x1152xbf16, #tpu.memory_space<vmem>>, vector<256x128xbf16>
    tpu.vector_store %arg15[%c0_28, %c128], %33 {strides = array<i32>} : memref<256x1152xbf16, #tpu.memory_space<vmem>>, vector<256x128xbf16>,
    %c9 = arith.constant 9 : index
    %c0_29 = arith.constant 0 : index
    %35 = vector.load %arg14[%c9, %c0_29] : memref<304x128xbf16, #tpu.memory_space<vmem>>, vector<256x128xbf16>
    %36 = vector.broadcast %28 : vector<256x1xbf16> to vector<256x128xbf16>
    %37 = arith.mulf %35, %36 : vector<256x128xbf16>
    %c0_30 = arith.constant 0 : index
    %c256 = arith.constant 256 : index
    %38 = vector.load %arg15[%c0_30, %c256] : memref<256x1152xbf16, #tpu.memory_space<vmem>>, vector<256x128xbf16>
    tpu.vector_store %arg15[%c0_30, %c256], %37 {strides = array<i32>} : memref<256x1152xbf16, #tpu.memory_space<vmem>>, vector<256x128xbf16>,
    %c23 = arith.constant 23 : index
    %c0_31 = arith.constant 0 : index
    %39 = vector.load %arg14[%c23, %c0_31] : memref<304x128xbf16, #tpu.memory_space<vmem>>, vector<256x128xbf16>
    %40 = vector.broadcast %27 : vector<256x1xbf16> to vector<256x128xbf16>
    %41 = arith.mulf %39, %40 : vector<256x128xbf16>
    %c0_32 = arith.constant 0 : index
    %c384 = arith.constant 384 : index
    %42 = vector.load %arg15[%c0_32, %c384] : memref<256x1152xbf16, #tpu.memory_space<vmem>>, vector<256x128xbf16>
    tpu.vector_store %arg15[%c0_32, %c384], %41 {strides = array<i32>} : memref<256x1152xbf16, #tpu.memory_space<vmem>>, vector<256x128xbf16>,
    %c24_33 = arith.constant 24 : index
    %c0_34 = arith.constant 0 : index
    %43 = vector.load %arg14[%c24_33, %c0_34] : memref<304x128xbf16, #tpu.memory_space<vmem>>, vector<256x128xbf16>
    %c0_35 = arith.constant 0 : index
    %c512 = arith.constant 512 : index
    %44 = vector.load %arg15[%c0_35, %c512] : memref<256x1152xbf16, #tpu.memory_space<vmem>>, vector<256x128xbf16>
    tpu.vector_store %arg15[%c0_35, %c512], %43 {strides = array<i32>} : memref<256x1152xbf16, #tpu.memory_space<vmem>>, vector<256x128xbf16>,
    %c25 = arith.constant 25 : index
    %c0_36 = arith.constant 0 : index
    %45 = vector.load %arg14[%c25, %c0_36] : memref<304x128xbf16, #tpu.memory_space<vmem>>, vector<256x128xbf16>
    %46 = vector.broadcast %28 : vector<256x1xbf16> to vector<256x128xbf16>
    %47 = arith.mulf %45, %46 : vector<256x128xbf16>
    %c0_37 = arith.constant 0 : index
    %c640 = arith.constant 640 : index
    %48 = vector.load %arg15[%c0_37, %c640] : memref<256x1152xbf16, #tpu.memory_space<vmem>>, vector<256x128xbf16>
    tpu.vector_store %arg15[%c0_37, %c640], %47 {strides = array<i32>} : memref<256x1152xbf16, #tpu.memory_space<vmem>>, vector<256x128xbf16>,
    %c39 = arith.constant 39 : index
    %c0_38 = arith.constant 0 : index
    %49 = vector.load %arg14[%c39, %c0_38] : memref<304x128xbf16, #tpu.memory_space<vmem>>, vector<256x128xbf16>
    %50 = vector.broadcast %27 : vector<256x1xbf16> to vector<256x128xbf16>
    %51 = arith.mulf %49, %50 : vector<256x128xbf16>
    %c0_39 = arith.constant 0 : index
    %c768 = arith.constant 768 : index
    %52 = vector.load %arg15[%c0_39, %c768] : memref<256x1152xbf16, #tpu.memory_space<vmem>>, vector<256x128xbf16>
    tpu.vector_store %arg15[%c0_39, %c768], %51 {strides = array<i32>} : memref<256x1152xbf16, #tpu.memory_space<vmem>>, vector<256x128xbf16>,
    %c40 = arith.constant 40 : index
    %c0_40 = arith.constant 0 : index
    %53 = vector.load %arg14[%c40, %c0_40] : memref<304x128xbf16, #tpu.memory_space<vmem>>, vector<256x128xbf16>
    %c0_41 = arith.constant 0 : index
    %c896 = arith.constant 896 : index
    %54 = vector.load %arg15[%c0_41, %c896] : memref<256x1152xbf16, #tpu.memory_space<vmem>>, vector<256x128xbf16>
    tpu.vector_store %arg15[%c0_41, %c896], %53 {strides = array<i32>} : memref<256x1152xbf16, #tpu.memory_space<vmem>>, vector<256x128xbf16>,
    %c41 = arith.constant 41 : index
    %c0_42 = arith.constant 0 : index
    %55 = vector.load %arg14[%c41, %c0_42] : memref<304x128xbf16, #tpu.memory_space<vmem>>, vector<256x128xbf16>
    %56 = vector.broadcast %28 : vector<256x1xbf16> to vector<256x128xbf16>
    %57 = arith.mulf %55, %56 : vector<256x128xbf16>
    %c0_43 = arith.constant 0 : index
    %c1024 = arith.constant 1024 : index
    %58 = vector.load %arg15[%c0_43, %c1024] : memref<256x1152xbf16, #tpu.memory_space<vmem>>, vector<256x128xbf16>
    tpu.vector_store %arg15[%c0_43, %c1024], %57 {strides = array<i32>} : memref<256x1152xbf16, #tpu.memory_space<vmem>>, vector<256x128xbf16>,
    %c0_44 = arith.constant 0 : index
    %c0_45 = arith.constant 0 : index
    %59 = vector.load %arg15[%c0_44, %c0_45] : memref<256x1152xbf16, #tpu.memory_space<vmem>>, vector<256x1152xbf16>
    %c0_46 = arith.constant 0 : index
    %c0_47 = arith.constant 0 : index
    %60 = vector.load %arg7[%c0_46, %c0_47] : memref<1152x128xbf16, #tpu.memory_space<vmem>>, vector<1152x128xbf16>
    %cst_48 = arith.constant dense<0.000000e+00> : vector<256x128xf32>
    %61 = tpu.matmul %59, %60, %cst_48 {dimension_numbers = #tpu.dot_dimension_numbers<[1], [0], [0], [1], [0, 0, 1, 1], [], []>} : vector<256x1152xbf16>, vector<1152x128xbf16>, vector<256x128xf32> -> vector<256x128xf32>
    %c0_49 = arith.constant 0 : index
    %c0_50 = arith.constant 0 : index
    %62 = vector.load %arg8[%c0_49, %c0_50] : memref<1x128xf32, #tpu.memory_space<vmem>>, vector<1x128xf32>
    %63 = vector.broadcast %62 : vector<1x128xf32> to vector<256x128xf32>
    %64 = arith.addf %61, %63 : vector<256x128xf32>
    %cst_51 = arith.constant 0.000000e+00 : f32
    %65 = vector.broadcast %cst_51 : f32 to vector<256x128xf32>
    %66 = arith.maximumf %64, %65 : vector<256x128xf32>
    %67 = arith.truncf %66 : vector<256x128xf32> to vector<256x128xbf16>
    %c0_52 = arith.constant 0 : index
    %c0_53 = arith.constant 0 : index
    %68 = vector.load %arg9[%c0_52, %c0_53] : memref<128x128xbf16, #tpu.memory_space<vmem>>, vector<128x128xbf16>
    %cst_54 = arith.constant dense<0.000000e+00> : vector<256x128xf32>
    %69 = tpu.matmul %67, %68, %cst_54 {dimension_numbers = #tpu.dot_dimension_numbers<[1], [0], [0], [1], [0, 0, 1, 1], [], []>} : vector<256x128xbf16>, vector<128x128xbf16>, vector<256x128xf32> -> vector<256x128xf32>
    %c0_55 = arith.constant 0 : index
    %c0_56 = arith.constant 0 : index
    %70 = vector.load %arg10[%c0_55, %c0_56] : memref<1x128xf32, #tpu.memory_space<vmem>>, vector<1x128xf32>
    %71 = vector.broadcast %70 : vector<1x128xf32> to vector<256x128xf32>
    %72 = arith.addf %69, %71 : vector<256x128xf32>
    %c0_57 = arith.constant 0 : index
    %c0_58 = arith.constant 0 : index
    %c0_59 = arith.constant 0 : index
    %73 = vector.load %arg2[%c0_57, %c0_58, %c0_59] : memref<1x256x128xbf16, #tpu.memory_space<vmem>>, vector<1x256x128xbf16>
    %74 = vector.shape_cast %73 : vector<1x256x128xbf16> to vector<256x128xbf16>
    %75 = arith.extf %74 : vector<256x128xbf16> to vector<256x128xf32>
    %76 = arith.addf %72, %75 : vector<256x128xf32>
    %cst_60 = arith.constant 0.000000e+00 : f32
    %77 = vector.broadcast %cst_60 : f32 to vector<256x128xf32>
    %78 = arith.maximumf %76, %77 : vector<256x128xf32>
    %79 = arith.truncf %78 : vector<256x128xf32> to vector<256x128xbf16>
    %c0_61 = arith.constant 0 : index
    %c0_62 = arith.constant 0 : index
    %c0_63 = arith.constant 0 : index
    %80 = vector.load %arg13[%c0_61, %c0_62, %c0_63] : memref<1x256x128xbf16, #tpu.memory_space<vmem>>, vector<1x256x128xbf16>
    %81 = vector.shape_cast %80 : vector<1x256x128xbf16> to vector<256x128xbf16>
    %82 = vector.shape_cast %79 : vector<256x128xbf16> to vector<1x256x128xbf16>
    tpu.vector_store %arg13[%c0_61, %c0_62, %c0_63], %82 {strides = array<i32>} : memref<1x256x128xbf16, #tpu.memory_space<vmem>>, vector<1x256x128xbf16>,
    return
  }
  func.func @transform_0(%arg0: i32, %arg1: i32) -> (i32, i32, i32) {
    %c0_i32 = arith.constant 0 : i32
    %c0_i32_0 = arith.constant 0 : i32
    return %arg0, %arg1, %c0_i32 : i32, i32, i32
  }
  func.func @transform_1(%arg0: i32, %arg1: i32) -> (i32, i32, i32) {
    %c0_i32 = arith.constant 0 : i32
    %c0_i32_0 = arith.constant 0 : i32
    return %arg0, %arg1, %c0_i32 : i32, i32, i32
  }
  func.func @transform_2(%arg0: i32, %arg1: i32) -> (i32, i32, i32) {
    %c0_i32 = arith.constant 0 : i32
    %c0_i32_0 = arith.constant 0 : i32
    return %arg0, %arg1, %c0_i32 : i32, i32, i32
  }
  func.func @transform_3(%arg0: i32, %arg1: i32) -> (i32, i32) {
    %c0_i32 = arith.constant 0 : i32
    %c0_i32_0 = arith.constant 0 : i32
    %c0_i32_1 = arith.constant 0 : i32
    return %c0_i32, %c0_i32_0 : i32, i32
  }
  func.func @transform_4(%arg0: i32, %arg1: i32) -> (i32, i32) {
    %c0_i32 = arith.constant 0 : i32
    %c0_i32_0 = arith.constant 0 : i32
    %c0_i32_1 = arith.constant 0 : i32
    return %c0_i32, %c0_i32_0 : i32, i32
  }
  func.func @transform_5(%arg0: i32, %arg1: i32) -> (i32, i32) {
    %c0_i32 = arith.constant 0 : i32
    %c0_i32_0 = arith.constant 0 : i32
    %c0_i32_1 = arith.constant 0 : i32
    return %c0_i32, %c0_i32_0 : i32, i32
  }
  func.func @transform_6(%arg0: i32, %arg1: i32) -> (i32, i32) {
    %c0_i32 = arith.constant 0 : i32
    %c0_i32_0 = arith.constant 0 : i32
    %c0_i32_1 = arith.constant 0 : i32
    return %c0_i32, %c0_i32_0 : i32, i32
  }
  func.func @transform_7(%arg0: i32, %arg1: i32) -> (i32, i32) {
    %c0_i32 = arith.constant 0 : i32
    %c0_i32_0 = arith.constant 0 : i32
    %c0_i32_1 = arith.constant 0 : i32
    return %c0_i32, %c0_i32_0 : i32, i32
  }
  func.func @transform_8(%arg0: i32, %arg1: i32) -> (i32, i32) {
    %c0_i32 = arith.constant 0 : i32
    %c0_i32_0 = arith.constant 0 : i32
    %c0_i32_1 = arith.constant 0 : i32
    return %c0_i32, %c0_i32_0 : i32, i32
  }
  func.func @transform_9(%arg0: i32, %arg1: i32) -> (i32, i32) {
    %c0_i32 = arith.constant 0 : i32
    %c0_i32_0 = arith.constant 0 : i32
    %c0_i32_1 = arith.constant 0 : i32
    return %c0_i32, %c0_i32_0 : i32, i32
  }
  func.func @transform_10(%arg0: i32, %arg1: i32) -> (i32, i32) {
    %c0_i32 = arith.constant 0 : i32
    %c0_i32_0 = arith.constant 0 : i32
    %c0_i32_1 = arith.constant 0 : i32
    return %c0_i32, %c0_i32_0 : i32, i32
  }
  func.func @transform_11(%arg0: i32, %arg1: i32) -> (i32, i32, i32) {
    %c0_i32 = arith.constant 0 : i32
    %c0_i32_0 = arith.constant 0 : i32
    return %arg0, %arg1, %c0_i32 : i32, i32, i32
  }
}

</mosaic_0001>

<llo_original>
// kernel: tpu_custom_call.1
$region0: #{tpu_custom_call.1}
  #allocation0 [shape = 'u32[]', space=smem, size = 0x4, offset = 0x4, fixed_abs, tag = 'smem constant byte address 0x4 - core index']
  #allocation1 [shape = 'u32[72,128]{1,0:T(1,128)}', space=vmem, size = 0x9000, scoped, tag = 'internal scratch']
  #allocation2 [shape = 'bf16[304,128]{1,0:T(8,128)(2,1)}', space=vmem, size = 0x13000, scoped, tag = 'scratch operand']
  #allocation3 [shape = 'bf16[256,1152]{1,0:T(8,128)(2,1)}', space=vmem, size = 0x90000, scoped, tag = 'scratch operand']
  %s0 = inlined_call_operand.vmem [shape: bf16[2,256,128], index: 0, kind: input, shape index: {}]
  %s1 = inlined_call_operand.hbm [shape: bf16[2,16,128], index: 1, kind: input, shape index: {}]
  %s2 = inlined_call_operand.hbm [shape: bf16[2,16,128], index: 2, kind: input, shape index: {}]
  %s3 = inlined_call_operand.hbm [shape: bf16[128,128], index: 3, kind: input, shape index: {}]
  %s4 = inlined_call_operand.vmem [shape: f32[1,128], index: 4, kind: input, shape index: {}]
  %s5 = inlined_call_operand.hbm [shape: bf16[1152,128], index: 5, kind: input, shape index: {}]
  %s6 = inlined_call_operand.vmem [shape: f32[1,128], index: 6, kind: input, shape index: {}]
  %s7 = inlined_call_operand.hbm [shape: bf16[128,128], index: 7, kind: input, shape index: {}]
  %s8 = inlined_call_operand.vmem [shape: f32[1,128], index: 8, kind: input, shape index: {}]
  %s9 = inlined_call_operand.vmem [shape: bf16[256,1], index: 9, kind: input, shape index: {}]
  %s10 = inlined_call_operand.vmem [shape: bf16[256,1], index: 10, kind: input, shape index: {}]
  %s11 = inlined_call_operand.hbm [shape: bf16[2,256,128], index: 11, kind: output, shape index: {}]
  %s12 = sld [smem:[#allocation0]]
  $region113: #{tpu_custom_call.1} parent=0
    _
  %s14 = ssub.s32 1, %s12
  %s15 = scalar_select 0, %s14, %s12
  $region1: #{tpu_custom_call.1} parent=0
    #allocation4 [shape = 'u8[8192]{0}', space=vmem, size = 0x2000, scoped, tag = 'input window, operand 1']
    #allocation5 [shape = 's32[2]{0}', space=sflag, size = 0x8, scoped, tag = 'scoped memory for tpu_custom_call.1']
    #allocation6 [shape = 's32[2]{0}', space=sflag, size = 0x8, scoped, tag = 'scoped memory for tpu_custom_call.1']
    #allocation7 [shape = 'u8[8192]{0}', space=vmem, size = 0x2000, scoped, tag = 'input window, operand 2']
    #allocation8 [shape = 's32[2]{0}', space=sflag, size = 0x8, scoped, tag = 'scoped memory for tpu_custom_call.1']
    #allocation9 [shape = 'u8[32768]{0}', space=vmem, size = 0x8000, scoped, tag = 'input window, operand 3, single buffered']
    #allocation10 [shape = 'u8[294912]{0}', space=vmem, size = 0x48000, scoped, tag = 'input window, operand 5, single buffered']
    #allocation11 [shape = 's32[1]{0}', space=sflag, size = 0x4, scoped, tag = 'scoped memory for tpu_custom_call.1']
    #allocation12 [shape = 'u8[32768]{0}', space=vmem, size = 0x8000, scoped, tag = 'input window, operand 7, single buffered']
    #allocation13 [shape = 'u8[131072]{0}', space=vmem, size = 0x20000, scoped, tag = 'output window, operand 0']
    %16 = vsyncpa [#allocation5], 0
    %s17 = scalar_lea.sflag [#allocation5], 1
    %18 = vsyncpa %s17, 0
    %19 = vsyncpa [#allocation8], 0
    %s20 = scalar_lea.sflag [#allocation8], 1
    %21 = vsyncpa %s20, 0
    %22 = vsyncpa [#allocation11], 0
    %23 = vsyncpa [#allocation6], 0
    %s24 = scalar_lea.sflag [#allocation6], 1
    %25 = vsyncpa %s24, 0
    loop: start=0, step=1, limit=4
    $region2: #{tpu_custom_call.1} parent=1 // loop_pre_header
      _
    $region3: #{tpu_custom_call.1} parent=1 // loop_header
      %s27 = sphi 0, %s31
      %p28 = scmp.ge.s32.totalorder %s27, 4
      %s34 = sphi 0, %s46
      %s35 = sphi 0, %s42
      %s36 = sphi 0, %s34
      %s37 = sphi 0, %s35
      %s38 = sphi 0, %s36
      %s39 = sphi 0, %s37
      %s51 = sphi 0, %s53
      %s54 = sphi 0, %s51
      %s55 = sphi 0, %s54
      %s71 = sphi 0, %s55
      %s79 = sphi 0, %s81
      %s82 = sphi 0, %s79
      %s83 = sphi 0, %s82
      %s99 = sphi 0, %s83
      %s107 = sphi 0, %s109
      %s110 = sphi 0, %s107
      %s111 = sphi 0, %s110
      %s127 = sphi 0, %s111
      %s131 = sphi 0, %s131
      %s133 = sphi 0, %s131
      %s134 = sphi 0, %s133
      %s148 = sphi 0, %s134
      %s152 = sphi 0, %s152
      %s154 = sphi 0, %s152
      %s155 = sphi 0, %s154
      %s169 = sphi 0, %s155
      %s173 = sphi 0, %s173
      %s175 = sphi 0, %s173
      %s176 = sphi 0, %s175
      %s190 = sphi 0, %s176
      %s194 = sphi 0, %s194
      %s196 = sphi 0, %s194
      %s197 = sphi 0, %s196
      %s211 = sphi 0, %s197
      %s215 = sphi 0, %s215
      %s217 = sphi 0, %s215
      %s218 = sphi 0, %s217
      %s232 = sphi 0, %s218
      %s236 = sphi 0, %s236
      %s238 = sphi 0, %s236
      %s239 = sphi 0, %s238
      %s253 = sphi 0, %s239
      %s257 = sphi 0, %s257
      %s259 = sphi 0, %s257
      %s260 = sphi 0, %s259
      %s274 = sphi 0, %s260
      %s278 = sphi 0, %s278
      %s280 = sphi 0, %s278
      %s281 = sphi 0, %s280
      %s295 = sphi 0, %s281
      %s303 = sphi 0, %s305
      %s306 = sphi 0, %s303
      %s307 = sphi 0, %s306
      %s323 = sphi 0, %s307
    $region4: #{tpu_custom_call.1} parent=1 // loop_header_branch
      %30 = sbr.rel (%p28) target = $region8
    $region5: #{tpu_custom_call.1} parent=1 // loop_body
      %s32 = ssub.s32 %s27, 1
      %s33 = ssub.s32 %s27, 2
      %s40 = sadd.s32 1, %s35
      %p41 = scmp.ge.s32.totalorder %s40, 1
      %s42 = scalar_select %p41, 0, %s40
      %s43 = sadd.s32 1, %s34
      %s44 = scalar_select %p41, %s43, %s34
      %p45 = scmp.ge.s32.totalorder %s44, 2
      %s46 = scalar_select %p45, 0, %s44
      %s47 = ssub.s32 %s34, %s46
      %s48 = ssub.s32 %s35, %s42
      %s49 = sor.u32 %s47, %s48
      %p50 = scmp.eq.s32.totalorder %s49, 0
      %s52 = sadd.s32 %s51, 1
      %s53 = scalar_select %p50, %s51, %s52
      %p56 = pneg %p50
      %p57 = scmp.eq.s32.totalorder %s27, 1
      %p58 = por %p56, %p57
      %p59 = scmp.ne.s32.totalorder %s51, %s54
      %p60 = scmp.eq.s32.totalorder %s27, 0
      %p61 = por %p59, %p60
      %p62 = scmp.ne.s32.totalorder %s51, %s54
      %p63 = scmp.eq.s32.totalorder %s32, 1
      %p64 = por %p62, %p63
      %p65 = scmp.ne.s32.totalorder %s54, %s55
      %p66 = scmp.eq.s32.totalorder %s32, 0
      %p67 = por %p65, %p66
      %p68 = scmp.ne.s32.totalorder %s54, %s55
      %p69 = scmp.eq.s32.totalorder %s33, 1
      %p70 = por %p68, %p69
      %p72 = scmp.ne.s32.totalorder %s55, %s71
      %p73 = scmp.eq.s32.totalorder %s33, 0
      %p74 = por %p72, %p73
      %s75 = ssub.s32 %s34, %s46
      %s76 = ssub.s32 %s35, %s42
      %s77 = sor.u32 %s75, %s76
      %p78 = scmp.eq.s32.totalorder %s77, 0
      %s80 = sadd.s32 %s79, 1
      %s81 = scalar_select %p78, %s79, %s80
      %p84 = pneg %p78
      %p85 = scmp.eq.s32.totalorder %s27, 1
      %p86 = por %p84, %p85
      %p87 = scmp.ne.s32.totalorder %s79, %s82
      %p88 = scmp.eq.s32.totalorder %s27, 0
      %p89 = por %p87, %p88
      %p90 = scmp.ne.s32.totalorder %s79, %s82
      %p91 = scmp.eq.s32.totalorder %s32, 1
      %p92 = por %p90, %p91
      %p93 = scmp.ne.s32.totalorder %s82, %s83
      %p94 = scmp.eq.s32.totalorder %s32, 0
      %p95 = por %p93, %p94
      %p96 = scmp.ne.s32.totalorder %s82, %s83
      %p97 = scmp.eq.s32.totalorder %s33, 1
      %p98 = por %p96, %p97
      %p100 = scmp.ne.s32.totalorder %s83, %s99
      %p101 = scmp.eq.s32.totalorder %s33, 0
      %p102 = por %p100, %p101
      %s103 = ssub.s32 %s34, %s46
      %s104 = ssub.s32 %s35, %s42
      %s105 = sor.u32 %s103, %s104
      %p106 = scmp.eq.s32.totalorder %s105, 0
      %s108 = sadd.s32 %s107, 1
      %s109 = scalar_select %p106, %s107, %s108
      %p112 = pneg %p106
      %p113 = scmp.eq.s32.totalorder %s27, 1
      %p114 = por %p112, %p113
      %p115 = scmp.ne.s32.totalorder %s107, %s110
      %p116 = scmp.eq.s32.totalorder %s27, 0
      %p117 = por %p115, %p116
      %p118 = scmp.ne.s32.totalorder %s107, %s110
      %p119 = scmp.eq.s32.totalorder %s32, 1
      %p120 = por %p118, %p119
      %p121 = scmp.ne.s32.totalorder %s110, %s111
      %p122 = scmp.eq.s32.totalorder %s32, 0
      %p123 = por %p121, %p122
      %p124 = scmp.ne.s32.totalorder %s110, %s111
      %p125 = scmp.eq.s32.totalorder %s33, 1
      %p126 = por %p124, %p125
      %p128 = scmp.ne.s32.totalorder %s111, %s127
      %p129 = scmp.eq.s32.totalorder %s33, 0
      %p130 = por %p128, %p129
      %s132 = sadd.s32 %s131, 1
      %p135 = scmp.eq.s32.totalorder %s27, 1
      %p136 = scmp.ne.s32.totalorder %s131, %s133
      %p137 = scmp.eq.s32.totalorder %s27, 0
      %p138 = por %p136, %p137
      %p139 = scmp.ne.s32.totalorder %s131, %s133
      %p140 = scmp.eq.s32.totalorder %s32, 1
      %p141 = por %p139, %p140
      %p142 = scmp.ne.s32.totalorder %s133, %s134
      %p143 = scmp.eq.s32.totalorder %s32, 0
      %p144 = por %p142, %p143
      %p145 = scmp.ne.s32.totalorder %s133, %s134
      %p146 = scmp.eq.s32.totalorder %s33, 1
      %p147 = por %p145, %p146
      %p149 = scmp.ne.s32.totalorder %s134, %s148
      %p150 = scmp.eq.s32.totalorder %s33, 0
      %p151 = por %p149, %p150
      %s153 = sadd.s32 %s152, 1
      %p156 = scmp.eq.s32.totalorder %s27, 1
      %p157 = scmp.ne.s32.totalorder %s152, %s154
      %p158 = scmp.eq.s32.totalorder %s27, 0
      %p159 = por %p157, %p158
      %p160 = scmp.ne.s32.totalorder %s152, %s154
      %p161 = scmp.eq.s32.totalorder %s32, 1
      %p162 = por %p160, %p161
      %p163 = scmp.ne.s32.totalorder %s154, %s155
      %p164 = scmp.eq.s32.totalorder %s32, 0
      %p165 = por %p163, %p164
      %p166 = scmp.ne.s32.totalorder %s154, %s155
      %p167 = scmp.eq.s32.totalorder %s33, 1
      %p168 = por %p166, %p167
      %p170 = scmp.ne.s32.totalorder %s155, %s169
      %p171 = scmp.eq.s32.totalorder %s33, 0
      %p172 = por %p170, %p171
      %s174 = sadd.s32 %s173, 1
      %p177 = scmp.eq.s32.totalorder %s27, 1
      %p178 = scmp.ne.s32.totalorder %s173, %s175
      %p179 = scmp.eq.s32.totalorder %s27, 0
      %p180 = por %p178, %p179
      %p181 = scmp.ne.s32.totalorder %s173, %s175
      %p182 = scmp.eq.s32.totalorder %s32, 1
      %p183 = por %p181, %p182
      %p184 = scmp.ne.s32.totalorder %s175, %s176
      %p185 = scmp.eq.s32.totalorder %s32, 0
      %p186 = por %p184, %p185
      %p187 = scmp.ne.s32.totalorder %s175, %s176
      %p188 = scmp.eq.s32.totalorder %s33, 1
      %p189 = por %p187, %p188
      %p191 = scmp.ne.s32.totalorder %s176, %s190
      %p192 = scmp.eq.s32.totalorder %s33, 0
      %p193 = por %p191, %p192
      %s195 = sadd.s32 %s194, 1
      %p198 = scmp.eq.s32.totalorder %s27, 1
      %p199 = scmp.ne.s32.totalorder %s194, %s196
      %p200 = scmp.eq.s32.totalorder %s27, 0
      %p201 = por %p199, %p200
      %p202 = scmp.ne.s32.totalorder %s194, %s196
      %p203 = scmp.eq.s32.totalorder %s32, 1
      %p204 = por %p202, %p203
      %p205 = scmp.ne.s32.totalorder %s196, %s197
      %p206 = scmp.eq.s32.totalorder %s32, 0
      %p207 = por %p205, %p206
      %p208 = scmp.ne.s32.totalorder %s196, %s197
      %p209 = scmp.eq.s32.totalorder %s33, 1
      %p210 = por %p208, %p209
      %p212 = scmp.ne.s32.totalorder %s197, %s211
      %p213 = scmp.eq.s32.totalorder %s33, 0
      %p214 = por %p212, %p213
      %s216 = sadd.s32 %s215, 1
      %p219 = scmp.eq.s32.totalorder %s27, 1
      %p220 = scmp.ne.s32.totalorder %s215, %s217
      %p221 = scmp.eq.s32.totalorder %s27, 0
      %p222 = por %p220, %p221
      %p223 = scmp.ne.s32.totalorder %s215, %s217
      %p224 = scmp.eq.s32.totalorder %s32, 1
      %p225 = por %p223, %p224
      %p226 = scmp.ne.s32.totalorder %s217, %s218
      %p227 = scmp.eq.s32.totalorder %s32, 0
      %p228 = por %p226, %p227
      %p229 = scmp.ne.s32.totalorder %s217, %s218
      %p230 = scmp.eq.s32.totalorder %s33, 1
      %p231 = por %p229, %p230
      %p233 = scmp.ne.s32.totalorder %s218, %s232
      %p234 = scmp.eq.s32.totalorder %s33, 0
      %p235 = por %p233, %p234
      %s237 = sadd.s32 %s236, 1
      %p240 = scmp.eq.s32.totalorder %s27, 1
      %p241 = scmp.ne.s32.totalorder %s236, %s238
      %p242 = scmp.eq.s32.totalorder %s27, 0
      %p243 = por %p241, %p242
      %p244 = scmp.ne.s32.totalorder %s236, %s238
      %p245 = scmp.eq.s32.totalorder %s32, 1
      %p246 = por %p244, %p245
      %p247 = scmp.ne.s32.totalorder %s238, %s239
      %p248 = scmp.eq.s32.totalorder %s32, 0
      %p249 = por %p247, %p248
      %p250 = scmp.ne.s32.totalorder %s238, %s239
      %p251 = scmp.eq.s32.totalorder %s33, 1
      %p252 = por %p250, %p251
      %p254 = scmp.ne.s32.totalorder %s239, %s253
      %p255 = scmp.eq.s32.totalorder %s33, 0
      %p256 = por %p254, %p255
      %s258 = sadd.s32 %s257, 1
      %p261 = scmp.eq.s32.totalorder %s27, 1
      %p262 = scmp.ne.s32.totalorder %s257, %s259
      %p263 = scmp.eq.s32.totalorder %s27, 0
      %p264 = por %p262, %p263
      %p265 = scmp.ne.s32.totalorder %s257, %s259
      %p266 = scmp.eq.s32.totalorder %s32, 1
      %p267 = por %p265, %p266
      %p268 = scmp.ne.s32.totalorder %s259, %s260
      %p269 = scmp.eq.s32.totalorder %s32, 0
      %p270 = por %p268, %p269
      %p271 = scmp.ne.s32.totalorder %s259, %s260
      %p272 = scmp.eq.s32.totalorder %s33, 1
      %p273 = por %p271, %p272
      %p275 = scmp.ne.s32.totalorder %s260, %s274
      %p276 = scmp.eq.s32.totalorder %s33, 0
      %p277 = por %p275, %p276
      %s279 = sadd.s32 %s278, 1
      %p282 = scmp.eq.s32.totalorder %s27, 1
      %p283 = scmp.ne.s32.totalorder %s278, %s280
      %p284 = scmp.eq.s32.totalorder %s27, 0
      %p285 = por %p283, %p284
      %p286 = scmp.ne.s32.totalorder %s278, %s280
      %p287 = scmp.eq.s32.totalorder %s32, 1
      %p288 = por %p286, %p287
      %p289 = scmp.ne.s32.totalorder %s280, %s281
      %p290 = scmp.eq.s32.totalorder %s32, 0
      %p291 = por %p289, %p290
      %p292 = scmp.ne.s32.totalorder %s280, %s281
      %p293 = scmp.eq.s32.totalorder %s33, 1
      %p294 = por %p292, %p293
      %p296 = scmp.ne.s32.totalorder %s281, %s295
      %p297 = scmp.eq.s32.totalorder %s33, 0
      %p298 = por %p296, %p297
      %s299 = ssub.s32 %s34, %s46
      %s300 = ssub.s32 %s35, %s42
      %s301 = sor.u32 %s299, %s300
      %p302 = scmp.eq.s32.totalorder %s301, 0
      %s304 = sadd.s32 %s303, 1
      %s305 = scalar_select %p302, %s303, %s304
      %p308 = pneg %p302
      %p309 = scmp.eq.s32.totalorder %s27, 1
      %p310 = por %p308, %p309
      %p311 = scmp.ne.s32.totalorder %s303, %s306
      %p312 = scmp.eq.s32.totalorder %s27, 0
      %p313 = por %p311, %p312
      %p314 = scmp.ne.s32.totalorder %s303, %s306
      %p315 = scmp.eq.s32.totalorder %s32, 1
      %p316 = por %p314, %p315
      %p317 = scmp.ne.s32.totalorder %s306, %s307
      %p318 = scmp.eq.s32.totalorder %s32, 0
      %p319 = por %p317, %p318
      %p320 = scmp.ne.s32.totalorder %s306, %s307
      %p321 = scmp.eq.s32.totalorder %s33, 1
      %p322 = por %p320, %p321
      %p324 = scmp.ne.s32.totalorder %s307, %s323
      %p325 = scmp.eq.s32.totalorder %s33, 0
      %p326 = por %p324, %p325
      %p327 = scmp.le.s32.totalorder 1, %s27
      %p328 = scmp.lt.s32.totalorder %s27, 3
      %p329 = pnand %p327, %p328
      %p330 = pneg %p329
      // Predicated region
      $region9: #{tpu_custom_call.1} parent=5 // pred_check
        _
      $region10: #{tpu_custom_call.1} parent=5 // pred_check_branch
        %332 = sbr.rel (%p329) target = $region12
      $region11: #{tpu_custom_call.1} parent=5 // pred_region
        %s333 = ssub.s32 %s27, 1
        // Predicated region
        $region13: #{tpu_custom_call.1} parent=11 // pred_check
          %p334 = pneg %p144
        $region14: #{tpu_custom_call.1} parent=11 // pred_check_branch
          %336 = sbr.rel (%p334) target = $region16
        $region15: #{tpu_custom_call.1} parent=11 // pred_region
          %338 = vsyncadd [#allocation8], 0
          %s339 = sshll.u32 %s3, 4
          %s340 = int_to_ptr.hbm [resolvable:$true] %s339
          %s341 = sshll.u32 [#allocation9], 4
          %s342 = int_to_ptr.vmem [resolvable:$true] %s341
          %347 = dma.hbm_to_vmem [thread:$0]  %s340, 1024, %s342, [#allocation8], 64, 64, 4
        $region16: #{tpu_custom_call.1} parent=11 // pred_fallthru
          _
        // Predicated region
        $region17: #{tpu_custom_call.1} parent=11 // pred_check
          %p348 = pneg %p165
        $region18: #{tpu_custom_call.1} parent=11 // pred_check_branch
          %350 = sbr.rel (%p348) target = $region20
        $region19: #{tpu_custom_call.1} parent=11 // pred_region
          _
        $region20: #{tpu_custom_call.1} parent=11 // pred_fallthru
          _
        // Predicated region
        $region21: #{tpu_custom_call.1} parent=11 // pred_check
          %p351 = pneg %p186
        $region22: #{tpu_custom_call.1} parent=11 // pred_check_branch
          %353 = sbr.rel (%p351) target = $region24
        $region23: #{tpu_custom_call.1} parent=11 // pred_region
          %355 = vsyncadd [#allocation11], 0
          %s356 = sshll.u32 %s5, 4
          %s357 = int_to_ptr.hbm [resolvable:$true] %s356
          %s358 = sshll.u32 [#allocation10], 4
          %s359 = int_to_ptr.vmem [resolvable:$true] %s358
          %364 = dma.hbm_to_vmem [thread:$0]  %s357, 9216, %s359, [#allocation11], 64, 64, 4
        $region24: #{tpu_custom_call.1} parent=11 // pred_fallthru
          _
        // Predicated region
        $region25: #{tpu_custom_call.1} parent=11 // pred_check
          %p365 = pneg %p207
        $region26: #{tpu_custom_call.1} parent=11 // pred_check_branch
          %367 = sbr.rel (%p365) target = $region28
        $region27: #{tpu_custom_call.1} parent=11 // pred_region
          _
        $region28: #{tpu_custom_call.1} parent=11 // pred_fallthru
          _
        // Predicated region
        $region29: #{tpu_custom_call.1} parent=11 // pred_check
          %p368 = pneg %p228
        $region30: #{tpu_custom_call.1} parent=11 // pred_check_branch
          %370 = sbr.rel (%p368) target = $region32
        $region31: #{tpu_custom_call.1} parent=11 // pred_region
          %372 = vsyncadd [#allocation11], 0
          %s373 = sshll.u32 %s7, 4
          %s374 = int_to_ptr.hbm [resolvable:$true] %s373
          %s375 = sshll.u32 [#allocation12], 4
          %s376 = int_to_ptr.vmem [resolvable:$true] %s375
          %381 = dma.hbm_to_vmem [thread:$0]  %s374, 1024, %s376, [#allocation11], 64, 64, 4
        $region32: #{tpu_custom_call.1} parent=11 // pred_fallthru
          _
        // Predicated region
        $region33: #{tpu_custom_call.1} parent=11 // pred_check
          %p382 = pneg %p249
        $region34: #{tpu_custom_call.1} parent=11 // pred_check_branch
          %384 = sbr.rel (%p382) target = $region36
        $region35: #{tpu_custom_call.1} parent=11 // pred_region
          _
        $region36: #{tpu_custom_call.1} parent=11 // pred_fallthru
          _
        // Predicated region
        $region37: #{tpu_custom_call.1} parent=11 // pred_check
          %p385 = pneg %p270
        $region38: #{tpu_custom_call.1} parent=11 // pred_check_branch
          %387 = sbr.rel (%p385) target = $region40
        $region39: #{tpu_custom_call.1} parent=11 // pred_region
          _
        $region40: #{tpu_custom_call.1} parent=11 // pred_fallthru
          _
        // Predicated region
        $region41: #{tpu_custom_call.1} parent=11 // pred_check
          %p388 = pneg %p291
        $region42: #{tpu_custom_call.1} parent=11 // pred_check_branch
          %390 = sbr.rel (%p388) target = $region44
        $region43: #{tpu_custom_call.1} parent=11 // pred_region
          _
        $region44: #{tpu_custom_call.1} parent=11 // pred_fallthru
          _
      $region12: #{tpu_custom_call.1} parent=5 // pred_fallthru
        _
      %p391 = scmp.lt.s32.totalorder %s27, 2
      // Predicated region
      $region45: #{tpu_custom_call.1} parent=5 // pred_check
        %p392 = pneg %p391
      $region46: #{tpu_custom_call.1} parent=5 // pred_check_branch
        %394 = sbr.rel (%p392) target = $region48
      $region47: #{tpu_custom_call.1} parent=5 // pred_region
        // Predicated region
        $region49: #{tpu_custom_call.1} parent=47 // pred_check
          %p395 = pneg %p61
        $region50: #{tpu_custom_call.1} parent=47 // pred_check_branch
          %397 = sbr.rel (%p395) target = $region52
        $region51: #{tpu_custom_call.1} parent=47 // pred_region
          %s398 = smul.u32 32, %s35
          %p399 = scmp.lt.s32.totalorder %s34, 1
          %s400 = scalar_select %p399, %s34, 1
          %p401 = scmp.lt.s32.totalorder %s398, 31
          %s402 = scalar_select %p401, %s398, 31
          %s403 = smul.addr %s400, 32
          %s404 = sadd.s32 %s402, %s403
          %s405 = smul.addr %s404, 4
          %s406 = scalar_lea.vmem %s0, %s405
          %s407 = smul.u32 32, %s35
        $region52: #{tpu_custom_call.1} parent=47 // pred_fallthru
          _
        // Predicated region
        $region53: #{tpu_custom_call.1} parent=47 // pred_check
          %p408 = pneg %p89
        $region54: #{tpu_custom_call.1} parent=47 // pred_check_branch
          %410 = sbr.rel (%p408) target = $region56
        $region55: #{tpu_custom_call.1} parent=47 // pred_region
          %s411 = sand.u32 %s79, 1
          %s412 = scalar_lea.sflag [#allocation5], %s411
          %s413 = sand.u32 %s79, 1
          %s414 = smul.addr %s413, 8
          %s415 = scalar_lea.vmem [#allocation4], %s414
          %s416 = smul.u32 2, %s35
          %418 = vsyncadd %s412, 0
          %s419 = smul.addr %s34, 2
          %s420 = sadd.s32 %s416, %s419
          %s421 = smul.addr %s420, 4
          %s422 = scalar_lea.hbm %s1, %s421
          %s423 = sshll.u32 %s422, 4
          %s424 = int_to_ptr.hbm [resolvable:$true] %s423
          %s425 = sshll.u32 %s415, 4
          %s426 = int_to_ptr.vmem [resolvable:$true] %s425
          %431 = dma.hbm_to_vmem [thread:$0]  %s424, 128, %s426, %s412, 64, 64, 4
        $region56: #{tpu_custom_call.1} parent=47 // pred_fallthru
          _
        // Predicated region
        $region57: #{tpu_custom_call.1} parent=47 // pred_check
          %p432 = pneg %p117
        $region58: #{tpu_custom_call.1} parent=47 // pred_check_branch
          %434 = sbr.rel (%p432) target = $region60
        $region59: #{tpu_custom_call.1} parent=47 // pred_region
          %s435 = sand.u32 %s27, 1
          %s436 = scalar_lea.sflag [#allocation8], %s435
          %s437 = sand.u32 %s107, 1
          %s438 = smul.addr %s437, 8
          %s439 = scalar_lea.vmem [#allocation7], %s438
          %s440 = smul.u32 2, %s35
          %442 = vsyncadd %s436, 0
          %s443 = smul.addr %s34, 2
          %s444 = sadd.s32 %s440, %s443
          %s445 = smul.addr %s444, 4
          %s446 = scalar_lea.hbm %s2, %s445
          %s447 = sshll.u32 %s446, 4
          %s448 = int_to_ptr.hbm [resolvable:$true] %s447
          %s449 = sshll.u32 %s439, 4
          %s450 = int_to_ptr.vmem [resolvable:$true] %s449
          %455 = dma.hbm_to_vmem [thread:$0]  %s448, 128, %s450, %s436, 64, 64, 4
        $region60: #{tpu_custom_call.1} parent=47 // pred_fallthru
          _
      $region48: #{tpu_custom_call.1} parent=5 // pred_fallthru
        _
      %p456 = scmp.le.s32.totalorder 1, %s27
      %p457 = scmp.lt.s32.totalorder %s27, 3
      %p458 = pnand %p456, %p457
      %p459 = pneg %p458
      // Predicated region
      $region61: #{tpu_custom_call.1} parent=5 // pred_check
        _
      $region62: #{tpu_custom_call.1} parent=5 // pred_check_branch
        %461 = sbr.rel (%p458) target = $region64
      $region63: #{tpu_custom_call.1} parent=5 // pred_region
        %s462 = ssub.s32 %s27, 1
        %s463 = sand.u32 %s82, 1
        %s464 = scalar_lea.sflag [#allocation5], %s463
        %s465 = sand.u32 %s82, 1
        %s466 = smul.addr %s465, 8
        %s467 = scalar_lea.vmem [#allocation4], %s466
        // Predicated region
        $region65: #{tpu_custom_call.1} parent=63 // pred_check
          %p468 = pneg %p95
        $region66: #{tpu_custom_call.1} parent=63 // pred_check_branch
          %470 = sbr.rel (%p468) target = $region68
        $region67: #{tpu_custom_call.1} parent=63 // pred_region
          %472 = dma.done %s464, 128
        $region68: #{tpu_custom_call.1} parent=63 // pred_fallthru
          _
        %s473 = sand.u32 %s32, 1
        %s474 = scalar_lea.sflag [#allocation8], %s473
        %s475 = sand.u32 %s110, 1
        %s476 = smul.addr %s475, 8
        %s477 = scalar_lea.vmem [#allocation7], %s476
        // Predicated region
        $region69: #{tpu_custom_call.1} parent=63 // pred_check
          %p478 = pneg %p123
        $region70: #{tpu_custom_call.1} parent=63 // pred_check_branch
          %480 = sbr.rel (%p478) target = $region72
        $region71: #{tpu_custom_call.1} parent=63 // pred_region
          %482 = dma.done %s474, 128
        $region72: #{tpu_custom_call.1} parent=63 // pred_fallthru
          _
        // Predicated region
        $region73: #{tpu_custom_call.1} parent=63 // pred_check
          %p483 = pneg %p144
        $region74: #{tpu_custom_call.1} parent=63 // pred_check_branch
          %485 = sbr.rel (%p483) target = $region76
        $region75: #{tpu_custom_call.1} parent=63 // pred_region
          %487 = dma.done [#allocation8], 1024
        $region76: #{tpu_custom_call.1} parent=63 // pred_fallthru
          _
        // Predicated region
        $region77: #{tpu_custom_call.1} parent=63 // pred_check
          %p488 = pneg %p186
        $region78: #{tpu_custom_call.1} parent=63 // pred_check_branch
          %490 = sbr.rel (%p488) target = $region80
        $region79: #{tpu_custom_call.1} parent=63 // pred_region
          %492 = dma.done [#allocation11], 9216
        $region80: #{tpu_custom_call.1} parent=63 // pred_fallthru
          _
        // Predicated region
        $region81: #{tpu_custom_call.1} parent=63 // pred_check
          %p493 = pneg %p228
        $region82: #{tpu_custom_call.1} parent=63 // pred_check_branch
          %495 = sbr.rel (%p493) target = $region84
        $region83: #{tpu_custom_call.1} parent=63 // pred_region
          %497 = dma.done [#allocation11], 1024
        $region84: #{tpu_custom_call.1} parent=63 // pred_fallthru
          _
        %s498 = smul.u32 32, %s37
        %p499 = scmp.lt.s32.totalorder %s36, 1
        %s500 = scalar_select %p499, %s36, 1
        %p501 = scmp.lt.s32.totalorder %s498, 31
        %s502 = scalar_select %p501, %s498, 31
        %s503 = smul.addr %s500, 32
        %s504 = sadd.s32 %s502, %s503
        %s505 = smul.addr %s504, 4
        %s506 = scalar_lea.vmem %s0, %s505
        %p507 = pneg %p67
        %p508 = pneg %p64
        %s509 = sand.u32 %s82, 1
        %s510 = scalar_lea.sflag [#allocation5], %s509
        %s511 = sand.u32 %s82, 1
        %s512 = smul.addr %s511, 8
        %s513 = scalar_lea.vmem [#allocation4], %s512
        %p514 = pneg %p95
        %p515 = pneg %p92
        %s516 = sand.u32 %s32, 1
        %s517 = scalar_lea.sflag [#allocation8], %s516
        %s518 = sand.u32 %s110, 1
        %s519 = smul.addr %s518, 8
        %s520 = scalar_lea.vmem [#allocation7], %s519
        %p521 = pneg %p123
        %p522 = pneg %p120
        %p523 = pneg %p144
        %p524 = pneg %p141
        %p525 = pneg %p165
        %p526 = pneg %p162
        %p527 = pneg %p186
        %p528 = pneg %p183
        %p529 = pneg %p207
        %p530 = pneg %p204
        %p531 = pneg %p228
        %p532 = pneg %p225
        %p533 = pneg %p249
        %p534 = pneg %p246
        %p535 = pneg %p270
        %p536 = pneg %p267
        %p537 = pneg %p291
        %p538 = pneg %p288
        %p539 = pneg %p319
        %p540 = pneg %p316
        %s541 = sand.u32 %s306, 1
        %s542 = scalar_lea.sflag [#allocation6], %s541
        %s543 = sand.u32 %s306, 1
        %s544 = smul.addr %s543, 128
        %s545 = scalar_lea.vmem [#allocation13], %s544
        %s546 = smul.u32 32, %s37
        %p547 = scmp.lt.s32.totalorder %s36, 1
        %s548 = scalar_select %p547, %s36, 1
        %p549 = scmp.lt.s32.totalorder %s546, 31
        %s550 = scalar_select %p549, %s546, 31
        %s551 = smul.addr %s548, 32
        %s552 = sadd.s32 %s550, %s551
        %s553 = smul.addr %s552, 4
        %s554 = scalar_lea.vmem %s0, %s553
        %s555 = smul.u32 32, %s37
        %s556 = smul.u32 2, %s37
        %s557 = smul.u32 2, %s37
        %s558 = smul.u32 32, %s37
        %v560 = vld [vmem:[%s554] sm:$0xf]
        %v561 = vld [vmem:[%s554 + $0x4] sm:$0xf]
        %v562 = vld [vmem:[%s554 + $0x8] sm:$0xf]
        %v563 = vld [vmem:[%s554 + $0xc] sm:$0xf]
        %v564 = vld [vmem:[%s554 + $0x10] sm:$0xf]
        %v565 = vld [vmem:[%s554 + $0x14] sm:$0xf]
        %v566 = vld [vmem:[%s554 + $0x18] sm:$0xf]
        %v567 = vld [vmem:[%s554 + $0x1c] sm:$0xf]
        %v568 = vld [vmem:[%s554 + $0x20] sm:$0xf]
        %v569 = vld [vmem:[%s554 + $0x24] sm:$0xf]
        %v570 = vld [vmem:[%s554 + $0x28] sm:$0xf]
        %v571 = vld [vmem:[%s554 + $0x2c] sm:$0xf]
        %v572 = vld [vmem:[%s554 + $0x30] sm:$0xf]
        %v573 = vld [vmem:[%s554 + $0x34] sm:$0xf]
        %v574 = vld [vmem:[%s554 + $0x38] sm:$0xf]
        %v575 = vld [vmem:[%s554 + $0x3c] sm:$0xf]
        %v576 = vld [vmem:[%s554 + $0x40] sm:$0xf]
        %v577 = vld [vmem:[%s554 + $0x44] sm:$0xf]
        %v578 = vld [vmem:[%s554 + $0x48] sm:$0xf]
        %v579 = vld [vmem:[%s554 + $0x4c] sm:$0xf]
        %v580 = vld [vmem:[%s554 + $0x50] sm:$0xf]
        %v581 = vld [vmem:[%s554 + $0x54] sm:$0xf]
        %v582 = vld [vmem:[%s554 + $0x58] sm:$0xf]
        %v583 = vld [vmem:[%s554 + $0x5c] sm:$0xf]
        %v584 = vld [vmem:[%s554 + $0x60] sm:$0xf]
        %v585 = vld [vmem:[%s554 + $0x64] sm:$0xf]
        %v586 = vld [vmem:[%s554 + $0x68] sm:$0xf]
        %v587 = vld [vmem:[%s554 + $0x6c] sm:$0xf]
        %v588 = vld [vmem:[%s554 + $0x70] sm:$0xf]
        %v589 = vld [vmem:[%s554 + $0x74] sm:$0xf]
        %v590 = vld [vmem:[%s554 + $0x78] sm:$0xf]
        %v591 = vld [vmem:[%s554 + $0x7c] sm:$0xf]
        %v592 = vld [vmem:[#allocation9] sm:$0xf]
        %v593 = vld [vmem:[#allocation9 + $0x4] sm:$0xf]
        %v594 = vld [vmem:[#allocation9 + $0x8] sm:$0xf]
        %v595 = vld [vmem:[#allocation9 + $0xc] sm:$0xf]
        %v596 = vld [vmem:[#allocation9 + $0x10] sm:$0xf]
        %v597 = vld [vmem:[#allocation9 + $0x14] sm:$0xf]
        %v598 = vld [vmem:[#allocation9 + $0x18] sm:$0xf]
        %v599 = vld [vmem:[#allocation9 + $0x1c] sm:$0xf]
        %v600 = vld [vmem:[#allocation9 + $0x20] sm:$0xf]
        %v601 = vld [vmem:[#allocation9 + $0x24] sm:$0xf]
        %v602 = vld [vmem:[#allocation9 + $0x28] sm:$0xf]
        %v603 = vld [vmem:[#allocation9 + $0x2c] sm:$0xf]
        %v604 = vld [vmem:[#allocation9 + $0x30] sm:$0xf]
        %v605 = vld [vmem:[#allocation9 + $0x34] sm:$0xf]
        %v606 = vld [vmem:[#allocation9 + $0x38] sm:$0xf]
        %v607 = vld [vmem:[#allocation9 + $0x3c] sm:$0xf]
        %v608 = vld [vmem:[%s4] sm:$0x1]
        %v610 = vperm.slane %v608, 0
        %v644 = vunpack.c.l.b16 %v560
        %v645 = vunpack.c.l.b16 %v561
        %v646 = vunpack.c.l.b16 %v562
        %v647 = vunpack.c.l.b16 %v563
        %v648 = vunpack.c.l.b16 %v564
        %v649 = vunpack.c.l.b16 %v565
        %v650 = vunpack.c.l.b16 %v566
        %v651 = vunpack.c.l.b16 %v567
        %v652 = vunpack.c.l.b16 %v568
        %v653 = vunpack.c.l.b16 %v569
        %v654 = vunpack.c.l.b16 %v570
        %v655 = vunpack.c.l.b16 %v571
        %v656 = vunpack.c.l.b16 %v572
        %v657 = vunpack.c.l.b16 %v573
        %v658 = vunpack.c.l.b16 %v574
        %v659 = vunpack.c.l.b16 %v575
        %v660 = vunpack.c.l.b16 %v576
        %v661 = vunpack.c.l.b16 %v577
        %v662 = vunpack.c.l.b16 %v578
        %v663 = vunpack.c.l.b16 %v579
        %v664 = vunpack.c.l.b16 %v580
        %v665 = vunpack.c.l.b16 %v581
        %v666 = vunpack.c.l.b16 %v582
        %v667 = vunpack.c.l.b16 %v583
        %v668 = vunpack.c.l.b16 %v584
        %v669 = vunpack.c.l.b16 %v585
        %v670 = vunpack.c.l.b16 %v586
        %v671 = vunpack.c.l.b16 %v587
        %v672 = vunpack.c.l.b16 %v588
        %v673 = vunpack.c.l.b16 %v589
        %v674 = vunpack.c.l.b16 %v590
        %v675 = vunpack.c.l.b16 %v591
        %v676 = vpack.c.b16 %v645, %v644
        %v677 = vpack.c.b16 %v647, %v646
        %v678 = vpack.c.b16 %v649, %v648
        %v679 = vpack.c.b16 %v651, %v650
        %v680 = vpack.c.b16 %v653, %v652
        %v681 = vpack.c.b16 %v655, %v654
        %v682 = vpack.c.b16 %v657, %v656
        %v683 = vpack.c.b16 %v659, %v658
        %v684 = vpack.c.b16 %v661, %v660
        %v685 = vpack.c.b16 %v663, %v662
        %v686 = vpack.c.b16 %v665, %v664
        %v687 = vpack.c.b16 %v667, %v666
        %v688 = vpack.c.b16 %v669, %v668
        %v689 = vpack.c.b16 %v671, %v670
        %v690 = vpack.c.b16 %v673, %v672
        %v691 = vpack.c.b16 %v675, %v674
        %v724 = vunpack.c.l.b16 %v592
        %v725 = vunpack.c.l.b16 %v593
        %v726 = vunpack.c.l.b16 %v594
        %v727 = vunpack.c.l.b16 %v595
        %v728 = vunpack.c.l.b16 %v596
        %v729 = vunpack.c.l.b16 %v597
        %v730 = vunpack.c.l.b16 %v598
        %v731 = vunpack.c.l.b16 %v599
        %v732 = vunpack.c.l.b16 %v600
        %v733 = vunpack.c.l.b16 %v601
        %v734 = vunpack.c.l.b16 %v602
        %v735 = vunpack.c.l.b16 %v603
        %v736 = vunpack.c.l.b16 %v604
        %v737 = vunpack.c.l.b16 %v605
        %v738 = vunpack.c.l.b16 %v606
        %v739 = vunpack.c.l.b16 %v607
        %v740 = vpack.c.b16 %v725, %v724
        %v741 = vpack.c.b16 %v727, %v726
        %v742 = vpack.c.b16 %v729, %v728
        %v743 = vpack.c.b16 %v731, %v730
        %v744 = vpack.c.b16 %v733, %v732
        %v745 = vpack.c.b16 %v735, %v734
        %v746 = vpack.c.b16 %v737, %v736
        %v747 = vpack.c.b16 %v739, %v738
        %756 = vmatpush.bf16.msra.mxu0 %v747
        %757 = vmatpush.bf16.msra.mxu0 %v746
        %758 = vmatpush.bf16.msra.mxu0 %v745
        %759 = vmatpush.bf16.msra.mxu0 %v744
        %760 = vmatpush.bf16.msra.mxu0 %v743
        %761 = vmatpush.bf16.msra.mxu0 %v742
        %762 = vmatpush.bf16.msra.mxu0 %v741
        %763 = vmatpush.bf16.msra.mxu0 %v740
        %764 = vmatmul.bf16.gmra.mxu0 %v676
        %v765 = vpop.f32.mrf.mxu0
        %v766 = vadd.f32 %v610, %v765
        %v767 = vpop.f32.mrf.mxu0
        %v768 = vadd.f32 %v610, %v767
        %769 = vmatmul.bf16.gmra.mxu0 %v677
        %v770 = vpop.f32.mrf.mxu0
        %v771 = vadd.f32 %v610, %v770
        %v772 = vpop.f32.mrf.mxu0
        %v773 = vadd.f32 %v610, %v772
        %774 = vmatmul.bf16.gmra.mxu0 %v678
        %v775 = vpop.f32.mrf.mxu0
        %v776 = vadd.f32 %v610, %v775
        %v777 = vpop.f32.mrf.mxu0
        %v778 = vadd.f32 %v610, %v777
        %779 = vmatmul.bf16.gmra.mxu0 %v679
        %v780 = vpop.f32.mrf.mxu0
        %v781 = vadd.f32 %v610, %v780
        %v782 = vpop.f32.mrf.mxu0
        %v783 = vadd.f32 %v610, %v782
        %784 = vmatmul.bf16.gmra.mxu0 %v680
        %v785 = vpop.f32.mrf.mxu0
        %v786 = vadd.f32 %v610, %v785
        %v787 = vpop.f32.mrf.mxu0
        %v788 = vadd.f32 %v610, %v787
        %789 = vmatmul.bf16.gmra.mxu0 %v681
        %v790 = vpop.f32.mrf.mxu0
        %v791 = vadd.f32 %v610, %v790
        %v792 = vpop.f32.mrf.mxu0
        %v793 = vadd.f32 %v610, %v792
        %794 = vmatmul.bf16.gmra.mxu0 %v682
        %v795 = vpop.f32.mrf.mxu0
        %v796 = vadd.f32 %v610, %v795
        %v797 = vpop.f32.mrf.mxu0
        %v798 = vadd.f32 %v610, %v797
        %799 = vmatmul.bf16.gmra.mxu0 %v683
        %v800 = vpop.f32.mrf.mxu0
        %v801 = vadd.f32 %v610, %v800
        %v802 = vpop.f32.mrf.mxu0
        %v803 = vadd.f32 %v610, %v802
        %804 = vmatmul.bf16.gmra.mxu0 %v684
        %v805 = vpop.f32.mrf.mxu0
        %v806 = vadd.f32 %v610, %v805
        %v807 = vpop.f32.mrf.mxu0
        %v808 = vadd.f32 %v610, %v807
        %809 = vmatmul.bf16.gmra.mxu0 %v685
        %v810 = vpop.f32.mrf.mxu0
        %v811 = vadd.f32 %v610, %v810
        %v812 = vpop.f32.mrf.mxu0
        %v813 = vadd.f32 %v610, %v812
        %814 = vmatmul.bf16.gmra.mxu0 %v686
        %v815 = vpop.f32.mrf.mxu0
        %v816 = vadd.f32 %v610, %v815
        %v817 = vpop.f32.mrf.mxu0
        %v818 = vadd.f32 %v610, %v817
        %819 = vmatmul.bf16.gmra.mxu0 %v687
        %v820 = vpop.f32.mrf.mxu0
        %v821 = vadd.f32 %v610, %v820
        %v822 = vpop.f32.mrf.mxu0
        %v823 = vadd.f32 %v610, %v822
        %824 = vmatmul.bf16.gmra.mxu0 %v688
        %v825 = vpop.f32.mrf.mxu0
        %v826 = vadd.f32 %v610, %v825
        %v827 = vpop.f32.mrf.mxu0
        %v828 = vadd.f32 %v610, %v827
        %829 = vmatmul.bf16.gmra.mxu0 %v689
        %v830 = vpop.f32.mrf.mxu0
        %v831 = vadd.f32 %v610, %v830
        %v832 = vpop.f32.mrf.mxu0
        %v833 = vadd.f32 %v610, %v832
        %834 = vmatmul.bf16.gmra.mxu0 %v690
        %v835 = vpop.f32.mrf.mxu0
        %v836 = vadd.f32 %v610, %v835
        %v837 = vpop.f32.mrf.mxu0
        %v838 = vadd.f32 %v610, %v837
        %839 = vmatmul.bf16.gmra.mxu0 %v691
        %v840 = vpop.f32.mrf.mxu0
        %v841 = vadd.f32 %v610, %v840
        %v842 = vpop.f32.mrf.mxu0
        %v843 = vadd.f32 %v610, %v842
        %844 = vdwg.mxu0
        %v845 = vmax.f32 %v766, 0.0
        %v846 = vmax.f32 %v768, 0.0
        %v847 = vmax.f32 %v771, 0.0
        %v848 = vmax.f32 %v773, 0.0
        %v849 = vmax.f32 %v776, 0.0
        %v850 = vmax.f32 %v778, 0.0
        %v851 = vmax.f32 %v781, 0.0
        %v852 = vmax.f32 %v783, 0.0
        %v853 = vmax.f32 %v786, 0.0
        %v854 = vmax.f32 %v788, 0.0
        %v855 = vmax.f32 %v791, 0.0
        %v856 = vmax.f32 %v793, 0.0
        %v857 = vmax.f32 %v796, 0.0
        %v858 = vmax.f32 %v798, 0.0
        %v859 = vmax.f32 %v801, 0.0
        %v860 = vmax.f32 %v803, 0.0
        %v861 = vmax.f32 %v806, 0.0
        %v862 = vmax.f32 %v808, 0.0
        %v863 = vmax.f32 %v811, 0.0
        %v864 = vmax.f32 %v813, 0.0
        %v865 = vmax.f32 %v816, 0.0
        %v866 = vmax.f32 %v818, 0.0
        %v867 = vmax.f32 %v821, 0.0
        %v868 = vmax.f32 %v823, 0.0
        %v869 = vmax.f32 %v826, 0.0
        %v870 = vmax.f32 %v828, 0.0
        %v871 = vmax.f32 %v831, 0.0
        %v872 = vmax.f32 %v833, 0.0
        %v873 = vmax.f32 %v836, 0.0
        %v874 = vmax.f32 %v838, 0.0
        %v875 = vmax.f32 %v841, 0.0
        %v876 = vmax.f32 %v843, 0.0
        %v877 = vpack.c.bf16 %v845, %v845
        %v878 = vpack.c.bf16 %v846, %v846
        %v879 = vpack.c.bf16 %v847, %v847
        %v880 = vpack.c.bf16 %v848, %v848
        %v881 = vpack.c.bf16 %v849, %v849
        %v882 = vpack.c.bf16 %v850, %v850
        %v883 = vpack.c.bf16 %v851, %v851
        %v884 = vpack.c.bf16 %v852, %v852
        %v885 = vpack.c.bf16 %v853, %v853
        %v886 = vpack.c.bf16 %v854, %v854
        %v887 = vpack.c.bf16 %v855, %v855
        %v888 = vpack.c.bf16 %v856, %v856
        %v889 = vpack.c.bf16 %v857, %v857
        %v890 = vpack.c.bf16 %v858, %v858
        %v891 = vpack.c.bf16 %v859, %v859
        %v892 = vpack.c.bf16 %v860, %v860
        %v893 = vpack.c.bf16 %v861, %v861
        %v894 = vpack.c.bf16 %v862, %v862
        %v895 = vpack.c.bf16 %v863, %v863
        %v896 = vpack.c.bf16 %v864, %v864
        %v897 = vpack.c.bf16 %v865, %v865
        %v898 = vpack.c.bf16 %v866, %v866
        %v899 = vpack.c.bf16 %v867, %v867
        %v900 = vpack.c.bf16 %v868, %v868
        %v901 = vpack.c.bf16 %v869, %v869
        %v902 = vpack.c.bf16 %v870, %v870
        %v903 = vpack.c.bf16 %v871, %v871
        %v904 = vpack.c.bf16 %v872, %v872
        %v905 = vpack.c.bf16 %v873, %v873
        %v906 = vpack.c.bf16 %v874, %v874
        %v907 = vpack.c.bf16 %v875, %v875
        %v908 = vpack.c.bf16 %v876, %v876
        %909 = vst [vmem:[#allocation2 + $0xc] sm:$0xf] %v877
        %910 = vst [vmem:[#allocation2 + $0x10] sm:$0xf] %v878
        %911 = vst [vmem:[#allocation2 + $0x14] sm:$0xf] %v879
        %912 = vst [vmem:[#allocation2 + $0x18] sm:$0xf] %v880
        %913 = vst [vmem:[#allocation2 + $0x1c] sm:$0xf] %v881
        %914 = vst [vmem:[#allocation2 + $0x20] sm:$0xf] %v882
        %915 = vst [vmem:[#allocation2 + $0x24] sm:$0xf] %v883
        %916 = vst [vmem:[#allocation2 + $0x28] sm:$0xf] %v884
        %917 = vst [vmem:[#allocation2 + $0x2c] sm:$0xf] %v885
        %918 = vst [vmem:[#allocation2 + $0x30] sm:$0xf] %v886
        %919 = vst [vmem:[#allocation2 + $0x34] sm:$0xf] %v887
        %920 = vst [vmem:[#allocation2 + $0x38] sm:$0xf] %v888
        %921 = vst [vmem:[#allocation2 + $0x3c] sm:$0xf] %v889
        %922 = vst [vmem:[#allocation2 + $0x40] sm:$0xf] %v890
        %923 = vst [vmem:[#allocation2 + $0x44] sm:$0xf] %v891
        %924 = vst [vmem:[#allocation2 + $0x48] sm:$0xf] %v892
        %925 = vst [vmem:[#allocation2 + $0x4c] sm:$0xf] %v893
        %926 = vst [vmem:[#allocation2 + $0x50] sm:$0xf] %v894
        %927 = vst [vmem:[#allocation2 + $0x54] sm:$0xf] %v895
        %928 = vst [vmem:[#allocation2 + $0x58] sm:$0xf] %v896
        %929 = vst [vmem:[#allocation2 + $0x5c] sm:$0xf] %v897
        %930 = vst [vmem:[#allocation2 + $0x60] sm:$0xf] %v898
        %931 = vst [vmem:[#allocation2 + $0x64] sm:$0xf] %v899
        %932 = vst [vmem:[#allocation2 + $0x68] sm:$0xf] %v900
        %933 = vst [vmem:[#allocation2 + $0x6c] sm:$0xf] %v901
        %934 = vst [vmem:[#allocation2 + $0x70] sm:$0xf] %v902
        %935 = vst [vmem:[#allocation2 + $0x74] sm:$0xf] %v903
        %936 = vst [vmem:[#allocation2 + $0x78] sm:$0xf] %v904
        %937 = vst [vmem:[#allocation2 + $0x7c] sm:$0xf] %v905
        %938 = vst [vmem:[#allocation2 + $0x80] sm:$0xf] %v906
        %939 = vst [vmem:[#allocation2 + $0x84] sm:$0xf] %v907
        %940 = vst [vmem:[#allocation2 + $0x88] sm:$0xf] %v908
        %941 = vst [vmem:[#allocation2] sm:$0xf] 0
        %942 = vst [vmem:[#allocation2 + $0x94] sm:$0xf] 0
        %p943 = scmp.gt.s32.totalorder %s37, 0
        // Predicated region
        $region85: #{tpu_custom_call.1} parent=63 // pred_check
          %p944 = pneg %p943
        $region86: #{tpu_custom_call.1} parent=63 // pred_check_branch
          %946 = sbr.rel (%p944) target = $region88
        $region87: #{tpu_custom_call.1} parent=63 // pred_region
          %v947 = vld [vmem:[%s467] sm:$0xf]
          %v948 = vld [vmem:[%s467 + $0x4] sm:$0xf]
          %v949 = vld [vmem:[#allocation9] sm:$0xf]
          %v950 = vld [vmem:[#allocation9 + $0x4] sm:$0xf]
          %v951 = vld [vmem:[#allocation9 + $0x8] sm:$0xf]
          %v952 = vld [vmem:[#allocation9 + $0xc] sm:$0xf]
          %v953 = vld [vmem:[#allocation9 + $0x10] sm:$0xf]
          %v954 = vld [vmem:[#allocation9 + $0x14] sm:$0xf]
          %v955 = vld [vmem:[#allocation9 + $0x18] sm:$0xf]
          %v956 = vld [vmem:[#allocation9 + $0x1c] sm:$0xf]
          %v957 = vld [vmem:[#allocation9 + $0x20] sm:$0xf]
          %v958 = vld [vmem:[#allocation9 + $0x24] sm:$0xf]
          %v959 = vld [vmem:[#allocation9 + $0x28] sm:$0xf]
          %v960 = vld [vmem:[#allocation9 + $0x2c] sm:$0xf]
          %v961 = vld [vmem:[#allocation9 + $0x30] sm:$0xf]
          %v962 = vld [vmem:[#allocation9 + $0x34] sm:$0xf]
          %v963 = vld [vmem:[#allocation9 + $0x38] sm:$0xf]
          %v964 = vld [vmem:[#allocation9 + $0x3c] sm:$0xf]
          %v965 = vld [vmem:[%s4] sm:$0x1]
          %v967 = vperm.slane %v965, 0
          %v971 = vunpack.c.l.b16 %v947
          %v972 = vunpack.c.l.b16 %v948
          %v973 = vpack.c.b16 %v972, %v971
          %v991 = vunpack.c.l.b16 %v949
          %v992 = vunpack.c.l.b16 %v950
          %v993 = vunpack.c.l.b16 %v951
          %v994 = vunpack.c.l.b16 %v952
          %v995 = vunpack.c.l.b16 %v953
          %v996 = vunpack.c.l.b16 %v954
          %v997 = vunpack.c.l.b16 %v955
          %v998 = vunpack.c.l.b16 %v956
          %v999 = vunpack.c.l.b16 %v957
          %v1000 = vunpack.c.l.b16 %v958
          %v1001 = vunpack.c.l.b16 %v959
          %v1002 = vunpack.c.l.b16 %v960
          %v1003 = vunpack.c.l.b16 %v961
          %v1004 = vunpack.c.l.b16 %v962
          %v1005 = vunpack.c.l.b16 %v963
          %v1006 = vunpack.c.l.b16 %v964
          %v1007 = vpack.c.b16 %v992, %v991
          %v1008 = vpack.c.b16 %v994, %v993
          %v1009 = vpack.c.b16 %v996, %v995
          %v1010 = vpack.c.b16 %v998, %v997
          %v1011 = vpack.c.b16 %v1000, %v999
          %v1012 = vpack.c.b16 %v1002, %v1001
          %v1013 = vpack.c.b16 %v1004, %v1003
          %v1014 = vpack.c.b16 %v1006, %v1005
          %1023 = vmatpush.bf16.msra.mxu0 %v1014
          %1024 = vmatpush.bf16.msra.mxu0 %v1013
          %1025 = vmatpush.bf16.msra.mxu0 %v1012
          %1026 = vmatpush.bf16.msra.mxu0 %v1011
          %1027 = vmatpush.bf16.msra.mxu0 %v1010
          %1028 = vmatpush.bf16.msra.mxu0 %v1009
          %1029 = vmatpush.bf16.msra.mxu0 %v1008
          %1030 = vmatpush.bf16.msra.mxu0 %v1007
          %1031 = vmatmul.bf16.gmra.mxu0 %v973
          %v1032 = vpop.f32.mrf.mxu0
          %v1033 = vadd.f32 %v967, %v1032
          %v1034 = vpop.f32.mrf.mxu0
          %v1035 = vadd.f32 %v967, %v1034
          %1036 = vdwg.mxu0
          %v1037 = vmax.f32 %v1033, 0.0
          %v1038 = vmax.f32 %v1035, 0.0
          %v1039 = vpack.c.bf16 %v1037, %v1037
          %v1040 = vpack.c.bf16 %v1038, %v1038
          %1041 = vst [vmem:[#allocation2 + $0x4] sm:$0xf] %v1039
          %1042 = vst [vmem:[#allocation2 + $0x8] sm:$0xf] %v1040
        $region88: #{tpu_custom_call.1} parent=63 // pred_fallthru
          _
        %p1043 = scmp.eq.s32.totalorder %s37, 0
        // Predicated region
        $region89: #{tpu_custom_call.1} parent=63 // pred_check
          %p1044 = pneg %p1043
        $region90: #{tpu_custom_call.1} parent=63 // pred_check_branch
          %1046 = sbr.rel (%p1044) target = $region92
        $region91: #{tpu_custom_call.1} parent=63 // pred_region
          %1047 = vst [vmem:[#allocation2 + $0x4] sm:$0xf] 0
          %1048 = vst [vmem:[#allocation2 + $0x8] sm:$0xf] 0
        $region92: #{tpu_custom_call.1} parent=63 // pred_fallthru
          _
        %p1049 = scmp.lt.s32.totalorder %s37, 0
        // Predicated region
        $region93: #{tpu_custom_call.1} parent=63 // pred_check
          %p1050 = pneg %p1049
        $region94: #{tpu_custom_call.1} parent=63 // pred_check_branch
          %1052 = sbr.rel (%p1050) target = $region96
        $region95: #{tpu_custom_call.1} parent=63 // pred_region
          %v1053 = vld [vmem:[%s477] sm:$0xf]
          %v1054 = vld [vmem:[%s477 + $0x4] sm:$0xf]
          %v1055 = vld [vmem:[#allocation9] sm:$0xf]
          %v1056 = vld [vmem:[#allocation9 + $0x4] sm:$0xf]
          %v1057 = vld [vmem:[#allocation9 + $0x8] sm:$0xf]
          %v1058 = vld [vmem:[#allocation9 + $0xc] sm:$0xf]
          %v1059 = vld [vmem:[#allocation9 + $0x10] sm:$0xf]
          %v1060 = vld [vmem:[#allocation9 + $0x14] sm:$0xf]
          %v1061 = vld [vmem:[#allocation9 + $0x18] sm:$0xf]
          %v1062 = vld [vmem:[#allocation9 + $0x1c] sm:$0xf]
          %v1063 = vld [vmem:[#allocation9 + $0x20] sm:$0xf]
          %v1064 = vld [vmem:[#allocation9 + $0x24] sm:$0xf]
          %v1065 = vld [vmem:[#allocation9 + $0x28] sm:$0xf]
          %v1066 = vld [vmem:[#allocation9 + $0x2c] sm:$0xf]
          %v1067 = vld [vmem:[#allocation9 + $0x30] sm:$0xf]
          %v1068 = vld [vmem:[#allocation9 + $0x34] sm:$0xf]
          %v1069 = vld [vmem:[#allocation9 + $0x38] sm:$0xf]
          %v1070 = vld [vmem:[#allocation9 + $0x3c] sm:$0xf]
          %v1071 = vld [vmem:[%s4] sm:$0x1]
          %v1073 = vperm.slane %v1071, 0
          %v1077 = vunpack.c.l.b16 %v1053
          %v1078 = vunpack.c.l.b16 %v1054
          %v1079 = vpack.c.b16 %v1078, %v1077
          %v1097 = vunpack.c.l.b16 %v1055
          %v1098 = vunpack.c.l.b16 %v1056
          %v1099 = vunpack.c.l.b16 %v1057
          %v1100 = vunpack.c.l.b16 %v1058
          %v1101 = vunpack.c.l.b16 %v1059
          %v1102 = vunpack.c.l.b16 %v1060
          %v1103 = vunpack.c.l.b16 %v1061
          %v1104 = vunpack.c.l.b16 %v1062
          %v1105 = vunpack.c.l.b16 %v1063
          %v1106 = vunpack.c.l.b16 %v1064
          %v1107 = vunpack.c.l.b16 %v1065
          %v1108 = vunpack.c.l.b16 %v1066
          %v1109 = vunpack.c.l.b16 %v1067
          %v1110 = vunpack.c.l.b16 %v1068
          %v1111 = vunpack.c.l.b16 %v1069
          %v1112 = vunpack.c.l.b16 %v1070
          %v1113 = vpack.c.b16 %v1098, %v1097
          %v1114 = vpack.c.b16 %v1100, %v1099
          %v1115 = vpack.c.b16 %v1102, %v1101
          %v1116 = vpack.c.b16 %v1104, %v1103
          %v1117 = vpack.c.b16 %v1106, %v1105
          %v1118 = vpack.c.b16 %v1108, %v1107
          %v1119 = vpack.c.b16 %v1110, %v1109
          %v1120 = vpack.c.b16 %v1112, %v1111
          %1129 = vmatpush.bf16.msra.mxu0 %v1120
          %1130 = vmatpush.bf16.msra.mxu0 %v1119
          %1131 = vmatpush.bf16.msra.mxu0 %v1118
          %1132 = vmatpush.bf16.msra.mxu0 %v1117
          %1133 = vmatpush.bf16.msra.mxu0 %v1116
          %1134 = vmatpush.bf16.msra.mxu0 %v1115
          %1135 = vmatpush.bf16.msra.mxu0 %v1114
          %1136 = vmatpush.bf16.msra.mxu0 %v1113
          %1137 = vmatmul.bf16.gmra.mxu0 %v1079
          %v1138 = vpop.f32.mrf.mxu0
          %v1139 = vadd.f32 %v1073, %v1138
          %v1140 = vpop.f32.mrf.mxu0
          %v1141 = vadd.f32 %v1073, %v1140
          %1142 = vdwg.mxu0
          %v1143 = vmax.f32 %v1139, 0.0
          %v1144 = vmax.f32 %v1141, 0.0
          %v1145 = vpack.c.bf16 %v1143, %v1143
          %v1146 = vpack.c.bf16 %v1144, %v1144
          %1147 = vst [vmem:[#allocation2 + $0x8c] sm:$0xf] %v1145
          %1148 = vst [vmem:[#allocation2 + $0x90] sm:$0xf] %v1146
        $region96: #{tpu_custom_call.1} parent=63 // pred_fallthru
          _
        // Predicated region
        $region97: #{tpu_custom_call.1} parent=63 // pred_check
          %p1149 = pneg %p1043
        $region98: #{tpu_custom_call.1} parent=63 // pred_check_branch
          %1151 = sbr.rel (%p1149) target = $region100
        $region99: #{tpu_custom_call.1} parent=63 // pred_region
          %1152 = vst [vmem:[#allocation2 + $0x8c] sm:$0xf] 0
          %1153 = vst [vmem:[#allocation2 + $0x90] sm:$0xf] 0
        $region100: #{tpu_custom_call.1} parent=63 // pred_fallthru
          _
        %v1154 = vld [vmem:[%s9] sm:$0xf]
        %v1155 = vld [vmem:[%s9 + $0x4] sm:$0xf]
        %v1156 = vld [vmem:[%s9 + $0x8] sm:$0xf]
        %v1157 = vld [vmem:[%s9 + $0xc] sm:$0xf]
        %v1158 = vld [vmem:[%s9 + $0x10] sm:$0xf]
        %v1159 = vld [vmem:[%s9 + $0x14] sm:$0xf]
        %v1160 = vld [vmem:[%s9 + $0x18] sm:$0xf]
        %v1161 = vld [vmem:[%s9 + $0x1c] sm:$0xf]
        %v1162 = vld [vmem:[%s9 + $0x20] sm:$0xf]
        %v1163 = vld [vmem:[%s9 + $0x24] sm:$0xf]
        %v1164 = vld [vmem:[%s9 + $0x28] sm:$0xf]
        %v1165 = vld [vmem:[%s9 + $0x2c] sm:$0xf]
        %v1166 = vld [vmem:[%s9 + $0x30] sm:$0xf]
        %v1167 = vld [vmem:[%s9 + $0x34] sm:$0xf]
        %v1168 = vld [vmem:[%s9 + $0x38] sm:$0xf]
        %v1169 = vld [vmem:[%s9 + $0x3c] sm:$0xf]
        %v1170 = vld [vmem:[%s9 + $0x40] sm:$0xf]
        %v1171 = vld [vmem:[%s9 + $0x44] sm:$0xf]
        %v1172 = vld [vmem:[%s9 + $0x48] sm:$0xf]
        %v1173 = vld [vmem:[%s9 + $0x4c] sm:$0xf]
        %v1174 = vld [vmem:[%s9 + $0x50] sm:$0xf]
        %v1175 = vld [vmem:[%s9 + $0x54] sm:$0xf]
        %v1176 = vld [vmem:[%s9 + $0x58] sm:$0xf]
        %v1177 = vld [vmem:[%s9 + $0x5c] sm:$0xf]
        %v1178 = vld [vmem:[%s9 + $0x60] sm:$0xf]
        %v1179 = vld [vmem:[%s9 + $0x64] sm:$0xf]
        %v1180 = vld [vmem:[%s9 + $0x68] sm:$0xf]
        %v1181 = vld [vmem:[%s9 + $0x6c] sm:$0xf]
        %v1182 = vld [vmem:[%s9 + $0x70] sm:$0xf]
        %v1183 = vld [vmem:[%s9 + $0x74] sm:$0xf]
        %v1184 = vld [vmem:[%s9 + $0x78] sm:$0xf]
        %v1185 = vld [vmem:[%s9 + $0x7c] sm:$0xf]
        %v1186 = vld [vmem:[%s10] sm:$0xf]
        %v1187 = vld [vmem:[%s10 + $0x4] sm:$0xf]
        %v1188 = vld [vmem:[%s10 + $0x8] sm:$0xf]
        %v1189 = vld [vmem:[%s10 + $0xc] sm:$0xf]
        %v1190 = vld [vmem:[%s10 + $0x10] sm:$0xf]
        %v1191 = vld [vmem:[%s10 + $0x14] sm:$0xf]
        %v1192 = vld [vmem:[%s10 + $0x18] sm:$0xf]
        %v1193 = vld [vmem:[%s10 + $0x1c] sm:$0xf]
        %v1194 = vld [vmem:[%s10 + $0x20] sm:$0xf]
        %v1195 = vld [vmem:[%s10 + $0x24] sm:$0xf]
        %v1196 = vld [vmem:[%s10 + $0x28] sm:$0xf]
        %v1197 = vld [vmem:[%s10 + $0x2c] sm:$0xf]
        %v1198 = vld [vmem:[%s10 + $0x30] sm:$0xf]
        %v1199 = vld [vmem:[%s10 + $0x34] sm:$0xf]
        %v1200 = vld [vmem:[%s10 + $0x38] sm:$0xf]
        %v1201 = vld [vmem:[%s10 + $0x3c] sm:$0xf]
        %v1202 = vld [vmem:[%s10 + $0x40] sm:$0xf]
        %v1203 = vld [vmem:[%s10 + $0x44] sm:$0xf]
        %v1204 = vld [vmem:[%s10 + $0x48] sm:$0xf]
        %v1205 = vld [vmem:[%s10 + $0x4c] sm:$0xf]
        %v1206 = vld [vmem:[%s10 + $0x50] sm:$0xf]
        %v1207 = vld [vmem:[%s10 + $0x54] sm:$0xf]
        %v1208 = vld [vmem:[%s10 + $0x58] sm:$0xf]
        %v1209 = vld [vmem:[%s10 + $0x5c] sm:$0xf]
        %v1210 = vld [vmem:[%s10 + $0x60] sm:$0xf]
        %v1211 = vld [vmem:[%s10 + $0x64] sm:$0xf]
        %v1212 = vld [vmem:[%s10 + $0x68] sm:$0xf]
        %v1213 = vld [vmem:[%s10 + $0x6c] sm:$0xf]
        %v1214 = vld [vmem:[%s10 + $0x70] sm:$0xf]
        %v1215 = vld [vmem:[%s10 + $0x74] sm:$0xf]
        %v1216 = vld [vmem:[%s10 + $0x78] sm:$0xf]
        %v1217 = vld [vmem:[%s10 + $0x7c] sm:$0xf]
        %v1218 = vld [vmem:[#allocation2] sm:$0x8]
        %v1219 = vld [vmem:[#allocation2 + $0x4] sm:$0xf]
        %v1220 = vld [vmem:[#allocation2 + $0x8] sm:$0xf]
        %v1221 = vld [vmem:[#allocation2 + $0xc] sm:$0xf]
        %v1222 = vld [vmem:[#allocation2 + $0x10] sm:$0xf]
        %v1223 = vld [vmem:[#allocation2 + $0x14] sm:$0xf]
        %v1224 = vld [vmem:[#allocation2 + $0x18] sm:$0xf]
        %v1225 = vld [vmem:[#allocation2 + $0x1c] sm:$0xf]
        %v1226 = vld [vmem:[#allocation2 + $0x20] sm:$0xf]
        %v1227 = vld [vmem:[#allocation2 + $0x24] sm:$0xf]
        %v1228 = vld [vmem:[#allocation2 + $0x28] sm:$0xf]
        %v1229 = vld [vmem:[#allocation2 + $0x2c] sm:$0xf]
        %v1230 = vld [vmem:[#allocation2 + $0x30] sm:$0xf]
        %v1231 = vld [vmem:[#allocation2 + $0x34] sm:$0xf]
        %v1232 = vld [vmem:[#allocation2 + $0x38] sm:$0xf]
        %v1233 = vld [vmem:[#allocation2 + $0x3c] sm:$0xf]
        %v1234 = vld [vmem:[#allocation2 + $0x40] sm:$0xf]
        %v1235 = vld [vmem:[#allocation2 + $0x44] sm:$0xf]
        %v1236 = vld [vmem:[#allocation2 + $0x48] sm:$0xf]
        %v1237 = vld [vmem:[#allocation2 + $0x4c] sm:$0xf]
        %v1238 = vld [vmem:[#allocation2 + $0x50] sm:$0xf]
        %v1239 = vld [vmem:[#allocation2 + $0x54] sm:$0xf]
        %v1240 = vld [vmem:[#allocation2 + $0x58] sm:$0xf]
        %v1241 = vld [vmem:[#allocation2 + $0x5c] sm:$0xf]
        %v1242 = vld [vmem:[#allocation2 + $0x60] sm:$0xf]
        %v1243 = vld [vmem:[#allocation2 + $0x64] sm:$0xf]
        %v1244 = vld [vmem:[#allocation2 + $0x68] sm:$0xf]
        %v1245 = vld [vmem:[#allocation2 + $0x6c] sm:$0xf]
        %v1246 = vld [vmem:[#allocation2 + $0x70] sm:$0xf]
        %v1247 = vld [vmem:[#allocation2 + $0x74] sm:$0xf]
        %v1248 = vld [vmem:[#allocation2 + $0x78] sm:$0xf]
        %v1249 = vld [vmem:[#allocation2 + $0x7c] sm:$0xf]
        %v1250 = vld [vmem:[#allocation2 + $0x80] sm:$0xf]
        %1252 = vset.pattern.permute.xlu0 0
        %1253 = vperm.xlu0 %1252, %v1154
        %v1254 = vpop.permute.xlu0 %1253
        %v1257 = vunpack.c.l.s4 839922192
        %v1258 = vunpack.c.0.s8 %v1257
        %v1259 = vperm.slane %v1254, %v1258
        %1261 = vset.pattern.permute.xlu0 0
        %1262 = vperm.xlu0 %1261, %v1155
        %v1263 = vpop.permute.xlu0 %1262
        %v1266 = vunpack.c.l.s4 839922192
        %v1267 = vunpack.c.0.s8 %v1266
        %v1268 = vperm.slane %v1263, %v1267
        %1270 = vset.pattern.permute.xlu0 0
        %1271 = vperm.xlu0 %1270, %v1156
        %v1272 = vpop.permute.xlu0 %1271
        %v1275 = vunpack.c.l.s4 839922192
        %v1276 = vunpack.c.0.s8 %v1275
        %v1277 = vperm.slane %v1272, %v1276
        %1279 = vset.pattern.permute.xlu0 0
        %1280 = vperm.xlu0 %1279, %v1157
        %v1281 = vpop.permute.xlu0 %1280
        %v1284 = vunpack.c.l.s4 839922192
        %v1285 = vunpack.c.0.s8 %v1284
        %v1286 = vperm.slane %v1281, %v1285
        %1288 = vset.pattern.permute.xlu0 0
        %1289 = vperm.xlu0 %1288, %v1158
        %v1290 = vpop.permute.xlu0 %1289
        %v1293 = vunpack.c.l.s4 839922192
        %v1294 = vunpack.c.0.s8 %v1293
        %v1295 = vperm.slane %v1290, %v1294
        %1297 = vset.pattern.permute.xlu0 0
        %1298 = vperm.xlu0 %1297, %v1159
        %v1299 = vpop.permute.xlu0 %1298
        %v1302 = vunpack.c.l.s4 839922192
        %v1303 = vunpack.c.0.s8 %v1302
        %v1304 = vperm.slane %v1299, %v1303
        %1306 = vset.pattern.permute.xlu0 0
        %1307 = vperm.xlu0 %1306, %v1160
        %v1308 = vpop.permute.xlu0 %1307
        %v1311 = vunpack.c.l.s4 839922192
        %v1312 = vunpack.c.0.s8 %v1311
        %v1313 = vperm.slane %v1308, %v1312
        %1315 = vset.pattern.permute.xlu0 0
        %1316 = vperm.xlu0 %1315, %v1161
        %v1317 = vpop.permute.xlu0 %1316
        %v1320 = vunpack.c.l.s4 839922192
        %v1321 = vunpack.c.0.s8 %v1320
        %v1322 = vperm.slane %v1317, %v1321
        %1324 = vset.pattern.permute.xlu0 0
        %1325 = vperm.xlu0 %1324, %v1162
        %v1326 = vpop.permute.xlu0 %1325
        %v1329 = vunpack.c.l.s4 839922192
        %v1330 = vunpack.c.0.s8 %v1329
        %v1331 = vperm.slane %v1326, %v1330
        %1333 = vset.pattern.permute.xlu0 0
        %1334 = vperm.xlu0 %1333, %v1163
        %v1335 = vpop.permute.xlu0 %1334
        %v1338 = vunpack.c.l.s4 839922192
        %v1339 = vunpack.c.0.s8 %v1338
        %v1340 = vperm.slane %v1335, %v1339
        %1342 = vset.pattern.permute.xlu0 0
        %1343 = vperm.xlu0 %1342, %v1164
        %v1344 = vpop.permute.xlu0 %1343
        %v1347 = vunpack.c.l.s4 839922192
        %v1348 = vunpack.c.0.s8 %v1347
        %v1349 = vperm.slane %v1344, %v1348
        %1351 = vset.pattern.permute.xlu0 0
        %1352 = vperm.xlu0 %1351, %v1165
        %v1353 = vpop.permute.xlu0 %1352
        %v1356 = vunpack.c.l.s4 839922192
        %v1357 = vunpack.c.0.s8 %v1356
        %v1358 = vperm.slane %v1353, %v1357
        %1360 = vset.pattern.permute.xlu0 0
        %1361 = vperm.xlu0 %1360, %v1166
        %v1362 = vpop.permute.xlu0 %1361
        %v1365 = vunpack.c.l.s4 839922192
        %v1366 = vunpack.c.0.s8 %v1365
        %v1367 = vperm.slane %v1362, %v1366
        %1369 = vset.pattern.permute.xlu0 0
        %1370 = vperm.xlu0 %1369, %v1167
        %v1371 = vpop.permute.xlu0 %1370
        %v1374 = vunpack.c.l.s4 839922192
        %v1375 = vunpack.c.0.s8 %v1374
        %v1376 = vperm.slane %v1371, %v1375
        %1378 = vset.pattern.permute.xlu0 0
        %1379 = vperm.xlu0 %1378, %v1168
        %v1380 = vpop.permute.xlu0 %1379
        %v1383 = vunpack.c.l.s4 839922192
        %v1384 = vunpack.c.0.s8 %v1383
        %v1385 = vperm.slane %v1380, %v1384
        %1387 = vset.pattern.permute.xlu0 0
        %1388 = vperm.xlu0 %1387, %v1169
        %v1389 = vpop.permute.xlu0 %1388
        %v1392 = vunpack.c.l.s4 839922192
        %v1393 = vunpack.c.0.s8 %v1392
        %v1394 = vperm.slane %v1389, %v1393
        %1396 = vset.pattern.permute.xlu0 0
        %1397 = vperm.xlu0 %1396, %v1170
        %v1398 = vpop.permute.xlu0 %1397
        %v1401 = vunpack.c.l.s4 839922192
        %v1402 = vunpack.c.0.s8 %v1401
        %v1403 = vperm.slane %v1398, %v1402
        %1405 = vset.pattern.permute.xlu0 0
        %1406 = vperm.xlu0 %1405, %v1171
        %v1407 = vpop.permute.xlu0 %1406
        %v1410 = vunpack.c.l.s4 839922192
        %v1411 = vunpack.c.0.s8 %v1410
        %v1412 = vperm.slane %v1407, %v1411
        %1414 = vset.pattern.permute.xlu0 0
        %1415 = vperm.xlu0 %1414, %v1172
        %v1416 = vpop.permute.xlu0 %1415
        %v1419 = vunpack.c.l.s4 839922192
        %v1420 = vunpack.c.0.s8 %v1419
        %v1421 = vperm.slane %v1416, %v1420
        %1423 = vset.pattern.permute.xlu0 0
        %1424 = vperm.xlu0 %1423, %v1173
        %v1425 = vpop.permute.xlu0 %1424
        %v1428 = vunpack.c.l.s4 839922192
        %v1429 = vunpack.c.0.s8 %v1428
        %v1430 = vperm.slane %v1425, %v1429
        %1432 = vset.pattern.permute.xlu0 0
        %1433 = vperm.xlu0 %1432, %v1174
        %v1434 = vpop.permute.xlu0 %1433
        %v1437 = vunpack.c.l.s4 839922192
        %v1438 = vunpack.c.0.s8 %v1437
        %v1439 = vperm.slane %v1434, %v1438
        %1441 = vset.pattern.permute.xlu0 0
        %1442 = vperm.xlu0 %1441, %v1175
        %v1443 = vpop.permute.xlu0 %1442
        %v1446 = vunpack.c.l.s4 839922192
        %v1447 = vunpack.c.0.s8 %v1446
        %v1448 = vperm.slane %v1443, %v1447
        %1450 = vset.pattern.permute.xlu0 0
        %1451 = vperm.xlu0 %1450, %v1176
        %v1452 = vpop.permute.xlu0 %1451
        %v1455 = vunpack.c.l.s4 839922192
        %v1456 = vunpack.c.0.s8 %v1455
        %v1457 = vperm.slane %v1452, %v1456
        %1459 = vset.pattern.permute.xlu0 0
        %1460 = vperm.xlu0 %1459, %v1177
        %v1461 = vpop.permute.xlu0 %1460
        %v1464 = vunpack.c.l.s4 839922192
        %v1465 = vunpack.c.0.s8 %v1464
        %v1466 = vperm.slane %v1461, %v1465
        %1468 = vset.pattern.permute.xlu0 0
        %1469 = vperm.xlu0 %1468, %v1178
        %v1470 = vpop.permute.xlu0 %1469
        %v1473 = vunpack.c.l.s4 839922192
        %v1474 = vunpack.c.0.s8 %v1473
        %v1475 = vperm.slane %v1470, %v1474
        %1477 = vset.pattern.permute.xlu0 0
        %1478 = vperm.xlu0 %1477, %v1179
        %v1479 = vpop.permute.xlu0 %1478
        %v1482 = vunpack.c.l.s4 839922192
        %v1483 = vunpack.c.0.s8 %v1482
        %v1484 = vperm.slane %v1479, %v1483
        %1486 = vset.pattern.permute.xlu0 0
        %1487 = vperm.xlu0 %1486, %v1180
        %v1488 = vpop.permute.xlu0 %1487
        %v1491 = vunpack.c.l.s4 839922192
        %v1492 = vunpack.c.0.s8 %v1491
        %v1493 = vperm.slane %v1488, %v1492
        %1495 = vset.pattern.permute.xlu0 0
        %1496 = vperm.xlu0 %1495, %v1181
        %v1497 = vpop.permute.xlu0 %1496
        %v1500 = vunpack.c.l.s4 839922192
        %v1501 = vunpack.c.0.s8 %v1500
        %v1502 = vperm.slane %v1497, %v1501
        %1504 = vset.pattern.permute.xlu0 0
        %1505 = vperm.xlu0 %1504, %v1182
        %v1506 = vpop.permute.xlu0 %1505
        %v1509 = vunpack.c.l.s4 839922192
        %v1510 = vunpack.c.0.s8 %v1509
        %v1511 = vperm.slane %v1506, %v1510
        %1513 = vset.pattern.permute.xlu0 0
        %1514 = vperm.xlu0 %1513, %v1183
        %v1515 = vpop.permute.xlu0 %1514
        %v1518 = vunpack.c.l.s4 839922192
        %v1519 = vunpack.c.0.s8 %v1518
        %v1520 = vperm.slane %v1515, %v1519
        %1522 = vset.pattern.permute.xlu0 0
        %1523 = vperm.xlu0 %1522, %v1184
        %v1524 = vpop.permute.xlu0 %1523
        %v1527 = vunpack.c.l.s4 839922192
        %v1528 = vunpack.c.0.s8 %v1527
        %v1529 = vperm.slane %v1524, %v1528
        %1531 = vset.pattern.permute.xlu0 0
        %1532 = vperm.xlu0 %1531, %v1185
        %v1533 = vpop.permute.xlu0 %1532
        %v1536 = vunpack.c.l.s4 839922192
        %v1537 = vunpack.c.0.s8 %v1536
        %v1538 = vperm.slane %v1533, %v1537
        %v1539 = vunpack.c.l.bf16 %v1218
        %v1540 = vunpack.c.l.bf16 %v1219
        %v1541 = vunpack.c.l.bf16 %v1220
        %v1542 = vunpack.c.l.bf16 %v1221
        %v1543 = vunpack.c.l.bf16 %v1222
        %v1544 = vunpack.c.l.bf16 %v1223
        %v1545 = vunpack.c.l.bf16 %v1224
        %v1546 = vunpack.c.l.bf16 %v1225
        %v1547 = vunpack.c.l.bf16 %v1226
        %v1548 = vunpack.c.l.bf16 %v1227
        %v1549 = vunpack.c.l.bf16 %v1228
        %v1550 = vunpack.c.l.bf16 %v1229
        %v1551 = vunpack.c.l.bf16 %v1230
        %v1552 = vunpack.c.l.bf16 %v1231
        %v1553 = vunpack.c.l.bf16 %v1232
        %v1554 = vunpack.c.l.bf16 %v1233
        %v1555 = vunpack.c.l.bf16 %v1234
        %v1556 = vunpack.c.l.bf16 %v1235
        %v1557 = vunpack.c.l.bf16 %v1236
        %v1558 = vunpack.c.l.bf16 %v1237
        %v1559 = vunpack.c.l.bf16 %v1238
        %v1560 = vunpack.c.l.bf16 %v1239
        %v1561 = vunpack.c.l.bf16 %v1240
        %v1562 = vunpack.c.l.bf16 %v1241
        %v1563 = vunpack.c.l.bf16 %v1242
        %v1564 = vunpack.c.l.bf16 %v1243
        %v1565 = vunpack.c.l.bf16 %v1244
        %v1566 = vunpack.c.l.bf16 %v1245
        %v1567 = vunpack.c.l.bf16 %v1246
        %v1568 = vunpack.c.l.bf16 %v1247
        %v1569 = vunpack.c.l.bf16 %v1248
        %v1570 = vunpack.c.l.bf16 %v1249
        %v1571 = vunpack.c.l.bf16 %v1250
        %v1572 = vunpack.c.l.bf16 %v1259
        %v1573 = vunpack.c.l.bf16 %v1268
        %v1574 = vunpack.c.l.bf16 %v1277
        %v1575 = vunpack.c.l.bf16 %v1286
        %v1576 = vunpack.c.l.bf16 %v1295
        %v1577 = vunpack.c.l.bf16 %v1304
        %v1578 = vunpack.c.l.bf16 %v1313
        %v1579 = vunpack.c.l.bf16 %v1322
        %v1580 = vunpack.c.l.bf16 %v1331
        %v1581 = vunpack.c.l.bf16 %v1340
        %v1582 = vunpack.c.l.bf16 %v1349
        %v1583 = vunpack.c.l.bf16 %v1358
        %v1584 = vunpack.c.l.bf16 %v1367
        %v1585 = vunpack.c.l.bf16 %v1376
        %v1586 = vunpack.c.l.bf16 %v1385
        %v1587 = vunpack.c.l.bf16 %v1394
        %v1588 = vunpack.c.l.bf16 %v1403
        %v1589 = vunpack.c.l.bf16 %v1412
        %v1590 = vunpack.c.l.bf16 %v1421
        %v1591 = vunpack.c.l.bf16 %v1430
        %v1592 = vunpack.c.l.bf16 %v1439
        %v1593 = vunpack.c.l.bf16 %v1448
        %v1594 = vunpack.c.l.bf16 %v1457
        %v1595 = vunpack.c.l.bf16 %v1466
        %v1596 = vunpack.c.l.bf16 %v1475
        %v1597 = vunpack.c.l.bf16 %v1484
        %v1598 = vunpack.c.l.bf16 %v1493
        %v1599 = vunpack.c.l.bf16 %v1502
        %v1600 = vunpack.c.l.bf16 %v1511
        %v1601 = vunpack.c.l.bf16 %v1520
        %v1602 = vunpack.c.l.bf16 %v1529
        %v1603 = vunpack.c.l.bf16 %v1538
        %vm1636 = vcmask 1046528
        %v1637 = vrot.slane %v1572, 1
        %v1638 = vrot.slane %v1573, 1
        %v1639 = vsel %vm1636, %v1637, %v1638
        %v1640 = vrot.slane %v1574, 1
        %v1641 = vsel %vm1636, %v1638, %v1640
        %v1642 = vrot.slane %v1575, 1
        %v1643 = vsel %vm1636, %v1640, %v1642
        %v1644 = vrot.slane %v1576, 1
        %v1645 = vsel %vm1636, %v1642, %v1644
        %v1646 = vrot.slane %v1577, 1
        %v1647 = vsel %vm1636, %v1644, %v1646
        %v1648 = vrot.slane %v1578, 1
        %v1649 = vsel %vm1636, %v1646, %v1648
        %v1650 = vrot.slane %v1579, 1
        %v1651 = vsel %vm1636, %v1648, %v1650
        %v1652 = vrot.slane %v1580, 1
        %v1653 = vsel %vm1636, %v1650, %v1652
        %v1654 = vrot.slane %v1581, 1
        %v1655 = vsel %vm1636, %v1652, %v1654
        %v1656 = vrot.slane %v1582, 1
        %v1657 = vsel %vm1636, %v1654, %v1656
        %v1658 = vrot.slane %v1583, 1
        %v1659 = vsel %vm1636, %v1656, %v1658
        %v1660 = vrot.slane %v1584, 1
        %v1661 = vsel %vm1636, %v1658, %v1660
        %v1662 = vrot.slane %v1585, 1
        %v1663 = vsel %vm1636, %v1660, %v1662
        %v1664 = vrot.slane %v1586, 1
        %v1665 = vsel %vm1636, %v1662, %v1664
        %v1666 = vrot.slane %v1587, 1
        %v1667 = vsel %vm1636, %v1664, %v1666
        %v1668 = vrot.slane %v1588, 1
        %v1669 = vsel %vm1636, %v1666, %v1668
        %v1670 = vrot.slane %v1589, 1
        %v1671 = vsel %vm1636, %v1668, %v1670
        %v1672 = vrot.slane %v1590, 1
        %v1673 = vsel %vm1636, %v1670, %v1672
        %v1674 = vrot.slane %v1591, 1
        %v1675 = vsel %vm1636, %v1672, %v1674
        %v1676 = vrot.slane %v1592, 1
        %v1677 = vsel %vm1636, %v1674, %v1676
        %v1678 = vrot.slane %v1593, 1
        %v1679 = vsel %vm1636, %v1676, %v1678
        %v1680 = vrot.slane %v1594, 1
        %v1681 = vsel %vm1636, %v1678, %v1680
        %v1682 = vrot.slane %v1595, 1
        %v1683 = vsel %vm1636, %v1680, %v1682
        %v1684 = vrot.slane %v1596, 1
        %v1685 = vsel %vm1636, %v1682, %v1684
        %v1686 = vrot.slane %v1597, 1
        %v1687 = vsel %vm1636, %v1684, %v1686
        %v1688 = vrot.slane %v1598, 1
        %v1689 = vsel %vm1636, %v1686, %v1688
        %v1690 = vrot.slane %v1599, 1
        %v1691 = vsel %vm1636, %v1688, %v1690
        %v1692 = vrot.slane %v1600, 1
        %v1693 = vsel %vm1636, %v1690, %v1692
        %v1694 = vrot.slane %v1601, 1
        %v1695 = vsel %vm1636, %v1692, %v1694
        %v1696 = vrot.slane %v1602, 1
        %v1697 = vsel %vm1636, %v1694, %v1696
        %v1698 = vrot.slane %v1603, 1
        %v1699 = vsel %vm1636, %v1696, %v1698
        %v1733 = vmul.f32 %v1539, %v1637
        %v1734 = vmul.f32 %v1540, %v1639
        %v1735 = vmul.f32 %v1541, %v1641
        %v1736 = vmul.f32 %v1542, %v1643
        %v1737 = vmul.f32 %v1543, %v1645
        %v1738 = vmul.f32 %v1544, %v1647
        %v1739 = vmul.f32 %v1545, %v1649
        %v1740 = vmul.f32 %v1546, %v1651
        %v1741 = vmul.f32 %v1547, %v1653
        %v1742 = vmul.f32 %v1548, %v1655
        %v1743 = vmul.f32 %v1549, %v1657
        %v1744 = vmul.f32 %v1550, %v1659
        %v1745 = vmul.f32 %v1551, %v1661
        %v1746 = vmul.f32 %v1552, %v1663
        %v1747 = vmul.f32 %v1553, %v1665
        %v1748 = vmul.f32 %v1554, %v1667
        %v1749 = vmul.f32 %v1555, %v1669
        %v1750 = vmul.f32 %v1556, %v1671
        %v1751 = vmul.f32 %v1557, %v1673
        %v1752 = vmul.f32 %v1558, %v1675
        %v1753 = vmul.f32 %v1559, %v1677
        %v1754 = vmul.f32 %v1560, %v1679
        %v1755 = vmul.f32 %v1561, %v1681
        %v1756 = vmul.f32 %v1562, %v1683
        %v1757 = vmul.f32 %v1563, %v1685
        %v1758 = vmul.f32 %v1564, %v1687
        %v1759 = vmul.f32 %v1565, %v1689
        %v1760 = vmul.f32 %v1566, %v1691
        %v1761 = vmul.f32 %v1567, %v1693
        %v1762 = vmul.f32 %v1568, %v1695
        %v1763 = vmul.f32 %v1569, %v1697
        %v1764 = vmul.f32 %v1570, %v1699
        %v1765 = vmul.f32 %v1571, %v1698
        %v1766 = vpack.c.bf16 %v1733, %v1733
        %v1767 = vpack.c.bf16 %v1734, %v1734
        %v1768 = vpack.c.bf16 %v1735, %v1735
        %v1769 = vpack.c.bf16 %v1736, %v1736
        %v1770 = vpack.c.bf16 %v1737, %v1737
        %v1771 = vpack.c.bf16 %v1738, %v1738
        %v1772 = vpack.c.bf16 %v1739, %v1739
        %v1773 = vpack.c.bf16 %v1740, %v1740
        %v1774 = vpack.c.bf16 %v1741, %v1741
        %v1775 = vpack.c.bf16 %v1742, %v1742
        %v1776 = vpack.c.bf16 %v1743, %v1743
        %v1777 = vpack.c.bf16 %v1744, %v1744
        %v1778 = vpack.c.bf16 %v1745, %v1745
        %v1779 = vpack.c.bf16 %v1746, %v1746
        %v1780 = vpack.c.bf16 %v1747, %v1747
        %v1781 = vpack.c.bf16 %v1748, %v1748
        %v1782 = vpack.c.bf16 %v1749, %v1749
        %v1783 = vpack.c.bf16 %v1750, %v1750
        %v1784 = vpack.c.bf16 %v1751, %v1751
        %v1785 = vpack.c.bf16 %v1752, %v1752
        %v1786 = vpack.c.bf16 %v1753, %v1753
        %v1787 = vpack.c.bf16 %v1754, %v1754
        %v1788 = vpack.c.bf16 %v1755, %v1755
        %v1789 = vpack.c.bf16 %v1756, %v1756
        %v1790 = vpack.c.bf16 %v1757, %v1757
        %v1791 = vpack.c.bf16 %v1758, %v1758
        %v1792 = vpack.c.bf16 %v1759, %v1759
        %v1793 = vpack.c.bf16 %v1760, %v1760
        %v1794 = vpack.c.bf16 %v1761, %v1761
        %v1795 = vpack.c.bf16 %v1762, %v1762
        %v1796 = vpack.c.bf16 %v1763, %v1763
        %v1797 = vpack.c.bf16 %v1764, %v1764
        %v1798 = vpack.c.bf16 %v1765, %v1765
        %vm1799 = vsmask.f32 256
        %vm1800 = vsmask.f32 4368
        %vm1801 = vmor %vm1799, %vm1800
        %v1803 = vshrl.u32 %v1766, 16
        %v1805 = vrot.slane %v1803, 7
        %v1806 = vrot.slane %v1805, 4
        %v1808 = vshrl.u32 %v1767, 16
        %v1810 = vrot.slane %v1808, 7
        %v1811 = vshll.u32 %v1767, 16
        %v1813 = vor.u32 %v1810, %v1811
        %v1814 = vsel %vm1801, %v1806, %v1813
        %v1815 = vrot.slane %v1810, 4
        %v1817 = vshrl.u32 %v1768, 16
        %v1819 = vrot.slane %v1817, 7
        %v1820 = vshll.u32 %v1768, 16
        %v1822 = vor.u32 %v1819, %v1820
        %v1823 = vsel %vm1801, %v1815, %v1822
        %v1824 = vrot.slane %v1819, 4
        %v1826 = vshrl.u32 %v1769, 16
        %v1828 = vrot.slane %v1826, 7
        %v1829 = vshll.u32 %v1769, 16
        %v1831 = vor.u32 %v1828, %v1829
        %v1832 = vsel %vm1801, %v1824, %v1831
        %v1833 = vrot.slane %v1828, 4
        %v1835 = vshrl.u32 %v1770, 16
        %v1837 = vrot.slane %v1835, 7
        %v1838 = vshll.u32 %v1770, 16
        %v1840 = vor.u32 %v1837, %v1838
        %v1841 = vsel %vm1801, %v1833, %v1840
        %v1842 = vrot.slane %v1837, 4
        %v1844 = vshrl.u32 %v1771, 16
        %v1846 = vrot.slane %v1844, 7
        %v1847 = vshll.u32 %v1771, 16
        %v1849 = vor.u32 %v1846, %v1847
        %v1850 = vsel %vm1801, %v1842, %v1849
        %v1851 = vrot.slane %v1846, 4
        %v1853 = vshrl.u32 %v1772, 16
        %v1855 = vrot.slane %v1853, 7
        %v1856 = vshll.u32 %v1772, 16
        %v1858 = vor.u32 %v1855, %v1856
        %v1859 = vsel %vm1801, %v1851, %v1858
        %v1860 = vrot.slane %v1855, 4
        %v1862 = vshrl.u32 %v1773, 16
        %v1864 = vrot.slane %v1862, 7
        %v1865 = vshll.u32 %v1773, 16
        %v1867 = vor.u32 %v1864, %v1865
        %v1868 = vsel %vm1801, %v1860, %v1867
        %v1869 = vrot.slane %v1864, 4
        %v1871 = vshrl.u32 %v1774, 16
        %v1873 = vrot.slane %v1871, 7
        %v1874 = vshll.u32 %v1774, 16
        %v1876 = vor.u32 %v1873, %v1874
        %v1877 = vsel %vm1801, %v1869, %v1876
        %v1878 = vrot.slane %v1873, 4
        %v1880 = vshrl.u32 %v1775, 16
        %v1882 = vrot.slane %v1880, 7
        %v1883 = vshll.u32 %v1775, 16
        %v1885 = vor.u32 %v1882, %v1883
        %v1886 = vsel %vm1801, %v1878, %v1885
        %v1887 = vrot.slane %v1882, 4
        %v1889 = vshrl.u32 %v1776, 16
        %v1891 = vrot.slane %v1889, 7
        %v1892 = vshll.u32 %v1776, 16
        %v1894 = vor.u32 %v1891, %v1892
        %v1895 = vsel %vm1801, %v1887, %v1894
        %v1896 = vrot.slane %v1891, 4
        %v1898 = vshrl.u32 %v1777, 16
        %v1900 = vrot.slane %v1898, 7
        %v1901 = vshll.u32 %v1777, 16
        %v1903 = vor.u32 %v1900, %v1901
        %v1904 = vsel %vm1801, %v1896, %v1903
        %v1905 = vrot.slane %v1900, 4
        %v1907 = vshrl.u32 %v1778, 16
        %v1909 = vrot.slane %v1907, 7
        %v1910 = vshll.u32 %v1778, 16
        %v1912 = vor.u32 %v1909, %v1910
        %v1913 = vsel %vm1801, %v1905, %v1912
        %v1914 = vrot.slane %v1909, 4
        %v1916 = vshrl.u32 %v1779, 16
        %v1918 = vrot.slane %v1916, 7
        %v1919 = vshll.u32 %v1779, 16
        %v1921 = vor.u32 %v1918, %v1919
        %v1922 = vsel %vm1801, %v1914, %v1921
        %v1923 = vrot.slane %v1918, 4
        %v1925 = vshrl.u32 %v1780, 16
        %v1927 = vrot.slane %v1925, 7
        %v1928 = vshll.u32 %v1780, 16
        %v1930 = vor.u32 %v1927, %v1928
        %v1931 = vsel %vm1801, %v1923, %v1930
        %v1932 = vrot.slane %v1927, 4
        %v1934 = vshrl.u32 %v1781, 16
        %v1936 = vrot.slane %v1934, 7
        %v1937 = vshll.u32 %v1781, 16
        %v1939 = vor.u32 %v1936, %v1937
        %v1940 = vsel %vm1801, %v1932, %v1939
        %v1941 = vrot.slane %v1936, 4
        %v1943 = vshrl.u32 %v1782, 16
        %v1945 = vrot.slane %v1943, 7
        %v1946 = vshll.u32 %v1782, 16
        %v1948 = vor.u32 %v1945, %v1946
        %v1949 = vsel %vm1801, %v1941, %v1948
        %v1950 = vrot.slane %v1945, 4
        %v1952 = vshrl.u32 %v1783, 16
        %v1954 = vrot.slane %v1952, 7
        %v1955 = vshll.u32 %v1783, 16
        %v1957 = vor.u32 %v1954, %v1955
        %v1958 = vsel %vm1801, %v1950, %v1957
        %v1959 = vrot.slane %v1954, 4
        %v1961 = vshrl.u32 %v1784, 16
        %v1963 = vrot.slane %v1961, 7
        %v1964 = vshll.u32 %v1784, 16
        %v1966 = vor.u32 %v1963, %v1964
        %v1967 = vsel %vm1801, %v1959, %v1966
        %v1968 = vrot.slane %v1963, 4
        %v1970 = vshrl.u32 %v1785, 16
        %v1972 = vrot.slane %v1970, 7
        %v1973 = vshll.u32 %v1785, 16
        %v1975 = vor.u32 %v1972, %v1973
        %v1976 = vsel %vm1801, %v1968, %v1975
        %v1977 = vrot.slane %v1972, 4
        %v1979 = vshrl.u32 %v1786, 16
        %v1981 = vrot.slane %v1979, 7
        %v1982 = vshll.u32 %v1786, 16
        %v1984 = vor.u32 %v1981, %v1982
        %v1985 = vsel %vm1801, %v1977, %v1984
        %v1986 = vrot.slane %v1981, 4
        %v1988 = vshrl.u32 %v1787, 16
        %v1990 = vrot.slane %v1988, 7
        %v1991 = vshll.u32 %v1787, 16
        %v1993 = vor.u32 %v1990, %v1991
        %v1994 = vsel %vm1801, %v1986, %v1993
        %v1995 = vrot.slane %v1990, 4
        %v1997 = vshrl.u32 %v1788, 16
        %v1999 = vrot.slane %v1997, 7
        %v2000 = vshll.u32 %v1788, 16
        %v2002 = vor.u32 %v1999, %v2000
        %v2003 = vsel %vm1801, %v1995, %v2002
        %v2004 = vrot.slane %v1999, 4
        %v2006 = vshrl.u32 %v1789, 16
        %v2008 = vrot.slane %v2006, 7
        %v2009 = vshll.u32 %v1789, 16
        %v2011 = vor.u32 %v2008, %v2009
        %v2012 = vsel %vm1801, %v2004, %v2011
        %v2013 = vrot.slane %v2008, 4
        %v2015 = vshrl.u32 %v1790, 16
        %v2017 = vrot.slane %v2015, 7
        %v2018 = vshll.u32 %v1790, 16
        %v2020 = vor.u32 %v2017, %v2018
        %v2021 = vsel %vm1801, %v2013, %v2020
        %v2022 = vrot.slane %v2017, 4
        %v2024 = vshrl.u32 %v1791, 16
        %v2026 = vrot.slane %v2024, 7
        %v2027 = vshll.u32 %v1791, 16
        %v2029 = vor.u32 %v2026, %v2027
        %v2030 = vsel %vm1801, %v2022, %v2029
        %v2031 = vrot.slane %v2026, 4
        %v2033 = vshrl.u32 %v1792, 16
        %v2035 = vrot.slane %v2033, 7
        %v2036 = vshll.u32 %v1792, 16
        %v2038 = vor.u32 %v2035, %v2036
        %v2039 = vsel %vm1801, %v2031, %v2038
        %v2040 = vrot.slane %v2035, 4
        %v2042 = vshrl.u32 %v1793, 16
        %v2044 = vrot.slane %v2042, 7
        %v2045 = vshll.u32 %v1793, 16
        %v2047 = vor.u32 %v2044, %v2045
        %v2048 = vsel %vm1801, %v2040, %v2047
        %v2049 = vrot.slane %v2044, 4
        %v2051 = vshrl.u32 %v1794, 16
        %v2053 = vrot.slane %v2051, 7
        %v2054 = vshll.u32 %v1794, 16
        %v2056 = vor.u32 %v2053, %v2054
        %v2057 = vsel %vm1801, %v2049, %v2056
        %v2058 = vrot.slane %v2053, 4
        %v2060 = vshrl.u32 %v1795, 16
        %v2062 = vrot.slane %v2060, 7
        %v2063 = vshll.u32 %v1795, 16
        %v2065 = vor.u32 %v2062, %v2063
        %v2066 = vsel %vm1801, %v2058, %v2065
        %v2067 = vrot.slane %v2062, 4
        %v2069 = vshrl.u32 %v1796, 16
        %v2071 = vrot.slane %v2069, 7
        %v2072 = vshll.u32 %v1796, 16
        %v2074 = vor.u32 %v2071, %v2072
        %v2075 = vsel %vm1801, %v2067, %v2074
        %v2076 = vrot.slane %v2071, 4
        %v2078 = vshrl.u32 %v1797, 16
        %v2080 = vrot.slane %v2078, 7
        %v2081 = vshll.u32 %v1797, 16
        %v2083 = vor.u32 %v2080, %v2081
        %v2084 = vsel %vm1801, %v2076, %v2083
        %v2085 = vrot.slane %v2080, 4
        %v2087 = vshrl.u32 %v1798, 16
        %v2089 = vrot.slane %v2087, 7
        %v2090 = vshll.u32 %v1798, 16
        %v2092 = vor.u32 %v2089, %v2090
        %v2093 = vsel %vm1801, %v2085, %v2092
        %2126 = vst [vmem:[#allocation3] sm:$0xf] %v1814
        %2127 = vst [vmem:[#allocation3 + $0x24] sm:$0xf] %v1823
        %2128 = vst [vmem:[#allocation3 + $0x48] sm:$0xf] %v1832
        %2129 = vst [vmem:[#allocation3 + $0x6c] sm:$0xf] %v1841
        %2130 = vst [vmem:[#allocation3 + $0x90] sm:$0xf] %v1850
        %2131 = vst [vmem:[#allocation3 + $0xb4] sm:$0xf] %v1859
        %2132 = vst [vmem:[#allocation3 + $0xd8] sm:$0xf] %v1868
        %2133 = vst [vmem:[#allocation3 + $0xfc] sm:$0xf] %v1877
        %2134 = vst [vmem:[#allocation3 + $0x120] sm:$0xf] %v1886
        %2135 = vst [vmem:[#allocation3 + $0x144] sm:$0xf] %v1895
        %2136 = vst [vmem:[#allocation3 + $0x168] sm:$0xf] %v1904
        %2137 = vst [vmem:[#allocation3 + $0x18c] sm:$0xf] %v1913
        %2138 = vst [vmem:[#allocation3 + $0x1b0] sm:$0xf] %v1922
        %2139 = vst [vmem:[#allocation3 + $0x1d4] sm:$0xf] %v1931
        %2140 = vst [vmem:[#allocation3 + $0x1f8] sm:$0xf] %v1940
        %2141 = vst [vmem:[#allocation3 + $0x21c] sm:$0xf] %v1949
        %2142 = vst [vmem:[#allocation3 + $0x240] sm:$0xf] %v1958
        %2143 = vst [vmem:[#allocation3 + $0x264] sm:$0xf] %v1967
        %2144 = vst [vmem:[#allocation3 + $0x288] sm:$0xf] %v1976
        %2145 = vst [vmem:[#allocation3 + $0x2ac] sm:$0xf] %v1985
        %2146 = vst [vmem:[#allocation3 + $0x2d0] sm:$0xf] %v1994
        %2147 = vst [vmem:[#allocation3 + $0x2f4] sm:$0xf] %v2003
        %2148 = vst [vmem:[#allocation3 + $0x318] sm:$0xf] %v2012
        %2149 = vst [vmem:[#allocation3 + $0x33c] sm:$0xf] %v2021
        %2150 = vst [vmem:[#allocation3 + $0x360] sm:$0xf] %v2030
        %2151 = vst [vmem:[#allocation3 + $0x384] sm:$0xf] %v2039
        %2152 = vst [vmem:[#allocation3 + $0x3a8] sm:$0xf] %v2048
        %2153 = vst [vmem:[#allocation3 + $0x3cc] sm:$0xf] %v2057
        %2154 = vst [vmem:[#allocation3 + $0x3f0] sm:$0xf] %v2066
        %2155 = vst [vmem:[#allocation3 + $0x414] sm:$0xf] %v2075
        %2156 = vst [vmem:[#allocation3 + $0x438] sm:$0xf] %v2084
        %2157 = vst [vmem:[#allocation3 + $0x45c] sm:$0xf] %v2093
        %v2158 = vld [vmem:[#allocation2 + $0x4] sm:$0xf]
        %v2159 = vld [vmem:[#allocation2 + $0x8] sm:$0xf]
        %v2160 = vld [vmem:[#allocation2 + $0xc] sm:$0xf]
        %v2161 = vld [vmem:[#allocation2 + $0x10] sm:$0xf]
        %v2162 = vld [vmem:[#allocation2 + $0x14] sm:$0xf]
        %v2163 = vld [vmem:[#allocation2 + $0x18] sm:$0xf]
        %v2164 = vld [vmem:[#allocation2 + $0x1c] sm:$0xf]
        %v2165 = vld [vmem:[#allocation2 + $0x20] sm:$0xf]
        %v2166 = vld [vmem:[#allocation2 + $0x24] sm:$0xf]
        %v2167 = vld [vmem:[#allocation2 + $0x28] sm:$0xf]
        %v2168 = vld [vmem:[#allocation2 + $0x2c] sm:$0xf]
        %v2169 = vld [vmem:[#allocation2 + $0x30] sm:$0xf]
        %v2170 = vld [vmem:[#allocation2 + $0x34] sm:$0xf]
        %v2171 = vld [vmem:[#allocation2 + $0x38] sm:$0xf]
        %v2172 = vld [vmem:[#allocation2 + $0x3c] sm:$0xf]
        %v2173 = vld [vmem:[#allocation2 + $0x40] sm:$0xf]
        %v2174 = vld [vmem:[#allocation2 + $0x44] sm:$0xf]
        %v2175 = vld [vmem:[#allocation2 + $0x48] sm:$0xf]
        %v2176 = vld [vmem:[#allocation2 + $0x4c] sm:$0xf]
        %v2177 = vld [vmem:[#allocation2 + $0x50] sm:$0xf]
        %v2178 = vld [vmem:[#allocation2 + $0x54] sm:$0xf]
        %v2179 = vld [vmem:[#allocation2 + $0x58] sm:$0xf]
        %v2180 = vld [vmem:[#allocation2 + $0x5c] sm:$0xf]
        %v2181 = vld [vmem:[#allocation2 + $0x60] sm:$0xf]
        %v2182 = vld [vmem:[#allocation2 + $0x64] sm:$0xf]
        %v2183 = vld [vmem:[#allocation2 + $0x68] sm:$0xf]
        %v2184 = vld [vmem:[#allocation2 + $0x6c] sm:$0xf]
        %v2185 = vld [vmem:[#allocation2 + $0x70] sm:$0xf]
        %v2186 = vld [vmem:[#allocation2 + $0x74] sm:$0xf]
        %v2187 = vld [vmem:[#allocation2 + $0x78] sm:$0xf]
        %v2188 = vld [vmem:[#allocation2 + $0x7c] sm:$0xf]
        %v2189 = vld [vmem:[#allocation2 + $0x80] sm:$0xf]
        %2190 = vst [vmem:[#allocation3 + $0x4] sm:$0xf] %v2158
        %2191 = vst [vmem:[#allocation3 + $0x28] sm:$0xf] %v2159
        %2192 = vst [vmem:[#allocation3 + $0x4c] sm:$0xf] %v2160
        %2193 = vst [vmem:[#allocation3 + $0x70] sm:$0xf] %v2161
        %2194 = vst [vmem:[#allocation3 + $0x94] sm:$0xf] %v2162
        %2195 = vst [vmem:[#allocation3 + $0xb8] sm:$0xf] %v2163
        %2196 = vst [vmem:[#allocation3 + $0xdc] sm:$0xf] %v2164
        %2197 = vst [vmem:[#allocation3 + $0x100] sm:$0xf] %v2165
        %2198 = vst [vmem:[#allocation3 + $0x124] sm:$0xf] %v2166
        %2199 = vst [vmem:[#allocation3 + $0x148] sm:$0xf] %v2167
        %2200 = vst [vmem:[#allocation3 + $0x16c] sm:$0xf] %v2168
        %2201 = vst [vmem:[#allocation3 + $0x190] sm:$0xf] %v2169
        %2202 = vst [vmem:[#allocation3 + $0x1b4] sm:$0xf] %v2170
        %2203 = vst [vmem:[#allocation3 + $0x1d8] sm:$0xf] %v2171
        %2204 = vst [vmem:[#allocation3 + $0x1fc] sm:$0xf] %v2172
        %2205 = vst [vmem:[#allocation3 + $0x220] sm:$0xf] %v2173
        %2206 = vst [vmem:[#allocation3 + $0x244] sm:$0xf] %v2174
        %2207 = vst [vmem:[#allocation3 + $0x268] sm:$0xf] %v2175
        %2208 = vst [vmem:[#allocation3 + $0x28c] sm:$0xf] %v2176
        %2209 = vst [vmem:[#allocation3 + $0x2b0] sm:$0xf] %v2177
        %2210 = vst [vmem:[#allocation3 + $0x2d4] sm:$0xf] %v2178
        %2211 = vst [vmem:[#allocation3 + $0x2f8] sm:$0xf] %v2179
        %2212 = vst [vmem:[#allocation3 + $0x31c] sm:$0xf] %v2180
        %2213 = vst [vmem:[#allocation3 + $0x340] sm:$0xf] %v2181
        %2214 = vst [vmem:[#allocation3 + $0x364] sm:$0xf] %v2182
        %2215 = vst [vmem:[#allocation3 + $0x388] sm:$0xf] %v2183
        %2216 = vst [vmem:[#allocation3 + $0x3ac] sm:$0xf] %v2184
        %2217 = vst [vmem:[#allocation3 + $0x3d0] sm:$0xf] %v2185
        %2218 = vst [vmem:[#allocation3 + $0x3f4] sm:$0xf] %v2186
        %2219 = vst [vmem:[#allocation3 + $0x418] sm:$0xf] %v2187
        %2220 = vst [vmem:[#allocation3 + $0x43c] sm:$0xf] %v2188
        %2221 = vst [vmem:[#allocation3 + $0x460] sm:$0xf] %v2189
        %v2222 = vld [vmem:[#allocation2 + $0x4] sm:$0xf]
        %v2223 = vld [vmem:[#allocation2 + $0x8] sm:$0xf]
        %v2224 = vld [vmem:[#allocation2 + $0xc] sm:$0xf]
        %v2225 = vld [vmem:[#allocation2 + $0x10] sm:$0xf]
        %v2226 = vld [vmem:[#allocation2 + $0x14] sm:$0xf]
        %v2227 = vld [vmem:[#allocation2 + $0x18] sm:$0xf]
        %v2228 = vld [vmem:[#allocation2 + $0x1c] sm:$0xf]
        %v2229 = vld [vmem:[#allocation2 + $0x20] sm:$0xf]
        %v2230 = vld [vmem:[#allocation2 + $0x24] sm:$0xf]
        %v2231 = vld [vmem:[#allocation2 + $0x28] sm:$0xf]
        %v2232 = vld [vmem:[#allocation2 + $0x2c] sm:$0xf]
        %v2233 = vld [vmem:[#allocation2 + $0x30] sm:$0xf]
        %v2234 = vld [vmem:[#allocation2 + $0x34] sm:$0xf]
        %v2235 = vld [vmem:[#allocation2 + $0x38] sm:$0xf]
        %v2236 = vld [vmem:[#allocation2 + $0x3c] sm:$0xf]
        %v2237 = vld [vmem:[#allocation2 + $0x40] sm:$0xf]
        %v2238 = vld [vmem:[#allocation2 + $0x44] sm:$0xf]
        %v2239 = vld [vmem:[#allocation2 + $0x48] sm:$0xf]
        %v2240 = vld [vmem:[#allocation2 + $0x4c] sm:$0xf]
        %v2241 = vld [vmem:[#allocation2 + $0x50] sm:$0xf]
        %v2242 = vld [vmem:[#allocation2 + $0x54] sm:$0xf]
        %v2243 = vld [vmem:[#allocation2 + $0x58] sm:$0xf]
        %v2244 = vld [vmem:[#allocation2 + $0x5c] sm:$0xf]
        %v2245 = vld [vmem:[#allocation2 + $0x60] sm:$0xf]
        %v2246 = vld [vmem:[#allocation2 + $0x64] sm:$0xf]
        %v2247 = vld [vmem:[#allocation2 + $0x68] sm:$0xf]
        %v2248 = vld [vmem:[#allocation2 + $0x6c] sm:$0xf]
        %v2249 = vld [vmem:[#allocation2 + $0x70] sm:$0xf]
        %v2250 = vld [vmem:[#allocation2 + $0x74] sm:$0xf]
        %v2251 = vld [vmem:[#allocation2 + $0x78] sm:$0xf]
        %v2252 = vld [vmem:[#allocation2 + $0x7c] sm:$0xf]
        %v2253 = vld [vmem:[#allocation2 + $0x80] sm:$0xf]
        %v2254 = vld [vmem:[#allocation2 + $0x84] sm:$0x1]
        %2256 = vset.pattern.permute.xlu0 0
        %2257 = vperm.xlu0 %2256, %v1186
        %v2258 = vpop.permute.xlu0 %2257
        %v2261 = vunpack.c.l.s4 839922192
        %v2262 = vunpack.c.0.s8 %v2261
        %v2263 = vperm.slane %v2258, %v2262
        %2265 = vset.pattern.permute.xlu0 0
        %2266 = vperm.xlu0 %2265, %v1187
        %v2267 = vpop.permute.xlu0 %2266
        %v2270 = vunpack.c.l.s4 839922192
        %v2271 = vunpack.c.0.s8 %v2270
        %v2272 = vperm.slane %v2267, %v2271
        %2274 = vset.pattern.permute.xlu0 0
        %2275 = vperm.xlu0 %2274, %v1188
        %v2276 = vpop.permute.xlu0 %2275
        %v2279 = vunpack.c.l.s4 839922192
        %v2280 = vunpack.c.0.s8 %v2279
        %v2281 = vperm.slane %v2276, %v2280
        %2283 = vset.pattern.permute.xlu0 0
        %2284 = vperm.xlu0 %2283, %v1189
        %v2285 = vpop.permute.xlu0 %2284
        %v2288 = vunpack.c.l.s4 839922192
        %v2289 = vunpack.c.0.s8 %v2288
        %v2290 = vperm.slane %v2285, %v2289
        %2292 = vset.pattern.permute.xlu0 0
        %2293 = vperm.xlu0 %2292, %v1190
        %v2294 = vpop.permute.xlu0 %2293
        %v2297 = vunpack.c.l.s4 839922192
        %v2298 = vunpack.c.0.s8 %v2297
        %v2299 = vperm.slane %v2294, %v2298
        %2301 = vset.pattern.permute.xlu0 0
        %2302 = vperm.xlu0 %2301, %v1191
        %v2303 = vpop.permute.xlu0 %2302
        %v2306 = vunpack.c.l.s4 839922192
        %v2307 = vunpack.c.0.s8 %v2306
        %v2308 = vperm.slane %v2303, %v2307
        %2310 = vset.pattern.permute.xlu0 0
        %2311 = vperm.xlu0 %2310, %v1192
        %v2312 = vpop.permute.xlu0 %2311
        %v2315 = vunpack.c.l.s4 839922192
        %v2316 = vunpack.c.0.s8 %v2315
        %v2317 = vperm.slane %v2312, %v2316
        %2319 = vset.pattern.permute.xlu0 0
        %2320 = vperm.xlu0 %2319, %v1193
        %v2321 = vpop.permute.xlu0 %2320
        %v2324 = vunpack.c.l.s4 839922192
        %v2325 = vunpack.c.0.s8 %v2324
        %v2326 = vperm.slane %v2321, %v2325
        %2328 = vset.pattern.permute.xlu0 0
        %2329 = vperm.xlu0 %2328, %v1194
        %v2330 = vpop.permute.xlu0 %2329
        %v2333 = vunpack.c.l.s4 839922192
        %v2334 = vunpack.c.0.s8 %v2333
        %v2335 = vperm.slane %v2330, %v2334
        %2337 = vset.pattern.permute.xlu0 0
        %2338 = vperm.xlu0 %2337, %v1195
        %v2339 = vpop.permute.xlu0 %2338
        %v2342 = vunpack.c.l.s4 839922192
        %v2343 = vunpack.c.0.s8 %v2342
        %v2344 = vperm.slane %v2339, %v2343
        %2346 = vset.pattern.permute.xlu0 0
        %2347 = vperm.xlu0 %2346, %v1196
        %v2348 = vpop.permute.xlu0 %2347
        %v2351 = vunpack.c.l.s4 839922192
        %v2352 = vunpack.c.0.s8 %v2351
        %v2353 = vperm.slane %v2348, %v2352
        %2355 = vset.pattern.permute.xlu0 0
        %2356 = vperm.xlu0 %2355, %v1197
        %v2357 = vpop.permute.xlu0 %2356
        %v2360 = vunpack.c.l.s4 839922192
        %v2361 = vunpack.c.0.s8 %v2360
        %v2362 = vperm.slane %v2357, %v2361
        %2364 = vset.pattern.permute.xlu0 0
        %2365 = vperm.xlu0 %2364, %v1198
        %v2366 = vpop.permute.xlu0 %2365
        %v2369 = vunpack.c.l.s4 839922192
        %v2370 = vunpack.c.0.s8 %v2369
        %v2371 = vperm.slane %v2366, %v2370
        %2373 = vset.pattern.permute.xlu0 0
        %2374 = vperm.xlu0 %2373, %v1199
        %v2375 = vpop.permute.xlu0 %2374
        %v2378 = vunpack.c.l.s4 839922192
        %v2379 = vunpack.c.0.s8 %v2378
        %v2380 = vperm.slane %v2375, %v2379
        %2382 = vset.pattern.permute.xlu0 0
        %2383 = vperm.xlu0 %2382, %v1200
        %v2384 = vpop.permute.xlu0 %2383
        %v2387 = vunpack.c.l.s4 839922192
        %v2388 = vunpack.c.0.s8 %v2387
        %v2389 = vperm.slane %v2384, %v2388
        %2391 = vset.pattern.permute.xlu0 0
        %2392 = vperm.xlu0 %2391, %v1201
        %v2393 = vpop.permute.xlu0 %2392
        %v2396 = vunpack.c.l.s4 839922192
        %v2397 = vunpack.c.0.s8 %v2396
        %v2398 = vperm.slane %v2393, %v2397
        %2400 = vset.pattern.permute.xlu0 0
        %2401 = vperm.xlu0 %2400, %v1202
        %v2402 = vpop.permute.xlu0 %2401
        %v2405 = vunpack.c.l.s4 839922192
        %v2406 = vunpack.c.0.s8 %v2405
        %v2407 = vperm.slane %v2402, %v2406
        %2409 = vset.pattern.permute.xlu0 0
        %2410 = vperm.xlu0 %2409, %v1203
        %v2411 = vpop.permute.xlu0 %2410
        %v2414 = vunpack.c.l.s4 839922192
        %v2415 = vunpack.c.0.s8 %v2414
        %v2416 = vperm.slane %v2411, %v2415
        %2418 = vset.pattern.permute.xlu0 0
        %2419 = vperm.xlu0 %2418, %v1204
        %v2420 = vpop.permute.xlu0 %2419
        %v2423 = vunpack.c.l.s4 839922192
        %v2424 = vunpack.c.0.s8 %v2423
        %v2425 = vperm.slane %v2420, %v2424
        %2427 = vset.pattern.permute.xlu0 0
        %2428 = vperm.xlu0 %2427, %v1205
        %v2429 = vpop.permute.xlu0 %2428
        %v2432 = vunpack.c.l.s4 839922192
        %v2433 = vunpack.c.0.s8 %v2432
        %v2434 = vperm.slane %v2429, %v2433
        %2436 = vset.pattern.permute.xlu0 0
        %2437 = vperm.xlu0 %2436, %v1206
        %v2438 = vpop.permute.xlu0 %2437
        %v2441 = vunpack.c.l.s4 839922192
        %v2442 = vunpack.c.0.s8 %v2441
        %v2443 = vperm.slane %v2438, %v2442
        %2445 = vset.pattern.permute.xlu0 0
        %2446 = vperm.xlu0 %2445, %v1207
        %v2447 = vpop.permute.xlu0 %2446
        %v2450 = vunpack.c.l.s4 839922192
        %v2451 = vunpack.c.0.s8 %v2450
        %v2452 = vperm.slane %v2447, %v2451
        %2454 = vset.pattern.permute.xlu0 0
        %2455 = vperm.xlu0 %2454, %v1208
        %v2456 = vpop.permute.xlu0 %2455
        %v2459 = vunpack.c.l.s4 839922192
        %v2460 = vunpack.c.0.s8 %v2459
        %v2461 = vperm.slane %v2456, %v2460
        %2463 = vset.pattern.permute.xlu0 0
        %2464 = vperm.xlu0 %2463, %v1209
        %v2465 = vpop.permute.xlu0 %2464
        %v2468 = vunpack.c.l.s4 839922192
        %v2469 = vunpack.c.0.s8 %v2468
        %v2470 = vperm.slane %v2465, %v2469
        %2472 = vset.pattern.permute.xlu0 0
        %2473 = vperm.xlu0 %2472, %v1210
        %v2474 = vpop.permute.xlu0 %2473
        %v2477 = vunpack.c.l.s4 839922192
        %v2478 = vunpack.c.0.s8 %v2477
        %v2479 = vperm.slane %v2474, %v2478
        %2481 = vset.pattern.permute.xlu0 0
        %2482 = vperm.xlu0 %2481, %v1211
        %v2483 = vpop.permute.xlu0 %2482
        %v2486 = vunpack.c.l.s4 839922192
        %v2487 = vunpack.c.0.s8 %v2486
        %v2488 = vperm.slane %v2483, %v2487
        %2490 = vset.pattern.permute.xlu0 0
        %2491 = vperm.xlu0 %2490, %v1212
        %v2492 = vpop.permute.xlu0 %2491
        %v2495 = vunpack.c.l.s4 839922192
        %v2496 = vunpack.c.0.s8 %v2495
        %v2497 = vperm.slane %v2492, %v2496
        %2499 = vset.pattern.permute.xlu0 0
        %2500 = vperm.xlu0 %2499, %v1213
        %v2501 = vpop.permute.xlu0 %2500
        %v2504 = vunpack.c.l.s4 839922192
        %v2505 = vunpack.c.0.s8 %v2504
        %v2506 = vperm.slane %v2501, %v2505
        %2508 = vset.pattern.permute.xlu0 0
        %2509 = vperm.xlu0 %2508, %v1214
        %v2510 = vpop.permute.xlu0 %2509
        %v2513 = vunpack.c.l.s4 839922192
        %v2514 = vunpack.c.0.s8 %v2513
        %v2515 = vperm.slane %v2510, %v2514
        %2517 = vset.pattern.permute.xlu0 0
        %2518 = vperm.xlu0 %2517, %v1215
        %v2519 = vpop.permute.xlu0 %2518
        %v2522 = vunpack.c.l.s4 839922192
        %v2523 = vunpack.c.0.s8 %v2522
        %v2524 = vperm.slane %v2519, %v2523
        %2526 = vset.pattern.permute.xlu0 0
        %2527 = vperm.xlu0 %2526, %v1216
        %v2528 = vpop.permute.xlu0 %2527
        %v2531 = vunpack.c.l.s4 839922192
        %v2532 = vunpack.c.0.s8 %v2531
        %v2533 = vperm.slane %v2528, %v2532
        %2535 = vset.pattern.permute.xlu0 0
        %2536 = vperm.xlu0 %2535, %v1217
        %v2537 = vpop.permute.xlu0 %2536
        %v2540 = vunpack.c.l.s4 839922192
        %v2541 = vunpack.c.0.s8 %v2540
        %v2542 = vperm.slane %v2537, %v2541
        %v2543 = vunpack.c.l.bf16 %v2222
        %v2544 = vunpack.c.l.bf16 %v2223
        %v2545 = vunpack.c.l.bf16 %v2224
        %v2546 = vunpack.c.l.bf16 %v2225
        %v2547 = vunpack.c.l.bf16 %v2226
        %v2548 = vunpack.c.l.bf16 %v2227
        %v2549 = vunpack.c.l.bf16 %v2228
        %v2550 = vunpack.c.l.bf16 %v2229
        %v2551 = vunpack.c.l.bf16 %v2230
        %v2552 = vunpack.c.l.bf16 %v2231
        %v2553 = vunpack.c.l.bf16 %v2232
        %v2554 = vunpack.c.l.bf16 %v2233
        %v2555 = vunpack.c.l.bf16 %v2234
        %v2556 = vunpack.c.l.bf16 %v2235
        %v2557 = vunpack.c.l.bf16 %v2236
        %v2558 = vunpack.c.l.bf16 %v2237
        %v2559 = vunpack.c.l.bf16 %v2238
        %v2560 = vunpack.c.l.bf16 %v2239
        %v2561 = vunpack.c.l.bf16 %v2240
        %v2562 = vunpack.c.l.bf16 %v2241
        %v2563 = vunpack.c.l.bf16 %v2242
        %v2564 = vunpack.c.l.bf16 %v2243
        %v2565 = vunpack.c.l.bf16 %v2244
        %v2566 = vunpack.c.l.bf16 %v2245
        %v2567 = vunpack.c.l.bf16 %v2246
        %v2568 = vunpack.c.l.bf16 %v2247
        %v2569 = vunpack.c.l.bf16 %v2248
        %v2570 = vunpack.c.l.bf16 %v2249
        %v2571 = vunpack.c.l.bf16 %v2250
        %v2572 = vunpack.c.l.bf16 %v2251
        %v2573 = vunpack.c.l.bf16 %v2252
        %v2574 = vunpack.c.l.bf16 %v2253
        %v2575 = vunpack.c.l.bf16 %v2254
        %v2576 = vunpack.c.l.bf16 %v2263
        %v2577 = vunpack.c.l.bf16 %v2272
        %v2578 = vunpack.c.l.bf16 %v2281
        %v2579 = vunpack.c.l.bf16 %v2290
        %v2580 = vunpack.c.l.bf16 %v2299
        %v2581 = vunpack.c.l.bf16 %v2308
        %v2582 = vunpack.c.l.bf16 %v2317
        %v2583 = vunpack.c.l.bf16 %v2326
        %v2584 = vunpack.c.l.bf16 %v2335
        %v2585 = vunpack.c.l.bf16 %v2344
        %v2586 = vunpack.c.l.bf16 %v2353
        %v2587 = vunpack.c.l.bf16 %v2362
        %v2588 = vunpack.c.l.bf16 %v2371
        %v2589 = vunpack.c.l.bf16 %v2380
        %v2590 = vunpack.c.l.bf16 %v2389
        %v2591 = vunpack.c.l.bf16 %v2398
        %v2592 = vunpack.c.l.bf16 %v2407
        %v2593 = vunpack.c.l.bf16 %v2416
        %v2594 = vunpack.c.l.bf16 %v2425
        %v2595 = vunpack.c.l.bf16 %v2434
        %v2596 = vunpack.c.l.bf16 %v2443
        %v2597 = vunpack.c.l.bf16 %v2452
        %v2598 = vunpack.c.l.bf16 %v2461
        %v2599 = vunpack.c.l.bf16 %v2470
        %v2600 = vunpack.c.l.bf16 %v2479
        %v2601 = vunpack.c.l.bf16 %v2488
        %v2602 = vunpack.c.l.bf16 %v2497
        %v2603 = vunpack.c.l.bf16 %v2506
        %v2604 = vunpack.c.l.bf16 %v2515
        %v2605 = vunpack.c.l.bf16 %v2524
        %v2606 = vunpack.c.l.bf16 %v2533
        %v2607 = vunpack.c.l.bf16 %v2542
        %vm2640 = vcmask 1040384
        %v2641 = vrot.slane %v2576, 7
        %v2642 = vrot.slane %v2577, 7
        %v2643 = vsel %vm2640, %v2641, %v2642
        %v2644 = vrot.slane %v2578, 7
        %v2645 = vsel %vm2640, %v2642, %v2644
        %v2646 = vrot.slane %v2579, 7
        %v2647 = vsel %vm2640, %v2644, %v2646
        %v2648 = vrot.slane %v2580, 7
        %v2649 = vsel %vm2640, %v2646, %v2648
        %v2650 = vrot.slane %v2581, 7
        %v2651 = vsel %vm2640, %v2648, %v2650
        %v2652 = vrot.slane %v2582, 7
        %v2653 = vsel %vm2640, %v2650, %v2652
        %v2654 = vrot.slane %v2583, 7
        %v2655 = vsel %vm2640, %v2652, %v2654
        %v2656 = vrot.slane %v2584, 7
        %v2657 = vsel %vm2640, %v2654, %v2656
        %v2658 = vrot.slane %v2585, 7
        %v2659 = vsel %vm2640, %v2656, %v2658
        %v2660 = vrot.slane %v2586, 7
        %v2661 = vsel %vm2640, %v2658, %v2660
        %v2662 = vrot.slane %v2587, 7
        %v2663 = vsel %vm2640, %v2660, %v2662
        %v2664 = vrot.slane %v2588, 7
        %v2665 = vsel %vm2640, %v2662, %v2664
        %v2666 = vrot.slane %v2589, 7
        %v2667 = vsel %vm2640, %v2664, %v2666
        %v2668 = vrot.slane %v2590, 7
        %v2669 = vsel %vm2640, %v2666, %v2668
        %v2670 = vrot.slane %v2591, 7
        %v2671 = vsel %vm2640, %v2668, %v2670
        %v2672 = vrot.slane %v2592, 7
        %v2673 = vsel %vm2640, %v2670, %v2672
        %v2674 = vrot.slane %v2593, 7
        %v2675 = vsel %vm2640, %v2672, %v2674
        %v2676 = vrot.slane %v2594, 7
        %v2677 = vsel %vm2640, %v2674, %v2676
        %v2678 = vrot.slane %v2595, 7
        %v2679 = vsel %vm2640, %v2676, %v2678
        %v2680 = vrot.slane %v2596, 7
        %v2681 = vsel %vm2640, %v2678, %v2680
        %v2682 = vrot.slane %v2597, 7
        %v2683 = vsel %vm2640, %v2680, %v2682
        %v2684 = vrot.slane %v2598, 7
        %v2685 = vsel %vm2640, %v2682, %v2684
        %v2686 = vrot.slane %v2599, 7
        %v2687 = vsel %vm2640, %v2684, %v2686
        %v2688 = vrot.slane %v2600, 7
        %v2689 = vsel %vm2640, %v2686, %v2688
        %v2690 = vrot.slane %v2601, 7
        %v2691 = vsel %vm2640, %v2688, %v2690
        %v2692 = vrot.slane %v2602, 7
        %v2693 = vsel %vm2640, %v2690, %v2692
        %v2694 = vrot.slane %v2603, 7
        %v2695 = vsel %vm2640, %v2692, %v2694
        %v2696 = vrot.slane %v2604, 7
        %v2697 = vsel %vm2640, %v2694, %v2696
        %v2698 = vrot.slane %v2605, 7
        %v2699 = vsel %vm2640, %v2696, %v2698
        %v2700 = vrot.slane %v2606, 7
        %v2701 = vsel %vm2640, %v2698, %v2700
        %v2702 = vrot.slane %v2607, 7
        %v2703 = vsel %vm2640, %v2700, %v2702
        %v2737 = vmul.f32 %v2543, %v2641
        %v2738 = vmul.f32 %v2544, %v2643
        %v2739 = vmul.f32 %v2545, %v2645
        %v2740 = vmul.f32 %v2546, %v2647
        %v2741 = vmul.f32 %v2547, %v2649
        %v2742 = vmul.f32 %v2548, %v2651
        %v2743 = vmul.f32 %v2549, %v2653
        %v2744 = vmul.f32 %v2550, %v2655
        %v2745 = vmul.f32 %v2551, %v2657
        %v2746 = vmul.f32 %v2552, %v2659
        %v2747 = vmul.f32 %v2553, %v2661
        %v2748 = vmul.f32 %v2554, %v2663
        %v2749 = vmul.f32 %v2555, %v2665
        %v2750 = vmul.f32 %v2556, %v2667
        %v2751 = vmul.f32 %v2557, %v2669
        %v2752 = vmul.f32 %v2558, %v2671
        %v2753 = vmul.f32 %v2559, %v2673
        %v2754 = vmul.f32 %v2560, %v2675
        %v2755 = vmul.f32 %v2561, %v2677
        %v2756 = vmul.f32 %v2562, %v2679
        %v2757 = vmul.f32 %v2563, %v2681
        %v2758 = vmul.f32 %v2564, %v2683
        %v2759 = vmul.f32 %v2565, %v2685
        %v2760 = vmul.f32 %v2566, %v2687
        %v2761 = vmul.f32 %v2567, %v2689
        %v2762 = vmul.f32 %v2568, %v2691
        %v2763 = vmul.f32 %v2569, %v2693
        %v2764 = vmul.f32 %v2570, %v2695
        %v2765 = vmul.f32 %v2571, %v2697
        %v2766 = vmul.f32 %v2572, %v2699
        %v2767 = vmul.f32 %v2573, %v2701
        %v2768 = vmul.f32 %v2574, %v2703
        %v2769 = vmul.f32 %v2575, %v2702
        %v2770 = vpack.c.bf16 %v2737, %v2737
        %v2771 = vpack.c.bf16 %v2738, %v2738
        %v2772 = vpack.c.bf16 %v2739, %v2739
        %v2773 = vpack.c.bf16 %v2740, %v2740
        %v2774 = vpack.c.bf16 %v2741, %v2741
        %v2775 = vpack.c.bf16 %v2742, %v2742
        %v2776 = vpack.c.bf16 %v2743, %v2743
        %v2777 = vpack.c.bf16 %v2744, %v2744
        %v2778 = vpack.c.bf16 %v2745, %v2745
        %v2779 = vpack.c.bf16 %v2746, %v2746
        %v2780 = vpack.c.bf16 %v2747, %v2747
        %v2781 = vpack.c.bf16 %v2748, %v2748
        %v2782 = vpack.c.bf16 %v2749, %v2749
        %v2783 = vpack.c.bf16 %v2750, %v2750
        %v2784 = vpack.c.bf16 %v2751, %v2751
        %v2785 = vpack.c.bf16 %v2752, %v2752
        %v2786 = vpack.c.bf16 %v2753, %v2753
        %v2787 = vpack.c.bf16 %v2754, %v2754
        %v2788 = vpack.c.bf16 %v2755, %v2755
        %v2789 = vpack.c.bf16 %v2756, %v2756
        %v2790 = vpack.c.bf16 %v2757, %v2757
        %v2791 = vpack.c.bf16 %v2758, %v2758
        %v2792 = vpack.c.bf16 %v2759, %v2759
        %v2793 = vpack.c.bf16 %v2760, %v2760
        %v2794 = vpack.c.bf16 %v2761, %v2761
        %v2795 = vpack.c.bf16 %v2762, %v2762
        %v2796 = vpack.c.bf16 %v2763, %v2763
        %v2797 = vpack.c.bf16 %v2764, %v2764
        %v2798 = vpack.c.bf16 %v2765, %v2765
        %v2799 = vpack.c.bf16 %v2766, %v2766
        %v2800 = vpack.c.bf16 %v2767, %v2767
        %v2801 = vpack.c.bf16 %v2768, %v2768
        %v2802 = vpack.c.bf16 %v2769, %v2769
        %vm2803 = vsmask.f32 3328
        %vm2804 = vsmask.f32 7440
        %vm2805 = vmor %vm2803, %vm2804
        %v2807 = vshrl.u32 %v2770, 16
        %v2809 = vrot.slane %v2807, 4
        %v2810 = vshll.u32 %v2770, 16
        %v2812 = vrot.slane %v2810, 5
        %v2813 = vor.u32 %v2809, %v2812
        %v2814 = vrot.slane %v2813, 4
        %v2816 = vshll.u32 %v2771, 16
        %v2818 = vrot.slane %v2816, 5
        %v2819 = vsel %vm2805, %v2814, %v2818
        %v2820 = vshrl.u32 %v2771, 16
        %v2822 = vrot.slane %v2820, 4
        %v2823 = vor.u32 %v2822, %v2818
        %v2824 = vrot.slane %v2823, 4
        %v2826 = vshll.u32 %v2772, 16
        %v2828 = vrot.slane %v2826, 5
        %v2829 = vsel %vm2805, %v2824, %v2828
        %v2830 = vshrl.u32 %v2772, 16
        %v2832 = vrot.slane %v2830, 4
        %v2833 = vor.u32 %v2832, %v2828
        %v2834 = vrot.slane %v2833, 4
        %v2836 = vshll.u32 %v2773, 16
        %v2838 = vrot.slane %v2836, 5
        %v2839 = vsel %vm2805, %v2834, %v2838
        %v2840 = vshrl.u32 %v2773, 16
        %v2842 = vrot.slane %v2840, 4
        %v2843 = vor.u32 %v2842, %v2838
        %v2844 = vrot.slane %v2843, 4
        %v2846 = vshll.u32 %v2774, 16
        %v2848 = vrot.slane %v2846, 5
        %v2849 = vsel %vm2805, %v2844, %v2848
        %v2850 = vshrl.u32 %v2774, 16
        %v2852 = vrot.slane %v2850, 4
        %v2853 = vor.u32 %v2852, %v2848
        %v2854 = vrot.slane %v2853, 4
        %v2856 = vshll.u32 %v2775, 16
        %v2858 = vrot.slane %v2856, 5
        %v2859 = vsel %vm2805, %v2854, %v2858
        %v2860 = vshrl.u32 %v2775, 16
        %v2862 = vrot.slane %v2860, 4
        %v2863 = vor.u32 %v2862, %v2858
        %v2864 = vrot.slane %v2863, 4
        %v2866 = vshll.u32 %v2776, 16
        %v2868 = vrot.slane %v2866, 5
        %v2869 = vsel %vm2805, %v2864, %v2868
        %v2870 = vshrl.u32 %v2776, 16
        %v2872 = vrot.slane %v2870, 4
        %v2873 = vor.u32 %v2872, %v2868
        %v2874 = vrot.slane %v2873, 4
        %v2876 = vshll.u32 %v2777, 16
        %v2878 = vrot.slane %v2876, 5
        %v2879 = vsel %vm2805, %v2874, %v2878
        %v2880 = vshrl.u32 %v2777, 16
        %v2882 = vrot.slane %v2880, 4
        %v2883 = vor.u32 %v2882, %v2878
        %v2884 = vrot.slane %v2883, 4
        %v2886 = vshll.u32 %v2778, 16
        %v2888 = vrot.slane %v2886, 5
        %v2889 = vsel %vm2805, %v2884, %v2888
        %v2890 = vshrl.u32 %v2778, 16
        %v2892 = vrot.slane %v2890, 4
        %v2893 = vor.u32 %v2892, %v2888
        %v2894 = vrot.slane %v2893, 4
        %v2896 = vshll.u32 %v2779, 16
        %v2898 = vrot.slane %v2896, 5
        %v2899 = vsel %vm2805, %v2894, %v2898
        %v2900 = vshrl.u32 %v2779, 16
        %v2902 = vrot.slane %v2900, 4
        %v2903 = vor.u32 %v2902, %v2898
        %v2904 = vrot.slane %v2903, 4
        %v2906 = vshll.u32 %v2780, 16
        %v2908 = vrot.slane %v2906, 5
        %v2909 = vsel %vm2805, %v2904, %v2908
        %v2910 = vshrl.u32 %v2780, 16
        %v2912 = vrot.slane %v2910, 4
        %v2913 = vor.u32 %v2912, %v2908
        %v2914 = vrot.slane %v2913, 4
        %v2916 = vshll.u32 %v2781, 16
        %v2918 = vrot.slane %v2916, 5
        %v2919 = vsel %vm2805, %v2914, %v2918
        %v2920 = vshrl.u32 %v2781, 16
        %v2922 = vrot.slane %v2920, 4
        %v2923 = vor.u32 %v2922, %v2918
        %v2924 = vrot.slane %v2923, 4
        %v2926 = vshll.u32 %v2782, 16
        %v2928 = vrot.slane %v2926, 5
        %v2929 = vsel %vm2805, %v2924, %v2928
        %v2930 = vshrl.u32 %v2782, 16
        %v2932 = vrot.slane %v2930, 4
        %v2933 = vor.u32 %v2932, %v2928
        %v2934 = vrot.slane %v2933, 4
        %v2936 = vshll.u32 %v2783, 16
        %v2938 = vrot.slane %v2936, 5
        %v2939 = vsel %vm2805, %v2934, %v2938
        %v2940 = vshrl.u32 %v2783, 16
        %v2942 = vrot.slane %v2940, 4
        %v2943 = vor.u32 %v2942, %v2938
        %v2944 = vrot.slane %v2943, 4
        %v2946 = vshll.u32 %v2784, 16
        %v2948 = vrot.slane %v2946, 5
        %v2949 = vsel %vm2805, %v2944, %v2948
        %v2950 = vshrl.u32 %v2784, 16
        %v2952 = vrot.slane %v2950, 4
        %v2953 = vor.u32 %v2952, %v2948
        %v2954 = vrot.slane %v2953, 4
        %v2956 = vshll.u32 %v2785, 16
        %v2958 = vrot.slane %v2956, 5
        %v2959 = vsel %vm2805, %v2954, %v2958
        %v2960 = vshrl.u32 %v2785, 16
        %v2962 = vrot.slane %v2960, 4
        %v2963 = vor.u32 %v2962, %v2958
        %v2964 = vrot.slane %v2963, 4
        %v2966 = vshll.u32 %v2786, 16
        %v2968 = vrot.slane %v2966, 5
        %v2969 = vsel %vm2805, %v2964, %v2968
        %v2970 = vshrl.u32 %v2786, 16
        %v2972 = vrot.slane %v2970, 4
        %v2973 = vor.u32 %v2972, %v2968
        %v2974 = vrot.slane %v2973, 4
        %v2976 = vshll.u32 %v2787, 16
        %v2978 = vrot.slane %v2976, 5
        %v2979 = vsel %vm2805, %v2974, %v2978
        %v2980 = vshrl.u32 %v2787, 16
        %v2982 = vrot.slane %v2980, 4
        %v2983 = vor.u32 %v2982, %v2978
        %v2984 = vrot.slane %v2983, 4
        %v2986 = vshll.u32 %v2788, 16
        %v2988 = vrot.slane %v2986, 5
        %v2989 = vsel %vm2805, %v2984, %v2988
        %v2990 = vshrl.u32 %v2788, 16
        %v2992 = vrot.slane %v2990, 4
        %v2993 = vor.u32 %v2992, %v2988
        %v2994 = vrot.slane %v2993, 4
        %v2996 = vshll.u32 %v2789, 16
        %v2998 = vrot.slane %v2996, 5
        %v2999 = vsel %vm2805, %v2994, %v2998
        %v3000 = vshrl.u32 %v2789, 16
        %v3002 = vrot.slane %v3000, 4
        %v3003 = vor.u32 %v3002, %v2998
        %v3004 = vrot.slane %v3003, 4
        %v3006 = vshll.u32 %v2790, 16
        %v3008 = vrot.slane %v3006, 5
        %v3009 = vsel %vm2805, %v3004, %v3008
        %v3010 = vshrl.u32 %v2790, 16
        %v3012 = vrot.slane %v3010, 4
        %v3013 = vor.u32 %v3012, %v3008
        %v3014 = vrot.slane %v3013, 4
        %v3016 = vshll.u32 %v2791, 16
        %v3018 = vrot.slane %v3016, 5
        %v3019 = vsel %vm2805, %v3014, %v3018
        %v3020 = vshrl.u32 %v2791, 16
        %v3022 = vrot.slane %v3020, 4
        %v3023 = vor.u32 %v3022, %v3018
        %v3024 = vrot.slane %v3023, 4
        %v3026 = vshll.u32 %v2792, 16
        %v3028 = vrot.slane %v3026, 5
        %v3029 = vsel %vm2805, %v3024, %v3028
        %v3030 = vshrl.u32 %v2792, 16
        %v3032 = vrot.slane %v3030, 4
        %v3033 = vor.u32 %v3032, %v3028
        %v3034 = vrot.slane %v3033, 4
        %v3036 = vshll.u32 %v2793, 16
        %v3038 = vrot.slane %v3036, 5
        %v3039 = vsel %vm2805, %v3034, %v3038
        %v3040 = vshrl.u32 %v2793, 16
        %v3042 = vrot.slane %v3040, 4
        %v3043 = vor.u32 %v3042, %v3038
        %v3044 = vrot.slane %v3043, 4
        %v3046 = vshll.u32 %v2794, 16
        %v3048 = vrot.slane %v3046, 5
        %v3049 = vsel %vm2805, %v3044, %v3048
        %v3050 = vshrl.u32 %v2794, 16
        %v3052 = vrot.slane %v3050, 4
        %v3053 = vor.u32 %v3052, %v3048
        %v3054 = vrot.slane %v3053, 4
        %v3056 = vshll.u32 %v2795, 16
        %v3058 = vrot.slane %v3056, 5
        %v3059 = vsel %vm2805, %v3054, %v3058
        %v3060 = vshrl.u32 %v2795, 16
        %v3062 = vrot.slane %v3060, 4
        %v3063 = vor.u32 %v3062, %v3058
        %v3064 = vrot.slane %v3063, 4
        %v3066 = vshll.u32 %v2796, 16
        %v3068 = vrot.slane %v3066, 5
        %v3069 = vsel %vm2805, %v3064, %v3068
        %v3070 = vshrl.u32 %v2796, 16
        %v3072 = vrot.slane %v3070, 4
        %v3073 = vor.u32 %v3072, %v3068
        %v3074 = vrot.slane %v3073, 4
        %v3076 = vshll.u32 %v2797, 16
        %v3078 = vrot.slane %v3076, 5
        %v3079 = vsel %vm2805, %v3074, %v3078
        %v3080 = vshrl.u32 %v2797, 16
        %v3082 = vrot.slane %v3080, 4
        %v3083 = vor.u32 %v3082, %v3078
        %v3084 = vrot.slane %v3083, 4
        %v3086 = vshll.u32 %v2798, 16
        %v3088 = vrot.slane %v3086, 5
        %v3089 = vsel %vm2805, %v3084, %v3088
        %v3090 = vshrl.u32 %v2798, 16
        %v3092 = vrot.slane %v3090, 4
        %v3093 = vor.u32 %v3092, %v3088
        %v3094 = vrot.slane %v3093, 4
        %v3096 = vshll.u32 %v2799, 16
        %v3098 = vrot.slane %v3096, 5
        %v3099 = vsel %vm2805, %v3094, %v3098
        %v3100 = vshrl.u32 %v2799, 16
        %v3102 = vrot.slane %v3100, 4
        %v3103 = vor.u32 %v3102, %v3098
        %v3104 = vrot.slane %v3103, 4
        %v3106 = vshll.u32 %v2800, 16
        %v3108 = vrot.slane %v3106, 5
        %v3109 = vsel %vm2805, %v3104, %v3108
        %v3110 = vshrl.u32 %v2800, 16
        %v3112 = vrot.slane %v3110, 4
        %v3113 = vor.u32 %v3112, %v3108
        %v3114 = vrot.slane %v3113, 4
        %v3116 = vshll.u32 %v2801, 16
        %v3118 = vrot.slane %v3116, 5
        %v3119 = vsel %vm2805, %v3114, %v3118
        %v3120 = vshrl.u32 %v2801, 16
        %v3122 = vrot.slane %v3120, 4
        %v3123 = vor.u32 %v3122, %v3118
        %v3124 = vrot.slane %v3123, 4
        %v3126 = vshll.u32 %v2802, 16
        %v3128 = vrot.slane %v3126, 5
        %v3129 = vsel %vm2805, %v3124, %v3128
        %3162 = vst [vmem:[#allocation3 + $0x8] sm:$0xf] %v2819
        %3163 = vst [vmem:[#allocation3 + $0x2c] sm:$0xf] %v2829
        %3164 = vst [vmem:[#allocation3 + $0x50] sm:$0xf] %v2839
        %3165 = vst [vmem:[#allocation3 + $0x74] sm:$0xf] %v2849
        %3166 = vst [vmem:[#allocation3 + $0x98] sm:$0xf] %v2859
        %3167 = vst [vmem:[#allocation3 + $0xbc] sm:$0xf] %v2869
        %3168 = vst [vmem:[#allocation3 + $0xe0] sm:$0xf] %v2879
        %3169 = vst [vmem:[#allocation3 + $0x104] sm:$0xf] %v2889
        %3170 = vst [vmem:[#allocation3 + $0x128] sm:$0xf] %v2899
        %3171 = vst [vmem:[#allocation3 + $0x14c] sm:$0xf] %v2909
        %3172 = vst [vmem:[#allocation3 + $0x170] sm:$0xf] %v2919
        %3173 = vst [vmem:[#allocation3 + $0x194] sm:$0xf] %v2929
        %3174 = vst [vmem:[#allocation3 + $0x1b8] sm:$0xf] %v2939
        %3175 = vst [vmem:[#allocation3 + $0x1dc] sm:$0xf] %v2949
        %3176 = vst [vmem:[#allocation3 + $0x200] sm:$0xf] %v2959
        %3177 = vst [vmem:[#allocation3 + $0x224] sm:$0xf] %v2969
        %3178 = vst [vmem:[#allocation3 + $0x248] sm:$0xf] %v2979
        %3179 = vst [vmem:[#allocation3 + $0x26c] sm:$0xf] %v2989
        %3180 = vst [vmem:[#allocation3 + $0x290] sm:$0xf] %v2999
        %3181 = vst [vmem:[#allocation3 + $0x2b4] sm:$0xf] %v3009
        %3182 = vst [vmem:[#allocation3 + $0x2d8] sm:$0xf] %v3019
        %3183 = vst [vmem:[#allocation3 + $0x2fc] sm:$0xf] %v3029
        %3184 = vst [vmem:[#allocation3 + $0x320] sm:$0xf] %v3039
        %3185 = vst [vmem:[#allocation3 + $0x344] sm:$0xf] %v3049
        %3186 = vst [vmem:[#allocation3 + $0x368] sm:$0xf] %v3059
        %3187 = vst [vmem:[#allocation3 + $0x38c] sm:$0xf] %v3069
        %3188 = vst [vmem:[#allocation3 + $0x3b0] sm:$0xf] %v3079
        %3189 = vst [vmem:[#allocation3 + $0x3d4] sm:$0xf] %v3089
        %3190 = vst [vmem:[#allocation3 + $0x3f8] sm:$0xf] %v3099
        %3191 = vst [vmem:[#allocation3 + $0x41c] sm:$0xf] %v3109
        %3192 = vst [vmem:[#allocation3 + $0x440] sm:$0xf] %v3119
        %3193 = vst [vmem:[#allocation3 + $0x464] sm:$0xf] %v3129
        %v3194 = vld [vmem:[#allocation2 + $0x8] sm:$0x8]
        %v3195 = vld [vmem:[#allocation2 + $0xc] sm:$0xf]
        %v3196 = vld [vmem:[#allocation2 + $0x10] sm:$0xf]
        %v3197 = vld [vmem:[#allocation2 + $0x14] sm:$0xf]
        %v3198 = vld [vmem:[#allocation2 + $0x18] sm:$0xf]
        %v3199 = vld [vmem:[#allocation2 + $0x1c] sm:$0xf]
        %v3200 = vld [vmem:[#allocation2 + $0x20] sm:$0xf]
        %v3201 = vld [vmem:[#allocation2 + $0x24] sm:$0xf]
        %v3202 = vld [vmem:[#allocation2 + $0x28] sm:$0xf]
        %v3203 = vld [vmem:[#allocation2 + $0x2c] sm:$0xf]
        %v3204 = vld [vmem:[#allocation2 + $0x30] sm:$0xf]
        %v3205 = vld [vmem:[#allocation2 + $0x34] sm:$0xf]
        %v3206 = vld [vmem:[#allocation2 + $0x38] sm:$0xf]
        %v3207 = vld [vmem:[#allocation2 + $0x3c] sm:$0xf]
        %v3208 = vld [vmem:[#allocation2 + $0x40] sm:$0xf]
        %v3209 = vld [vmem:[#allocation2 + $0x44] sm:$0xf]
        %v3210 = vld [vmem:[#allocation2 + $0x48] sm:$0xf]
        %v3211 = vld [vmem:[#allocation2 + $0x4c] sm:$0xf]
        %v3212 = vld [vmem:[#allocation2 + $0x50] sm:$0xf]
        %v3213 = vld [vmem:[#allocation2 + $0x54] sm:$0xf]
        %v3214 = vld [vmem:[#allocation2 + $0x58] sm:$0xf]
        %v3215 = vld [vmem:[#allocation2 + $0x5c] sm:$0xf]
        %v3216 = vld [vmem:[#allocation2 + $0x60] sm:$0xf]
        %v3217 = vld [vmem:[#allocation2 + $0x64] sm:$0xf]
        %v3218 = vld [vmem:[#allocation2 + $0x68] sm:$0xf]
        %v3219 = vld [vmem:[#allocation2 + $0x6c] sm:$0xf]
        %v3220 = vld [vmem:[#allocation2 + $0x70] sm:$0xf]
        %v3221 = vld [vmem:[#allocation2 + $0x74] sm:$0xf]
        %v3222 = vld [vmem:[#allocation2 + $0x78] sm:$0xf]
        %v3223 = vld [vmem:[#allocation2 + $0x7c] sm:$0xf]
        %v3224 = vld [vmem:[#allocation2 + $0x80] sm:$0xf]
        %v3225 = vld [vmem:[#allocation2 + $0x84] sm:$0xf]
        %v3226 = vld [vmem:[#allocation2 + $0x88] sm:$0xf]
        %v3227 = vunpack.c.l.bf16 %v3194
        %v3228 = vunpack.c.l.bf16 %v3195
        %v3229 = vunpack.c.l.bf16 %v3196
        %v3230 = vunpack.c.l.bf16 %v3197
        %v3231 = vunpack.c.l.bf16 %v3198
        %v3232 = vunpack.c.l.bf16 %v3199
        %v3233 = vunpack.c.l.bf16 %v3200
        %v3234 = vunpack.c.l.bf16 %v3201
        %v3235 = vunpack.c.l.bf16 %v3202
        %v3236 = vunpack.c.l.bf16 %v3203
        %v3237 = vunpack.c.l.bf16 %v3204
        %v3238 = vunpack.c.l.bf16 %v3205
        %v3239 = vunpack.c.l.bf16 %v3206
        %v3240 = vunpack.c.l.bf16 %v3207
        %v3241 = vunpack.c.l.bf16 %v3208
        %v3242 = vunpack.c.l.bf16 %v3209
        %v3243 = vunpack.c.l.bf16 %v3210
        %v3244 = vunpack.c.l.bf16 %v3211
        %v3245 = vunpack.c.l.bf16 %v3212
        %v3246 = vunpack.c.l.bf16 %v3213
        %v3247 = vunpack.c.l.bf16 %v3214
        %v3248 = vunpack.c.l.bf16 %v3215
        %v3249 = vunpack.c.l.bf16 %v3216
        %v3250 = vunpack.c.l.bf16 %v3217
        %v3251 = vunpack.c.l.bf16 %v3218
        %v3252 = vunpack.c.l.bf16 %v3219
        %v3253 = vunpack.c.l.bf16 %v3220
        %v3254 = vunpack.c.l.bf16 %v3221
        %v3255 = vunpack.c.l.bf16 %v3222
        %v3256 = vunpack.c.l.bf16 %v3223
        %v3257 = vunpack.c.l.bf16 %v3224
        %v3258 = vunpack.c.l.bf16 %v3225
        %v3259 = vunpack.c.l.bf16 %v3226
        %v3260 = vmul.f32 %v3227, %v1637
        %v3261 = vmul.f32 %v3228, %v1639
        %v3262 = vmul.f32 %v3229, %v1641
        %v3263 = vmul.f32 %v3230, %v1643
        %v3264 = vmul.f32 %v3231, %v1645
        %v3265 = vmul.f32 %v3232, %v1647
        %v3266 = vmul.f32 %v3233, %v1649
        %v3267 = vmul.f32 %v3234, %v1651
        %v3268 = vmul.f32 %v3235, %v1653
        %v3269 = vmul.f32 %v3236, %v1655
        %v3270 = vmul.f32 %v3237, %v1657
        %v3271 = vmul.f32 %v3238, %v1659
        %v3272 = vmul.f32 %v3239, %v1661
        %v3273 = vmul.f32 %v3240, %v1663
        %v3274 = vmul.f32 %v3241, %v1665
        %v3275 = vmul.f32 %v3242, %v1667
        %v3276 = vmul.f32 %v3243, %v1669
        %v3277 = vmul.f32 %v3244, %v1671
        %v3278 = vmul.f32 %v3245, %v1673
        %v3279 = vmul.f32 %v3246, %v1675
        %v3280 = vmul.f32 %v3247, %v1677
        %v3281 = vmul.f32 %v3248, %v1679
        %v3282 = vmul.f32 %v3249, %v1681
        %v3283 = vmul.f32 %v3250, %v1683
        %v3284 = vmul.f32 %v3251, %v1685
        %v3285 = vmul.f32 %v3252, %v1687
        %v3286 = vmul.f32 %v3253, %v1689
        %v3287 = vmul.f32 %v3254, %v1691
        %v3288 = vmul.f32 %v3255, %v1693
        %v3289 = vmul.f32 %v3256, %v1695
        %v3290 = vmul.f32 %v3257, %v1697
        %v3291 = vmul.f32 %v3258, %v1699
        %v3292 = vmul.f32 %v3259, %v1698
        %v3293 = vpack.c.bf16 %v3260, %v3260
        %v3294 = vpack.c.bf16 %v3261, %v3261
        %v3295 = vpack.c.bf16 %v3262, %v3262
        %v3296 = vpack.c.bf16 %v3263, %v3263
        %v3297 = vpack.c.bf16 %v3264, %v3264
        %v3298 = vpack.c.bf16 %v3265, %v3265
        %v3299 = vpack.c.bf16 %v3266, %v3266
        %v3300 = vpack.c.bf16 %v3267, %v3267
        %v3301 = vpack.c.bf16 %v3268, %v3268
        %v3302 = vpack.c.bf16 %v3269, %v3269
        %v3303 = vpack.c.bf16 %v3270, %v3270
        %v3304 = vpack.c.bf16 %v3271, %v3271
        %v3305 = vpack.c.bf16 %v3272, %v3272
        %v3306 = vpack.c.bf16 %v3273, %v3273
        %v3307 = vpack.c.bf16 %v3274, %v3274
        %v3308 = vpack.c.bf16 %v3275, %v3275
        %v3309 = vpack.c.bf16 %v3276, %v3276
        %v3310 = vpack.c.bf16 %v3277, %v3277
        %v3311 = vpack.c.bf16 %v3278, %v3278
        %v3312 = vpack.c.bf16 %v3279, %v3279
        %v3313 = vpack.c.bf16 %v3280, %v3280
        %v3314 = vpack.c.bf16 %v3281, %v3281
        %v3315 = vpack.c.bf16 %v3282, %v3282
        %v3316 = vpack.c.bf16 %v3283, %v3283
        %v3317 = vpack.c.bf16 %v3284, %v3284
        %v3318 = vpack.c.bf16 %v3285, %v3285
        %v3319 = vpack.c.bf16 %v3286, %v3286
        %v3320 = vpack.c.bf16 %v3287, %v3287
        %v3321 = vpack.c.bf16 %v3288, %v3288
        %v3322 = vpack.c.bf16 %v3289, %v3289
        %v3323 = vpack.c.bf16 %v3290, %v3290
        %v3324 = vpack.c.bf16 %v3291, %v3291
        %v3325 = vpack.c.bf16 %v3292, %v3292
        %v3327 = vshrl.u32 %v3293, 16
        %v3329 = vrot.slane %v3327, 7
        %v3330 = vrot.slane %v3329, 4
        %v3332 = vshrl.u32 %v3294, 16
        %v3334 = vrot.slane %v3332, 7
        %v3335 = vshll.u32 %v3294, 16
        %v3337 = vor.u32 %v3334, %v3335
        %v3338 = vsel %vm1801, %v3330, %v3337
        %v3339 = vrot.slane %v3334, 4
        %v3341 = vshrl.u32 %v3295, 16
        %v3343 = vrot.slane %v3341, 7
        %v3344 = vshll.u32 %v3295, 16
        %v3346 = vor.u32 %v3343, %v3344
        %v3347 = vsel %vm1801, %v3339, %v3346
        %v3348 = vrot.slane %v3343, 4
        %v3350 = vshrl.u32 %v3296, 16
        %v3352 = vrot.slane %v3350, 7
        %v3353 = vshll.u32 %v3296, 16
        %v3355 = vor.u32 %v3352, %v3353
        %v3356 = vsel %vm1801, %v3348, %v3355
        %v3357 = vrot.slane %v3352, 4
        %v3359 = vshrl.u32 %v3297, 16
        %v3361 = vrot.slane %v3359, 7
        %v3362 = vshll.u32 %v3297, 16
        %v3364 = vor.u32 %v3361, %v3362
        %v3365 = vsel %vm1801, %v3357, %v3364
        %v3366 = vrot.slane %v3361, 4
        %v3368 = vshrl.u32 %v3298, 16
        %v3370 = vrot.slane %v3368, 7
        %v3371 = vshll.u32 %v3298, 16
        %v3373 = vor.u32 %v3370, %v3371
        %v3374 = vsel %vm1801, %v3366, %v3373
        %v3375 = vrot.slane %v3370, 4
        %v3377 = vshrl.u32 %v3299, 16
        %v3379 = vrot.slane %v3377, 7
        %v3380 = vshll.u32 %v3299, 16
        %v3382 = vor.u32 %v3379, %v3380
        %v3383 = vsel %vm1801, %v3375, %v3382
        %v3384 = vrot.slane %v3379, 4
        %v3386 = vshrl.u32 %v3300, 16
        %v3388 = vrot.slane %v3386, 7
        %v3389 = vshll.u32 %v3300, 16
        %v3391 = vor.u32 %v3388, %v3389
        %v3392 = vsel %vm1801, %v3384, %v3391
        %v3393 = vrot.slane %v3388, 4
        %v3395 = vshrl.u32 %v3301, 16
        %v3397 = vrot.slane %v3395, 7
        %v3398 = vshll.u32 %v3301, 16
        %v3400 = vor.u32 %v3397, %v3398
        %v3401 = vsel %vm1801, %v3393, %v3400
        %v3402 = vrot.slane %v3397, 4
        %v3404 = vshrl.u32 %v3302, 16
        %v3406 = vrot.slane %v3404, 7
        %v3407 = vshll.u32 %v3302, 16
        %v3409 = vor.u32 %v3406, %v3407
        %v3410 = vsel %vm1801, %v3402, %v3409
        %v3411 = vrot.slane %v3406, 4
        %v3413 = vshrl.u32 %v3303, 16
        %v3415 = vrot.slane %v3413, 7
        %v3416 = vshll.u32 %v3303, 16
        %v3418 = vor.u32 %v3415, %v3416
        %v3419 = vsel %vm1801, %v3411, %v3418
        %v3420 = vrot.slane %v3415, 4
        %v3422 = vshrl.u32 %v3304, 16
        %v3424 = vrot.slane %v3422, 7
        %v3425 = vshll.u32 %v3304, 16
        %v3427 = vor.u32 %v3424, %v3425
        %v3428 = vsel %vm1801, %v3420, %v3427
        %v3429 = vrot.slane %v3424, 4
        %v3431 = vshrl.u32 %v3305, 16
        %v3433 = vrot.slane %v3431, 7
        %v3434 = vshll.u32 %v3305, 16
        %v3436 = vor.u32 %v3433, %v3434
        %v3437 = vsel %vm1801, %v3429, %v3436
        %v3438 = vrot.slane %v3433, 4
        %v3440 = vshrl.u32 %v3306, 16
        %v3442 = vrot.slane %v3440, 7
        %v3443 = vshll.u32 %v3306, 16
        %v3445 = vor.u32 %v3442, %v3443
        %v3446 = vsel %vm1801, %v3438, %v3445
        %v3447 = vrot.slane %v3442, 4
        %v3449 = vshrl.u32 %v3307, 16
        %v3451 = vrot.slane %v3449, 7
        %v3452 = vshll.u32 %v3307, 16
        %v3454 = vor.u32 %v3451, %v3452
        %v3455 = vsel %vm1801, %v3447, %v3454
        %v3456 = vrot.slane %v3451, 4
        %v3458 = vshrl.u32 %v3308, 16
        %v3460 = vrot.slane %v3458, 7
        %v3461 = vshll.u32 %v3308, 16
        %v3463 = vor.u32 %v3460, %v3461
        %v3464 = vsel %vm1801, %v3456, %v3463
        %v3465 = vrot.slane %v3460, 4
        %v3467 = vshrl.u32 %v3309, 16
        %v3469 = vrot.slane %v3467, 7
        %v3470 = vshll.u32 %v3309, 16
        %v3472 = vor.u32 %v3469, %v3470
        %v3473 = vsel %vm1801, %v3465, %v3472
        %v3474 = vrot.slane %v3469, 4
        %v3476 = vshrl.u32 %v3310, 16
        %v3478 = vrot.slane %v3476, 7
        %v3479 = vshll.u32 %v3310, 16
        %v3481 = vor.u32 %v3478, %v3479
        %v3482 = vsel %vm1801, %v3474, %v3481
        %v3483 = vrot.slane %v3478, 4
        %v3485 = vshrl.u32 %v3311, 16
        %v3487 = vrot.slane %v3485, 7
        %v3488 = vshll.u32 %v3311, 16
        %v3490 = vor.u32 %v3487, %v3488
        %v3491 = vsel %vm1801, %v3483, %v3490
        %v3492 = vrot.slane %v3487, 4
        %v3494 = vshrl.u32 %v3312, 16
        %v3496 = vrot.slane %v3494, 7
        %v3497 = vshll.u32 %v3312, 16
        %v3499 = vor.u32 %v3496, %v3497
        %v3500 = vsel %vm1801, %v3492, %v3499
        %v3501 = vrot.slane %v3496, 4
        %v3503 = vshrl.u32 %v3313, 16
        %v3505 = vrot.slane %v3503, 7
        %v3506 = vshll.u32 %v3313, 16
        %v3508 = vor.u32 %v3505, %v3506
        %v3509 = vsel %vm1801, %v3501, %v3508
        %v3510 = vrot.slane %v3505, 4
        %v3512 = vshrl.u32 %v3314, 16
        %v3514 = vrot.slane %v3512, 7
        %v3515 = vshll.u32 %v3314, 16
        %v3517 = vor.u32 %v3514, %v3515
        %v3518 = vsel %vm1801, %v3510, %v3517
        %v3519 = vrot.slane %v3514, 4
        %v3521 = vshrl.u32 %v3315, 16
        %v3523 = vrot.slane %v3521, 7
        %v3524 = vshll.u32 %v3315, 16
        %v3526 = vor.u32 %v3523, %v3524
        %v3527 = vsel %vm1801, %v3519, %v3526
        %v3528 = vrot.slane %v3523, 4
        %v3530 = vshrl.u32 %v3316, 16
        %v3532 = vrot.slane %v3530, 7
        %v3533 = vshll.u32 %v3316, 16
        %v3535 = vor.u32 %v3532, %v3533
        %v3536 = vsel %vm1801, %v3528, %v3535
        %v3537 = vrot.slane %v3532, 4
        %v3539 = vshrl.u32 %v3317, 16
        %v3541 = vrot.slane %v3539, 7
        %v3542 = vshll.u32 %v3317, 16
        %v3544 = vor.u32 %v3541, %v3542
        %v3545 = vsel %vm1801, %v3537, %v3544
        %v3546 = vrot.slane %v3541, 4
        %v3548 = vshrl.u32 %v3318, 16
        %v3550 = vrot.slane %v3548, 7
        %v3551 = vshll.u32 %v3318, 16
        %v3553 = vor.u32 %v3550, %v3551
        %v3554 = vsel %vm1801, %v3546, %v3553
        %v3555 = vrot.slane %v3550, 4
        %v3557 = vshrl.u32 %v3319, 16
        %v3559 = vrot.slane %v3557, 7
        %v3560 = vshll.u32 %v3319, 16
        %v3562 = vor.u32 %v3559, %v3560
        %v3563 = vsel %vm1801, %v3555, %v3562
        %v3564 = vrot.slane %v3559, 4
        %v3566 = vshrl.u32 %v3320, 16
        %v3568 = vrot.slane %v3566, 7
        %v3569 = vshll.u32 %v3320, 16
        %v3571 = vor.u32 %v3568, %v3569
        %v3572 = vsel %vm1801, %v3564, %v3571
        %v3573 = vrot.slane %v3568, 4
        %v3575 = vshrl.u32 %v3321, 16
        %v3577 = vrot.slane %v3575, 7
        %v3578 = vshll.u32 %v3321, 16
        %v3580 = vor.u32 %v3577, %v3578
        %v3581 = vsel %vm1801, %v3573, %v3580
        %v3582 = vrot.slane %v3577, 4
        %v3584 = vshrl.u32 %v3322, 16
        %v3586 = vrot.slane %v3584, 7
        %v3587 = vshll.u32 %v3322, 16
        %v3589 = vor.u32 %v3586, %v3587
        %v3590 = vsel %vm1801, %v3582, %v3589
        %v3591 = vrot.slane %v3586, 4
        %v3593 = vshrl.u32 %v3323, 16
        %v3595 = vrot.slane %v3593, 7
        %v3596 = vshll.u32 %v3323, 16
        %v3598 = vor.u32 %v3595, %v3596
        %v3599 = vsel %vm1801, %v3591, %v3598
        %v3600 = vrot.slane %v3595, 4
        %v3602 = vshrl.u32 %v3324, 16
        %v3604 = vrot.slane %v3602, 7
        %v3605 = vshll.u32 %v3324, 16
        %v3607 = vor.u32 %v3604, %v3605
        %v3608 = vsel %vm1801, %v3600, %v3607
        %v3609 = vrot.slane %v3604, 4
        %v3611 = vshrl.u32 %v3325, 16
        %v3613 = vrot.slane %v3611, 7
        %v3614 = vshll.u32 %v3325, 16
        %v3616 = vor.u32 %v3613, %v3614
        %v3617 = vsel %vm1801, %v3609, %v3616
        %3650 = vst [vmem:[#allocation3 + $0xc] sm:$0xf] %v3338
        %3651 = vst [vmem:[#allocation3 + $0x30] sm:$0xf] %v3347
        %3652 = vst [vmem:[#allocation3 + $0x54] sm:$0xf] %v3356
        %3653 = vst [vmem:[#allocation3 + $0x78] sm:$0xf] %v3365
        %3654 = vst [vmem:[#allocation3 + $0x9c] sm:$0xf] %v3374
        %3655 = vst [vmem:[#allocation3 + $0xc0] sm:$0xf] %v3383
        %3656 = vst [vmem:[#allocation3 + $0xe4] sm:$0xf] %v3392
        %3657 = vst [vmem:[#allocation3 + $0x108] sm:$0xf] %v3401
        %3658 = vst [vmem:[#allocation3 + $0x12c] sm:$0xf] %v3410
        %3659 = vst [vmem:[#allocation3 + $0x150] sm:$0xf] %v3419
        %3660 = vst [vmem:[#allocation3 + $0x174] sm:$0xf] %v3428
        %3661 = vst [vmem:[#allocation3 + $0x198] sm:$0xf] %v3437
        %3662 = vst [vmem:[#allocation3 + $0x1bc] sm:$0xf] %v3446
        %3663 = vst [vmem:[#allocation3 + $0x1e0] sm:$0xf] %v3455
        %3664 = vst [vmem:[#allocation3 + $0x204] sm:$0xf] %v3464
        %3665 = vst [vmem:[#allocation3 + $0x228] sm:$0xf] %v3473
        %3666 = vst [vmem:[#allocation3 + $0x24c] sm:$0xf] %v3482
        %3667 = vst [vmem:[#allocation3 + $0x270] sm:$0xf] %v3491
        %3668 = vst [vmem:[#allocation3 + $0x294] sm:$0xf] %v3500
        %3669 = vst [vmem:[#allocation3 + $0x2b8] sm:$0xf] %v3509
        %3670 = vst [vmem:[#allocation3 + $0x2dc] sm:$0xf] %v3518
        %3671 = vst [vmem:[#allocation3 + $0x300] sm:$0xf] %v3527
        %3672 = vst [vmem:[#allocation3 + $0x324] sm:$0xf] %v3536
        %3673 = vst [vmem:[#allocation3 + $0x348] sm:$0xf] %v3545
        %3674 = vst [vmem:[#allocation3 + $0x36c] sm:$0xf] %v3554
        %3675 = vst [vmem:[#allocation3 + $0x390] sm:$0xf] %v3563
        %3676 = vst [vmem:[#allocation3 + $0x3b4] sm:$0xf] %v3572
        %3677 = vst [vmem:[#allocation3 + $0x3d8] sm:$0xf] %v3581
        %3678 = vst [vmem:[#allocation3 + $0x3fc] sm:$0xf] %v3590
        %3679 = vst [vmem:[#allocation3 + $0x420] sm:$0xf] %v3599
        %3680 = vst [vmem:[#allocation3 + $0x444] sm:$0xf] %v3608
        %3681 = vst [vmem:[#allocation3 + $0x468] sm:$0xf] %v3617
        %v3682 = vld [vmem:[#allocation2 + $0xc] sm:$0xf]
        %v3683 = vld [vmem:[#allocation2 + $0x10] sm:$0xf]
        %v3684 = vld [vmem:[#allocation2 + $0x14] sm:$0xf]
        %v3685 = vld [vmem:[#allocation2 + $0x18] sm:$0xf]
        %v3686 = vld [vmem:[#allocation2 + $0x1c] sm:$0xf]
        %v3687 = vld [vmem:[#allocation2 + $0x20] sm:$0xf]
        %v3688 = vld [vmem:[#allocation2 + $0x24] sm:$0xf]
        %v3689 = vld [vmem:[#allocation2 + $0x28] sm:$0xf]
        %v3690 = vld [vmem:[#allocation2 + $0x2c] sm:$0xf]
        %v3691 = vld [vmem:[#allocation2 + $0x30] sm:$0xf]
        %v3692 = vld [vmem:[#allocation2 + $0x34] sm:$0xf]
        %v3693 = vld [vmem:[#allocation2 + $0x38] sm:$0xf]
        %v3694 = vld [vmem:[#allocation2 + $0x3c] sm:$0xf]
        %v3695 = vld [vmem:[#allocation2 + $0x40] sm:$0xf]
        %v3696 = vld [vmem:[#allocation2 + $0x44] sm:$0xf]
        %v3697 = vld [vmem:[#allocation2 + $0x48] sm:$0xf]
        %v3698 = vld [vmem:[#allocation2 + $0x4c] sm:$0xf]
        %v3699 = vld [vmem:[#allocation2 + $0x50] sm:$0xf]
        %v3700 = vld [vmem:[#allocation2 + $0x54] sm:$0xf]
        %v3701 = vld [vmem:[#allocation2 + $0x58] sm:$0xf]
        %v3702 = vld [vmem:[#allocation2 + $0x5c] sm:$0xf]
        %v3703 = vld [vmem:[#allocation2 + $0x60] sm:$0xf]
        %v3704 = vld [vmem:[#allocation2 + $0x64] sm:$0xf]
        %v3705 = vld [vmem:[#allocation2 + $0x68] sm:$0xf]
        %v3706 = vld [vmem:[#allocation2 + $0x6c] sm:$0xf]
        %v3707 = vld [vmem:[#allocation2 + $0x70] sm:$0xf]
        %v3708 = vld [vmem:[#allocation2 + $0x74] sm:$0xf]
        %v3709 = vld [vmem:[#allocation2 + $0x78] sm:$0xf]
        %v3710 = vld [vmem:[#allocation2 + $0x7c] sm:$0xf]
        %v3711 = vld [vmem:[#allocation2 + $0x80] sm:$0xf]
        %v3712 = vld [vmem:[#allocation2 + $0x84] sm:$0xf]
        %v3713 = vld [vmem:[#allocation2 + $0x88] sm:$0xf]
        %3714 = vst [vmem:[#allocation3 + $0x10] sm:$0xf] %v3682
        %3715 = vst [vmem:[#allocation3 + $0x34] sm:$0xf] %v3683
        %3716 = vst [vmem:[#allocation3 + $0x58] sm:$0xf] %v3684
        %3717 = vst [vmem:[#allocation3 + $0x7c] sm:$0xf] %v3685
        %3718 = vst [vmem:[#allocation3 + $0xa0] sm:$0xf] %v3686
        %3719 = vst [vmem:[#allocation3 + $0xc4] sm:$0xf] %v3687
        %3720 = vst [vmem:[#allocation3 + $0xe8] sm:$0xf] %v3688
        %3721 = vst [vmem:[#allocation3 + $0x10c] sm:$0xf] %v3689
        %3722 = vst [vmem:[#allocation3 + $0x130] sm:$0xf] %v3690
        %3723 = vst [vmem:[#allocation3 + $0x154] sm:$0xf] %v3691
        %3724 = vst [vmem:[#allocation3 + $0x178] sm:$0xf] %v3692
        %3725 = vst [vmem:[#allocation3 + $0x19c] sm:$0xf] %v3693
        %3726 = vst [vmem:[#allocation3 + $0x1c0] sm:$0xf] %v3694
        %3727 = vst [vmem:[#allocation3 + $0x1e4] sm:$0xf] %v3695
        %3728 = vst [vmem:[#allocation3 + $0x208] sm:$0xf] %v3696
        %3729 = vst [vmem:[#allocation3 + $0x22c] sm:$0xf] %v3697
        %3730 = vst [vmem:[#allocation3 + $0x250] sm:$0xf] %v3698
        %3731 = vst [vmem:[#allocation3 + $0x274] sm:$0xf] %v3699
        %3732 = vst [vmem:[#allocation3 + $0x298] sm:$0xf] %v3700
        %3733 = vst [vmem:[#allocation3 + $0x2bc] sm:$0xf] %v3701
        %3734 = vst [vmem:[#allocation3 + $0x2e0] sm:$0xf] %v3702
        %3735 = vst [vmem:[#allocation3 + $0x304] sm:$0xf] %v3703
        %3736 = vst [vmem:[#allocation3 + $0x328] sm:$0xf] %v3704
        %3737 = vst [vmem:[#allocation3 + $0x34c] sm:$0xf] %v3705
        %3738 = vst [vmem:[#allocation3 + $0x370] sm:$0xf] %v3706
        %3739 = vst [vmem:[#allocation3 + $0x394] sm:$0xf] %v3707
        %3740 = vst [vmem:[#allocation3 + $0x3b8] sm:$0xf] %v3708
        %3741 = vst [vmem:[#allocation3 + $0x3dc] sm:$0xf] %v3709
        %3742 = vst [vmem:[#allocation3 + $0x400] sm:$0xf] %v3710
        %3743 = vst [vmem:[#allocation3 + $0x424] sm:$0xf] %v3711
        %3744 = vst [vmem:[#allocation3 + $0x448] sm:$0xf] %v3712
        %3745 = vst [vmem:[#allocation3 + $0x46c] sm:$0xf] %v3713
        %v3746 = vld [vmem:[#allocation2 + $0xc] sm:$0xf]
        %v3747 = vld [vmem:[#allocation2 + $0x10] sm:$0xf]
        %v3748 = vld [vmem:[#allocation2 + $0x14] sm:$0xf]
        %v3749 = vld [vmem:[#allocation2 + $0x18] sm:$0xf]
        %v3750 = vld [vmem:[#allocation2 + $0x1c] sm:$0xf]
        %v3751 = vld [vmem:[#allocation2 + $0x20] sm:$0xf]
        %v3752 = vld [vmem:[#allocation2 + $0x24] sm:$0xf]
        %v3753 = vld [vmem:[#allocation2 + $0x28] sm:$0xf]
        %v3754 = vld [vmem:[#allocation2 + $0x2c] sm:$0xf]
        %v3755 = vld [vmem:[#allocation2 + $0x30] sm:$0xf]
        %v3756 = vld [vmem:[#allocation2 + $0x34] sm:$0xf]
        %v3757 = vld [vmem:[#allocation2 + $0x38] sm:$0xf]
        %v3758 = vld [vmem:[#allocation2 + $0x3c] sm:$0xf]
        %v3759 = vld [vmem:[#allocation2 + $0x40] sm:$0xf]
        %v3760 = vld [vmem:[#allocation2 + $0x44] sm:$0xf]
        %v3761 = vld [vmem:[#allocation2 + $0x48] sm:$0xf]
        %v3762 = vld [vmem:[#allocation2 + $0x4c] sm:$0xf]
        %v3763 = vld [vmem:[#allocation2 + $0x50] sm:$0xf]
        %v3764 = vld [vmem:[#allocation2 + $0x54] sm:$0xf]
        %v3765 = vld [vmem:[#allocation2 + $0x58] sm:$0xf]
        %v3766 = vld [vmem:[#allocation2 + $0x5c] sm:$0xf]
        %v3767 = vld [vmem:[#allocation2 + $0x60] sm:$0xf]
        %v3768 = vld [vmem:[#allocation2 + $0x64] sm:$0xf]
        %v3769 = vld [vmem:[#allocation2 + $0x68] sm:$0xf]
        %v3770 = vld [vmem:[#allocation2 + $0x6c] sm:$0xf]
        %v3771 = vld [vmem:[#allocation2 + $0x70] sm:$0xf]
        %v3772 = vld [vmem:[#allocation2 + $0x74] sm:$0xf]
        %v3773 = vld [vmem:[#allocation2 + $0x78] sm:$0xf]
        %v3774 = vld [vmem:[#allocation2 + $0x7c] sm:$0xf]
        %v3775 = vld [vmem:[#allocation2 + $0x80] sm:$0xf]
        %v3776 = vld [vmem:[#allocation2 + $0x84] sm:$0xf]
        %v3777 = vld [vmem:[#allocation2 + $0x88] sm:$0xf]
        %v3778 = vld [vmem:[#allocation2 + $0x8c] sm:$0x1]
        %v3779 = vunpack.c.l.bf16 %v3746
        %v3780 = vunpack.c.l.bf16 %v3747
        %v3781 = vunpack.c.l.bf16 %v3748
        %v3782 = vunpack.c.l.bf16 %v3749
        %v3783 = vunpack.c.l.bf16 %v3750
        %v3784 = vunpack.c.l.bf16 %v3751
        %v3785 = vunpack.c.l.bf16 %v3752
        %v3786 = vunpack.c.l.bf16 %v3753
        %v3787 = vunpack.c.l.bf16 %v3754
        %v3788 = vunpack.c.l.bf16 %v3755
        %v3789 = vunpack.c.l.bf16 %v3756
        %v3790 = vunpack.c.l.bf16 %v3757
        %v3791 = vunpack.c.l.bf16 %v3758
        %v3792 = vunpack.c.l.bf16 %v3759
        %v3793 = vunpack.c.l.bf16 %v3760
        %v3794 = vunpack.c.l.bf16 %v3761
        %v3795 = vunpack.c.l.bf16 %v3762
        %v3796 = vunpack.c.l.bf16 %v3763
        %v3797 = vunpack.c.l.bf16 %v3764
        %v3798 = vunpack.c.l.bf16 %v3765
        %v3799 = vunpack.c.l.bf16 %v3766
        %v3800 = vunpack.c.l.bf16 %v3767
        %v3801 = vunpack.c.l.bf16 %v3768
        %v3802 = vunpack.c.l.bf16 %v3769
        %v3803 = vunpack.c.l.bf16 %v3770
        %v3804 = vunpack.c.l.bf16 %v3771
        %v3805 = vunpack.c.l.bf16 %v3772
        %v3806 = vunpack.c.l.bf16 %v3773
        %v3807 = vunpack.c.l.bf16 %v3774
        %v3808 = vunpack.c.l.bf16 %v3775
        %v3809 = vunpack.c.l.bf16 %v3776
        %v3810 = vunpack.c.l.bf16 %v3777
        %v3811 = vunpack.c.l.bf16 %v3778
        %v3812 = vmul.f32 %v3779, %v2641
        %v3813 = vmul.f32 %v3780, %v2643
        %v3814 = vmul.f32 %v3781, %v2645
        %v3815 = vmul.f32 %v3782, %v2647
        %v3816 = vmul.f32 %v3783, %v2649
        %v3817 = vmul.f32 %v3784, %v2651
        %v3818 = vmul.f32 %v3785, %v2653
        %v3819 = vmul.f32 %v3786, %v2655
        %v3820 = vmul.f32 %v3787, %v2657
        %v3821 = vmul.f32 %v3788, %v2659
        %v3822 = vmul.f32 %v3789, %v2661
        %v3823 = vmul.f32 %v3790, %v2663
        %v3824 = vmul.f32 %v3791, %v2665
        %v3825 = vmul.f32 %v3792, %v2667
        %v3826 = vmul.f32 %v3793, %v2669
        %v3827 = vmul.f32 %v3794, %v2671
        %v3828 = vmul.f32 %v3795, %v2673
        %v3829 = vmul.f32 %v3796, %v2675
        %v3830 = vmul.f32 %v3797, %v2677
        %v3831 = vmul.f32 %v3798, %v2679
        %v3832 = vmul.f32 %v3799, %v2681
        %v3833 = vmul.f32 %v3800, %v2683
        %v3834 = vmul.f32 %v3801, %v2685
        %v3835 = vmul.f32 %v3802, %v2687
        %v3836 = vmul.f32 %v3803, %v2689
        %v3837 = vmul.f32 %v3804, %v2691
        %v3838 = vmul.f32 %v3805, %v2693
        %v3839 = vmul.f32 %v3806, %v2695
        %v3840 = vmul.f32 %v3807, %v2697
        %v3841 = vmul.f32 %v3808, %v2699
        %v3842 = vmul.f32 %v3809, %v2701
        %v3843 = vmul.f32 %v3810, %v2703
        %v3844 = vmul.f32 %v3811, %v2702
        %v3845 = vpack.c.bf16 %v3812, %v3812
        %v3846 = vpack.c.bf16 %v3813, %v3813
        %v3847 = vpack.c.bf16 %v3814, %v3814
        %v3848 = vpack.c.bf16 %v3815, %v3815
        %v3849 = vpack.c.bf16 %v3816, %v3816
        %v3850 = vpack.c.bf16 %v3817, %v3817
        %v3851 = vpack.c.bf16 %v3818, %v3818
        %v3852 = vpack.c.bf16 %v3819, %v3819
        %v3853 = vpack.c.bf16 %v3820, %v3820
        %v3854 = vpack.c.bf16 %v3821, %v3821
        %v3855 = vpack.c.bf16 %v3822, %v3822
        %v3856 = vpack.c.bf16 %v3823, %v3823
        %v3857 = vpack.c.bf16 %v3824, %v3824
        %v3858 = vpack.c.bf16 %v3825, %v3825
        %v3859 = vpack.c.bf16 %v3826, %v3826
        %v3860 = vpack.c.bf16 %v3827, %v3827
        %v3861 = vpack.c.bf16 %v3828, %v3828
        %v3862 = vpack.c.bf16 %v3829, %v3829
        %v3863 = vpack.c.bf16 %v3830, %v3830
        %v3864 = vpack.c.bf16 %v3831, %v3831
        %v3865 = vpack.c.bf16 %v3832, %v3832
        %v3866 = vpack.c.bf16 %v3833, %v3833
        %v3867 = vpack.c.bf16 %v3834, %v3834
        %v3868 = vpack.c.bf16 %v3835, %v3835
        %v3869 = vpack.c.bf16 %v3836, %v3836
        %v3870 = vpack.c.bf16 %v3837, %v3837
        %v3871 = vpack.c.bf16 %v3838, %v3838
        %v3872 = vpack.c.bf16 %v3839, %v3839
        %v3873 = vpack.c.bf16 %v3840, %v3840
        %v3874 = vpack.c.bf16 %v3841, %v3841
        %v3875 = vpack.c.bf16 %v3842, %v3842
        %v3876 = vpack.c.bf16 %v3843, %v3843
        %v3877 = vpack.c.bf16 %v3844, %v3844
        %v3879 = vshrl.u32 %v3845, 16
        %v3881 = vrot.slane %v3879, 4
        %v3882 = vshll.u32 %v3845, 16
        %v3884 = vrot.slane %v3882, 5
        %v3885 = vor.u32 %v3881, %v3884
        %v3886 = vrot.slane %v3885, 4
        %v3888 = vshll.u32 %v3846, 16
        %v3890 = vrot.slane %v3888, 5
        %v3891 = vsel %vm2805, %v3886, %v3890
        %v3892 = vshrl.u32 %v3846, 16
        %v3894 = vrot.slane %v3892, 4
        %v3895 = vor.u32 %v3894, %v3890
        %v3896 = vrot.slane %v3895, 4
        %v3898 = vshll.u32 %v3847, 16
        %v3900 = vrot.slane %v3898, 5
        %v3901 = vsel %vm2805, %v3896, %v3900
        %v3902 = vshrl.u32 %v3847, 16
        %v3904 = vrot.slane %v3902, 4
        %v3905 = vor.u32 %v3904, %v3900
        %v3906 = vrot.slane %v3905, 4
        %v3908 = vshll.u32 %v3848, 16
        %v3910 = vrot.slane %v3908, 5
        %v3911 = vsel %vm2805, %v3906, %v3910
        %v3912 = vshrl.u32 %v3848, 16
        %v3914 = vrot.slane %v3912, 4
        %v3915 = vor.u32 %v3914, %v3910
        %v3916 = vrot.slane %v3915, 4
        %v3918 = vshll.u32 %v3849, 16
        %v3920 = vrot.slane %v3918, 5
        %v3921 = vsel %vm2805, %v3916, %v3920
        %v3922 = vshrl.u32 %v3849, 16
        %v3924 = vrot.slane %v3922, 4
        %v3925 = vor.u32 %v3924, %v3920
        %v3926 = vrot.slane %v3925, 4
        %v3928 = vshll.u32 %v3850, 16
        %v3930 = vrot.slane %v3928, 5
        %v3931 = vsel %vm2805, %v3926, %v3930
        %v3932 = vshrl.u32 %v3850, 16
        %v3934 = vrot.slane %v3932, 4
        %v3935 = vor.u32 %v3934, %v3930
        %v3936 = vrot.slane %v3935, 4
        %v3938 = vshll.u32 %v3851, 16
        %v3940 = vrot.slane %v3938, 5
        %v3941 = vsel %vm2805, %v3936, %v3940
        %v3942 = vshrl.u32 %v3851, 16
        %v3944 = vrot.slane %v3942, 4
        %v3945 = vor.u32 %v3944, %v3940
        %v3946 = vrot.slane %v3945, 4
        %v3948 = vshll.u32 %v3852, 16
        %v3950 = vrot.slane %v3948, 5
        %v3951 = vsel %vm2805, %v3946, %v3950
        %v3952 = vshrl.u32 %v3852, 16
        %v3954 = vrot.slane %v3952, 4
        %v3955 = vor.u32 %v3954, %v3950
        %v3956 = vrot.slane %v3955, 4
        %v3958 = vshll.u32 %v3853, 16
        %v3960 = vrot.slane %v3958, 5
        %v3961 = vsel %vm2805, %v3956, %v3960
        %v3962 = vshrl.u32 %v3853, 16
        %v3964 = vrot.slane %v3962, 4
        %v3965 = vor.u32 %v3964, %v3960
        %v3966 = vrot.slane %v3965, 4
        %v3968 = vshll.u32 %v3854, 16
        %v3970 = vrot.slane %v3968, 5
        %v3971 = vsel %vm2805, %v3966, %v3970
        %v3972 = vshrl.u32 %v3854, 16
        %v3974 = vrot.slane %v3972, 4
        %v3975 = vor.u32 %v3974, %v3970
        %v3976 = vrot.slane %v3975, 4
        %v3978 = vshll.u32 %v3855, 16
        %v3980 = vrot.slane %v3978, 5
        %v3981 = vsel %vm2805, %v3976, %v3980
        %v3982 = vshrl.u32 %v3855, 16
        %v3984 = vrot.slane %v3982, 4
        %v3985 = vor.u32 %v3984, %v3980
        %v3986 = vrot.slane %v3985, 4
        %v3988 = vshll.u32 %v3856, 16
        %v3990 = vrot.slane %v3988, 5
        %v3991 = vsel %vm2805, %v3986, %v3990
        %v3992 = vshrl.u32 %v3856, 16
        %v3994 = vrot.slane %v3992, 4
        %v3995 = vor.u32 %v3994, %v3990
        %v3996 = vrot.slane %v3995, 4
        %v3998 = vshll.u32 %v3857, 16
        %v4000 = vrot.slane %v3998, 5
        %v4001 = vsel %vm2805, %v3996, %v4000
        %v4002 = vshrl.u32 %v3857, 16
        %v4004 = vrot.slane %v4002, 4
        %v4005 = vor.u32 %v4004, %v4000
        %v4006 = vrot.slane %v4005, 4
        %v4008 = vshll.u32 %v3858, 16
        %v4010 = vrot.slane %v4008, 5
        %v4011 = vsel %vm2805, %v4006, %v4010
        %v4012 = vshrl.u32 %v3858, 16
        %v4014 = vrot.slane %v4012, 4
        %v4015 = vor.u32 %v4014, %v4010
        %v4016 = vrot.slane %v4015, 4
        %v4018 = vshll.u32 %v3859, 16
        %v4020 = vrot.slane %v4018, 5
        %v4021 = vsel %vm2805, %v4016, %v4020
        %v4022 = vshrl.u32 %v3859, 16
        %v4024 = vrot.slane %v4022, 4
        %v4025 = vor.u32 %v4024, %v4020
        %v4026 = vrot.slane %v4025, 4
        %v4028 = vshll.u32 %v3860, 16
        %v4030 = vrot.slane %v4028, 5
        %v4031 = vsel %vm2805, %v4026, %v4030
        %v4032 = vshrl.u32 %v3860, 16
        %v4034 = vrot.slane %v4032, 4
        %v4035 = vor.u32 %v4034, %v4030
        %v4036 = vrot.slane %v4035, 4
        %v4038 = vshll.u32 %v3861, 16
        %v4040 = vrot.slane %v4038, 5
        %v4041 = vsel %vm2805, %v4036, %v4040
        %v4042 = vshrl.u32 %v3861, 16
        %v4044 = vrot.slane %v4042, 4
        %v4045 = vor.u32 %v4044, %v4040
        %v4046 = vrot.slane %v4045, 4
        %v4048 = vshll.u32 %v3862, 16
        %v4050 = vrot.slane %v4048, 5
        %v4051 = vsel %vm2805, %v4046, %v4050
        %v4052 = vshrl.u32 %v3862, 16
        %v4054 = vrot.slane %v4052, 4
        %v4055 = vor.u32 %v4054, %v4050
        %v4056 = vrot.slane %v4055, 4
        %v4058 = vshll.u32 %v3863, 16
        %v4060 = vrot.slane %v4058, 5
        %v4061 = vsel %vm2805, %v4056, %v4060
        %v4062 = vshrl.u32 %v3863, 16
        %v4064 = vrot.slane %v4062, 4
        %v4065 = vor.u32 %v4064, %v4060
        %v4066 = vrot.slane %v4065, 4
        %v4068 = vshll.u32 %v3864, 16
        %v4070 = vrot.slane %v4068, 5
        %v4071 = vsel %vm2805, %v4066, %v4070
        %v4072 = vshrl.u32 %v3864, 16
        %v4074 = vrot.slane %v4072, 4
        %v4075 = vor.u32 %v4074, %v4070
        %v4076 = vrot.slane %v4075, 4
        %v4078 = vshll.u32 %v3865, 16
        %v4080 = vrot.slane %v4078, 5
        %v4081 = vsel %vm2805, %v4076, %v4080
        %v4082 = vshrl.u32 %v3865, 16
        %v4084 = vrot.slane %v4082, 4
        %v4085 = vor.u32 %v4084, %v4080
        %v4086 = vrot.slane %v4085, 4
        %v4088 = vshll.u32 %v3866, 16
        %v4090 = vrot.slane %v4088, 5
        %v4091 = vsel %vm2805, %v4086, %v4090
        %v4092 = vshrl.u32 %v3866, 16
        %v4094 = vrot.slane %v4092, 4
        %v4095 = vor.u32 %v4094, %v4090
        %v4096 = vrot.slane %v4095, 4
        %v4098 = vshll.u32 %v3867, 16
        %v4100 = vrot.slane %v4098, 5
        %v4101 = vsel %vm2805, %v4096, %v4100
        %v4102 = vshrl.u32 %v3867, 16
        %v4104 = vrot.slane %v4102, 4
        %v4105 = vor.u32 %v4104, %v4100
        %v4106 = vrot.slane %v4105, 4
        %v4108 = vshll.u32 %v3868, 16
        %v4110 = vrot.slane %v4108, 5
        %v4111 = vsel %vm2805, %v4106, %v4110
        %v4112 = vshrl.u32 %v3868, 16
        %v4114 = vrot.slane %v4112, 4
        %v4115 = vor.u32 %v4114, %v4110
        %v4116 = vrot.slane %v4115, 4
        %v4118 = vshll.u32 %v3869, 16
        %v4120 = vrot.slane %v4118, 5
        %v4121 = vsel %vm2805, %v4116, %v4120
        %v4122 = vshrl.u32 %v3869, 16
        %v4124 = vrot.slane %v4122, 4
        %v4125 = vor.u32 %v4124, %v4120
        %v4126 = vrot.slane %v4125, 4
        %v4128 = vshll.u32 %v3870, 16
        %v4130 = vrot.slane %v4128, 5
        %v4131 = vsel %vm2805, %v4126, %v4130
        %v4132 = vshrl.u32 %v3870, 16
        %v4134 = vrot.slane %v4132, 4
        %v4135 = vor.u32 %v4134, %v4130
        %v4136 = vrot.slane %v4135, 4
        %v4138 = vshll.u32 %v3871, 16
        %v4140 = vrot.slane %v4138, 5
        %v4141 = vsel %vm2805, %v4136, %v4140
        %v4142 = vshrl.u32 %v3871, 16
        %v4144 = vrot.slane %v4142, 4
        %v4145 = vor.u32 %v4144, %v4140
        %v4146 = vrot.slane %v4145, 4
        %v4148 = vshll.u32 %v3872, 16
        %v4150 = vrot.slane %v4148, 5
        %v4151 = vsel %vm2805, %v4146, %v4150
        %v4152 = vshrl.u32 %v3872, 16
        %v4154 = vrot.slane %v4152, 4
        %v4155 = vor.u32 %v4154, %v4150
        %v4156 = vrot.slane %v4155, 4
        %v4158 = vshll.u32 %v3873, 16
        %v4160 = vrot.slane %v4158, 5
        %v4161 = vsel %vm2805, %v4156, %v4160
        %v4162 = vshrl.u32 %v3873, 16
        %v4164 = vrot.slane %v4162, 4
        %v4165 = vor.u32 %v4164, %v4160
        %v4166 = vrot.slane %v4165, 4
        %v4168 = vshll.u32 %v3874, 16
        %v4170 = vrot.slane %v4168, 5
        %v4171 = vsel %vm2805, %v4166, %v4170
        %v4172 = vshrl.u32 %v3874, 16
        %v4174 = vrot.slane %v4172, 4
        %v4175 = vor.u32 %v4174, %v4170
        %v4176 = vrot.slane %v4175, 4
        %v4178 = vshll.u32 %v3875, 16
        %v4180 = vrot.slane %v4178, 5
        %v4181 = vsel %vm2805, %v4176, %v4180
        %v4182 = vshrl.u32 %v3875, 16
        %v4184 = vrot.slane %v4182, 4
        %v4185 = vor.u32 %v4184, %v4180
        %v4186 = vrot.slane %v4185, 4
        %v4188 = vshll.u32 %v3876, 16
        %v4190 = vrot.slane %v4188, 5
        %v4191 = vsel %vm2805, %v4186, %v4190
        %v4192 = vshrl.u32 %v3876, 16
        %v4194 = vrot.slane %v4192, 4
        %v4195 = vor.u32 %v4194, %v4190
        %v4196 = vrot.slane %v4195, 4
        %v4198 = vshll.u32 %v3877, 16
        %v4200 = vrot.slane %v4198, 5
        %v4201 = vsel %vm2805, %v4196, %v4200
        %4234 = vst [vmem:[#allocation3 + $0x14] sm:$0xf] %v3891
        %4235 = vst [vmem:[#allocation3 + $0x38] sm:$0xf] %v3901
        %4236 = vst [vmem:[#allocation3 + $0x5c] sm:$0xf] %v3911
        %4237 = vst [vmem:[#allocation3 + $0x80] sm:$0xf] %v3921
        %4238 = vst [vmem:[#allocation3 + $0xa4] sm:$0xf] %v3931
        %4239 = vst [vmem:[#allocation3 + $0xc8] sm:$0xf] %v3941
        %4240 = vst [vmem:[#allocation3 + $0xec] sm:$0xf] %v3951
        %4241 = vst [vmem:[#allocation3 + $0x110] sm:$0xf] %v3961
        %4242 = vst [vmem:[#allocation3 + $0x134] sm:$0xf] %v3971
        %4243 = vst [vmem:[#allocation3 + $0x158] sm:$0xf] %v3981
        %4244 = vst [vmem:[#allocation3 + $0x17c] sm:$0xf] %v3991
        %4245 = vst [vmem:[#allocation3 + $0x1a0] sm:$0xf] %v4001
        %4246 = vst [vmem:[#allocation3 + $0x1c4] sm:$0xf] %v4011
        %4247 = vst [vmem:[#allocation3 + $0x1e8] sm:$0xf] %v4021
        %4248 = vst [vmem:[#allocation3 + $0x20c] sm:$0xf] %v4031
        %4249 = vst [vmem:[#allocation3 + $0x230] sm:$0xf] %v4041
        %4250 = vst [vmem:[#allocation3 + $0x254] sm:$0xf] %v4051
        %4251 = vst [vmem:[#allocation3 + $0x278] sm:$0xf] %v4061
        %4252 = vst [vmem:[#allocation3 + $0x29c] sm:$0xf] %v4071
        %4253 = vst [vmem:[#allocation3 + $0x2c0] sm:$0xf] %v4081
        %4254 = vst [vmem:[#allocation3 + $0x2e4] sm:$0xf] %v4091
        %4255 = vst [vmem:[#allocation3 + $0x308] sm:$0xf] %v4101
        %4256 = vst [vmem:[#allocation3 + $0x32c] sm:$0xf] %v4111
        %4257 = vst [vmem:[#allocation3 + $0x350] sm:$0xf] %v4121
        %4258 = vst [vmem:[#allocation3 + $0x374] sm:$0xf] %v4131
        %4259 = vst [vmem:[#allocation3 + $0x398] sm:$0xf] %v4141
        %4260 = vst [vmem:[#allocation3 + $0x3bc] sm:$0xf] %v4151
        %4261 = vst [vmem:[#allocation3 + $0x3e0] sm:$0xf] %v4161
        %4262 = vst [vmem:[#allocation3 + $0x404] sm:$0xf] %v4171
        %4263 = vst [vmem:[#allocation3 + $0x428] sm:$0xf] %v4181
        %4264 = vst [vmem:[#allocation3 + $0x44c] sm:$0xf] %v4191
        %4265 = vst [vmem:[#allocation3 + $0x470] sm:$0xf] %v4201
        %v4266 = vld [vmem:[#allocation2 + $0x10] sm:$0x8]
        %v4267 = vld [vmem:[#allocation2 + $0x14] sm:$0xf]
        %v4268 = vld [vmem:[#allocation2 + $0x18] sm:$0xf]
        %v4269 = vld [vmem:[#allocation2 + $0x1c] sm:$0xf]
        %v4270 = vld [vmem:[#allocation2 + $0x20] sm:$0xf]
        %v4271 = vld [vmem:[#allocation2 + $0x24] sm:$0xf]
        %v4272 = vld [vmem:[#allocation2 + $0x28] sm:$0xf]
        %v4273 = vld [vmem:[#allocation2 + $0x2c] sm:$0xf]
        %v4274 = vld [vmem:[#allocation2 + $0x30] sm:$0xf]
        %v4275 = vld [vmem:[#allocation2 + $0x34] sm:$0xf]
        %v4276 = vld [vmem:[#allocation2 + $0x38] sm:$0xf]
        %v4277 = vld [vmem:[#allocation2 + $0x3c] sm:$0xf]
        %v4278 = vld [vmem:[#allocation2 + $0x40] sm:$0xf]
        %v4279 = vld [vmem:[#allocation2 + $0x44] sm:$0xf]
        %v4280 = vld [vmem:[#allocation2 + $0x48] sm:$0xf]
        %v4281 = vld [vmem:[#allocation2 + $0x4c] sm:$0xf]
        %v4282 = vld [vmem:[#allocation2 + $0x50] sm:$0xf]
        %v4283 = vld [vmem:[#allocation2 + $0x54] sm:$0xf]
        %v4284 = vld [vmem:[#allocation2 + $0x58] sm:$0xf]
        %v4285 = vld [vmem:[#allocation2 + $0x5c] sm:$0xf]
        %v4286 = vld [vmem:[#allocation2 + $0x60] sm:$0xf]
        %v4287 = vld [vmem:[#allocation2 + $0x64] sm:$0xf]
        %v4288 = vld [vmem:[#allocation2 + $0x68] sm:$0xf]
        %v4289 = vld [vmem:[#allocation2 + $0x6c] sm:$0xf]
        %v4290 = vld [vmem:[#allocation2 + $0x70] sm:$0xf]
        %v4291 = vld [vmem:[#allocation2 + $0x74] sm:$0xf]
        %v4292 = vld [vmem:[#allocation2 + $0x78] sm:$0xf]
        %v4293 = vld [vmem:[#allocation2 + $0x7c] sm:$0xf]
        %v4294 = vld [vmem:[#allocation2 + $0x80] sm:$0xf]
        %v4295 = vld [vmem:[#allocation2 + $0x84] sm:$0xf]
        %v4296 = vld [vmem:[#allocation2 + $0x88] sm:$0xf]
        %v4297 = vld [vmem:[#allocation2 + $0x8c] sm:$0xf]
        %v4298 = vld [vmem:[#allocation2 + $0x90] sm:$0xf]
        %v4299 = vunpack.c.l.bf16 %v4266
        %v4300 = vunpack.c.l.bf16 %v4267
        %v4301 = vunpack.c.l.bf16 %v4268
        %v4302 = vunpack.c.l.bf16 %v4269
        %v4303 = vunpack.c.l.bf16 %v4270
        %v4304 = vunpack.c.l.bf16 %v4271
        %v4305 = vunpack.c.l.bf16 %v4272
        %v4306 = vunpack.c.l.bf16 %v4273
        %v4307 = vunpack.c.l.bf16 %v4274
        %v4308 = vunpack.c.l.bf16 %v4275
        %v4309 = vunpack.c.l.bf16 %v4276
        %v4310 = vunpack.c.l.bf16 %v4277
        %v4311 = vunpack.c.l.bf16 %v4278
        %v4312 = vunpack.c.l.bf16 %v4279
        %v4313 = vunpack.c.l.bf16 %v4280
        %v4314 = vunpack.c.l.bf16 %v4281
        %v4315 = vunpack.c.l.bf16 %v4282
        %v4316 = vunpack.c.l.bf16 %v4283
        %v4317 = vunpack.c.l.bf16 %v4284
        %v4318 = vunpack.c.l.bf16 %v4285
        %v4319 = vunpack.c.l.bf16 %v4286
        %v4320 = vunpack.c.l.bf16 %v4287
        %v4321 = vunpack.c.l.bf16 %v4288
        %v4322 = vunpack.c.l.bf16 %v4289
        %v4323 = vunpack.c.l.bf16 %v4290
        %v4324 = vunpack.c.l.bf16 %v4291
        %v4325 = vunpack.c.l.bf16 %v4292
        %v4326 = vunpack.c.l.bf16 %v4293
        %v4327 = vunpack.c.l.bf16 %v4294
        %v4328 = vunpack.c.l.bf16 %v4295
        %v4329 = vunpack.c.l.bf16 %v4296
        %v4330 = vunpack.c.l.bf16 %v4297
        %v4331 = vunpack.c.l.bf16 %v4298
        %v4332 = vmul.f32 %v4299, %v1637
        %v4333 = vmul.f32 %v4300, %v1639
        %v4334 = vmul.f32 %v4301, %v1641
        %v4335 = vmul.f32 %v4302, %v1643
        %v4336 = vmul.f32 %v4303, %v1645
        %v4337 = vmul.f32 %v4304, %v1647
        %v4338 = vmul.f32 %v4305, %v1649
        %v4339 = vmul.f32 %v4306, %v1651
        %v4340 = vmul.f32 %v4307, %v1653
        %v4341 = vmul.f32 %v4308, %v1655
        %v4342 = vmul.f32 %v4309, %v1657
        %v4343 = vmul.f32 %v4310, %v1659
        %v4344 = vmul.f32 %v4311, %v1661
        %v4345 = vmul.f32 %v4312, %v1663
        %v4346 = vmul.f32 %v4313, %v1665
        %v4347 = vmul.f32 %v4314, %v1667
        %v4348 = vmul.f32 %v4315, %v1669
        %v4349 = vmul.f32 %v4316, %v1671
        %v4350 = vmul.f32 %v4317, %v1673
        %v4351 = vmul.f32 %v4318, %v1675
        %v4352 = vmul.f32 %v4319, %v1677
        %v4353 = vmul.f32 %v4320, %v1679
        %v4354 = vmul.f32 %v4321, %v1681
        %v4355 = vmul.f32 %v4322, %v1683
        %v4356 = vmul.f32 %v4323, %v1685
        %v4357 = vmul.f32 %v4324, %v1687
        %v4358 = vmul.f32 %v4325, %v1689
        %v4359 = vmul.f32 %v4326, %v1691
        %v4360 = vmul.f32 %v4327, %v1693
        %v4361 = vmul.f32 %v4328, %v1695
        %v4362 = vmul.f32 %v4329, %v1697
        %v4363 = vmul.f32 %v4330, %v1699
        %v4364 = vmul.f32 %v4331, %v1698
        %v4365 = vpack.c.bf16 %v4332, %v4332
        %v4366 = vpack.c.bf16 %v4333, %v4333
        %v4367 = vpack.c.bf16 %v4334, %v4334
        %v4368 = vpack.c.bf16 %v4335, %v4335
        %v4369 = vpack.c.bf16 %v4336, %v4336
        %v4370 = vpack.c.bf16 %v4337, %v4337
        %v4371 = vpack.c.bf16 %v4338, %v4338
        %v4372 = vpack.c.bf16 %v4339, %v4339
        %v4373 = vpack.c.bf16 %v4340, %v4340
        %v4374 = vpack.c.bf16 %v4341, %v4341
        %v4375 = vpack.c.bf16 %v4342, %v4342
        %v4376 = vpack.c.bf16 %v4343, %v4343
        %v4377 = vpack.c.bf16 %v4344, %v4344
        %v4378 = vpack.c.bf16 %v4345, %v4345
        %v4379 = vpack.c.bf16 %v4346, %v4346
        %v4380 = vpack.c.bf16 %v4347, %v4347
        %v4381 = vpack.c.bf16 %v4348, %v4348
        %v4382 = vpack.c.bf16 %v4349, %v4349
        %v4383 = vpack.c.bf16 %v4350, %v4350
        %v4384 = vpack.c.bf16 %v4351, %v4351
        %v4385 = vpack.c.bf16 %v4352, %v4352
        %v4386 = vpack.c.bf16 %v4353, %v4353
        %v4387 = vpack.c.bf16 %v4354, %v4354
        %v4388 = vpack.c.bf16 %v4355, %v4355
        %v4389 = vpack.c.bf16 %v4356, %v4356
        %v4390 = vpack.c.bf16 %v4357, %v4357
        %v4391 = vpack.c.bf16 %v4358, %v4358
        %v4392 = vpack.c.bf16 %v4359, %v4359
        %v4393 = vpack.c.bf16 %v4360, %v4360
        %v4394 = vpack.c.bf16 %v4361, %v4361
        %v4395 = vpack.c.bf16 %v4362, %v4362
        %v4396 = vpack.c.bf16 %v4363, %v4363
        %v4397 = vpack.c.bf16 %v4364, %v4364
        %v4399 = vshrl.u32 %v4365, 16
        %v4401 = vrot.slane %v4399, 7
        %v4402 = vrot.slane %v4401, 4
        %v4404 = vshrl.u32 %v4366, 16
        %v4406 = vrot.slane %v4404, 7
        %v4407 = vshll.u32 %v4366, 16
        %v4409 = vor.u32 %v4406, %v4407
        %v4410 = vsel %vm1801, %v4402, %v4409
        %v4411 = vrot.slane %v4406, 4
        %v4413 = vshrl.u32 %v4367, 16
        %v4415 = vrot.slane %v4413, 7
        %v4416 = vshll.u32 %v4367, 16
        %v4418 = vor.u32 %v4415, %v4416
        %v4419 = vsel %vm1801, %v4411, %v4418
        %v4420 = vrot.slane %v4415, 4
        %v4422 = vshrl.u32 %v4368, 16
        %v4424 = vrot.slane %v4422, 7
        %v4425 = vshll.u32 %v4368, 16
        %v4427 = vor.u32 %v4424, %v4425
        %v4428 = vsel %vm1801, %v4420, %v4427
        %v4429 = vrot.slane %v4424, 4
        %v4431 = vshrl.u32 %v4369, 16
        %v4433 = vrot.slane %v4431, 7
        %v4434 = vshll.u32 %v4369, 16
        %v4436 = vor.u32 %v4433, %v4434
        %v4437 = vsel %vm1801, %v4429, %v4436
        %v4438 = vrot.slane %v4433, 4
        %v4440 = vshrl.u32 %v4370, 16
        %v4442 = vrot.slane %v4440, 7
        %v4443 = vshll.u32 %v4370, 16
        %v4445 = vor.u32 %v4442, %v4443
        %v4446 = vsel %vm1801, %v4438, %v4445
        %v4447 = vrot.slane %v4442, 4
        %v4449 = vshrl.u32 %v4371, 16
        %v4451 = vrot.slane %v4449, 7
        %v4452 = vshll.u32 %v4371, 16
        %v4454 = vor.u32 %v4451, %v4452
        %v4455 = vsel %vm1801, %v4447, %v4454
        %v4456 = vrot.slane %v4451, 4
        %v4458 = vshrl.u32 %v4372, 16
        %v4460 = vrot.slane %v4458, 7
        %v4461 = vshll.u32 %v4372, 16
        %v4463 = vor.u32 %v4460, %v4461
        %v4464 = vsel %vm1801, %v4456, %v4463
        %v4465 = vrot.slane %v4460, 4
        %v4467 = vshrl.u32 %v4373, 16
        %v4469 = vrot.slane %v4467, 7
        %v4470 = vshll.u32 %v4373, 16
        %v4472 = vor.u32 %v4469, %v4470
        %v4473 = vsel %vm1801, %v4465, %v4472
        %v4474 = vrot.slane %v4469, 4
        %v4476 = vshrl.u32 %v4374, 16
        %v4478 = vrot.slane %v4476, 7
        %v4479 = vshll.u32 %v4374, 16
        %v4481 = vor.u32 %v4478, %v4479
        %v4482 = vsel %vm1801, %v4474, %v4481
        %v4483 = vrot.slane %v4478, 4
        %v4485 = vshrl.u32 %v4375, 16
        %v4487 = vrot.slane %v4485, 7
        %v4488 = vshll.u32 %v4375, 16
        %v4490 = vor.u32 %v4487, %v4488
        %v4491 = vsel %vm1801, %v4483, %v4490
        %v4492 = vrot.slane %v4487, 4
        %v4494 = vshrl.u32 %v4376, 16
        %v4496 = vrot.slane %v4494, 7
        %v4497 = vshll.u32 %v4376, 16
        %v4499 = vor.u32 %v4496, %v4497
        %v4500 = vsel %vm1801, %v4492, %v4499
        %v4501 = vrot.slane %v4496, 4
        %v4503 = vshrl.u32 %v4377, 16
        %v4505 = vrot.slane %v4503, 7
        %v4506 = vshll.u32 %v4377, 16
        %v4508 = vor.u32 %v4505, %v4506
        %v4509 = vsel %vm1801, %v4501, %v4508
        %v4510 = vrot.slane %v4505, 4
        %v4512 = vshrl.u32 %v4378, 16
        %v4514 = vrot.slane %v4512, 7
        %v4515 = vshll.u32 %v4378, 16
        %v4517 = vor.u32 %v4514, %v4515
        %v4518 = vsel %vm1801, %v4510, %v4517
        %v4519 = vrot.slane %v4514, 4
        %v4521 = vshrl.u32 %v4379, 16
        %v4523 = vrot.slane %v4521, 7
        %v4524 = vshll.u32 %v4379, 16
        %v4526 = vor.u32 %v4523, %v4524
        %v4527 = vsel %vm1801, %v4519, %v4526
        %v4528 = vrot.slane %v4523, 4
        %v4530 = vshrl.u32 %v4380, 16
        %v4532 = vrot.slane %v4530, 7
        %v4533 = vshll.u32 %v4380, 16
        %v4535 = vor.u32 %v4532, %v4533
        %v4536 = vsel %vm1801, %v4528, %v4535
        %v4537 = vrot.slane %v4532, 4
        %v4539 = vshrl.u32 %v4381, 16
        %v4541 = vrot.slane %v4539, 7
        %v4542 = vshll.u32 %v4381, 16
        %v4544 = vor.u32 %v4541, %v4542
        %v4545 = vsel %vm1801, %v4537, %v4544
        %v4546 = vrot.slane %v4541, 4
        %v4548 = vshrl.u32 %v4382, 16
        %v4550 = vrot.slane %v4548, 7
        %v4551 = vshll.u32 %v4382, 16
        %v4553 = vor.u32 %v4550, %v4551
        %v4554 = vsel %vm1801, %v4546, %v4553
        %v4555 = vrot.slane %v4550, 4
        %v4557 = vshrl.u32 %v4383, 16
        %v4559 = vrot.slane %v4557, 7
        %v4560 = vshll.u32 %v4383, 16
        %v4562 = vor.u32 %v4559, %v4560
        %v4563 = vsel %vm1801, %v4555, %v4562
        %v4564 = vrot.slane %v4559, 4
        %v4566 = vshrl.u32 %v4384, 16
        %v4568 = vrot.slane %v4566, 7
        %v4569 = vshll.u32 %v4384, 16
        %v4571 = vor.u32 %v4568, %v4569
        %v4572 = vsel %vm1801, %v4564, %v4571
        %v4573 = vrot.slane %v4568, 4
        %v4575 = vshrl.u32 %v4385, 16
        %v4577 = vrot.slane %v4575, 7
        %v4578 = vshll.u32 %v4385, 16
        %v4580 = vor.u32 %v4577, %v4578
        %v4581 = vsel %vm1801, %v4573, %v4580
        %v4582 = vrot.slane %v4577, 4
        %v4584 = vshrl.u32 %v4386, 16
        %v4586 = vrot.slane %v4584, 7
        %v4587 = vshll.u32 %v4386, 16
        %v4589 = vor.u32 %v4586, %v4587
        %v4590 = vsel %vm1801, %v4582, %v4589
        %v4591 = vrot.slane %v4586, 4
        %v4593 = vshrl.u32 %v4387, 16
        %v4595 = vrot.slane %v4593, 7
        %v4596 = vshll.u32 %v4387, 16
        %v4598 = vor.u32 %v4595, %v4596
        %v4599 = vsel %vm1801, %v4591, %v4598
        %v4600 = vrot.slane %v4595, 4
        %v4602 = vshrl.u32 %v4388, 16
        %v4604 = vrot.slane %v4602, 7
        %v4605 = vshll.u32 %v4388, 16
        %v4607 = vor.u32 %v4604, %v4605
        %v4608 = vsel %vm1801, %v4600, %v4607
        %v4609 = vrot.slane %v4604, 4
        %v4611 = vshrl.u32 %v4389, 16
        %v4613 = vrot.slane %v4611, 7
        %v4614 = vshll.u32 %v4389, 16
        %v4616 = vor.u32 %v4613, %v4614
        %v4617 = vsel %vm1801, %v4609, %v4616
        %v4618 = vrot.slane %v4613, 4
        %v4620 = vshrl.u32 %v4390, 16
        %v4622 = vrot.slane %v4620, 7
        %v4623 = vshll.u32 %v4390, 16
        %v4625 = vor.u32 %v4622, %v4623
        %v4626 = vsel %vm1801, %v4618, %v4625
        %v4627 = vrot.slane %v4622, 4
        %v4629 = vshrl.u32 %v4391, 16
        %v4631 = vrot.slane %v4629, 7
        %v4632 = vshll.u32 %v4391, 16
        %v4634 = vor.u32 %v4631, %v4632
        %v4635 = vsel %vm1801, %v4627, %v4634
        %v4636 = vrot.slane %v4631, 4
        %v4638 = vshrl.u32 %v4392, 16
        %v4640 = vrot.slane %v4638, 7
        %v4641 = vshll.u32 %v4392, 16
        %v4643 = vor.u32 %v4640, %v4641
        %v4644 = vsel %vm1801, %v4636, %v4643
        %v4645 = vrot.slane %v4640, 4
        %v4647 = vshrl.u32 %v4393, 16
        %v4649 = vrot.slane %v4647, 7
        %v4650 = vshll.u32 %v4393, 16
        %v4652 = vor.u32 %v4649, %v4650
        %v4653 = vsel %vm1801, %v4645, %v4652
        %v4654 = vrot.slane %v4649, 4
        %v4656 = vshrl.u32 %v4394, 16
        %v4658 = vrot.slane %v4656, 7
        %v4659 = vshll.u32 %v4394, 16
        %v4661 = vor.u32 %v4658, %v4659
        %v4662 = vsel %vm1801, %v4654, %v4661
        %v4663 = vrot.slane %v4658, 4
        %v4665 = vshrl.u32 %v4395, 16
        %v4667 = vrot.slane %v4665, 7
        %v4668 = vshll.u32 %v4395, 16
        %v4670 = vor.u32 %v4667, %v4668
        %v4671 = vsel %vm1801, %v4663, %v4670
        %v4672 = vrot.slane %v4667, 4
        %v4674 = vshrl.u32 %v4396, 16
        %v4676 = vrot.slane %v4674, 7
        %v4677 = vshll.u32 %v4396, 16
        %v4679 = vor.u32 %v4676, %v4677
        %v4680 = vsel %vm1801, %v4672, %v4679
        %v4681 = vrot.slane %v4676, 4
        %v4683 = vshrl.u32 %v4397, 16
        %v4685 = vrot.slane %v4683, 7
        %v4686 = vshll.u32 %v4397, 16
        %v4688 = vor.u32 %v4685, %v4686
        %v4689 = vsel %vm1801, %v4681, %v4688
        %4722 = vst [vmem:[#allocation3 + $0x18] sm:$0xf] %v4410
        %4723 = vst [vmem:[#allocation3 + $0x3c] sm:$0xf] %v4419
        %4724 = vst [vmem:[#allocation3 + $0x60] sm:$0xf] %v4428
        %4725 = vst [vmem:[#allocation3 + $0x84] sm:$0xf] %v4437
        %4726 = vst [vmem:[#allocation3 + $0xa8] sm:$0xf] %v4446
        %4727 = vst [vmem:[#allocation3 + $0xcc] sm:$0xf] %v4455
        %4728 = vst [vmem:[#allocation3 + $0xf0] sm:$0xf] %v4464
        %4729 = vst [vmem:[#allocation3 + $0x114] sm:$0xf] %v4473
        %4730 = vst [vmem:[#allocation3 + $0x138] sm:$0xf] %v4482
        %4731 = vst [vmem:[#allocation3 + $0x15c] sm:$0xf] %v4491
        %4732 = vst [vmem:[#allocation3 + $0x180] sm:$0xf] %v4500
        %4733 = vst [vmem:[#allocation3 + $0x1a4] sm:$0xf] %v4509
        %4734 = vst [vmem:[#allocation3 + $0x1c8] sm:$0xf] %v4518
        %4735 = vst [vmem:[#allocation3 + $0x1ec] sm:$0xf] %v4527
        %4736 = vst [vmem:[#allocation3 + $0x210] sm:$0xf] %v4536
        %4737 = vst [vmem:[#allocation3 + $0x234] sm:$0xf] %v4545
        %4738 = vst [vmem:[#allocation3 + $0x258] sm:$0xf] %v4554
        %4739 = vst [vmem:[#allocation3 + $0x27c] sm:$0xf] %v4563
        %4740 = vst [vmem:[#allocation3 + $0x2a0] sm:$0xf] %v4572
        %4741 = vst [vmem:[#allocation3 + $0x2c4] sm:$0xf] %v4581
        %4742 = vst [vmem:[#allocation3 + $0x2e8] sm:$0xf] %v4590
        %4743 = vst [vmem:[#allocation3 + $0x30c] sm:$0xf] %v4599
        %4744 = vst [vmem:[#allocation3 + $0x330] sm:$0xf] %v4608
        %4745 = vst [vmem:[#allocation3 + $0x354] sm:$0xf] %v4617
        %4746 = vst [vmem:[#allocation3 + $0x378] sm:$0xf] %v4626
        %4747 = vst [vmem:[#allocation3 + $0x39c] sm:$0xf] %v4635
        %4748 = vst [vmem:[#allocation3 + $0x3c0] sm:$0xf] %v4644
        %4749 = vst [vmem:[#allocation3 + $0x3e4] sm:$0xf] %v4653
        %4750 = vst [vmem:[#allocation3 + $0x408] sm:$0xf] %v4662
        %4751 = vst [vmem:[#allocation3 + $0x42c] sm:$0xf] %v4671
        %4752 = vst [vmem:[#allocation3 + $0x450] sm:$0xf] %v4680
        %4753 = vst [vmem:[#allocation3 + $0x474] sm:$0xf] %v4689
        %v4754 = vld [vmem:[#allocation2 + $0x14] sm:$0xf]
        %v4755 = vld [vmem:[#allocation2 + $0x18] sm:$0xf]
        %v4756 = vld [vmem:[#allocation2 + $0x1c] sm:$0xf]
        %v4757 = vld [vmem:[#allocation2 + $0x20] sm:$0xf]
        %v4758 = vld [vmem:[#allocation2 + $0x24] sm:$0xf]
        %v4759 = vld [vmem:[#allocation2 + $0x28] sm:$0xf]
        %v4760 = vld [vmem:[#allocation2 + $0x2c] sm:$0xf]
        %v4761 = vld [vmem:[#allocation2 + $0x30] sm:$0xf]
        %v4762 = vld [vmem:[#allocation2 + $0x34] sm:$0xf]
        %v4763 = vld [vmem:[#allocation2 + $0x38] sm:$0xf]
        %v4764 = vld [vmem:[#allocation2 + $0x3c] sm:$0xf]
        %v4765 = vld [vmem:[#allocation2 + $0x40] sm:$0xf]
        %v4766 = vld [vmem:[#allocation2 + $0x44] sm:$0xf]
        %v4767 = vld [vmem:[#allocation2 + $0x48] sm:$0xf]
        %v4768 = vld [vmem:[#allocation2 + $0x4c] sm:$0xf]
        %v4769 = vld [vmem:[#allocation2 + $0x50] sm:$0xf]
        %v4770 = vld [vmem:[#allocation2 + $0x54] sm:$0xf]
        %v4771 = vld [vmem:[#allocation2 + $0x58] sm:$0xf]
        %v4772 = vld [vmem:[#allocation2 + $0x5c] sm:$0xf]
        %v4773 = vld [vmem:[#allocation2 + $0x60] sm:$0xf]
        %v4774 = vld [vmem:[#allocation2 + $0x64] sm:$0xf]
        %v4775 = vld [vmem:[#allocation2 + $0x68] sm:$0xf]
        %v4776 = vld [vmem:[#allocation2 + $0x6c] sm:$0xf]
        %v4777 = vld [vmem:[#allocation2 + $0x70] sm:$0xf]
        %v4778 = vld [vmem:[#allocation2 + $0x74] sm:$0xf]
        %v4779 = vld [vmem:[#allocation2 + $0x78] sm:$0xf]
        %v4780 = vld [vmem:[#allocation2 + $0x7c] sm:$0xf]
        %v4781 = vld [vmem:[#allocation2 + $0x80] sm:$0xf]
        %v4782 = vld [vmem:[#allocation2 + $0x84] sm:$0xf]
        %v4783 = vld [vmem:[#allocation2 + $0x88] sm:$0xf]
        %v4784 = vld [vmem:[#allocation2 + $0x8c] sm:$0xf]
        %v4785 = vld [vmem:[#allocation2 + $0x90] sm:$0xf]
        %4786 = vst [vmem:[#allocation3 + $0x1c] sm:$0xf] %v4754
        %4787 = vst [vmem:[#allocation3 + $0x40] sm:$0xf] %v4755
        %4788 = vst [vmem:[#allocation3 + $0x64] sm:$0xf] %v4756
        %4789 = vst [vmem:[#allocation3 + $0x88] sm:$0xf] %v4757
        %4790 = vst [vmem:[#allocation3 + $0xac] sm:$0xf] %v4758
        %4791 = vst [vmem:[#allocation3 + $0xd0] sm:$0xf] %v4759
        %4792 = vst [vmem:[#allocation3 + $0xf4] sm:$0xf] %v4760
        %4793 = vst [vmem:[#allocation3 + $0x118] sm:$0xf] %v4761
        %4794 = vst [vmem:[#allocation3 + $0x13c] sm:$0xf] %v4762
        %4795 = vst [vmem:[#allocation3 + $0x160] sm:$0xf] %v4763
        %4796 = vst [vmem:[#allocation3 + $0x184] sm:$0xf] %v4764
        %4797 = vst [vmem:[#allocation3 + $0x1a8] sm:$0xf] %v4765
        %4798 = vst [vmem:[#allocation3 + $0x1cc] sm:$0xf] %v4766
        %4799 = vst [vmem:[#allocation3 + $0x1f0] sm:$0xf] %v4767
        %4800 = vst [vmem:[#allocation3 + $0x214] sm:$0xf] %v4768
        %4801 = vst [vmem:[#allocation3 + $0x238] sm:$0xf] %v4769
        %4802 = vst [vmem:[#allocation3 + $0x25c] sm:$0xf] %v4770
        %4803 = vst [vmem:[#allocation3 + $0x280] sm:$0xf] %v4771
        %4804 = vst [vmem:[#allocation3 + $0x2a4] sm:$0xf] %v4772
        %4805 = vst [vmem:[#allocation3 + $0x2c8] sm:$0xf] %v4773
        %4806 = vst [vmem:[#allocation3 + $0x2ec] sm:$0xf] %v4774
        %4807 = vst [vmem:[#allocation3 + $0x310] sm:$0xf] %v4775
        %4808 = vst [vmem:[#allocation3 + $0x334] sm:$0xf] %v4776
        %4809 = vst [vmem:[#allocation3 + $0x358] sm:$0xf] %v4777
        %4810 = vst [vmem:[#allocation3 + $0x37c] sm:$0xf] %v4778
        %4811 = vst [vmem:[#allocation3 + $0x3a0] sm:$0xf] %v4779
        %4812 = vst [vmem:[#allocation3 + $0x3c4] sm:$0xf] %v4780
        %4813 = vst [vmem:[#allocation3 + $0x3e8] sm:$0xf] %v4781
        %4814 = vst [vmem:[#allocation3 + $0x40c] sm:$0xf] %v4782
        %4815 = vst [vmem:[#allocation3 + $0x430] sm:$0xf] %v4783
        %4816 = vst [vmem:[#allocation3 + $0x454] sm:$0xf] %v4784
        %4817 = vst [vmem:[#allocation3 + $0x478] sm:$0xf] %v4785
        %v4818 = vld [vmem:[#allocation2 + $0x14] sm:$0xf]
        %v4819 = vld [vmem:[#allocation2 + $0x18] sm:$0xf]
        %v4820 = vld [vmem:[#allocation2 + $0x1c] sm:$0xf]
        %v4821 = vld [vmem:[#allocation2 + $0x20] sm:$0xf]
        %v4822 = vld [vmem:[#allocation2 + $0x24] sm:$0xf]
        %v4823 = vld [vmem:[#allocation2 + $0x28] sm:$0xf]
        %v4824 = vld [vmem:[#allocation2 + $0x2c] sm:$0xf]
        %v4825 = vld [vmem:[#allocation2 + $0x30] sm:$0xf]
        %v4826 = vld [vmem:[#allocation2 + $0x34] sm:$0xf]
        %v4827 = vld [vmem:[#allocation2 + $0x38] sm:$0xf]
        %v4828 = vld [vmem:[#allocation2 + $0x3c] sm:$0xf]
        %v4829 = vld [vmem:[#allocation2 + $0x40] sm:$0xf]
        %v4830 = vld [vmem:[#allocation2 + $0x44] sm:$0xf]
        %v4831 = vld [vmem:[#allocation2 + $0x48] sm:$0xf]
        %v4832 = vld [vmem:[#allocation2 + $0x4c] sm:$0xf]
        %v4833 = vld [vmem:[#allocation2 + $0x50] sm:$0xf]
        %v4834 = vld [vmem:[#allocation2 + $0x54] sm:$0xf]
        %v4835 = vld [vmem:[#allocation2 + $0x58] sm:$0xf]
        %v4836 = vld [vmem:[#allocation2 + $0x5c] sm:$0xf]
        %v4837 = vld [vmem:[#allocation2 + $0x60] sm:$0xf]
        %v4838 = vld [vmem:[#allocation2 + $0x64] sm:$0xf]
        %v4839 = vld [vmem:[#allocation2 + $0x68] sm:$0xf]
        %v4840 = vld [vmem:[#allocation2 + $0x6c] sm:$0xf]
        %v4841 = vld [vmem:[#allocation2 + $0x70] sm:$0xf]
        %v4842 = vld [vmem:[#allocation2 + $0x74] sm:$0xf]
        %v4843 = vld [vmem:[#allocation2 + $0x78] sm:$0xf]
        %v4844 = vld [vmem:[#allocation2 + $0x7c] sm:$0xf]
        %v4845 = vld [vmem:[#allocation2 + $0x80] sm:$0xf]
        %v4846 = vld [vmem:[#allocation2 + $0x84] sm:$0xf]
        %v4847 = vld [vmem:[#allocation2 + $0x88] sm:$0xf]
        %v4848 = vld [vmem:[#allocation2 + $0x8c] sm:$0xf]
        %v4849 = vld [vmem:[#allocation2 + $0x90] sm:$0xf]
        %v4850 = vld [vmem:[#allocation2 + $0x94] sm:$0x1]
        %v4851 = vunpack.c.l.bf16 %v4818
        %v4852 = vunpack.c.l.bf16 %v4819
        %v4853 = vunpack.c.l.bf16 %v4820
        %v4854 = vunpack.c.l.bf16 %v4821
        %v4855 = vunpack.c.l.bf16 %v4822
        %v4856 = vunpack.c.l.bf16 %v4823
        %v4857 = vunpack.c.l.bf16 %v4824
        %v4858 = vunpack.c.l.bf16 %v4825
        %v4859 = vunpack.c.l.bf16 %v4826
        %v4860 = vunpack.c.l.bf16 %v4827
        %v4861 = vunpack.c.l.bf16 %v4828
        %v4862 = vunpack.c.l.bf16 %v4829
        %v4863 = vunpack.c.l.bf16 %v4830
        %v4864 = vunpack.c.l.bf16 %v4831
        %v4865 = vunpack.c.l.bf16 %v4832
        %v4866 = vunpack.c.l.bf16 %v4833
        %v4867 = vunpack.c.l.bf16 %v4834
        %v4868 = vunpack.c.l.bf16 %v4835
        %v4869 = vunpack.c.l.bf16 %v4836
        %v4870 = vunpack.c.l.bf16 %v4837
        %v4871 = vunpack.c.l.bf16 %v4838
        %v4872 = vunpack.c.l.bf16 %v4839
        %v4873 = vunpack.c.l.bf16 %v4840
        %v4874 = vunpack.c.l.bf16 %v4841
        %v4875 = vunpack.c.l.bf16 %v4842
        %v4876 = vunpack.c.l.bf16 %v4843
        %v4877 = vunpack.c.l.bf16 %v4844
        %v4878 = vunpack.c.l.bf16 %v4845
        %v4879 = vunpack.c.l.bf16 %v4846
        %v4880 = vunpack.c.l.bf16 %v4847
        %v4881 = vunpack.c.l.bf16 %v4848
        %v4882 = vunpack.c.l.bf16 %v4849
        %v4883 = vunpack.c.l.bf16 %v4850
        %v4884 = vmul.f32 %v4851, %v2641
        %v4885 = vmul.f32 %v4852, %v2643
        %v4886 = vmul.f32 %v4853, %v2645
        %v4887 = vmul.f32 %v4854, %v2647
        %v4888 = vmul.f32 %v4855, %v2649
        %v4889 = vmul.f32 %v4856, %v2651
        %v4890 = vmul.f32 %v4857, %v2653
        %v4891 = vmul.f32 %v4858, %v2655
        %v4892 = vmul.f32 %v4859, %v2657
        %v4893 = vmul.f32 %v4860, %v2659
        %v4894 = vmul.f32 %v4861, %v2661
        %v4895 = vmul.f32 %v4862, %v2663
        %v4896 = vmul.f32 %v4863, %v2665
        %v4897 = vmul.f32 %v4864, %v2667
        %v4898 = vmul.f32 %v4865, %v2669
        %v4899 = vmul.f32 %v4866, %v2671
        %v4900 = vmul.f32 %v4867, %v2673
        %v4901 = vmul.f32 %v4868, %v2675
        %v4902 = vmul.f32 %v4869, %v2677
        %v4903 = vmul.f32 %v4870, %v2679
        %v4904 = vmul.f32 %v4871, %v2681
        %v4905 = vmul.f32 %v4872, %v2683
        %v4906 = vmul.f32 %v4873, %v2685
        %v4907 = vmul.f32 %v4874, %v2687
        %v4908 = vmul.f32 %v4875, %v2689
        %v4909 = vmul.f32 %v4876, %v2691
        %v4910 = vmul.f32 %v4877, %v2693
        %v4911 = vmul.f32 %v4878, %v2695
        %v4912 = vmul.f32 %v4879, %v2697
        %v4913 = vmul.f32 %v4880, %v2699
        %v4914 = vmul.f32 %v4881, %v2701
        %v4915 = vmul.f32 %v4882, %v2703
        %v4916 = vmul.f32 %v4883, %v2702
        %v4917 = vpack.c.bf16 %v4884, %v4884
        %v4918 = vpack.c.bf16 %v4885, %v4885
        %v4919 = vpack.c.bf16 %v4886, %v4886
        %v4920 = vpack.c.bf16 %v4887, %v4887
        %v4921 = vpack.c.bf16 %v4888, %v4888
        %v4922 = vpack.c.bf16 %v4889, %v4889
        %v4923 = vpack.c.bf16 %v4890, %v4890
        %v4924 = vpack.c.bf16 %v4891, %v4891
        %v4925 = vpack.c.bf16 %v4892, %v4892
        %v4926 = vpack.c.bf16 %v4893, %v4893
        %v4927 = vpack.c.bf16 %v4894, %v4894
        %v4928 = vpack.c.bf16 %v4895, %v4895
        %v4929 = vpack.c.bf16 %v4896, %v4896
        %v4930 = vpack.c.bf16 %v4897, %v4897
        %v4931 = vpack.c.bf16 %v4898, %v4898
        %v4932 = vpack.c.bf16 %v4899, %v4899
        %v4933 = vpack.c.bf16 %v4900, %v4900
        %v4934 = vpack.c.bf16 %v4901, %v4901
        %v4935 = vpack.c.bf16 %v4902, %v4902
        %v4936 = vpack.c.bf16 %v4903, %v4903
        %v4937 = vpack.c.bf16 %v4904, %v4904
        %v4938 = vpack.c.bf16 %v4905, %v4905
        %v4939 = vpack.c.bf16 %v4906, %v4906
        %v4940 = vpack.c.bf16 %v4907, %v4907
        %v4941 = vpack.c.bf16 %v4908, %v4908
        %v4942 = vpack.c.bf16 %v4909, %v4909
        %v4943 = vpack.c.bf16 %v4910, %v4910
        %v4944 = vpack.c.bf16 %v4911, %v4911
        %v4945 = vpack.c.bf16 %v4912, %v4912
        %v4946 = vpack.c.bf16 %v4913, %v4913
        %v4947 = vpack.c.bf16 %v4914, %v4914
        %v4948 = vpack.c.bf16 %v4915, %v4915
        %v4949 = vpack.c.bf16 %v4916, %v4916
        %v4951 = vshrl.u32 %v4917, 16
        %v4953 = vrot.slane %v4951, 4
        %v4954 = vshll.u32 %v4917, 16
        %v4956 = vrot.slane %v4954, 5
        %v4957 = vor.u32 %v4953, %v4956
        %v4958 = vrot.slane %v4957, 4
        %v4960 = vshll.u32 %v4918, 16
        %v4962 = vrot.slane %v4960, 5
        %v4963 = vsel %vm2805, %v4958, %v4962
        %v4964 = vshrl.u32 %v4918, 16
        %v4966 = vrot.slane %v4964, 4
        %v4967 = vor.u32 %v4966, %v4962
        %v4968 = vrot.slane %v4967, 4
        %v4970 = vshll.u32 %v4919, 16
        %v4972 = vrot.slane %v4970, 5
        %v4973 = vsel %vm2805, %v4968, %v4972
        %v4974 = vshrl.u32 %v4919, 16
        %v4976 = vrot.slane %v4974, 4
        %v4977 = vor.u32 %v4976, %v4972
        %v4978 = vrot.slane %v4977, 4
        %v4980 = vshll.u32 %v4920, 16
        %v4982 = vrot.slane %v4980, 5
        %v4983 = vsel %vm2805, %v4978, %v4982
        %v4984 = vshrl.u32 %v4920, 16
        %v4986 = vrot.slane %v4984, 4
        %v4987 = vor.u32 %v4986, %v4982
        %v4988 = vrot.slane %v4987, 4
        %v4990 = vshll.u32 %v4921, 16
        %v4992 = vrot.slane %v4990, 5
        %v4993 = vsel %vm2805, %v4988, %v4992
        %v4994 = vshrl.u32 %v4921, 16
        %v4996 = vrot.slane %v4994, 4
        %v4997 = vor.u32 %v4996, %v4992
        %v4998 = vrot.slane %v4997, 4
        %v5000 = vshll.u32 %v4922, 16
        %v5002 = vrot.slane %v5000, 5
        %v5003 = vsel %vm2805, %v4998, %v5002
        %v5004 = vshrl.u32 %v4922, 16
        %v5006 = vrot.slane %v5004, 4
        %v5007 = vor.u32 %v5006, %v5002
        %v5008 = vrot.slane %v5007, 4
        %v5010 = vshll.u32 %v4923, 16
        %v5012 = vrot.slane %v5010, 5
        %v5013 = vsel %vm2805, %v5008, %v5012
        %v5014 = vshrl.u32 %v4923, 16
        %v5016 = vrot.slane %v5014, 4
        %v5017 = vor.u32 %v5016, %v5012
        %v5018 = vrot.slane %v5017, 4
        %v5020 = vshll.u32 %v4924, 16
        %v5022 = vrot.slane %v5020, 5
        %v5023 = vsel %vm2805, %v5018, %v5022
        %v5024 = vshrl.u32 %v4924, 16
        %v5026 = vrot.slane %v5024, 4
        %v5027 = vor.u32 %v5026, %v5022
        %v5028 = vrot.slane %v5027, 4
        %v5030 = vshll.u32 %v4925, 16
        %v5032 = vrot.slane %v5030, 5
        %v5033 = vsel %vm2805, %v5028, %v5032
        %v5034 = vshrl.u32 %v4925, 16
        %v5036 = vrot.slane %v5034, 4
        %v5037 = vor.u32 %v5036, %v5032
        %v5038 = vrot.slane %v5037, 4
        %v5040 = vshll.u32 %v4926, 16
        %v5042 = vrot.slane %v5040, 5
        %v5043 = vsel %vm2805, %v5038, %v5042
        %v5044 = vshrl.u32 %v4926, 16
        %v5046 = vrot.slane %v5044, 4
        %v5047 = vor.u32 %v5046, %v5042
        %v5048 = vrot.slane %v5047, 4
        %v5050 = vshll.u32 %v4927, 16
        %v5052 = vrot.slane %v5050, 5
        %v5053 = vsel %vm2805, %v5048, %v5052
        %v5054 = vshrl.u32 %v4927, 16
        %v5056 = vrot.slane %v5054, 4
        %v5057 = vor.u32 %v5056, %v5052
        %v5058 = vrot.slane %v5057, 4
        %v5060 = vshll.u32 %v4928, 16
        %v5062 = vrot.slane %v5060, 5
        %v5063 = vsel %vm2805, %v5058, %v5062
        %v5064 = vshrl.u32 %v4928, 16
        %v5066 = vrot.slane %v5064, 4
        %v5067 = vor.u32 %v5066, %v5062
        %v5068 = vrot.slane %v5067, 4
        %v5070 = vshll.u32 %v4929, 16
        %v5072 = vrot.slane %v5070, 5
        %v5073 = vsel %vm2805, %v5068, %v5072
        %v5074 = vshrl.u32 %v4929, 16
        %v5076 = vrot.slane %v5074, 4
        %v5077 = vor.u32 %v5076, %v5072
        %v5078 = vrot.slane %v5077, 4
        %v5080 = vshll.u32 %v4930, 16
        %v5082 = vrot.slane %v5080, 5
        %v5083 = vsel %vm2805, %v5078, %v5082
        %v5084 = vshrl.u32 %v4930, 16
        %v5086 = vrot.slane %v5084, 4
        %v5087 = vor.u32 %v5086, %v5082
        %v5088 = vrot.slane %v5087, 4
        %v5090 = vshll.u32 %v4931, 16
        %v5092 = vrot.slane %v5090, 5
        %v5093 = vsel %vm2805, %v5088, %v5092
        %v5094 = vshrl.u32 %v4931, 16
        %v5096 = vrot.slane %v5094, 4
        %v5097 = vor.u32 %v5096, %v5092
        %v5098 = vrot.slane %v5097, 4
        %v5100 = vshll.u32 %v4932, 16
        %v5102 = vrot.slane %v5100, 5
        %v5103 = vsel %vm2805, %v5098, %v5102
        %v5104 = vshrl.u32 %v4932, 16
        %v5106 = vrot.slane %v5104, 4
        %v5107 = vor.u32 %v5106, %v5102
        %v5108 = vrot.slane %v5107, 4
        %v5110 = vshll.u32 %v4933, 16
        %v5112 = vrot.slane %v5110, 5
        %v5113 = vsel %vm2805, %v5108, %v5112
        %v5114 = vshrl.u32 %v4933, 16
        %v5116 = vrot.slane %v5114, 4
        %v5117 = vor.u32 %v5116, %v5112
        %v5118 = vrot.slane %v5117, 4
        %v5120 = vshll.u32 %v4934, 16
        %v5122 = vrot.slane %v5120, 5
        %v5123 = vsel %vm2805, %v5118, %v5122
        %v5124 = vshrl.u32 %v4934, 16
        %v5126 = vrot.slane %v5124, 4
        %v5127 = vor.u32 %v5126, %v5122
        %v5128 = vrot.slane %v5127, 4
        %v5130 = vshll.u32 %v4935, 16
        %v5132 = vrot.slane %v5130, 5
        %v5133 = vsel %vm2805, %v5128, %v5132
        %v5134 = vshrl.u32 %v4935, 16
        %v5136 = vrot.slane %v5134, 4
        %v5137 = vor.u32 %v5136, %v5132
        %v5138 = vrot.slane %v5137, 4
        %v5140 = vshll.u32 %v4936, 16
        %v5142 = vrot.slane %v5140, 5
        %v5143 = vsel %vm2805, %v5138, %v5142
        %v5144 = vshrl.u32 %v4936, 16
        %v5146 = vrot.slane %v5144, 4
        %v5147 = vor.u32 %v5146, %v5142
        %v5148 = vrot.slane %v5147, 4
        %v5150 = vshll.u32 %v4937, 16
        %v5152 = vrot.slane %v5150, 5
        %v5153 = vsel %vm2805, %v5148, %v5152
        %v5154 = vshrl.u32 %v4937, 16
        %v5156 = vrot.slane %v5154, 4
        %v5157 = vor.u32 %v5156, %v5152
        %v5158 = vrot.slane %v5157, 4
        %v5160 = vshll.u32 %v4938, 16
        %v5162 = vrot.slane %v5160, 5
        %v5163 = vsel %vm2805, %v5158, %v5162
        %v5164 = vshrl.u32 %v4938, 16
        %v5166 = vrot.slane %v5164, 4
        %v5167 = vor.u32 %v5166, %v5162
        %v5168 = vrot.slane %v5167, 4
        %v5170 = vshll.u32 %v4939, 16
        %v5172 = vrot.slane %v5170, 5
        %v5173 = vsel %vm2805, %v5168, %v5172
        %v5174 = vshrl.u32 %v4939, 16
        %v5176 = vrot.slane %v5174, 4
        %v5177 = vor.u32 %v5176, %v5172
        %v5178 = vrot.slane %v5177, 4
        %v5180 = vshll.u32 %v4940, 16
        %v5182 = vrot.slane %v5180, 5
        %v5183 = vsel %vm2805, %v5178, %v5182
        %v5184 = vshrl.u32 %v4940, 16
        %v5186 = vrot.slane %v5184, 4
        %v5187 = vor.u32 %v5186, %v5182
        %v5188 = vrot.slane %v5187, 4
        %v5190 = vshll.u32 %v4941, 16
        %v5192 = vrot.slane %v5190, 5
        %v5193 = vsel %vm2805, %v5188, %v5192
        %v5194 = vshrl.u32 %v4941, 16
        %v5196 = vrot.slane %v5194, 4
        %v5197 = vor.u32 %v5196, %v5192
        %v5198 = vrot.slane %v5197, 4
        %v5200 = vshll.u32 %v4942, 16
        %v5202 = vrot.slane %v5200, 5
        %v5203 = vsel %vm2805, %v5198, %v5202
        %v5204 = vshrl.u32 %v4942, 16
        %v5206 = vrot.slane %v5204, 4
        %v5207 = vor.u32 %v5206, %v5202
        %v5208 = vrot.slane %v5207, 4
        %v5210 = vshll.u32 %v4943, 16
        %v5212 = vrot.slane %v5210, 5
        %v5213 = vsel %vm2805, %v5208, %v5212
        %v5214 = vshrl.u32 %v4943, 16
        %v5216 = vrot.slane %v5214, 4
        %v5217 = vor.u32 %v5216, %v5212
        %v5218 = vrot.slane %v5217, 4
        %v5220 = vshll.u32 %v4944, 16
        %v5222 = vrot.slane %v5220, 5
        %v5223 = vsel %vm2805, %v5218, %v5222
        %v5224 = vshrl.u32 %v4944, 16
        %v5226 = vrot.slane %v5224, 4
        %v5227 = vor.u32 %v5226, %v5222
        %v5228 = vrot.slane %v5227, 4
        %v5230 = vshll.u32 %v4945, 16
        %v5232 = vrot.slane %v5230, 5
        %v5233 = vsel %vm2805, %v5228, %v5232
        %v5234 = vshrl.u32 %v4945, 16
        %v5236 = vrot.slane %v5234, 4
        %v5237 = vor.u32 %v5236, %v5232
        %v5238 = vrot.slane %v5237, 4
        %v5240 = vshll.u32 %v4946, 16
        %v5242 = vrot.slane %v5240, 5
        %v5243 = vsel %vm2805, %v5238, %v5242
        %v5244 = vshrl.u32 %v4946, 16
        %v5246 = vrot.slane %v5244, 4
        %v5247 = vor.u32 %v5246, %v5242
        %v5248 = vrot.slane %v5247, 4
        %v5250 = vshll.u32 %v4947, 16
        %v5252 = vrot.slane %v5250, 5
        %v5253 = vsel %vm2805, %v5248, %v5252
        %v5254 = vshrl.u32 %v4947, 16
        %v5256 = vrot.slane %v5254, 4
        %v5257 = vor.u32 %v5256, %v5252
        %v5258 = vrot.slane %v5257, 4
        %v5260 = vshll.u32 %v4948, 16
        %v5262 = vrot.slane %v5260, 5
        %v5263 = vsel %vm2805, %v5258, %v5262
        %v5264 = vshrl.u32 %v4948, 16
        %v5266 = vrot.slane %v5264, 4
        %v5267 = vor.u32 %v5266, %v5262
        %v5268 = vrot.slane %v5267, 4
        %v5270 = vshll.u32 %v4949, 16
        %v5272 = vrot.slane %v5270, 5
        %v5273 = vsel %vm2805, %v5268, %v5272
        %5306 = vst [vmem:[#allocation3 + $0x20] sm:$0xf] %v4963
        %5307 = vst [vmem:[#allocation3 + $0x44] sm:$0xf] %v4973
        %5308 = vst [vmem:[#allocation3 + $0x68] sm:$0xf] %v4983
        %5309 = vst [vmem:[#allocation3 + $0x8c] sm:$0xf] %v4993
        %5310 = vst [vmem:[#allocation3 + $0xb0] sm:$0xf] %v5003
        %5311 = vst [vmem:[#allocation3 + $0xd4] sm:$0xf] %v5013
        %5312 = vst [vmem:[#allocation3 + $0xf8] sm:$0xf] %v5023
        %5313 = vst [vmem:[#allocation3 + $0x11c] sm:$0xf] %v5033
        %5314 = vst [vmem:[#allocation3 + $0x140] sm:$0xf] %v5043
        %5315 = vst [vmem:[#allocation3 + $0x164] sm:$0xf] %v5053
        %5316 = vst [vmem:[#allocation3 + $0x188] sm:$0xf] %v5063
        %5317 = vst [vmem:[#allocation3 + $0x1ac] sm:$0xf] %v5073
        %5318 = vst [vmem:[#allocation3 + $0x1d0] sm:$0xf] %v5083
        %5319 = vst [vmem:[#allocation3 + $0x1f4] sm:$0xf] %v5093
        %5320 = vst [vmem:[#allocation3 + $0x218] sm:$0xf] %v5103
        %5321 = vst [vmem:[#allocation3 + $0x23c] sm:$0xf] %v5113
        %5322 = vst [vmem:[#allocation3 + $0x260] sm:$0xf] %v5123
        %5323 = vst [vmem:[#allocation3 + $0x284] sm:$0xf] %v5133
        %5324 = vst [vmem:[#allocation3 + $0x2a8] sm:$0xf] %v5143
        %5325 = vst [vmem:[#allocation3 + $0x2cc] sm:$0xf] %v5153
        %5326 = vst [vmem:[#allocation3 + $0x2f0] sm:$0xf] %v5163
        %5327 = vst [vmem:[#allocation3 + $0x314] sm:$0xf] %v5173
        %5328 = vst [vmem:[#allocation3 + $0x338] sm:$0xf] %v5183
        %5329 = vst [vmem:[#allocation3 + $0x35c] sm:$0xf] %v5193
        %5330 = vst [vmem:[#allocation3 + $0x380] sm:$0xf] %v5203
        %5331 = vst [vmem:[#allocation3 + $0x3a4] sm:$0xf] %v5213
        %5332 = vst [vmem:[#allocation3 + $0x3c8] sm:$0xf] %v5223
        %5333 = vst [vmem:[#allocation3 + $0x3ec] sm:$0xf] %v5233
        %5334 = vst [vmem:[#allocation3 + $0x410] sm:$0xf] %v5243
        %5335 = vst [vmem:[#allocation3 + $0x434] sm:$0xf] %v5253
        %5336 = vst [vmem:[#allocation3 + $0x458] sm:$0xf] %v5263
        %5337 = vst [vmem:[#allocation3 + $0x47c] sm:$0xf] %v5273
        %v5338 = vld [vmem:[#allocation3] sm:$0xff]
        %v5339 = vld [vmem:[#allocation3 + $0x8] sm:$0xff]
        %v5340 = vld [vmem:[#allocation3 + $0x10] sm:$0xff]
        %v5341 = vld [vmem:[#allocation3 + $0x18] sm:$0xff]
        %v5342 = vld [vmem:[#allocation3 + $0x20] sm:$0xf]
        %v5343 = vld [vmem:[#allocation3 + $0x24] sm:$0xff]
        %v5344 = vld [vmem:[#allocation3 + $0x2c] sm:$0xff]
        %v5345 = vld [vmem:[#allocation3 + $0x34] sm:$0xff]
        %v5346 = vld [vmem:[#allocation3 + $0x3c] sm:$0xff]
        %v5347 = vld [vmem:[#allocation3 + $0x44] sm:$0xf]
        %v5348 = vld [vmem:[#allocation3 + $0x48] sm:$0xff]
        %v5349 = vld [vmem:[#allocation3 + $0x50] sm:$0xff]
        %v5350 = vld [vmem:[#allocation3 + $0x58] sm:$0xff]
        %v5351 = vld [vmem:[#allocation3 + $0x60] sm:$0xff]
        %v5352 = vld [vmem:[#allocation3 + $0x68] sm:$0xf]
        %v5353 = vld [vmem:[#allocation3 + $0x6c] sm:$0xff]
        %v5354 = vld [vmem:[#allocation3 + $0x74] sm:$0xff]
        %v5355 = vld [vmem:[#allocation3 + $0x7c] sm:$0xff]
        %v5356 = vld [vmem:[#allocation3 + $0x84] sm:$0xff]
        %v5357 = vld [vmem:[#allocation3 + $0x8c] sm:$0xf]
        %v5358 = vld [vmem:[#allocation3 + $0x90] sm:$0xff]
        %v5359 = vld [vmem:[#allocation3 + $0x98] sm:$0xff]
        %v5360 = vld [vmem:[#allocation3 + $0xa0] sm:$0xff]
        %v5361 = vld [vmem:[#allocation3 + $0xa8] sm:$0xff]
        %v5362 = vld [vmem:[#allocation3 + $0xb0] sm:$0xf]
        %v5363 = vld [vmem:[#allocation3 + $0xb4] sm:$0xff]
        %v5364 = vld [vmem:[#allocation3 + $0xbc] sm:$0xff]
        %v5365 = vld [vmem:[#allocation3 + $0xc4] sm:$0xff]
        %v5366 = vld [vmem:[#allocation3 + $0xcc] sm:$0xff]
        %v5367 = vld [vmem:[#allocation3 + $0xd4] sm:$0xf]
        %v5368 = vld [vmem:[#allocation3 + $0xd8] sm:$0xff]
        %v5369 = vld [vmem:[#allocation3 + $0xe0] sm:$0xff]
        %v5370 = vld [vmem:[#allocation3 + $0xe8] sm:$0xff]
        %v5371 = vld [vmem:[#allocation3 + $0xf0] sm:$0xff]
        %v5372 = vld [vmem:[#allocation3 + $0xf8] sm:$0xf]
        %v5373 = vld [vmem:[#allocation3 + $0xfc] sm:$0xff]
        %v5374 = vld [vmem:[#allocation3 + $0x104] sm:$0xff]
        %v5375 = vld [vmem:[#allocation3 + $0x10c] sm:$0xff]
        %v5376 = vld [vmem:[#allocation3 + $0x114] sm:$0xff]
        %v5377 = vld [vmem:[#allocation3 + $0x11c] sm:$0xf]
        %v5378 = vld [vmem:[#allocation3 + $0x120] sm:$0xff]
        %v5379 = vld [vmem:[#allocation3 + $0x128] sm:$0xff]
        %v5380 = vld [vmem:[#allocation3 + $0x130] sm:$0xff]
        %v5381 = vld [vmem:[#allocation3 + $0x138] sm:$0xff]
        %v5382 = vld [vmem:[#allocation3 + $0x140] sm:$0xf]
        %v5383 = vld [vmem:[#allocation3 + $0x144] sm:$0xff]
        %v5384 = vld [vmem:[#allocation3 + $0x14c] sm:$0xff]
        %v5385 = vld [vmem:[#allocation3 + $0x154] sm:$0xff]
        %v5386 = vld [vmem:[#allocation3 + $0x15c] sm:$0xff]
        %v5387 = vld [vmem:[#allocation3 + $0x164] sm:$0xf]
        %v5388 = vld [vmem:[#allocation3 + $0x168] sm:$0xff]
        %v5389 = vld [vmem:[#allocation3 + $0x170] sm:$0xff]
        %v5390 = vld [vmem:[#allocation3 + $0x178] sm:$0xff]
        %v5391 = vld [vmem:[#allocation3 + $0x180] sm:$0xff]
        %v5392 = vld [vmem:[#allocation3 + $0x188] sm:$0xf]
        %v5393 = vld [vmem:[#allocation3 + $0x18c] sm:$0xff]
        %v5394 = vld [vmem:[#allocation3 + $0x194] sm:$0xff]
        %v5395 = vld [vmem:[#allocation3 + $0x19c] sm:$0xff]
        %v5396 = vld [vmem:[#allocation3 + $0x1a4] sm:$0xff]
        %v5397 = vld [vmem:[#allocation3 + $0x1ac] sm:$0xf]
        %v5398 = vld [vmem:[#allocation3 + $0x1b0] sm:$0xff]
        %v5399 = vld [vmem:[#allocation3 + $0x1b8] sm:$0xff]
        %v5400 = vld [vmem:[#allocation3 + $0x1c0] sm:$0xff]
        %v5401 = vld [vmem:[#allocation3 + $0x1c8] sm:$0xff]
        %v5402 = vld [vmem:[#allocation3 + $0x1d0] sm:$0xf]
        %v5403 = vld [vmem:[#allocation3 + $0x1d4] sm:$0xff]
        %v5404 = vld [vmem:[#allocation3 + $0x1dc] sm:$0xff]
        %v5405 = vld [vmem:[#allocation3 + $0x1e4] sm:$0xff]
        %v5406 = vld [vmem:[#allocation3 + $0x1ec] sm:$0xff]
        %v5407 = vld [vmem:[#allocation3 + $0x1f4] sm:$0xf]
        %v5408 = vld [vmem:[#allocation3 + $0x1f8] sm:$0xff]
        %v5409 = vld [vmem:[#allocation3 + $0x200] sm:$0xff]
        %v5410 = vld [vmem:[#allocation3 + $0x208] sm:$0xff]
        %v5411 = vld [vmem:[#allocation3 + $0x210] sm:$0xff]
        %v5412 = vld [vmem:[#allocation3 + $0x218] sm:$0xf]
        %v5413 = vld [vmem:[#allocation3 + $0x21c] sm:$0xff]
        %v5414 = vld [vmem:[#allocation3 + $0x224] sm:$0xff]
        %v5415 = vld [vmem:[#allocation3 + $0x22c] sm:$0xff]
        %v5416 = vld [vmem:[#allocation3 + $0x234] sm:$0xff]
        %v5417 = vld [vmem:[#allocation3 + $0x23c] sm:$0xf]
        %v5418 = vld [vmem:[#allocation3 + $0x240] sm:$0xff]
        %v5419 = vld [vmem:[#allocation3 + $0x248] sm:$0xff]
        %v5420 = vld [vmem:[#allocation3 + $0x250] sm:$0xff]
        %v5421 = vld [vmem:[#allocation3 + $0x258] sm:$0xff]
        %v5422 = vld [vmem:[#allocation3 + $0x260] sm:$0xf]
        %v5423 = vld [vmem:[#allocation3 + $0x264] sm:$0xff]
        %v5424 = vld [vmem:[#allocation3 + $0x26c] sm:$0xff]
        %v5425 = vld [vmem:[#allocation3 + $0x274] sm:$0xff]
        %v5426 = vld [vmem:[#allocation3 + $0x27c] sm:$0xff]
        %v5427 = vld [vmem:[#allocation3 + $0x284] sm:$0xf]
        %v5428 = vld [vmem:[#allocation3 + $0x288] sm:$0xff]
        %v5429 = vld [vmem:[#allocation3 + $0x290] sm:$0xff]
        %v5430 = vld [vmem:[#allocation3 + $0x298] sm:$0xff]
        %v5431 = vld [vmem:[#allocation3 + $0x2a0] sm:$0xff]
        %v5432 = vld [vmem:[#allocation3 + $0x2a8] sm:$0xf]
        %v5433 = vld [vmem:[#allocation3 + $0x2ac] sm:$0xff]
        %v5434 = vld [vmem:[#allocation3 + $0x2b4] sm:$0xff]
        %v5435 = vld [vmem:[#allocation3 + $0x2bc] sm:$0xff]
        %v5436 = vld [vmem:[#allocation3 + $0x2c4] sm:$0xff]
        %v5437 = vld [vmem:[#allocation3 + $0x2cc] sm:$0xf]
        %v5438 = vld [vmem:[#allocation3 + $0x2d0] sm:$0xff]
        %v5439 = vld [vmem:[#allocation3 + $0x2d8] sm:$0xff]
        %v5440 = vld [vmem:[#allocation3 + $0x2e0] sm:$0xff]
        %v5441 = vld [vmem:[#allocation3 + $0x2e8] sm:$0xff]
        %v5442 = vld [vmem:[#allocation3 + $0x2f0] sm:$0xf]
        %v5443 = vld [vmem:[#allocation3 + $0x2f4] sm:$0xff]
        %v5444 = vld [vmem:[#allocation3 + $0x2fc] sm:$0xff]
        %v5445 = vld [vmem:[#allocation3 + $0x304] sm:$0xff]
        %v5446 = vld [vmem:[#allocation3 + $0x30c] sm:$0xff]
        %v5447 = vld [vmem:[#allocation3 + $0x314] sm:$0xf]
        %v5448 = vld [vmem:[#allocation3 + $0x318] sm:$0xff]
        %v5449 = vld [vmem:[#allocation3 + $0x320] sm:$0xff]
        %v5450 = vld [vmem:[#allocation3 + $0x328] sm:$0xff]
        %v5451 = vld [vmem:[#allocation3 + $0x330] sm:$0xff]
        %v5452 = vld [vmem:[#allocation3 + $0x338] sm:$0xf]
        %v5453 = vld [vmem:[#allocation3 + $0x33c] sm:$0xff]
        %v5454 = vld [vmem:[#allocation3 + $0x344] sm:$0xff]
        %v5455 = vld [vmem:[#allocation3 + $0x34c] sm:$0xff]
        %v5456 = vld [vmem:[#allocation3 + $0x354] sm:$0xff]
        %v5457 = vld [vmem:[#allocation3 + $0x35c] sm:$0xf]
        %v5458 = vld [vmem:[#allocation3 + $0x360] sm:$0xff]
        %v5459 = vld [vmem:[#allocation3 + $0x368] sm:$0xff]
        %v5460 = vld [vmem:[#allocation3 + $0x370] sm:$0xff]
        %v5461 = vld [vmem:[#allocation3 + $0x378] sm:$0xff]
        %v5462 = vld [vmem:[#allocation3 + $0x380] sm:$0xf]
        %v5463 = vld [vmem:[#allocation3 + $0x384] sm:$0xff]
        %v5464 = vld [vmem:[#allocation3 + $0x38c] sm:$0xff]
        %v5465 = vld [vmem:[#allocation3 + $0x394] sm:$0xff]
        %v5466 = vld [vmem:[#allocation3 + $0x39c] sm:$0xff]
        %v5467 = vld [vmem:[#allocation3 + $0x3a4] sm:$0xf]
        %v5468 = vld [vmem:[#allocation3 + $0x3a8] sm:$0xff]
        %v5469 = vld [vmem:[#allocation3 + $0x3b0] sm:$0xff]
        %v5470 = vld [vmem:[#allocation3 + $0x3b8] sm:$0xff]
        %v5471 = vld [vmem:[#allocation3 + $0x3c0] sm:$0xff]
        %v5472 = vld [vmem:[#allocation3 + $0x3c8] sm:$0xf]
        %v5473 = vld [vmem:[#allocation3 + $0x3cc] sm:$0xff]
        %v5474 = vld [vmem:[#allocation3 + $0x3d4] sm:$0xff]
        %v5475 = vld [vmem:[#allocation3 + $0x3dc] sm:$0xff]
        %v5476 = vld [vmem:[#allocation3 + $0x3e4] sm:$0xff]
        %v5477 = vld [vmem:[#allocation3 + $0x3ec] sm:$0xf]
        %v5478 = vld [vmem:[#allocation3 + $0x3f0] sm:$0xff]
        %v5479 = vld [vmem:[#allocation3 + $0x3f8] sm:$0xff]
        %v5480 = vld [vmem:[#allocation3 + $0x400] sm:$0xff]
        %v5481 = vld [vmem:[#allocation3 + $0x408] sm:$0xff]
        %v5482 = vld [vmem:[#allocation3 + $0x410] sm:$0xf]
        %v5483 = vld [vmem:[#allocation3 + $0x414] sm:$0xff]
        %v5484 = vld [vmem:[#allocation3 + $0x41c] sm:$0xff]
        %v5485 = vld [vmem:[#allocation3 + $0x424] sm:$0xff]
        %v5486 = vld [vmem:[#allocation3 + $0x42c] sm:$0xff]
        %v5487 = vld [vmem:[#allocation3 + $0x434] sm:$0xf]
        %v5488 = vld [vmem:[#allocation3 + $0x438] sm:$0xff]
        %v5489 = vld [vmem:[#allocation3 + $0x440] sm:$0xff]
        %v5490 = vld [vmem:[#allocation3 + $0x448] sm:$0xff]
        %v5491 = vld [vmem:[#allocation3 + $0x450] sm:$0xff]
        %v5492 = vld [vmem:[#allocation3 + $0x458] sm:$0xf]
        %v5493 = vld [vmem:[#allocation3 + $0x45c] sm:$0xff]
        %v5494 = vld [vmem:[#allocation3 + $0x464] sm:$0xff]
        %v5495 = vld [vmem:[#allocation3 + $0x46c] sm:$0xff]
        %v5496 = vld [vmem:[#allocation3 + $0x474] sm:$0xff]
        %v5497 = vld [vmem:[#allocation3 + $0x47c] sm:$0xf]
        %v5498 = vld [vmem:[#allocation10] sm:$0xf]
        %v5499 = vld [vmem:[#allocation10 + $0x4] sm:$0xf]
        %v5500 = vld [vmem:[#allocation10 + $0x8] sm:$0xf]
        %v5501 = vld [vmem:[#allocation10 + $0xc] sm:$0xf]
        %v5502 = vld [vmem:[#allocation10 + $0x10] sm:$0xf]
        %v5503 = vld [vmem:[#allocation10 + $0x14] sm:$0xf]
        %v5504 = vld [vmem:[#allocation10 + $0x18] sm:$0xf]
        %v5505 = vld [vmem:[#allocation10 + $0x1c] sm:$0xf]
        %v5506 = vld [vmem:[#allocation10 + $0x20] sm:$0xf]
        %v5507 = vld [vmem:[#allocation10 + $0x24] sm:$0xf]
        %v5508 = vld [vmem:[#allocation10 + $0x28] sm:$0xf]
        %v5509 = vld [vmem:[#allocation10 + $0x2c] sm:$0xf]
        %v5510 = vld [vmem:[#allocation10 + $0x30] sm:$0xf]
        %v5511 = vld [vmem:[#allocation10 + $0x34] sm:$0xf]
        %v5512 = vld [vmem:[#allocation10 + $0x38] sm:$0xf]
        %v5513 = vld [vmem:[#allocation10 + $0x3c] sm:$0xf]
        %v5514 = vld [vmem:[#allocation10 + $0x40] sm:$0xf]
        %v5515 = vld [vmem:[#allocation10 + $0x44] sm:$0xf]
        %v5516 = vld [vmem:[#allocation10 + $0x48] sm:$0xf]
        %v5517 = vld [vmem:[#allocation10 + $0x4c] sm:$0xf]
        %v5518 = vld [vmem:[#allocation10 + $0x50] sm:$0xf]
        %v5519 = vld [vmem:[#allocation10 + $0x54] sm:$0xf]
        %v5520 = vld [vmem:[#allocation10 + $0x58] sm:$0xf]
        %v5521 = vld [vmem:[#allocation10 + $0x5c] sm:$0xf]
        %v5522 = vld [vmem:[#allocation10 + $0x60] sm:$0xf]
        %v5523 = vld [vmem:[#allocation10 + $0x64] sm:$0xf]
        %v5524 = vld [vmem:[#allocation10 + $0x68] sm:$0xf]
        %v5525 = vld [vmem:[#allocation10 + $0x6c] sm:$0xf]
        %v5526 = vld [vmem:[#allocation10 + $0x70] sm:$0xf]
        %v5527 = vld [vmem:[#allocation10 + $0x74] sm:$0xf]
        %v5528 = vld [vmem:[#allocation10 + $0x78] sm:$0xf]
        %v5529 = vld [vmem:[#allocation10 + $0x7c] sm:$0xf]
        %v5530 = vld [vmem:[#allocation10 + $0x80] sm:$0xf]
        %v5531 = vld [vmem:[#allocation10 + $0x84] sm:$0xf]
        %v5532 = vld [vmem:[#allocation10 + $0x88] sm:$0xf]
        %v5533 = vld [vmem:[#allocation10 + $0x8c] sm:$0xf]
        %v5534 = vld [vmem:[#allocation10 + $0x90] sm:$0xf]
        %v5535 = vld [vmem:[#allocation10 + $0x94] sm:$0xf]
        %v5536 = vld [vmem:[#allocation10 + $0x98] sm:$0xf]
        %v5537 = vld [vmem:[#allocation10 + $0x9c] sm:$0xf]
        %v5538 = vld [vmem:[#allocation10 + $0xa0] sm:$0xf]
        %v5539 = vld [vmem:[#allocation10 + $0xa4] sm:$0xf]
        %v5540 = vld [vmem:[#allocation10 + $0xa8] sm:$0xf]
        %v5541 = vld [vmem:[#allocation10 + $0xac] sm:$0xf]
        %v5542 = vld [vmem:[#allocation10 + $0xb0] sm:$0xf]
        %v5543 = vld [vmem:[#allocation10 + $0xb4] sm:$0xf]
        %v5544 = vld [vmem:[#allocation10 + $0xb8] sm:$0xf]
        %v5545 = vld [vmem:[#allocation10 + $0xbc] sm:$0xf]
        %v5546 = vld [vmem:[#allocation10 + $0xc0] sm:$0xf]
        %v5547 = vld [vmem:[#allocation10 + $0xc4] sm:$0xf]
        %v5548 = vld [vmem:[#allocation10 + $0xc8] sm:$0xf]
        %v5549 = vld [vmem:[#allocation10 + $0xcc] sm:$0xf]
        %v5550 = vld [vmem:[#allocation10 + $0xd0] sm:$0xf]
        %v5551 = vld [vmem:[#allocation10 + $0xd4] sm:$0xf]
        %v5552 = vld [vmem:[#allocation10 + $0xd8] sm:$0xf]
        %v5553 = vld [vmem:[#allocation10 + $0xdc] sm:$0xf]
        %v5554 = vld [vmem:[#allocation10 + $0xe0] sm:$0xf]
        %v5555 = vld [vmem:[#allocation10 + $0xe4] sm:$0xf]
        %v5556 = vld [vmem:[#allocation10 + $0xe8] sm:$0xf]
        %v5557 = vld [vmem:[#allocation10 + $0xec] sm:$0xf]
        %v5558 = vld [vmem:[#allocation10 + $0xf0] sm:$0xf]
        %v5559 = vld [vmem:[#allocation10 + $0xf4] sm:$0xf]
        %v5560 = vld [vmem:[#allocation10 + $0xf8] sm:$0xf]
        %v5561 = vld [vmem:[#allocation10 + $0xfc] sm:$0xf]
        %v5562 = vld [vmem:[#allocation10 + $0x100] sm:$0xf]
        %v5563 = vld [vmem:[#allocation10 + $0x104] sm:$0xf]
        %v5564 = vld [vmem:[#allocation10 + $0x108] sm:$0xf]
        %v5565 = vld [vmem:[#allocation10 + $0x10c] sm:$0xf]
        %v5566 = vld [vmem:[#allocation10 + $0x110] sm:$0xf]
        %v5567 = vld [vmem:[#allocation10 + $0x114] sm:$0xf]
        %v5568 = vld [vmem:[#allocation10 + $0x118] sm:$0xf]
        %v5569 = vld [vmem:[#allocation10 + $0x11c] sm:$0xf]
        %v5570 = vld [vmem:[#allocation10 + $0x120] sm:$0xf]
        %v5571 = vld [vmem:[#allocation10 + $0x124] sm:$0xf]
        %v5572 = vld [vmem:[#allocation10 + $0x128] sm:$0xf]
        %v5573 = vld [vmem:[#allocation10 + $0x12c] sm:$0xf]
        %v5574 = vld [vmem:[#allocation10 + $0x130] sm:$0xf]
        %v5575 = vld [vmem:[#allocation10 + $0x134] sm:$0xf]
        %v5576 = vld [vmem:[#allocation10 + $0x138] sm:$0xf]
        %v5577 = vld [vmem:[#allocation10 + $0x13c] sm:$0xf]
        %v5578 = vld [vmem:[#allocation10 + $0x140] sm:$0xf]
        %v5579 = vld [vmem:[#allocation10 + $0x144] sm:$0xf]
        %v5580 = vld [vmem:[#allocation10 + $0x148] sm:$0xf]
        %v5581 = vld [vmem:[#allocation10 + $0x14c] sm:$0xf]
        %v5582 = vld [vmem:[#allocation10 + $0x150] sm:$0xf]
        %v5583 = vld [vmem:[#allocation10 + $0x154] sm:$0xf]
        %v5584 = vld [vmem:[#allocation10 + $0x158] sm:$0xf]
        %v5585 = vld [vmem:[#allocation10 + $0x15c] sm:$0xf]
        %v5586 = vld [vmem:[#allocation10 + $0x160] sm:$0xf]
        %v5587 = vld [vmem:[#allocation10 + $0x164] sm:$0xf]
        %v5588 = vld [vmem:[#allocation10 + $0x168] sm:$0xf]
        %v5589 = vld [vmem:[#allocation10 + $0x16c] sm:$0xf]
        %v5590 = vld [vmem:[#allocation10 + $0x170] sm:$0xf]
        %v5591 = vld [vmem:[#allocation10 + $0x174] sm:$0xf]
        %v5592 = vld [vmem:[#allocation10 + $0x178] sm:$0xf]
        %v5593 = vld [vmem:[#allocation10 + $0x17c] sm:$0xf]
        %v5594 = vld [vmem:[#allocation10 + $0x180] sm:$0xf]
        %v5595 = vld [vmem:[#allocation10 + $0x184] sm:$0xf]
        %v5596 = vld [vmem:[#allocation10 + $0x188] sm:$0xf]
        %v5597 = vld [vmem:[#allocation10 + $0x18c] sm:$0xf]
        %v5598 = vld [vmem:[#allocation10 + $0x190] sm:$0xf]
        %v5599 = vld [vmem:[#allocation10 + $0x194] sm:$0xf]
        %v5600 = vld [vmem:[#allocation10 + $0x198] sm:$0xf]
        %v5601 = vld [vmem:[#allocation10 + $0x19c] sm:$0xf]
        %v5602 = vld [vmem:[#allocation10 + $0x1a0] sm:$0xf]
        %v5603 = vld [vmem:[#allocation10 + $0x1a4] sm:$0xf]
        %v5604 = vld [vmem:[#allocation10 + $0x1a8] sm:$0xf]
        %v5605 = vld [vmem:[#allocation10 + $0x1ac] sm:$0xf]
        %v5606 = vld [vmem:[#allocation10 + $0x1b0] sm:$0xf]
        %v5607 = vld [vmem:[#allocation10 + $0x1b4] sm:$0xf]
        %v5608 = vld [vmem:[#allocation10 + $0x1b8] sm:$0xf]
        %v5609 = vld [vmem:[#allocation10 + $0x1bc] sm:$0xf]
        %v5610 = vld [vmem:[#allocation10 + $0x1c0] sm:$0xf]
        %v5611 = vld [vmem:[#allocation10 + $0x1c4] sm:$0xf]
        %v5612 = vld [vmem:[#allocation10 + $0x1c8] sm:$0xf]
        %v5613 = vld [vmem:[#allocation10 + $0x1cc] sm:$0xf]
        %v5614 = vld [vmem:[#allocation10 + $0x1d0] sm:$0xf]
        %v5615 = vld [vmem:[#allocation10 + $0x1d4] sm:$0xf]
        %v5616 = vld [vmem:[#allocation10 + $0x1d8] sm:$0xf]
        %v5617 = vld [vmem:[#allocation10 + $0x1dc] sm:$0xf]
        %v5618 = vld [vmem:[#allocation10 + $0x1e0] sm:$0xf]
        %v5619 = vld [vmem:[#allocation10 + $0x1e4] sm:$0xf]
        %v5620 = vld [vmem:[#allocation10 + $0x1e8] sm:$0xf]
        %v5621 = vld [vmem:[#allocation10 + $0x1ec] sm:$0xf]
        %v5622 = vld [vmem:[#allocation10 + $0x1f0] sm:$0xf]
        %v5623 = vld [vmem:[#allocation10 + $0x1f4] sm:$0xf]
        %v5624 = vld [vmem:[#allocation10 + $0x1f8] sm:$0xf]
        %v5625 = vld [vmem:[#allocation10 + $0x1fc] sm:$0xf]
        %v5626 = vld [vmem:[#allocation10 + $0x200] sm:$0xf]
        %v5627 = vld [vmem:[#allocation10 + $0x204] sm:$0xf]
        %v5628 = vld [vmem:[#allocation10 + $0x208] sm:$0xf]
        %v5629 = vld [vmem:[#allocation10 + $0x20c] sm:$0xf]
        %v5630 = vld [vmem:[#allocation10 + $0x210] sm:$0xf]
        %v5631 = vld [vmem:[#allocation10 + $0x214] sm:$0xf]
        %v5632 = vld [vmem:[#allocation10 + $0x218] sm:$0xf]
        %v5633 = vld [vmem:[#allocation10 + $0x21c] sm:$0xf]
        %v5634 = vld [vmem:[#allocation10 + $0x220] sm:$0xf]
        %v5635 = vld [vmem:[#allocation10 + $0x224] sm:$0xf]
        %v5636 = vld [vmem:[#allocation10 + $0x228] sm:$0xf]
        %v5637 = vld [vmem:[#allocation10 + $0x22c] sm:$0xf]
        %v5638 = vld [vmem:[#allocation10 + $0x230] sm:$0xf]
        %v5639 = vld [vmem:[#allocation10 + $0x234] sm:$0xf]
        %v5640 = vld [vmem:[#allocation10 + $0x238] sm:$0xf]
        %v5641 = vld [vmem:[#allocation10 + $0x23c] sm:$0xf]
        %v5642 = vld [vmem:[%s6] sm:$0x1]
        %v5644 = vperm.slane %v5642, 0
        %v5806 = vunpack.c.l.b16 %v5338
        %v5807 = vunpack.c.h.b16 %v5338
        %v5808 = vunpack.c.l.b16 %v5339
        %v5809 = vunpack.c.h.b16 %v5339
        %v5810 = vunpack.c.l.b16 %v5340
        %v5811 = vunpack.c.h.b16 %v5340
        %v5812 = vunpack.c.l.b16 %v5341
        %v5813 = vunpack.c.h.b16 %v5341
        %v5814 = vunpack.c.l.b16 %v5342
        %v5815 = vunpack.c.l.b16 %v5343
        %v5816 = vunpack.c.h.b16 %v5343
        %v5817 = vunpack.c.l.b16 %v5344
        %v5818 = vunpack.c.h.b16 %v5344
        %v5819 = vunpack.c.l.b16 %v5345
        %v5820 = vunpack.c.h.b16 %v5345
        %v5821 = vunpack.c.l.b16 %v5346
        %v5822 = vunpack.c.h.b16 %v5346
        %v5823 = vunpack.c.l.b16 %v5347
        %v5824 = vunpack.c.l.b16 %v5348
        %v5825 = vunpack.c.h.b16 %v5348
        %v5826 = vunpack.c.l.b16 %v5349
        %v5827 = vunpack.c.h.b16 %v5349
        %v5828 = vunpack.c.l.b16 %v5350
        %v5829 = vunpack.c.h.b16 %v5350
        %v5830 = vunpack.c.l.b16 %v5351
        %v5831 = vunpack.c.h.b16 %v5351
        %v5832 = vunpack.c.l.b16 %v5352
        %v5833 = vunpack.c.l.b16 %v5353
        %v5834 = vunpack.c.h.b16 %v5353
        %v5835 = vunpack.c.l.b16 %v5354
        %v5836 = vunpack.c.h.b16 %v5354
        %v5837 = vunpack.c.l.b16 %v5355
        %v5838 = vunpack.c.h.b16 %v5355
        %v5839 = vunpack.c.l.b16 %v5356
        %v5840 = vunpack.c.h.b16 %v5356
        %v5841 = vunpack.c.l.b16 %v5357
        %v5842 = vunpack.c.l.b16 %v5358
        %v5843 = vunpack.c.h.b16 %v5358
        %v5844 = vunpack.c.l.b16 %v5359
        %v5845 = vunpack.c.h.b16 %v5359
        %v5846 = vunpack.c.l.b16 %v5360
        %v5847 = vunpack.c.h.b16 %v5360
        %v5848 = vunpack.c.l.b16 %v5361
        %v5849 = vunpack.c.h.b16 %v5361
        %v5850 = vunpack.c.l.b16 %v5362
        %v5851 = vunpack.c.l.b16 %v5363
        %v5852 = vunpack.c.h.b16 %v5363
        %v5853 = vunpack.c.l.b16 %v5364
        %v5854 = vunpack.c.h.b16 %v5364
        %v5855 = vunpack.c.l.b16 %v5365
        %v5856 = vunpack.c.h.b16 %v5365
        %v5857 = vunpack.c.l.b16 %v5366
        %v5858 = vunpack.c.h.b16 %v5366
        %v5859 = vunpack.c.l.b16 %v5367
        %v5860 = vunpack.c.l.b16 %v5368
        %v5861 = vunpack.c.h.b16 %v5368
        %v5862 = vunpack.c.l.b16 %v5369
        %v5863 = vunpack.c.h.b16 %v5369
        %v5864 = vunpack.c.l.b16 %v5370
        %v5865 = vunpack.c.h.b16 %v5370
        %v5866 = vunpack.c.l.b16 %v5371
        %v5867 = vunpack.c.h.b16 %v5371
        %v5868 = vunpack.c.l.b16 %v5372
        %v5869 = vunpack.c.l.b16 %v5373
        %v5870 = vunpack.c.h.b16 %v5373
        %v5871 = vunpack.c.l.b16 %v5374
        %v5872 = vunpack.c.h.b16 %v5374
        %v5873 = vunpack.c.l.b16 %v5375
        %v5874 = vunpack.c.h.b16 %v5375
        %v5875 = vunpack.c.l.b16 %v5376
        %v5876 = vunpack.c.h.b16 %v5376
        %v5877 = vunpack.c.l.b16 %v5377
        %v5878 = vunpack.c.l.b16 %v5378
        %v5879 = vunpack.c.h.b16 %v5378
        %v5880 = vunpack.c.l.b16 %v5379
        %v5881 = vunpack.c.h.b16 %v5379
        %v5882 = vunpack.c.l.b16 %v5380
        %v5883 = vunpack.c.h.b16 %v5380
        %v5884 = vunpack.c.l.b16 %v5381
        %v5885 = vunpack.c.h.b16 %v5381
        %v5886 = vunpack.c.l.b16 %v5382
        %v5887 = vunpack.c.l.b16 %v5383
        %v5888 = vunpack.c.h.b16 %v5383
        %v5889 = vunpack.c.l.b16 %v5384
        %v5890 = vunpack.c.h.b16 %v5384
        %v5891 = vunpack.c.l.b16 %v5385
        %v5892 = vunpack.c.h.b16 %v5385
        %v5893 = vunpack.c.l.b16 %v5386
        %v5894 = vunpack.c.h.b16 %v5386
        %v5895 = vunpack.c.l.b16 %v5387
        %v5896 = vunpack.c.l.b16 %v5388
        %v5897 = vunpack.c.h.b16 %v5388
        %v5898 = vunpack.c.l.b16 %v5389
        %v5899 = vunpack.c.h.b16 %v5389
        %v5900 = vunpack.c.l.b16 %v5390
        %v5901 = vunpack.c.h.b16 %v5390
        %v5902 = vunpack.c.l.b16 %v5391
        %v5903 = vunpack.c.h.b16 %v5391
        %v5904 = vunpack.c.l.b16 %v5392
        %v5905 = vunpack.c.l.b16 %v5393
        %v5906 = vunpack.c.h.b16 %v5393
        %v5907 = vunpack.c.l.b16 %v5394
        %v5908 = vunpack.c.h.b16 %v5394
        %v5909 = vunpack.c.l.b16 %v5395
        %v5910 = vunpack.c.h.b16 %v5395
        %v5911 = vunpack.c.l.b16 %v5396
        %v5912 = vunpack.c.h.b16 %v5396
        %v5913 = vunpack.c.l.b16 %v5397
        %v5914 = vunpack.c.l.b16 %v5398
        %v5915 = vunpack.c.h.b16 %v5398
        %v5916 = vunpack.c.l.b16 %v5399
        %v5917 = vunpack.c.h.b16 %v5399
        %v5918 = vunpack.c.l.b16 %v5400
        %v5919 = vunpack.c.h.b16 %v5400
        %v5920 = vunpack.c.l.b16 %v5401
        %v5921 = vunpack.c.h.b16 %v5401
        %v5922 = vunpack.c.l.b16 %v5402
        %v5923 = vunpack.c.l.b16 %v5403
        %v5924 = vunpack.c.h.b16 %v5403
        %v5925 = vunpack.c.l.b16 %v5404
        %v5926 = vunpack.c.h.b16 %v5404
        %v5927 = vunpack.c.l.b16 %v5405
        %v5928 = vunpack.c.h.b16 %v5405
        %v5929 = vunpack.c.l.b16 %v5406
        %v5930 = vunpack.c.h.b16 %v5406
        %v5931 = vunpack.c.l.b16 %v5407
        %v5932 = vunpack.c.l.b16 %v5408
        %v5933 = vunpack.c.h.b16 %v5408
        %v5934 = vunpack.c.l.b16 %v5409
        %v5935 = vunpack.c.h.b16 %v5409
        %v5936 = vunpack.c.l.b16 %v5410
        %v5937 = vunpack.c.h.b16 %v5410
        %v5938 = vunpack.c.l.b16 %v5411
        %v5939 = vunpack.c.h.b16 %v5411
        %v5940 = vunpack.c.l.b16 %v5412
        %v5941 = vunpack.c.l.b16 %v5413
        %v5942 = vunpack.c.h.b16 %v5413
        %v5943 = vunpack.c.l.b16 %v5414
        %v5944 = vunpack.c.h.b16 %v5414
        %v5945 = vunpack.c.l.b16 %v5415
        %v5946 = vunpack.c.h.b16 %v5415
        %v5947 = vunpack.c.l.b16 %v5416
        %v5948 = vunpack.c.h.b16 %v5416
        %v5949 = vunpack.c.l.b16 %v5417
        %v5950 = vunpack.c.l.b16 %v5418
        %v5951 = vunpack.c.h.b16 %v5418
        %v5952 = vunpack.c.l.b16 %v5419
        %v5953 = vunpack.c.h.b16 %v5419
        %v5954 = vunpack.c.l.b16 %v5420
        %v5955 = vunpack.c.h.b16 %v5420
        %v5956 = vunpack.c.l.b16 %v5421
        %v5957 = vunpack.c.h.b16 %v5421
        %v5958 = vunpack.c.l.b16 %v5422
        %v5959 = vunpack.c.l.b16 %v5423
        %v5960 = vunpack.c.h.b16 %v5423
        %v5961 = vunpack.c.l.b16 %v5424
        %v5962 = vunpack.c.h.b16 %v5424
        %v5963 = vunpack.c.l.b16 %v5425
        %v5964 = vunpack.c.h.b16 %v5425
        %v5965 = vunpack.c.l.b16 %v5426
        %v5966 = vunpack.c.h.b16 %v5426
        %v5967 = vunpack.c.l.b16 %v5427
        %v5968 = vunpack.c.l.b16 %v5428
        %v5969 = vunpack.c.h.b16 %v5428
        %v5970 = vunpack.c.l.b16 %v5429
        %v5971 = vunpack.c.h.b16 %v5429
        %v5972 = vunpack.c.l.b16 %v5430
        %v5973 = vunpack.c.h.b16 %v5430
        %v5974 = vunpack.c.l.b16 %v5431
        %v5975 = vunpack.c.h.b16 %v5431
        %v5976 = vunpack.c.l.b16 %v5432
        %v5977 = vunpack.c.l.b16 %v5433
        %v5978 = vunpack.c.h.b16 %v5433
        %v5979 = vunpack.c.l.b16 %v5434
        %v5980 = vunpack.c.h.b16 %v5434
        %v5981 = vunpack.c.l.b16 %v5435
        %v5982 = vunpack.c.h.b16 %v5435
        %v5983 = vunpack.c.l.b16 %v5436
        %v5984 = vunpack.c.h.b16 %v5436
        %v5985 = vunpack.c.l.b16 %v5437
        %v5986 = vunpack.c.l.b16 %v5438
        %v5987 = vunpack.c.h.b16 %v5438
        %v5988 = vunpack.c.l.b16 %v5439
        %v5989 = vunpack.c.h.b16 %v5439
        %v5990 = vunpack.c.l.b16 %v5440
        %v5991 = vunpack.c.h.b16 %v5440
        %v5992 = vunpack.c.l.b16 %v5441
        %v5993 = vunpack.c.h.b16 %v5441
        %v5994 = vunpack.c.l.b16 %v5442
        %v5995 = vunpack.c.l.b16 %v5443
        %v5996 = vunpack.c.h.b16 %v5443
        %v5997 = vunpack.c.l.b16 %v5444
        %v5998 = vunpack.c.h.b16 %v5444
        %v5999 = vunpack.c.l.b16 %v5445
        %v6000 = vunpack.c.h.b16 %v5445
        %v6001 = vunpack.c.l.b16 %v5446
        %v6002 = vunpack.c.h.b16 %v5446
        %v6003 = vunpack.c.l.b16 %v5447
        %v6004 = vunpack.c.l.b16 %v5448
        %v6005 = vunpack.c.h.b16 %v5448
        %v6006 = vunpack.c.l.b16 %v5449
        %v6007 = vunpack.c.h.b16 %v5449
        %v6008 = vunpack.c.l.b16 %v5450
        %v6009 = vunpack.c.h.b16 %v5450
        %v6010 = vunpack.c.l.b16 %v5451
        %v6011 = vunpack.c.h.b16 %v5451
        %v6012 = vunpack.c.l.b16 %v5452
        %v6013 = vunpack.c.l.b16 %v5453
        %v6014 = vunpack.c.h.b16 %v5453
        %v6015 = vunpack.c.l.b16 %v5454
        %v6016 = vunpack.c.h.b16 %v5454
        %v6017 = vunpack.c.l.b16 %v5455
        %v6018 = vunpack.c.h.b16 %v5455
        %v6019 = vunpack.c.l.b16 %v5456
        %v6020 = vunpack.c.h.b16 %v5456
        %v6021 = vunpack.c.l.b16 %v5457
        %v6022 = vunpack.c.l.b16 %v5458
        %v6023 = vunpack.c.h.b16 %v5458
        %v6024 = vunpack.c.l.b16 %v5459
        %v6025 = vunpack.c.h.b16 %v5459
        %v6026 = vunpack.c.l.b16 %v5460
        %v6027 = vunpack.c.h.b16 %v5460
        %v6028 = vunpack.c.l.b16 %v5461
        %v6029 = vunpack.c.h.b16 %v5461
        %v6030 = vunpack.c.l.b16 %v5462
        %v6031 = vunpack.c.l.b16 %v5463
        %v6032 = vunpack.c.h.b16 %v5463
        %v6033 = vunpack.c.l.b16 %v5464
        %v6034 = vunpack.c.h.b16 %v5464
        %v6035 = vunpack.c.l.b16 %v5465
        %v6036 = vunpack.c.h.b16 %v5465
        %v6037 = vunpack.c.l.b16 %v5466
        %v6038 = vunpack.c.h.b16 %v5466
        %v6039 = vunpack.c.l.b16 %v5467
        %v6040 = vunpack.c.l.b16 %v5468
        %v6041 = vunpack.c.h.b16 %v5468
        %v6042 = vunpack.c.l.b16 %v5469
        %v6043 = vunpack.c.h.b16 %v5469
        %v6044 = vunpack.c.l.b16 %v5470
        %v6045 = vunpack.c.h.b16 %v5470
        %v6046 = vunpack.c.l.b16 %v5471
        %v6047 = vunpack.c.h.b16 %v5471
        %v6048 = vunpack.c.l.b16 %v5472
        %v6049 = vunpack.c.l.b16 %v5473
        %v6050 = vunpack.c.h.b16 %v5473
        %v6051 = vunpack.c.l.b16 %v5474
        %v6052 = vunpack.c.h.b16 %v5474
        %v6053 = vunpack.c.l.b16 %v5475
        %v6054 = vunpack.c.h.b16 %v5475
        %v6055 = vunpack.c.l.b16 %v5476
        %v6056 = vunpack.c.h.b16 %v5476
        %v6057 = vunpack.c.l.b16 %v5477
        %v6058 = vunpack.c.l.b16 %v5478
        %v6059 = vunpack.c.h.b16 %v5478
        %v6060 = vunpack.c.l.b16 %v5479
        %v6061 = vunpack.c.h.b16 %v5479
        %v6062 = vunpack.c.l.b16 %v5480
        %v6063 = vunpack.c.h.b16 %v5480
        %v6064 = vunpack.c.l.b16 %v5481
        %v6065 = vunpack.c.h.b16 %v5481
        %v6066 = vunpack.c.l.b16 %v5482
        %v6067 = vunpack.c.l.b16 %v5483
        %v6068 = vunpack.c.h.b16 %v5483
        %v6069 = vunpack.c.l.b16 %v5484
        %v6070 = vunpack.c.h.b16 %v5484
        %v6071 = vunpack.c.l.b16 %v5485
        %v6072 = vunpack.c.h.b16 %v5485
        %v6073 = vunpack.c.l.b16 %v5486
        %v6074 = vunpack.c.h.b16 %v5486
        %v6075 = vunpack.c.l.b16 %v5487
        %v6076 = vunpack.c.l.b16 %v5488
        %v6077 = vunpack.c.h.b16 %v5488
        %v6078 = vunpack.c.l.b16 %v5489
        %v6079 = vunpack.c.h.b16 %v5489
        %v6080 = vunpack.c.l.b16 %v5490
        %v6081 = vunpack.c.h.b16 %v5490
        %v6082 = vunpack.c.l.b16 %v5491
        %v6083 = vunpack.c.h.b16 %v5491
        %v6084 = vunpack.c.l.b16 %v5492
        %v6085 = vunpack.c.l.b16 %v5493
        %v6086 = vunpack.c.h.b16 %v5493
        %v6087 = vunpack.c.l.b16 %v5494
        %v6088 = vunpack.c.h.b16 %v5494
        %v6089 = vunpack.c.l.b16 %v5495
        %v6090 = vunpack.c.h.b16 %v5495
        %v6091 = vunpack.c.l.b16 %v5496
        %v6092 = vunpack.c.h.b16 %v5496
        %v6093 = vunpack.c.l.b16 %v5497
        %v6094 = vpack.c.b16 %v5815, %v5806
        %v6095 = vpack.c.b16 %v5816, %v5807
        %v6096 = vpack.c.b16 %v5817, %v5808
        %v6097 = vpack.c.b16 %v5818, %v5809
        %v6098 = vpack.c.b16 %v5819, %v5810
        %v6099 = vpack.c.b16 %v5820, %v5811
        %v6100 = vpack.c.b16 %v5821, %v5812
        %v6101 = vpack.c.b16 %v5822, %v5813
        %v6102 = vpack.c.b16 %v5823, %v5814
        %v6103 = vpack.c.b16 %v5833, %v5824
        %v6104 = vpack.c.b16 %v5834, %v5825
        %v6105 = vpack.c.b16 %v5835, %v5826
        %v6106 = vpack.c.b16 %v5836, %v5827
        %v6107 = vpack.c.b16 %v5837, %v5828
        %v6108 = vpack.c.b16 %v5838, %v5829
        %v6109 = vpack.c.b16 %v5839, %v5830
        %v6110 = vpack.c.b16 %v5840, %v5831
        %v6111 = vpack.c.b16 %v5841, %v5832
        %v6112 = vpack.c.b16 %v5851, %v5842
        %v6113 = vpack.c.b16 %v5852, %v5843
        %v6114 = vpack.c.b16 %v5853, %v5844
        %v6115 = vpack.c.b16 %v5854, %v5845
        %v6116 = vpack.c.b16 %v5855, %v5846
        %v6117 = vpack.c.b16 %v5856, %v5847
        %v6118 = vpack.c.b16 %v5857, %v5848
        %v6119 = vpack.c.b16 %v5858, %v5849
        %v6120 = vpack.c.b16 %v5859, %v5850
        %v6121 = vpack.c.b16 %v5869, %v5860
        %v6122 = vpack.c.b16 %v5870, %v5861
        %v6123 = vpack.c.b16 %v5871, %v5862
        %v6124 = vpack.c.b16 %v5872, %v5863
        %v6125 = vpack.c.b16 %v5873, %v5864
        %v6126 = vpack.c.b16 %v5874, %v5865
        %v6127 = vpack.c.b16 %v5875, %v5866
        %v6128 = vpack.c.b16 %v5876, %v5867
        %v6129 = vpack.c.b16 %v5877, %v5868
        %v6130 = vpack.c.b16 %v5887, %v5878
        %v6131 = vpack.c.b16 %v5888, %v5879
        %v6132 = vpack.c.b16 %v5889, %v5880
        %v6133 = vpack.c.b16 %v5890, %v5881
        %v6134 = vpack.c.b16 %v5891, %v5882
        %v6135 = vpack.c.b16 %v5892, %v5883
        %v6136 = vpack.c.b16 %v5893, %v5884
        %v6137 = vpack.c.b16 %v5894, %v5885
        %v6138 = vpack.c.b16 %v5895, %v5886
        %v6139 = vpack.c.b16 %v5905, %v5896
        %v6140 = vpack.c.b16 %v5906, %v5897
        %v6141 = vpack.c.b16 %v5907, %v5898
        %v6142 = vpack.c.b16 %v5908, %v5899
        %v6143 = vpack.c.b16 %v5909, %v5900
        %v6144 = vpack.c.b16 %v5910, %v5901
        %v6145 = vpack.c.b16 %v5911, %v5902
        %v6146 = vpack.c.b16 %v5912, %v5903
        %v6147 = vpack.c.b16 %v5913, %v5904
        %v6148 = vpack.c.b16 %v5923, %v5914
        %v6149 = vpack.c.b16 %v5924, %v5915
        %v6150 = vpack.c.b16 %v5925, %v5916
        %v6151 = vpack.c.b16 %v5926, %v5917
        %v6152 = vpack.c.b16 %v5927, %v5918
        %v6153 = vpack.c.b16 %v5928, %v5919
        %v6154 = vpack.c.b16 %v5929, %v5920
        %v6155 = vpack.c.b16 %v5930, %v5921
        %v6156 = vpack.c.b16 %v5931, %v5922
        %v6157 = vpack.c.b16 %v5941, %v5932
        %v6158 = vpack.c.b16 %v5942, %v5933
        %v6159 = vpack.c.b16 %v5943, %v5934
        %v6160 = vpack.c.b16 %v5944, %v5935
        %v6161 = vpack.c.b16 %v5945, %v5936
        %v6162 = vpack.c.b16 %v5946, %v5937
        %v6163 = vpack.c.b16 %v5947, %v5938
        %v6164 = vpack.c.b16 %v5948, %v5939
        %v6165 = vpack.c.b16 %v5949, %v5940
        %v6166 = vpack.c.b16 %v5959, %v5950
        %v6167 = vpack.c.b16 %v5960, %v5951
        %v6168 = vpack.c.b16 %v5961, %v5952
        %v6169 = vpack.c.b16 %v5962, %v5953
        %v6170 = vpack.c.b16 %v5963, %v5954
        %v6171 = vpack.c.b16 %v5964, %v5955
        %v6172 = vpack.c.b16 %v5965, %v5956
        %v6173 = vpack.c.b16 %v5966, %v5957
        %v6174 = vpack.c.b16 %v5967, %v5958
        %v6175 = vpack.c.b16 %v5977, %v5968
        %v6176 = vpack.c.b16 %v5978, %v5969
        %v6177 = vpack.c.b16 %v5979, %v5970
        %v6178 = vpack.c.b16 %v5980, %v5971
        %v6179 = vpack.c.b16 %v5981, %v5972
        %v6180 = vpack.c.b16 %v5982, %v5973
        %v6181 = vpack.c.b16 %v5983, %v5974
        %v6182 = vpack.c.b16 %v5984, %v5975
        %v6183 = vpack.c.b16 %v5985, %v5976
        %v6184 = vpack.c.b16 %v5995, %v5986
        %v6185 = vpack.c.b16 %v5996, %v5987
        %v6186 = vpack.c.b16 %v5997, %v5988
        %v6187 = vpack.c.b16 %v5998, %v5989
        %v6188 = vpack.c.b16 %v5999, %v5990
        %v6189 = vpack.c.b16 %v6000, %v5991
        %v6190 = vpack.c.b16 %v6001, %v5992
        %v6191 = vpack.c.b16 %v6002, %v5993
        %v6192 = vpack.c.b16 %v6003, %v5994
        %v6193 = vpack.c.b16 %v6013, %v6004
        %v6194 = vpack.c.b16 %v6014, %v6005
        %v6195 = vpack.c.b16 %v6015, %v6006
        %v6196 = vpack.c.b16 %v6016, %v6007
        %v6197 = vpack.c.b16 %v6017, %v6008
        %v6198 = vpack.c.b16 %v6018, %v6009
        %v6199 = vpack.c.b16 %v6019, %v6010
        %v6200 = vpack.c.b16 %v6020, %v6011
        %v6201 = vpack.c.b16 %v6021, %v6012
        %v6202 = vpack.c.b16 %v6031, %v6022
        %v6203 = vpack.c.b16 %v6032, %v6023
        %v6204 = vpack.c.b16 %v6033, %v6024
        %v6205 = vpack.c.b16 %v6034, %v6025
        %v6206 = vpack.c.b16 %v6035, %v6026
        %v6207 = vpack.c.b16 %v6036, %v6027
        %v6208 = vpack.c.b16 %v6037, %v6028
        %v6209 = vpack.c.b16 %v6038, %v6029
        %v6210 = vpack.c.b16 %v6039, %v6030
        %v6211 = vpack.c.b16 %v6049, %v6040
        %v6212 = vpack.c.b16 %v6050, %v6041
        %v6213 = vpack.c.b16 %v6051, %v6042
        %v6214 = vpack.c.b16 %v6052, %v6043
        %v6215 = vpack.c.b16 %v6053, %v6044
        %v6216 = vpack.c.b16 %v6054, %v6045
        %v6217 = vpack.c.b16 %v6055, %v6046
        %v6218 = vpack.c.b16 %v6056, %v6047
        %v6219 = vpack.c.b16 %v6057, %v6048
        %v6220 = vpack.c.b16 %v6067, %v6058
        %v6221 = vpack.c.b16 %v6068, %v6059
        %v6222 = vpack.c.b16 %v6069, %v6060
        %v6223 = vpack.c.b16 %v6070, %v6061
        %v6224 = vpack.c.b16 %v6071, %v6062
        %v6225 = vpack.c.b16 %v6072, %v6063
        %v6226 = vpack.c.b16 %v6073, %v6064
        %v6227 = vpack.c.b16 %v6074, %v6065
        %v6228 = vpack.c.b16 %v6075, %v6066
        %v6229 = vpack.c.b16 %v6085, %v6076
        %v6230 = vpack.c.b16 %v6086, %v6077
        %v6231 = vpack.c.b16 %v6087, %v6078
        %v6232 = vpack.c.b16 %v6088, %v6079
        %v6233 = vpack.c.b16 %v6089, %v6080
        %v6234 = vpack.c.b16 %v6090, %v6081
        %v6235 = vpack.c.b16 %v6091, %v6082
        %v6236 = vpack.c.b16 %v6092, %v6083
        %v6237 = vpack.c.b16 %v6093, %v6084
        %v6526 = vunpack.c.l.b16 %v5498
        %v6527 = vunpack.c.l.b16 %v5499
        %v6528 = vunpack.c.l.b16 %v5500
        %v6529 = vunpack.c.l.b16 %v5501
        %v6530 = vunpack.c.l.b16 %v5502
        %v6531 = vunpack.c.l.b16 %v5503
        %v6532 = vunpack.c.l.b16 %v5504
        %v6533 = vunpack.c.l.b16 %v5505
        %v6534 = vunpack.c.l.b16 %v5506
        %v6535 = vunpack.c.l.b16 %v5507
        %v6536 = vunpack.c.l.b16 %v5508
        %v6537 = vunpack.c.l.b16 %v5509
        %v6538 = vunpack.c.l.b16 %v5510
        %v6539 = vunpack.c.l.b16 %v5511
        %v6540 = vunpack.c.l.b16 %v5512
        %v6541 = vunpack.c.l.b16 %v5513
        %v6542 = vunpack.c.l.b16 %v5514
        %v6543 = vunpack.c.l.b16 %v5515
        %v6544 = vunpack.c.l.b16 %v5516
        %v6545 = vunpack.c.l.b16 %v5517
        %v6546 = vunpack.c.l.b16 %v5518
        %v6547 = vunpack.c.l.b16 %v5519
        %v6548 = vunpack.c.l.b16 %v5520
        %v6549 = vunpack.c.l.b16 %v5521
        %v6550 = vunpack.c.l.b16 %v5522
        %v6551 = vunpack.c.l.b16 %v5523
        %v6552 = vunpack.c.l.b16 %v5524
        %v6553 = vunpack.c.l.b16 %v5525
        %v6554 = vunpack.c.l.b16 %v5526
        %v6555 = vunpack.c.l.b16 %v5527
        %v6556 = vunpack.c.l.b16 %v5528
        %v6557 = vunpack.c.l.b16 %v5529
        %v6558 = vunpack.c.l.b16 %v5530
        %v6559 = vunpack.c.l.b16 %v5531
        %v6560 = vunpack.c.l.b16 %v5532
        %v6561 = vunpack.c.l.b16 %v5533
        %v6562 = vunpack.c.l.b16 %v5534
        %v6563 = vunpack.c.l.b16 %v5535
        %v6564 = vunpack.c.l.b16 %v5536
        %v6565 = vunpack.c.l.b16 %v5537
        %v6566 = vunpack.c.l.b16 %v5538
        %v6567 = vunpack.c.l.b16 %v5539
        %v6568 = vunpack.c.l.b16 %v5540
        %v6569 = vunpack.c.l.b16 %v5541
        %v6570 = vunpack.c.l.b16 %v5542
        %v6571 = vunpack.c.l.b16 %v5543
        %v6572 = vunpack.c.l.b16 %v5544
        %v6573 = vunpack.c.l.b16 %v5545
        %v6574 = vunpack.c.l.b16 %v5546
        %v6575 = vunpack.c.l.b16 %v5547
        %v6576 = vunpack.c.l.b16 %v5548
        %v6577 = vunpack.c.l.b16 %v5549
        %v6578 = vunpack.c.l.b16 %v5550
        %v6579 = vunpack.c.l.b16 %v5551
        %v6580 = vunpack.c.l.b16 %v5552
        %v6581 = vunpack.c.l.b16 %v5553
        %v6582 = vunpack.c.l.b16 %v5554
        %v6583 = vunpack.c.l.b16 %v5555
        %v6584 = vunpack.c.l.b16 %v5556
        %v6585 = vunpack.c.l.b16 %v5557
        %v6586 = vunpack.c.l.b16 %v5558
        %v6587 = vunpack.c.l.b16 %v5559
        %v6588 = vunpack.c.l.b16 %v5560
        %v6589 = vunpack.c.l.b16 %v5561
        %v6590 = vunpack.c.l.b16 %v5562
        %v6591 = vunpack.c.l.b16 %v5563
        %v6592 = vunpack.c.l.b16 %v5564
        %v6593 = vunpack.c.l.b16 %v5565
        %v6594 = vunpack.c.l.b16 %v5566
        %v6595 = vunpack.c.l.b16 %v5567
        %v6596 = vunpack.c.l.b16 %v5568
        %v6597 = vunpack.c.l.b16 %v5569
        %v6598 = vunpack.c.l.b16 %v5570
        %v6599 = vunpack.c.l.b16 %v5571
        %v6600 = vunpack.c.l.b16 %v5572
        %v6601 = vunpack.c.l.b16 %v5573
        %v6602 = vunpack.c.l.b16 %v5574
        %v6603 = vunpack.c.l.b16 %v5575
        %v6604 = vunpack.c.l.b16 %v5576
        %v6605 = vunpack.c.l.b16 %v5577
        %v6606 = vunpack.c.l.b16 %v5578
        %v6607 = vunpack.c.l.b16 %v5579
        %v6608 = vunpack.c.l.b16 %v5580
        %v6609 = vunpack.c.l.b16 %v5581
        %v6610 = vunpack.c.l.b16 %v5582
        %v6611 = vunpack.c.l.b16 %v5583
        %v6612 = vunpack.c.l.b16 %v5584
        %v6613 = vunpack.c.l.b16 %v5585
        %v6614 = vunpack.c.l.b16 %v5586
        %v6615 = vunpack.c.l.b16 %v5587
        %v6616 = vunpack.c.l.b16 %v5588
        %v6617 = vunpack.c.l.b16 %v5589
        %v6618 = vunpack.c.l.b16 %v5590
        %v6619 = vunpack.c.l.b16 %v5591
        %v6620 = vunpack.c.l.b16 %v5592
        %v6621 = vunpack.c.l.b16 %v5593
        %v6622 = vunpack.c.l.b16 %v5594
        %v6623 = vunpack.c.l.b16 %v5595
        %v6624 = vunpack.c.l.b16 %v5596
        %v6625 = vunpack.c.l.b16 %v5597
        %v6626 = vunpack.c.l.b16 %v5598
        %v6627 = vunpack.c.l.b16 %v5599
        %v6628 = vunpack.c.l.b16 %v5600
        %v6629 = vunpack.c.l.b16 %v5601
        %v6630 = vunpack.c.l.b16 %v5602
        %v6631 = vunpack.c.l.b16 %v5603
        %v6632 = vunpack.c.l.b16 %v5604
        %v6633 = vunpack.c.l.b16 %v5605
        %v6634 = vunpack.c.l.b16 %v5606
        %v6635 = vunpack.c.l.b16 %v5607
        %v6636 = vunpack.c.l.b16 %v5608
        %v6637 = vunpack.c.l.b16 %v5609
        %v6638 = vunpack.c.l.b16 %v5610
        %v6639 = vunpack.c.l.b16 %v5611
        %v6640 = vunpack.c.l.b16 %v5612
        %v6641 = vunpack.c.l.b16 %v5613
        %v6642 = vunpack.c.l.b16 %v5614
        %v6643 = vunpack.c.l.b16 %v5615
        %v6644 = vunpack.c.l.b16 %v5616
        %v6645 = vunpack.c.l.b16 %v5617
        %v6646 = vunpack.c.l.b16 %v5618
        %v6647 = vunpack.c.l.b16 %v5619
        %v6648 = vunpack.c.l.b16 %v5620
        %v6649 = vunpack.c.l.b16 %v5621
        %v6650 = vunpack.c.l.b16 %v5622
        %v6651 = vunpack.c.l.b16 %v5623
        %v6652 = vunpack.c.l.b16 %v5624
        %v6653 = vunpack.c.l.b16 %v5625
        %v6654 = vunpack.c.l.b16 %v5626
        %v6655 = vunpack.c.l.b16 %v5627
        %v6656 = vunpack.c.l.b16 %v5628
        %v6657 = vunpack.c.l.b16 %v5629
        %v6658 = vunpack.c.l.b16 %v5630
        %v6659 = vunpack.c.l.b16 %v5631
        %v6660 = vunpack.c.l.b16 %v5632
        %v6661 = vunpack.c.l.b16 %v5633
        %v6662 = vunpack.c.l.b16 %v5634
        %v6663 = vunpack.c.l.b16 %v5635
        %v6664 = vunpack.c.l.b16 %v5636
        %v6665 = vunpack.c.l.b16 %v5637
        %v6666 = vunpack.c.l.b16 %v5638
        %v6667 = vunpack.c.l.b16 %v5639
        %v6668 = vunpack.c.l.b16 %v5640
        %v6669 = vunpack.c.l.b16 %v5641
        %v6670 = vpack.c.b16 %v6527, %v6526
        %v6671 = vpack.c.b16 %v6529, %v6528
        %v6672 = vpack.c.b16 %v6531, %v6530
        %v6673 = vpack.c.b16 %v6533, %v6532
        %v6674 = vpack.c.b16 %v6535, %v6534
        %v6675 = vpack.c.b16 %v6537, %v6536
        %v6676 = vpack.c.b16 %v6539, %v6538
        %v6677 = vpack.c.b16 %v6541, %v6540
        %v6678 = vpack.c.b16 %v6543, %v6542
        %v6679 = vpack.c.b16 %v6545, %v6544
        %v6680 = vpack.c.b16 %v6547, %v6546
        %v6681 = vpack.c.b16 %v6549, %v6548
        %v6682 = vpack.c.b16 %v6551, %v6550
        %v6683 = vpack.c.b16 %v6553, %v6552
        %v6684 = vpack.c.b16 %v6555, %v6554
        %v6685 = vpack.c.b16 %v6557, %v6556
        %v6686 = vpack.c.b16 %v6559, %v6558
        %v6687 = vpack.c.b16 %v6561, %v6560
        %v6688 = vpack.c.b16 %v6563, %v6562
        %v6689 = vpack.c.b16 %v6565, %v6564
        %v6690 = vpack.c.b16 %v6567, %v6566
        %v6691 = vpack.c.b16 %v6569, %v6568
        %v6692 = vpack.c.b16 %v6571, %v6570
        %v6693 = vpack.c.b16 %v6573, %v6572
        %v6694 = vpack.c.b16 %v6575, %v6574
        %v6695 = vpack.c.b16 %v6577, %v6576
        %v6696 = vpack.c.b16 %v6579, %v6578
        %v6697 = vpack.c.b16 %v6581, %v6580
        %v6698 = vpack.c.b16 %v6583, %v6582
        %v6699 = vpack.c.b16 %v6585, %v6584
        %v6700 = vpack.c.b16 %v6587, %v6586
        %v6701 = vpack.c.b16 %v6589, %v6588
        %v6702 = vpack.c.b16 %v6591, %v6590
        %v6703 = vpack.c.b16 %v6593, %v6592
        %v6704 = vpack.c.b16 %v6595, %v6594
        %v6705 = vpack.c.b16 %v6597, %v6596
        %v6706 = vpack.c.b16 %v6599, %v6598
        %v6707 = vpack.c.b16 %v6601, %v6600
        %v6708 = vpack.c.b16 %v6603, %v6602
        %v6709 = vpack.c.b16 %v6605, %v6604
        %v6710 = vpack.c.b16 %v6607, %v6606
        %v6711 = vpack.c.b16 %v6609, %v6608
        %v6712 = vpack.c.b16 %v6611, %v6610
        %v6713 = vpack.c.b16 %v6613, %v6612
        %v6714 = vpack.c.b16 %v6615, %v6614
        %v6715 = vpack.c.b16 %v6617, %v6616
        %v6716 = vpack.c.b16 %v6619, %v6618
        %v6717 = vpack.c.b16 %v6621, %v6620
        %v6718 = vpack.c.b16 %v6623, %v6622
        %v6719 = vpack.c.b16 %v6625, %v6624
        %v6720 = vpack.c.b16 %v6627, %v6626
        %v6721 = vpack.c.b16 %v6629, %v6628
        %v6722 = vpack.c.b16 %v6631, %v6630
        %v6723 = vpack.c.b16 %v6633, %v6632
        %v6724 = vpack.c.b16 %v6635, %v6634
        %v6725 = vpack.c.b16 %v6637, %v6636
        %v6726 = vpack.c.b16 %v6639, %v6638
        %v6727 = vpack.c.b16 %v6641, %v6640
        %v6728 = vpack.c.b16 %v6643, %v6642
        %v6729 = vpack.c.b16 %v6645, %v6644
        %v6730 = vpack.c.b16 %v6647, %v6646
        %v6731 = vpack.c.b16 %v6649, %v6648
        %v6732 = vpack.c.b16 %v6651, %v6650
        %v6733 = vpack.c.b16 %v6653, %v6652
        %v6734 = vpack.c.b16 %v6655, %v6654
        %v6735 = vpack.c.b16 %v6657, %v6656
        %v6736 = vpack.c.b16 %v6659, %v6658
        %v6737 = vpack.c.b16 %v6661, %v6660
        %v6738 = vpack.c.b16 %v6663, %v6662
        %v6739 = vpack.c.b16 %v6665, %v6664
        %v6740 = vpack.c.b16 %v6667, %v6666
        %v6741 = vpack.c.b16 %v6669, %v6668
        %6814 = vmatpush.bf16.msra.mxu0 %v6677
        %6815 = vmatpush.bf16.msra.mxu0 %v6676
        %6816 = vmatpush.bf16.msra.mxu0 %v6675
        %6817 = vmatpush.bf16.msra.mxu0 %v6674
        %6818 = vmatpush.bf16.msra.mxu0 %v6673
        %6819 = vmatpush.bf16.msra.mxu0 %v6672
        %6820 = vmatpush.bf16.msra.mxu0 %v6671
        %6821 = vmatpush.bf16.msra.mxu0 %v6670
        %6822 = vmatmul.bf16.gmra.mxu0 %v6094
        %v6823 = vpop.f32.mrf.mxu0
        %v6824 = vadd.f32 %v5644, %v6823
        %v6825 = vpop.f32.mrf.mxu0
        %v6826 = vadd.f32 %v5644, %v6825
        %6827 = vmatmul.bf16.gmra.mxu0 %v6103
        %v6828 = vpop.f32.mrf.mxu0
        %v6829 = vadd.f32 %v5644, %v6828
        %v6830 = vpop.f32.mrf.mxu0
        %v6831 = vadd.f32 %v5644, %v6830
        %6832 = vmatmul.bf16.gmra.mxu0 %v6112
        %v6833 = vpop.f32.mrf.mxu0
        %v6834 = vadd.f32 %v5644, %v6833
        %v6835 = vpop.f32.mrf.mxu0
        %v6836 = vadd.f32 %v5644, %v6835
        %6837 = vmatmul.bf16.gmra.mxu0 %v6121
        %v6838 = vpop.f32.mrf.mxu0
        %v6839 = vadd.f32 %v5644, %v6838
        %v6840 = vpop.f32.mrf.mxu0
        %v6841 = vadd.f32 %v5644, %v6840
        %6842 = vmatmul.bf16.gmra.mxu0 %v6130
        %v6843 = vpop.f32.mrf.mxu0
        %v6844 = vadd.f32 %v5644, %v6843
        %v6845 = vpop.f32.mrf.mxu0
        %v6846 = vadd.f32 %v5644, %v6845
        %6847 = vmatmul.bf16.gmra.mxu0 %v6139
        %v6848 = vpop.f32.mrf.mxu0
        %v6849 = vadd.f32 %v5644, %v6848
        %v6850 = vpop.f32.mrf.mxu0
        %v6851 = vadd.f32 %v5644, %v6850
        %6852 = vmatmul.bf16.gmra.mxu0 %v6148
        %v6853 = vpop.f32.mrf.mxu0
        %v6854 = vadd.f32 %v5644, %v6853
        %v6855 = vpop.f32.mrf.mxu0
        %v6856 = vadd.f32 %v5644, %v6855
        %6857 = vmatmul.bf16.gmra.mxu0 %v6157
        %v6858 = vpop.f32.mrf.mxu0
        %v6859 = vadd.f32 %v5644, %v6858
        %v6860 = vpop.f32.mrf.mxu0
        %v6861 = vadd.f32 %v5644, %v6860
        %6862 = vmatmul.bf16.gmra.mxu0 %v6166
        %v6863 = vpop.f32.mrf.mxu0
        %v6864 = vadd.f32 %v5644, %v6863
        %v6865 = vpop.f32.mrf.mxu0
        %v6866 = vadd.f32 %v5644, %v6865
        %6867 = vmatmul.bf16.gmra.mxu0 %v6175
        %v6868 = vpop.f32.mrf.mxu0
        %v6869 = vadd.f32 %v5644, %v6868
        %v6870 = vpop.f32.mrf.mxu0
        %v6871 = vadd.f32 %v5644, %v6870
        %6872 = vmatmul.bf16.gmra.mxu0 %v6184
        %v6873 = vpop.f32.mrf.mxu0
        %v6874 = vadd.f32 %v5644, %v6873
        %v6875 = vpop.f32.mrf.mxu0
        %v6876 = vadd.f32 %v5644, %v6875
        %6877 = vmatmul.bf16.gmra.mxu0 %v6193
        %v6878 = vpop.f32.mrf.mxu0
        %v6879 = vadd.f32 %v5644, %v6878
        %v6880 = vpop.f32.mrf.mxu0
        %v6881 = vadd.f32 %v5644, %v6880
        %6882 = vmatmul.bf16.gmra.mxu0 %v6202
        %v6883 = vpop.f32.mrf.mxu0
        %v6884 = vadd.f32 %v5644, %v6883
        %v6885 = vpop.f32.mrf.mxu0
        %v6886 = vadd.f32 %v5644, %v6885
        %6887 = vmatmul.bf16.gmra.mxu0 %v6211
        %v6888 = vpop.f32.mrf.mxu0
        %v6889 = vadd.f32 %v5644, %v6888
        %v6890 = vpop.f32.mrf.mxu0
        %v6891 = vadd.f32 %v5644, %v6890
        %6892 = vmatmul.bf16.gmra.mxu0 %v6220
        %v6893 = vpop.f32.mrf.mxu0
        %v6894 = vadd.f32 %v5644, %v6893
        %v6895 = vpop.f32.mrf.mxu0
        %v6896 = vadd.f32 %v5644, %v6895
        %6897 = vmatmul.bf16.gmra.mxu0 %v6229
        %v6898 = vpop.f32.mrf.mxu0
        %v6899 = vadd.f32 %v5644, %v6898
        %v6900 = vpop.f32.mrf.mxu0
        %v6901 = vadd.f32 %v5644, %v6900
        %6902 = vdwg.mxu0
        %6903 = vmatpush.bf16.msra.mxu0 %v6685
        %6904 = vmatpush.bf16.msra.mxu0 %v6684
        %6905 = vmatpush.bf16.msra.mxu0 %v6683
        %6906 = vmatpush.bf16.msra.mxu0 %v6682
        %6907 = vmatpush.bf16.msra.mxu0 %v6681
        %6908 = vmatpush.bf16.msra.mxu0 %v6680
        %6909 = vmatpush.bf16.msra.mxu0 %v6679
        %6910 = vmatpush.bf16.msra.mxu0 %v6678
        %6911 = vmatmul.bf16.gmra.mxu0 %v6095
        %v6912 = vpop.f32.mrf.mxu0
        %v6913 = vadd.f32 %v6824, %v6912
        %v6914 = vpop.f32.mrf.mxu0
        %v6915 = vadd.f32 %v6826, %v6914
        %6916 = vmatmul.bf16.gmra.mxu0 %v6104
        %v6917 = vpop.f32.mrf.mxu0
        %v6918 = vadd.f32 %v6829, %v6917
        %v6919 = vpop.f32.mrf.mxu0
        %v6920 = vadd.f32 %v6831, %v6919
        %6921 = vmatmul.bf16.gmra.mxu0 %v6113
        %v6922 = vpop.f32.mrf.mxu0
        %v6923 = vadd.f32 %v6834, %v6922
        %v6924 = vpop.f32.mrf.mxu0
        %v6925 = vadd.f32 %v6836, %v6924
        %6926 = vmatmul.bf16.gmra.mxu0 %v6122
        %v6927 = vpop.f32.mrf.mxu0
        %v6928 = vadd.f32 %v6839, %v6927
        %v6929 = vpop.f32.mrf.mxu0
        %v6930 = vadd.f32 %v6841, %v6929
        %6931 = vmatmul.bf16.gmra.mxu0 %v6131
        %v6932 = vpop.f32.mrf.mxu0
        %v6933 = vadd.f32 %v6844, %v6932
        %v6934 = vpop.f32.mrf.mxu0
        %v6935 = vadd.f32 %v6846, %v6934
        %6936 = vmatmul.bf16.gmra.mxu0 %v6140
        %v6937 = vpop.f32.mrf.mxu0
        %v6938 = vadd.f32 %v6849, %v6937
        %v6939 = vpop.f32.mrf.mxu0
        %v6940 = vadd.f32 %v6851, %v6939
        %6941 = vmatmul.bf16.gmra.mxu0 %v6149
        %v6942 = vpop.f32.mrf.mxu0
        %v6943 = vadd.f32 %v6854, %v6942
        %v6944 = vpop.f32.mrf.mxu0
        %v6945 = vadd.f32 %v6856, %v6944
        %6946 = vmatmul.bf16.gmra.mxu0 %v6158
        %v6947 = vpop.f32.mrf.mxu0
        %v6948 = vadd.f32 %v6859, %v6947
        %v6949 = vpop.f32.mrf.mxu0
        %v6950 = vadd.f32 %v6861, %v6949
        %6951 = vmatmul.bf16.gmra.mxu0 %v6167
        %v6952 = vpop.f32.mrf.mxu0
        %v6953 = vadd.f32 %v6864, %v6952
        %v6954 = vpop.f32.mrf.mxu0
        %v6955 = vadd.f32 %v6866, %v6954
        %6956 = vmatmul.bf16.gmra.mxu0 %v6176
        %v6957 = vpop.f32.mrf.mxu0
        %v6958 = vadd.f32 %v6869, %v6957
        %v6959 = vpop.f32.mrf.mxu0
        %v6960 = vadd.f32 %v6871, %v6959
        %6961 = vmatmul.bf16.gmra.mxu0 %v6185
        %v6962 = vpop.f32.mrf.mxu0
        %v6963 = vadd.f32 %v6874, %v6962
        %v6964 = vpop.f32.mrf.mxu0
        %v6965 = vadd.f32 %v6876, %v6964
        %6966 = vmatmul.bf16.gmra.mxu0 %v6194
        %v6967 = vpop.f32.mrf.mxu0
        %v6968 = vadd.f32 %v6879, %v6967
        %v6969 = vpop.f32.mrf.mxu0
        %v6970 = vadd.f32 %v6881, %v6969
        %6971 = vmatmul.bf16.gmra.mxu0 %v6203
        %v6972 = vpop.f32.mrf.mxu0
        %v6973 = vadd.f32 %v6884, %v6972
        %v6974 = vpop.f32.mrf.mxu0
        %v6975 = vadd.f32 %v6886, %v6974
        %6976 = vmatmul.bf16.gmra.mxu0 %v6212
        %v6977 = vpop.f32.mrf.mxu0
        %v6978 = vadd.f32 %v6889, %v6977
        %v6979 = vpop.f32.mrf.mxu0
        %v6980 = vadd.f32 %v6891, %v6979
        %6981 = vmatmul.bf16.gmra.mxu0 %v6221
        %v6982 = vpop.f32.mrf.mxu0
        %v6983 = vadd.f32 %v6894, %v6982
        %v6984 = vpop.f32.mrf.mxu0
        %v6985 = vadd.f32 %v6896, %v6984
        %6986 = vmatmul.bf16.gmra.mxu0 %v6230
        %v6987 = vpop.f32.mrf.mxu0
        %v6988 = vadd.f32 %v6899, %v6987
        %v6989 = vpop.f32.mrf.mxu0
        %v6990 = vadd.f32 %v6901, %v6989
        %6991 = vdwg.mxu0
        %6992 = vmatpush.bf16.msra.mxu0 %v6693
        %6993 = vmatpush.bf16.msra.mxu0 %v6692
        %6994 = vmatpush.bf16.msra.mxu0 %v6691
        %6995 = vmatpush.bf16.msra.mxu0 %v6690
        %6996 = vmatpush.bf16.msra.mxu0 %v6689
        %6997 = vmatpush.bf16.msra.mxu0 %v6688
        %6998 = vmatpush.bf16.msra.mxu0 %v6687
        %6999 = vmatpush.bf16.msra.mxu0 %v6686
        %7000 = vmatmul.bf16.gmra.mxu0 %v6096
        %v7001 = vpop.f32.mrf.mxu0
        %v7002 = vadd.f32 %v6913, %v7001
        %v7003 = vpop.f32.mrf.mxu0
        %v7004 = vadd.f32 %v6915, %v7003
        %7005 = vmatmul.bf16.gmra.mxu0 %v6105
        %v7006 = vpop.f32.mrf.mxu0
        %v7007 = vadd.f32 %v6918, %v7006
        %v7008 = vpop.f32.mrf.mxu0
        %v7009 = vadd.f32 %v6920, %v7008
        %7010 = vmatmul.bf16.gmra.mxu0 %v6114
        %v7011 = vpop.f32.mrf.mxu0
        %v7012 = vadd.f32 %v6923, %v7011
        %v7013 = vpop.f32.mrf.mxu0
        %v7014 = vadd.f32 %v6925, %v7013
        %7015 = vmatmul.bf16.gmra.mxu0 %v6123
        %v7016 = vpop.f32.mrf.mxu0
        %v7017 = vadd.f32 %v6928, %v7016
        %v7018 = vpop.f32.mrf.mxu0
        %v7019 = vadd.f32 %v6930, %v7018
        %7020 = vmatmul.bf16.gmra.mxu0 %v6132
        %v7021 = vpop.f32.mrf.mxu0
        %v7022 = vadd.f32 %v6933, %v7021
        %v7023 = vpop.f32.mrf.mxu0
        %v7024 = vadd.f32 %v6935, %v7023
        %7025 = vmatmul.bf16.gmra.mxu0 %v6141
        %v7026 = vpop.f32.mrf.mxu0
        %v7027 = vadd.f32 %v6938, %v7026
        %v7028 = vpop.f32.mrf.mxu0
        %v7029 = vadd.f32 %v6940, %v7028
        %7030 = vmatmul.bf16.gmra.mxu0 %v6150
        %v7031 = vpop.f32.mrf.mxu0
        %v7032 = vadd.f32 %v6943, %v7031
        %v7033 = vpop.f32.mrf.mxu0
        %v7034 = vadd.f32 %v6945, %v7033
        %7035 = vmatmul.bf16.gmra.mxu0 %v6159
        %v7036 = vpop.f32.mrf.mxu0
        %v7037 = vadd.f32 %v6948, %v7036
        %v7038 = vpop.f32.mrf.mxu0
        %v7039 = vadd.f32 %v6950, %v7038
        %7040 = vmatmul.bf16.gmra.mxu0 %v6168
        %v7041 = vpop.f32.mrf.mxu0
        %v7042 = vadd.f32 %v6953, %v7041
        %v7043 = vpop.f32.mrf.mxu0
        %v7044 = vadd.f32 %v6955, %v7043
        %7045 = vmatmul.bf16.gmra.mxu0 %v6177
        %v7046 = vpop.f32.mrf.mxu0
        %v7047 = vadd.f32 %v6958, %v7046
        %v7048 = vpop.f32.mrf.mxu0
        %v7049 = vadd.f32 %v6960, %v7048
        %7050 = vmatmul.bf16.gmra.mxu0 %v6186
        %v7051 = vpop.f32.mrf.mxu0
        %v7052 = vadd.f32 %v6963, %v7051
        %v7053 = vpop.f32.mrf.mxu0
        %v7054 = vadd.f32 %v6965, %v7053
        %7055 = vmatmul.bf16.gmra.mxu0 %v6195
        %v7056 = vpop.f32.mrf.mxu0
        %v7057 = vadd.f32 %v6968, %v7056
        %v7058 = vpop.f32.mrf.mxu0
        %v7059 = vadd.f32 %v6970, %v7058
        %7060 = vmatmul.bf16.gmra.mxu0 %v6204
        %v7061 = vpop.f32.mrf.mxu0
        %v7062 = vadd.f32 %v6973, %v7061
        %v7063 = vpop.f32.mrf.mxu0
        %v7064 = vadd.f32 %v6975, %v7063
        %7065 = vmatmul.bf16.gmra.mxu0 %v6213
        %v7066 = vpop.f32.mrf.mxu0
        %v7067 = vadd.f32 %v6978, %v7066
        %v7068 = vpop.f32.mrf.mxu0
        %v7069 = vadd.f32 %v6980, %v7068
        %7070 = vmatmul.bf16.gmra.mxu0 %v6222
        %v7071 = vpop.f32.mrf.mxu0
        %v7072 = vadd.f32 %v6983, %v7071
        %v7073 = vpop.f32.mrf.mxu0
        %v7074 = vadd.f32 %v6985, %v7073
        %7075 = vmatmul.bf16.gmra.mxu0 %v6231
        %v7076 = vpop.f32.mrf.mxu0
        %v7077 = vadd.f32 %v6988, %v7076
        %v7078 = vpop.f32.mrf.mxu0
        %v7079 = vadd.f32 %v6990, %v7078
        %7080 = vdwg.mxu0
        %7081 = vmatpush.bf16.msra.mxu0 %v6701
        %7082 = vmatpush.bf16.msra.mxu0 %v6700
        %7083 = vmatpush.bf16.msra.mxu0 %v6699
        %7084 = vmatpush.bf16.msra.mxu0 %v6698
        %7085 = vmatpush.bf16.msra.mxu0 %v6697
        %7086 = vmatpush.bf16.msra.mxu0 %v6696
        %7087 = vmatpush.bf16.msra.mxu0 %v6695
        %7088 = vmatpush.bf16.msra.mxu0 %v6694
        %7089 = vmatmul.bf16.gmra.mxu0 %v6097
        %v7090 = vpop.f32.mrf.mxu0
        %v7091 = vadd.f32 %v7002, %v7090
        %v7092 = vpop.f32.mrf.mxu0
        %v7093 = vadd.f32 %v7004, %v7092
        %7094 = vmatmul.bf16.gmra.mxu0 %v6106
        %v7095 = vpop.f32.mrf.mxu0
        %v7096 = vadd.f32 %v7007, %v7095
        %v7097 = vpop.f32.mrf.mxu0
        %v7098 = vadd.f32 %v7009, %v7097
        %7099 = vmatmul.bf16.gmra.mxu0 %v6115
        %v7100 = vpop.f32.mrf.mxu0
        %v7101 = vadd.f32 %v7012, %v7100
        %v7102 = vpop.f32.mrf.mxu0
        %v7103 = vadd.f32 %v7014, %v7102
        %7104 = vmatmul.bf16.gmra.mxu0 %v6124
        %v7105 = vpop.f32.mrf.mxu0
        %v7106 = vadd.f32 %v7017, %v7105
        %v7107 = vpop.f32.mrf.mxu0
        %v7108 = vadd.f32 %v7019, %v7107
        %7109 = vmatmul.bf16.gmra.mxu0 %v6133
        %v7110 = vpop.f32.mrf.mxu0
        %v7111 = vadd.f32 %v7022, %v7110
        %v7112 = vpop.f32.mrf.mxu0
        %v7113 = vadd.f32 %v7024, %v7112
        %7114 = vmatmul.bf16.gmra.mxu0 %v6142
        %v7115 = vpop.f32.mrf.mxu0
        %v7116 = vadd.f32 %v7027, %v7115
        %v7117 = vpop.f32.mrf.mxu0
        %v7118 = vadd.f32 %v7029, %v7117
        %7119 = vmatmul.bf16.gmra.mxu0 %v6151
        %v7120 = vpop.f32.mrf.mxu0
        %v7121 = vadd.f32 %v7032, %v7120
        %v7122 = vpop.f32.mrf.mxu0
        %v7123 = vadd.f32 %v7034, %v7122
        %7124 = vmatmul.bf16.gmra.mxu0 %v6160
        %v7125 = vpop.f32.mrf.mxu0
        %v7126 = vadd.f32 %v7037, %v7125
        %v7127 = vpop.f32.mrf.mxu0
        %v7128 = vadd.f32 %v7039, %v7127
        %7129 = vmatmul.bf16.gmra.mxu0 %v6169
        %v7130 = vpop.f32.mrf.mxu0
        %v7131 = vadd.f32 %v7042, %v7130
        %v7132 = vpop.f32.mrf.mxu0
        %v7133 = vadd.f32 %v7044, %v7132
        %7134 = vmatmul.bf16.gmra.mxu0 %v6178
        %v7135 = vpop.f32.mrf.mxu0
        %v7136 = vadd.f32 %v7047, %v7135
        %v7137 = vpop.f32.mrf.mxu0
        %v7138 = vadd.f32 %v7049, %v7137
        %7139 = vmatmul.bf16.gmra.mxu0 %v6187
        %v7140 = vpop.f32.mrf.mxu0
        %v7141 = vadd.f32 %v7052, %v7140
        %v7142 = vpop.f32.mrf.mxu0
        %v7143 = vadd.f32 %v7054, %v7142
        %7144 = vmatmul.bf16.gmra.mxu0 %v6196
        %v7145 = vpop.f32.mrf.mxu0
        %v7146 = vadd.f32 %v7057, %v7145
        %v7147 = vpop.f32.mrf.mxu0
        %v7148 = vadd.f32 %v7059, %v7147
        %7149 = vmatmul.bf16.gmra.mxu0 %v6205
        %v7150 = vpop.f32.mrf.mxu0
        %v7151 = vadd.f32 %v7062, %v7150
        %v7152 = vpop.f32.mrf.mxu0
        %v7153 = vadd.f32 %v7064, %v7152
        %7154 = vmatmul.bf16.gmra.mxu0 %v6214
        %v7155 = vpop.f32.mrf.mxu0
        %v7156 = vadd.f32 %v7067, %v7155
        %v7157 = vpop.f32.mrf.mxu0
        %v7158 = vadd.f32 %v7069, %v7157
        %7159 = vmatmul.bf16.gmra.mxu0 %v6223
        %v7160 = vpop.f32.mrf.mxu0
        %v7161 = vadd.f32 %v7072, %v7160
        %v7162 = vpop.f32.mrf.mxu0
        %v7163 = vadd.f32 %v7074, %v7162
        %7164 = vmatmul.bf16.gmra.mxu0 %v6232
        %v7165 = vpop.f32.mrf.mxu0
        %v7166 = vadd.f32 %v7077, %v7165
        %v7167 = vpop.f32.mrf.mxu0
        %v7168 = vadd.f32 %v7079, %v7167
        %7169 = vdwg.mxu0
        %7170 = vmatpush.bf16.msra.mxu0 %v6709
        %7171 = vmatpush.bf16.msra.mxu0 %v6708
        %7172 = vmatpush.bf16.msra.mxu0 %v6707
        %7173 = vmatpush.bf16.msra.mxu0 %v6706
        %7174 = vmatpush.bf16.msra.mxu0 %v6705
        %7175 = vmatpush.bf16.msra.mxu0 %v6704
        %7176 = vmatpush.bf16.msra.mxu0 %v6703
        %7177 = vmatpush.bf16.msra.mxu0 %v6702
        %7178 = vmatmul.bf16.gmra.mxu0 %v6098
        %v7179 = vpop.f32.mrf.mxu0
        %v7180 = vadd.f32 %v7091, %v7179
        %v7181 = vpop.f32.mrf.mxu0
        %v7182 = vadd.f32 %v7093, %v7181
        %7183 = vmatmul.bf16.gmra.mxu0 %v6107
        %v7184 = vpop.f32.mrf.mxu0
        %v7185 = vadd.f32 %v7096, %v7184
        %v7186 = vpop.f32.mrf.mxu0
        %v7187 = vadd.f32 %v7098, %v7186
        %7188 = vmatmul.bf16.gmra.mxu0 %v6116
        %v7189 = vpop.f32.mrf.mxu0
        %v7190 = vadd.f32 %v7101, %v7189
        %v7191 = vpop.f32.mrf.mxu0
        %v7192 = vadd.f32 %v7103, %v7191
        %7193 = vmatmul.bf16.gmra.mxu0 %v6125
        %v7194 = vpop.f32.mrf.mxu0
        %v7195 = vadd.f32 %v7106, %v7194
        %v7196 = vpop.f32.mrf.mxu0
        %v7197 = vadd.f32 %v7108, %v7196
        %7198 = vmatmul.bf16.gmra.mxu0 %v6134
        %v7199 = vpop.f32.mrf.mxu0
        %v7200 = vadd.f32 %v7111, %v7199
        %v7201 = vpop.f32.mrf.mxu0
        %v7202 = vadd.f32 %v7113, %v7201
        %7203 = vmatmul.bf16.gmra.mxu0 %v6143
        %v7204 = vpop.f32.mrf.mxu0
        %v7205 = vadd.f32 %v7116, %v7204
        %v7206 = vpop.f32.mrf.mxu0
        %v7207 = vadd.f32 %v7118, %v7206
        %7208 = vmatmul.bf16.gmra.mxu0 %v6152
        %v7209 = vpop.f32.mrf.mxu0
        %v7210 = vadd.f32 %v7121, %v7209
        %v7211 = vpop.f32.mrf.mxu0
        %v7212 = vadd.f32 %v7123, %v7211
        %7213 = vmatmul.bf16.gmra.mxu0 %v6161
        %v7214 = vpop.f32.mrf.mxu0
        %v7215 = vadd.f32 %v7126, %v7214
        %v7216 = vpop.f32.mrf.mxu0
        %v7217 = vadd.f32 %v7128, %v7216
        %7218 = vmatmul.bf16.gmra.mxu0 %v6170
        %v7219 = vpop.f32.mrf.mxu0
        %v7220 = vadd.f32 %v7131, %v7219
        %v7221 = vpop.f32.mrf.mxu0
        %v7222 = vadd.f32 %v7133, %v7221
        %7223 = vmatmul.bf16.gmra.mxu0 %v6179
        %v7224 = vpop.f32.mrf.mxu0
        %v7225 = vadd.f32 %v7136, %v7224
        %v7226 = vpop.f32.mrf.mxu0
        %v7227 = vadd.f32 %v7138, %v7226
        %7228 = vmatmul.bf16.gmra.mxu0 %v6188
        %v7229 = vpop.f32.mrf.mxu0
        %v7230 = vadd.f32 %v7141, %v7229
        %v7231 = vpop.f32.mrf.mxu0
        %v7232 = vadd.f32 %v7143, %v7231
        %7233 = vmatmul.bf16.gmra.mxu0 %v6197
        %v7234 = vpop.f32.mrf.mxu0
        %v7235 = vadd.f32 %v7146, %v7234
        %v7236 = vpop.f32.mrf.mxu0
        %v7237 = vadd.f32 %v7148, %v7236
        %7238 = vmatmul.bf16.gmra.mxu0 %v6206
        %v7239 = vpop.f32.mrf.mxu0
        %v7240 = vadd.f32 %v7151, %v7239
        %v7241 = vpop.f32.mrf.mxu0
        %v7242 = vadd.f32 %v7153, %v7241
        %7243 = vmatmul.bf16.gmra.mxu0 %v6215
        %v7244 = vpop.f32.mrf.mxu0
        %v7245 = vadd.f32 %v7156, %v7244
        %v7246 = vpop.f32.mrf.mxu0
        %v7247 = vadd.f32 %v7158, %v7246
        %7248 = vmatmul.bf16.gmra.mxu0 %v6224
        %v7249 = vpop.f32.mrf.mxu0
        %v7250 = vadd.f32 %v7161, %v7249
        %v7251 = vpop.f32.mrf.mxu0
        %v7252 = vadd.f32 %v7163, %v7251
        %7253 = vmatmul.bf16.gmra.mxu0 %v6233
        %v7254 = vpop.f32.mrf.mxu0
        %v7255 = vadd.f32 %v7166, %v7254
        %v7256 = vpop.f32.mrf.mxu0
        %v7257 = vadd.f32 %v7168, %v7256
        %7258 = vdwg.mxu0
        %7259 = vmatpush.bf16.msra.mxu0 %v6717
        %7260 = vmatpush.bf16.msra.mxu0 %v6716
        %7261 = vmatpush.bf16.msra.mxu0 %v6715
        %7262 = vmatpush.bf16.msra.mxu0 %v6714
        %7263 = vmatpush.bf16.msra.mxu0 %v6713
        %7264 = vmatpush.bf16.msra.mxu0 %v6712
        %7265 = vmatpush.bf16.msra.mxu0 %v6711
        %7266 = vmatpush.bf16.msra.mxu0 %v6710
        %7267 = vmatmul.bf16.gmra.mxu0 %v6099
        %v7268 = vpop.f32.mrf.mxu0
        %v7269 = vadd.f32 %v7180, %v7268
        %v7270 = vpop.f32.mrf.mxu0
        %v7271 = vadd.f32 %v7182, %v7270
        %7272 = vmatmul.bf16.gmra.mxu0 %v6108
        %v7273 = vpop.f32.mrf.mxu0
        %v7274 = vadd.f32 %v7185, %v7273
        %v7275 = vpop.f32.mrf.mxu0
        %v7276 = vadd.f32 %v7187, %v7275
        %7277 = vmatmul.bf16.gmra.mxu0 %v6117
        %v7278 = vpop.f32.mrf.mxu0
        %v7279 = vadd.f32 %v7190, %v7278
        %v7280 = vpop.f32.mrf.mxu0
        %v7281 = vadd.f32 %v7192, %v7280
        %7282 = vmatmul.bf16.gmra.mxu0 %v6126
        %v7283 = vpop.f32.mrf.mxu0
        %v7284 = vadd.f32 %v7195, %v7283
        %v7285 = vpop.f32.mrf.mxu0
        %v7286 = vadd.f32 %v7197, %v7285
        %7287 = vmatmul.bf16.gmra.mxu0 %v6135
        %v7288 = vpop.f32.mrf.mxu0
        %v7289 = vadd.f32 %v7200, %v7288
        %v7290 = vpop.f32.mrf.mxu0
        %v7291 = vadd.f32 %v7202, %v7290
        %7292 = vmatmul.bf16.gmra.mxu0 %v6144
        %v7293 = vpop.f32.mrf.mxu0
        %v7294 = vadd.f32 %v7205, %v7293
        %v7295 = vpop.f32.mrf.mxu0
        %v7296 = vadd.f32 %v7207, %v7295
        %7297 = vmatmul.bf16.gmra.mxu0 %v6153
        %v7298 = vpop.f32.mrf.mxu0
        %v7299 = vadd.f32 %v7210, %v7298
        %v7300 = vpop.f32.mrf.mxu0
        %v7301 = vadd.f32 %v7212, %v7300
        %7302 = vmatmul.bf16.gmra.mxu0 %v6162
        %v7303 = vpop.f32.mrf.mxu0
        %v7304 = vadd.f32 %v7215, %v7303
        %v7305 = vpop.f32.mrf.mxu0
        %v7306 = vadd.f32 %v7217, %v7305
        %7307 = vmatmul.bf16.gmra.mxu0 %v6171
        %v7308 = vpop.f32.mrf.mxu0
        %v7309 = vadd.f32 %v7220, %v7308
        %v7310 = vpop.f32.mrf.mxu0
        %v7311 = vadd.f32 %v7222, %v7310
        %7312 = vmatmul.bf16.gmra.mxu0 %v6180
        %v7313 = vpop.f32.mrf.mxu0
        %v7314 = vadd.f32 %v7225, %v7313
        %v7315 = vpop.f32.mrf.mxu0
        %v7316 = vadd.f32 %v7227, %v7315
        %7317 = vmatmul.bf16.gmra.mxu0 %v6189
        %v7318 = vpop.f32.mrf.mxu0
        %v7319 = vadd.f32 %v7230, %v7318
        %v7320 = vpop.f32.mrf.mxu0
        %v7321 = vadd.f32 %v7232, %v7320
        %7322 = vmatmul.bf16.gmra.mxu0 %v6198
        %v7323 = vpop.f32.mrf.mxu0
        %v7324 = vadd.f32 %v7235, %v7323
        %v7325 = vpop.f32.mrf.mxu0
        %v7326 = vadd.f32 %v7237, %v7325
        %7327 = vmatmul.bf16.gmra.mxu0 %v6207
        %v7328 = vpop.f32.mrf.mxu0
        %v7329 = vadd.f32 %v7240, %v7328
        %v7330 = vpop.f32.mrf.mxu0
        %v7331 = vadd.f32 %v7242, %v7330
        %7332 = vmatmul.bf16.gmra.mxu0 %v6216
        %v7333 = vpop.f32.mrf.mxu0
        %v7334 = vadd.f32 %v7245, %v7333
        %v7335 = vpop.f32.mrf.mxu0
        %v7336 = vadd.f32 %v7247, %v7335
        %7337 = vmatmul.bf16.gmra.mxu0 %v6225
        %v7338 = vpop.f32.mrf.mxu0
        %v7339 = vadd.f32 %v7250, %v7338
        %v7340 = vpop.f32.mrf.mxu0
        %v7341 = vadd.f32 %v7252, %v7340
        %7342 = vmatmul.bf16.gmra.mxu0 %v6234
        %v7343 = vpop.f32.mrf.mxu0
        %v7344 = vadd.f32 %v7255, %v7343
        %v7345 = vpop.f32.mrf.mxu0
        %v7346 = vadd.f32 %v7257, %v7345
        %7347 = vdwg.mxu0
        %7348 = vmatpush.bf16.msra.mxu0 %v6725
        %7349 = vmatpush.bf16.msra.mxu0 %v6724
        %7350 = vmatpush.bf16.msra.mxu0 %v6723
        %7351 = vmatpush.bf16.msra.mxu0 %v6722
        %7352 = vmatpush.bf16.msra.mxu0 %v6721
        %7353 = vmatpush.bf16.msra.mxu0 %v6720
        %7354 = vmatpush.bf16.msra.mxu0 %v6719
        %7355 = vmatpush.bf16.msra.mxu0 %v6718
        %7356 = vmatmul.bf16.gmra.mxu0 %v6100
        %v7357 = vpop.f32.mrf.mxu0
        %v7358 = vadd.f32 %v7269, %v7357
        %v7359 = vpop.f32.mrf.mxu0
        %v7360 = vadd.f32 %v7271, %v7359
        %7361 = vmatmul.bf16.gmra.mxu0 %v6109
        %v7362 = vpop.f32.mrf.mxu0
        %v7363 = vadd.f32 %v7274, %v7362
        %v7364 = vpop.f32.mrf.mxu0
        %v7365 = vadd.f32 %v7276, %v7364
        %7366 = vmatmul.bf16.gmra.mxu0 %v6118
        %v7367 = vpop.f32.mrf.mxu0
        %v7368 = vadd.f32 %v7279, %v7367
        %v7369 = vpop.f32.mrf.mxu0
        %v7370 = vadd.f32 %v7281, %v7369
        %7371 = vmatmul.bf16.gmra.mxu0 %v6127
        %v7372 = vpop.f32.mrf.mxu0
        %v7373 = vadd.f32 %v7284, %v7372
        %v7374 = vpop.f32.mrf.mxu0
        %v7375 = vadd.f32 %v7286, %v7374
        %7376 = vmatmul.bf16.gmra.mxu0 %v6136
        %v7377 = vpop.f32.mrf.mxu0
        %v7378 = vadd.f32 %v7289, %v7377
        %v7379 = vpop.f32.mrf.mxu0
        %v7380 = vadd.f32 %v7291, %v7379
        %7381 = vmatmul.bf16.gmra.mxu0 %v6145
        %v7382 = vpop.f32.mrf.mxu0
        %v7383 = vadd.f32 %v7294, %v7382
        %v7384 = vpop.f32.mrf.mxu0
        %v7385 = vadd.f32 %v7296, %v7384
        %7386 = vmatmul.bf16.gmra.mxu0 %v6154
        %v7387 = vpop.f32.mrf.mxu0
        %v7388 = vadd.f32 %v7299, %v7387
        %v7389 = vpop.f32.mrf.mxu0
        %v7390 = vadd.f32 %v7301, %v7389
        %7391 = vmatmul.bf16.gmra.mxu0 %v6163
        %v7392 = vpop.f32.mrf.mxu0
        %v7393 = vadd.f32 %v7304, %v7392
        %v7394 = vpop.f32.mrf.mxu0
        %v7395 = vadd.f32 %v7306, %v7394
        %7396 = vmatmul.bf16.gmra.mxu0 %v6172
        %v7397 = vpop.f32.mrf.mxu0
        %v7398 = vadd.f32 %v7309, %v7397
        %v7399 = vpop.f32.mrf.mxu0
        %v7400 = vadd.f32 %v7311, %v7399
        %7401 = vmatmul.bf16.gmra.mxu0 %v6181
        %v7402 = vpop.f32.mrf.mxu0
        %v7403 = vadd.f32 %v7314, %v7402
        %v7404 = vpop.f32.mrf.mxu0
        %v7405 = vadd.f32 %v7316, %v7404
        %7406 = vmatmul.bf16.gmra.mxu0 %v6190
        %v7407 = vpop.f32.mrf.mxu0
        %v7408 = vadd.f32 %v7319, %v7407
        %v7409 = vpop.f32.mrf.mxu0
        %v7410 = vadd.f32 %v7321, %v7409
        %7411 = vmatmul.bf16.gmra.mxu0 %v6199
        %v7412 = vpop.f32.mrf.mxu0
        %v7413 = vadd.f32 %v7324, %v7412
        %v7414 = vpop.f32.mrf.mxu0
        %v7415 = vadd.f32 %v7326, %v7414
        %7416 = vmatmul.bf16.gmra.mxu0 %v6208
        %v7417 = vpop.f32.mrf.mxu0
        %v7418 = vadd.f32 %v7329, %v7417
        %v7419 = vpop.f32.mrf.mxu0
        %v7420 = vadd.f32 %v7331, %v7419
        %7421 = vmatmul.bf16.gmra.mxu0 %v6217
        %v7422 = vpop.f32.mrf.mxu0
        %v7423 = vadd.f32 %v7334, %v7422
        %v7424 = vpop.f32.mrf.mxu0
        %v7425 = vadd.f32 %v7336, %v7424
        %7426 = vmatmul.bf16.gmra.mxu0 %v6226
        %v7427 = vpop.f32.mrf.mxu0
        %v7428 = vadd.f32 %v7339, %v7427
        %v7429 = vpop.f32.mrf.mxu0
        %v7430 = vadd.f32 %v7341, %v7429
        %7431 = vmatmul.bf16.gmra.mxu0 %v6235
        %v7432 = vpop.f32.mrf.mxu0
        %v7433 = vadd.f32 %v7344, %v7432
        %v7434 = vpop.f32.mrf.mxu0
        %v7435 = vadd.f32 %v7346, %v7434
        %7436 = vdwg.mxu0
        %7437 = vmatpush.bf16.msra.mxu0 %v6733
        %7438 = vmatpush.bf16.msra.mxu0 %v6732
        %7439 = vmatpush.bf16.msra.mxu0 %v6731
        %7440 = vmatpush.bf16.msra.mxu0 %v6730
        %7441 = vmatpush.bf16.msra.mxu0 %v6729
        %7442 = vmatpush.bf16.msra.mxu0 %v6728
        %7443 = vmatpush.bf16.msra.mxu0 %v6727
        %7444 = vmatpush.bf16.msra.mxu0 %v6726
        %7445 = vmatmul.bf16.gmra.mxu0 %v6101
        %v7446 = vpop.f32.mrf.mxu0
        %v7447 = vadd.f32 %v7358, %v7446
        %v7448 = vpop.f32.mrf.mxu0
        %v7449 = vadd.f32 %v7360, %v7448
        %7450 = vmatmul.bf16.gmra.mxu0 %v6110
        %v7451 = vpop.f32.mrf.mxu0
        %v7452 = vadd.f32 %v7363, %v7451
        %v7453 = vpop.f32.mrf.mxu0
        %v7454 = vadd.f32 %v7365, %v7453
        %7455 = vmatmul.bf16.gmra.mxu0 %v6119
        %v7456 = vpop.f32.mrf.mxu0
        %v7457 = vadd.f32 %v7368, %v7456
        %v7458 = vpop.f32.mrf.mxu0
        %v7459 = vadd.f32 %v7370, %v7458
        %7460 = vmatmul.bf16.gmra.mxu0 %v6128
        %v7461 = vpop.f32.mrf.mxu0
        %v7462 = vadd.f32 %v7373, %v7461
        %v7463 = vpop.f32.mrf.mxu0
        %v7464 = vadd.f32 %v7375, %v7463
        %7465 = vmatmul.bf16.gmra.mxu0 %v6137
        %v7466 = vpop.f32.mrf.mxu0
        %v7467 = vadd.f32 %v7378, %v7466
        %v7468 = vpop.f32.mrf.mxu0
        %v7469 = vadd.f32 %v7380, %v7468
        %7470 = vmatmul.bf16.gmra.mxu0 %v6146
        %v7471 = vpop.f32.mrf.mxu0
        %v7472 = vadd.f32 %v7383, %v7471
        %v7473 = vpop.f32.mrf.mxu0
        %v7474 = vadd.f32 %v7385, %v7473
        %7475 = vmatmul.bf16.gmra.mxu0 %v6155
        %v7476 = vpop.f32.mrf.mxu0
        %v7477 = vadd.f32 %v7388, %v7476
        %v7478 = vpop.f32.mrf.mxu0
        %v7479 = vadd.f32 %v7390, %v7478
        %7480 = vmatmul.bf16.gmra.mxu0 %v6164
        %v7481 = vpop.f32.mrf.mxu0
        %v7482 = vadd.f32 %v7393, %v7481
        %v7483 = vpop.f32.mrf.mxu0
        %v7484 = vadd.f32 %v7395, %v7483
        %7485 = vmatmul.bf16.gmra.mxu0 %v6173
        %v7486 = vpop.f32.mrf.mxu0
        %v7487 = vadd.f32 %v7398, %v7486
        %v7488 = vpop.f32.mrf.mxu0
        %v7489 = vadd.f32 %v7400, %v7488
        %7490 = vmatmul.bf16.gmra.mxu0 %v6182
        %v7491 = vpop.f32.mrf.mxu0
        %v7492 = vadd.f32 %v7403, %v7491
        %v7493 = vpop.f32.mrf.mxu0
        %v7494 = vadd.f32 %v7405, %v7493
        %7495 = vmatmul.bf16.gmra.mxu0 %v6191
        %v7496 = vpop.f32.mrf.mxu0
        %v7497 = vadd.f32 %v7408, %v7496
        %v7498 = vpop.f32.mrf.mxu0
        %v7499 = vadd.f32 %v7410, %v7498
        %7500 = vmatmul.bf16.gmra.mxu0 %v6200
        %v7501 = vpop.f32.mrf.mxu0
        %v7502 = vadd.f32 %v7413, %v7501
        %v7503 = vpop.f32.mrf.mxu0
        %v7504 = vadd.f32 %v7415, %v7503
        %7505 = vmatmul.bf16.gmra.mxu0 %v6209
        %v7506 = vpop.f32.mrf.mxu0
        %v7507 = vadd.f32 %v7418, %v7506
        %v7508 = vpop.f32.mrf.mxu0
        %v7509 = vadd.f32 %v7420, %v7508
        %7510 = vmatmul.bf16.gmra.mxu0 %v6218
        %v7511 = vpop.f32.mrf.mxu0
        %v7512 = vadd.f32 %v7423, %v7511
        %v7513 = vpop.f32.mrf.mxu0
        %v7514 = vadd.f32 %v7425, %v7513
        %7515 = vmatmul.bf16.gmra.mxu0 %v6227
        %v7516 = vpop.f32.mrf.mxu0
        %v7517 = vadd.f32 %v7428, %v7516
        %v7518 = vpop.f32.mrf.mxu0
        %v7519 = vadd.f32 %v7430, %v7518
        %7520 = vmatmul.bf16.gmra.mxu0 %v6236
        %v7521 = vpop.f32.mrf.mxu0
        %v7522 = vadd.f32 %v7433, %v7521
        %v7523 = vpop.f32.mrf.mxu0
        %v7524 = vadd.f32 %v7435, %v7523
        %7525 = vdwg.mxu0
        %7526 = vmatpush.bf16.msra.mxu0 %v6741
        %7527 = vmatpush.bf16.msra.mxu0 %v6740
        %7528 = vmatpush.bf16.msra.mxu0 %v6739
        %7529 = vmatpush.bf16.msra.mxu0 %v6738
        %7530 = vmatpush.bf16.msra.mxu0 %v6737
        %7531 = vmatpush.bf16.msra.mxu0 %v6736
        %7532 = vmatpush.bf16.msra.mxu0 %v6735
        %7533 = vmatpush.bf16.msra.mxu0 %v6734
        %7534 = vmatmul.bf16.gmra.mxu0 %v6102
        %v7535 = vpop.f32.mrf.mxu0
        %v7536 = vadd.f32 %v7447, %v7535
        %v7537 = vpop.f32.mrf.mxu0
        %v7538 = vadd.f32 %v7449, %v7537
        %7539 = vmatmul.bf16.gmra.mxu0 %v6111
        %v7540 = vpop.f32.mrf.mxu0
        %v7541 = vadd.f32 %v7452, %v7540
        %v7542 = vpop.f32.mrf.mxu0
        %v7543 = vadd.f32 %v7454, %v7542
        %7544 = vmatmul.bf16.gmra.mxu0 %v6120
        %v7545 = vpop.f32.mrf.mxu0
        %v7546 = vadd.f32 %v7457, %v7545
        %v7547 = vpop.f32.mrf.mxu0
        %v7548 = vadd.f32 %v7459, %v7547
        %7549 = vmatmul.bf16.gmra.mxu0 %v6129
        %v7550 = vpop.f32.mrf.mxu0
        %v7551 = vadd.f32 %v7462, %v7550
        %v7552 = vpop.f32.mrf.mxu0
        %v7553 = vadd.f32 %v7464, %v7552
        %7554 = vmatmul.bf16.gmra.mxu0 %v6138
        %v7555 = vpop.f32.mrf.mxu0
        %v7556 = vadd.f32 %v7467, %v7555
        %v7557 = vpop.f32.mrf.mxu0
        %v7558 = vadd.f32 %v7469, %v7557
        %7559 = vmatmul.bf16.gmra.mxu0 %v6147
        %v7560 = vpop.f32.mrf.mxu0
        %v7561 = vadd.f32 %v7472, %v7560
        %v7562 = vpop.f32.mrf.mxu0
        %v7563 = vadd.f32 %v7474, %v7562
        %7564 = vmatmul.bf16.gmra.mxu0 %v6156
        %v7565 = vpop.f32.mrf.mxu0
        %v7566 = vadd.f32 %v7477, %v7565
        %v7567 = vpop.f32.mrf.mxu0
        %v7568 = vadd.f32 %v7479, %v7567
        %7569 = vmatmul.bf16.gmra.mxu0 %v6165
        %v7570 = vpop.f32.mrf.mxu0
        %v7571 = vadd.f32 %v7482, %v7570
        %v7572 = vpop.f32.mrf.mxu0
        %v7573 = vadd.f32 %v7484, %v7572
        %7574 = vmatmul.bf16.gmra.mxu0 %v6174
        %v7575 = vpop.f32.mrf.mxu0
        %v7576 = vadd.f32 %v7487, %v7575
        %v7577 = vpop.f32.mrf.mxu0
        %v7578 = vadd.f32 %v7489, %v7577
        %7579 = vmatmul.bf16.gmra.mxu0 %v6183
        %v7580 = vpop.f32.mrf.mxu0
        %v7581 = vadd.f32 %v7492, %v7580
        %v7582 = vpop.f32.mrf.mxu0
        %v7583 = vadd.f32 %v7494, %v7582
        %7584 = vmatmul.bf16.gmra.mxu0 %v6192
        %v7585 = vpop.f32.mrf.mxu0
        %v7586 = vadd.f32 %v7497, %v7585
        %v7587 = vpop.f32.mrf.mxu0
        %v7588 = vadd.f32 %v7499, %v7587
        %7589 = vmatmul.bf16.gmra.mxu0 %v6201
        %v7590 = vpop.f32.mrf.mxu0
        %v7591 = vadd.f32 %v7502, %v7590
        %v7592 = vpop.f32.mrf.mxu0
        %v7593 = vadd.f32 %v7504, %v7592
        %7594 = vmatmul.bf16.gmra.mxu0 %v6210
        %v7595 = vpop.f32.mrf.mxu0
        %v7596 = vadd.f32 %v7507, %v7595
        %v7597 = vpop.f32.mrf.mxu0
        %v7598 = vadd.f32 %v7509, %v7597
        %7599 = vmatmul.bf16.gmra.mxu0 %v6219
        %v7600 = vpop.f32.mrf.mxu0
        %v7601 = vadd.f32 %v7512, %v7600
        %v7602 = vpop.f32.mrf.mxu0
        %v7603 = vadd.f32 %v7514, %v7602
        %7604 = vmatmul.bf16.gmra.mxu0 %v6228
        %v7605 = vpop.f32.mrf.mxu0
        %v7606 = vadd.f32 %v7517, %v7605
        %v7607 = vpop.f32.mrf.mxu0
        %v7608 = vadd.f32 %v7519, %v7607
        %7609 = vmatmul.bf16.gmra.mxu0 %v6237
        %v7610 = vpop.f32.mrf.mxu0
        %v7611 = vadd.f32 %v7522, %v7610
        %v7612 = vpop.f32.mrf.mxu0
        %v7613 = vadd.f32 %v7524, %v7612
        %7614 = vdwg.mxu0
        %v7615 = vmax.f32 %v7536, 0.0
        %v7616 = vmax.f32 %v7538, 0.0
        %v7617 = vmax.f32 %v7541, 0.0
        %v7618 = vmax.f32 %v7543, 0.0
        %v7619 = vmax.f32 %v7546, 0.0
        %v7620 = vmax.f32 %v7548, 0.0
        %v7621 = vmax.f32 %v7551, 0.0
        %v7622 = vmax.f32 %v7553, 0.0
        %v7623 = vmax.f32 %v7556, 0.0
        %v7624 = vmax.f32 %v7558, 0.0
        %v7625 = vmax.f32 %v7561, 0.0
        %v7626 = vmax.f32 %v7563, 0.0
        %v7627 = vmax.f32 %v7566, 0.0
        %v7628 = vmax.f32 %v7568, 0.0
        %v7629 = vmax.f32 %v7571, 0.0
        %v7630 = vmax.f32 %v7573, 0.0
        %v7631 = vmax.f32 %v7576, 0.0
        %v7632 = vmax.f32 %v7578, 0.0
        %v7633 = vmax.f32 %v7581, 0.0
        %v7634 = vmax.f32 %v7583, 0.0
        %v7635 = vmax.f32 %v7586, 0.0
        %v7636 = vmax.f32 %v7588, 0.0
        %v7637 = vmax.f32 %v7591, 0.0
        %v7638 = vmax.f32 %v7593, 0.0
        %v7639 = vmax.f32 %v7596, 0.0
        %v7640 = vmax.f32 %v7598, 0.0
        %v7641 = vmax.f32 %v7601, 0.0
        %v7642 = vmax.f32 %v7603, 0.0
        %v7643 = vmax.f32 %v7606, 0.0
        %v7644 = vmax.f32 %v7608, 0.0
        %v7645 = vmax.f32 %v7611, 0.0
        %v7646 = vmax.f32 %v7613, 0.0
        %v7647 = vpack.c.bf16 %v7616, %v7615
        %v7648 = vpack.c.bf16 %v7618, %v7617
        %v7649 = vpack.c.bf16 %v7620, %v7619
        %v7650 = vpack.c.bf16 %v7622, %v7621
        %v7651 = vpack.c.bf16 %v7624, %v7623
        %v7652 = vpack.c.bf16 %v7626, %v7625
        %v7653 = vpack.c.bf16 %v7628, %v7627
        %v7654 = vpack.c.bf16 %v7630, %v7629
        %v7655 = vpack.c.bf16 %v7632, %v7631
        %v7656 = vpack.c.bf16 %v7634, %v7633
        %v7657 = vpack.c.bf16 %v7636, %v7635
        %v7658 = vpack.c.bf16 %v7638, %v7637
        %v7659 = vpack.c.bf16 %v7640, %v7639
        %v7660 = vpack.c.bf16 %v7642, %v7641
        %v7661 = vpack.c.bf16 %v7644, %v7643
        %v7662 = vpack.c.bf16 %v7646, %v7645
        %v7663 = vld [vmem:[#allocation12] sm:$0xf]
        %v7664 = vld [vmem:[#allocation12 + $0x4] sm:$0xf]
        %v7665 = vld [vmem:[#allocation12 + $0x8] sm:$0xf]
        %v7666 = vld [vmem:[#allocation12 + $0xc] sm:$0xf]
        %v7667 = vld [vmem:[#allocation12 + $0x10] sm:$0xf]
        %v7668 = vld [vmem:[#allocation12 + $0x14] sm:$0xf]
        %v7669 = vld [vmem:[#allocation12 + $0x18] sm:$0xf]
        %v7670 = vld [vmem:[#allocation12 + $0x1c] sm:$0xf]
        %v7671 = vld [vmem:[#allocation12 + $0x20] sm:$0xf]
        %v7672 = vld [vmem:[#allocation12 + $0x24] sm:$0xf]
        %v7673 = vld [vmem:[#allocation12 + $0x28] sm:$0xf]
        %v7674 = vld [vmem:[#allocation12 + $0x2c] sm:$0xf]
        %v7675 = vld [vmem:[#allocation12 + $0x30] sm:$0xf]
        %v7676 = vld [vmem:[#allocation12 + $0x34] sm:$0xf]
        %v7677 = vld [vmem:[#allocation12 + $0x38] sm:$0xf]
        %v7678 = vld [vmem:[#allocation12 + $0x3c] sm:$0xf]
        %v7679 = vld [vmem:[%s8] sm:$0x1]
        %v7681 = vperm.slane %v7679, 0
        %v7699 = vunpack.c.l.b16 %v7663
        %v7700 = vunpack.c.l.b16 %v7664
        %v7701 = vunpack.c.l.b16 %v7665
        %v7702 = vunpack.c.l.b16 %v7666
        %v7703 = vunpack.c.l.b16 %v7667
        %v7704 = vunpack.c.l.b16 %v7668
        %v7705 = vunpack.c.l.b16 %v7669
        %v7706 = vunpack.c.l.b16 %v7670
        %v7707 = vunpack.c.l.b16 %v7671
        %v7708 = vunpack.c.l.b16 %v7672
        %v7709 = vunpack.c.l.b16 %v7673
        %v7710 = vunpack.c.l.b16 %v7674
        %v7711 = vunpack.c.l.b16 %v7675
        %v7712 = vunpack.c.l.b16 %v7676
        %v7713 = vunpack.c.l.b16 %v7677
        %v7714 = vunpack.c.l.b16 %v7678
        %v7715 = vpack.c.b16 %v7700, %v7699
        %v7716 = vpack.c.b16 %v7702, %v7701
        %v7717 = vpack.c.b16 %v7704, %v7703
        %v7718 = vpack.c.b16 %v7706, %v7705
        %v7719 = vpack.c.b16 %v7708, %v7707
        %v7720 = vpack.c.b16 %v7710, %v7709
        %v7721 = vpack.c.b16 %v7712, %v7711
        %v7722 = vpack.c.b16 %v7714, %v7713
        %7731 = vmatpush.bf16.msra.mxu0 %v7722
        %7732 = vmatpush.bf16.msra.mxu0 %v7721
        %7733 = vmatpush.bf16.msra.mxu0 %v7720
        %7734 = vmatpush.bf16.msra.mxu0 %v7719
        %7735 = vmatpush.bf16.msra.mxu0 %v7718
        %7736 = vmatpush.bf16.msra.mxu0 %v7717
        %7737 = vmatpush.bf16.msra.mxu0 %v7716
        %7738 = vmatpush.bf16.msra.mxu0 %v7715
        %7739 = vmatmul.bf16.gmra.mxu0 %v7647
        %v7740 = vpop.f32.mrf.mxu0
        %v7741 = vadd.f32 %v7681, %v7740
        %v7742 = vpop.f32.mrf.mxu0
        %v7743 = vadd.f32 %v7681, %v7742
        %7744 = vmatmul.bf16.gmra.mxu0 %v7648
        %v7745 = vpop.f32.mrf.mxu0
        %v7746 = vadd.f32 %v7681, %v7745
        %v7747 = vpop.f32.mrf.mxu0
        %v7748 = vadd.f32 %v7681, %v7747
        %7749 = vmatmul.bf16.gmra.mxu0 %v7649
        %v7750 = vpop.f32.mrf.mxu0
        %v7751 = vadd.f32 %v7681, %v7750
        %v7752 = vpop.f32.mrf.mxu0
        %v7753 = vadd.f32 %v7681, %v7752
        %7754 = vmatmul.bf16.gmra.mxu0 %v7650
        %v7755 = vpop.f32.mrf.mxu0
        %v7756 = vadd.f32 %v7681, %v7755
        %v7757 = vpop.f32.mrf.mxu0
        %v7758 = vadd.f32 %v7681, %v7757
        %7759 = vmatmul.bf16.gmra.mxu0 %v7651
        %v7760 = vpop.f32.mrf.mxu0
        %v7761 = vadd.f32 %v7681, %v7760
        %v7762 = vpop.f32.mrf.mxu0
        %v7763 = vadd.f32 %v7681, %v7762
        %7764 = vmatmul.bf16.gmra.mxu0 %v7652
        %v7765 = vpop.f32.mrf.mxu0
        %v7766 = vadd.f32 %v7681, %v7765
        %v7767 = vpop.f32.mrf.mxu0
        %v7768 = vadd.f32 %v7681, %v7767
        %7769 = vmatmul.bf16.gmra.mxu0 %v7653
        %v7770 = vpop.f32.mrf.mxu0
        %v7771 = vadd.f32 %v7681, %v7770
        %v7772 = vpop.f32.mrf.mxu0
        %v7773 = vadd.f32 %v7681, %v7772
        %7774 = vmatmul.bf16.gmra.mxu0 %v7654
        %v7775 = vpop.f32.mrf.mxu0
        %v7776 = vadd.f32 %v7681, %v7775
        %v7777 = vpop.f32.mrf.mxu0
        %v7778 = vadd.f32 %v7681, %v7777
        %7779 = vmatmul.bf16.gmra.mxu0 %v7655
        %v7780 = vpop.f32.mrf.mxu0
        %v7781 = vadd.f32 %v7681, %v7780
        %v7782 = vpop.f32.mrf.mxu0
        %v7783 = vadd.f32 %v7681, %v7782
        %7784 = vmatmul.bf16.gmra.mxu0 %v7656
        %v7785 = vpop.f32.mrf.mxu0
        %v7786 = vadd.f32 %v7681, %v7785
        %v7787 = vpop.f32.mrf.mxu0
        %v7788 = vadd.f32 %v7681, %v7787
        %7789 = vmatmul.bf16.gmra.mxu0 %v7657
        %v7790 = vpop.f32.mrf.mxu0
        %v7791 = vadd.f32 %v7681, %v7790
        %v7792 = vpop.f32.mrf.mxu0
        %v7793 = vadd.f32 %v7681, %v7792
        %7794 = vmatmul.bf16.gmra.mxu0 %v7658
        %v7795 = vpop.f32.mrf.mxu0
        %v7796 = vadd.f32 %v7681, %v7795
        %v7797 = vpop.f32.mrf.mxu0
        %v7798 = vadd.f32 %v7681, %v7797
        %7799 = vmatmul.bf16.gmra.mxu0 %v7659
        %v7800 = vpop.f32.mrf.mxu0
        %v7801 = vadd.f32 %v7681, %v7800
        %v7802 = vpop.f32.mrf.mxu0
        %v7803 = vadd.f32 %v7681, %v7802
        %7804 = vmatmul.bf16.gmra.mxu0 %v7660
        %v7805 = vpop.f32.mrf.mxu0
        %v7806 = vadd.f32 %v7681, %v7805
        %v7807 = vpop.f32.mrf.mxu0
        %v7808 = vadd.f32 %v7681, %v7807
        %7809 = vmatmul.bf16.gmra.mxu0 %v7661
        %v7810 = vpop.f32.mrf.mxu0
        %v7811 = vadd.f32 %v7681, %v7810
        %v7812 = vpop.f32.mrf.mxu0
        %v7813 = vadd.f32 %v7681, %v7812
        %7814 = vmatmul.bf16.gmra.mxu0 %v7662
        %v7815 = vpop.f32.mrf.mxu0
        %v7816 = vadd.f32 %v7681, %v7815
        %v7817 = vpop.f32.mrf.mxu0
        %v7818 = vadd.f32 %v7681, %v7817
        %7819 = vdwg.mxu0
        %v7820 = vld [vmem:[%s554] sm:$0xf]
        %v7821 = vld [vmem:[%s554 + $0x4] sm:$0xf]
        %v7822 = vld [vmem:[%s554 + $0x8] sm:$0xf]
        %v7823 = vld [vmem:[%s554 + $0xc] sm:$0xf]
        %v7824 = vld [vmem:[%s554 + $0x10] sm:$0xf]
        %v7825 = vld [vmem:[%s554 + $0x14] sm:$0xf]
        %v7826 = vld [vmem:[%s554 + $0x18] sm:$0xf]
        %v7827 = vld [vmem:[%s554 + $0x1c] sm:$0xf]
        %v7828 = vld [vmem:[%s554 + $0x20] sm:$0xf]
        %v7829 = vld [vmem:[%s554 + $0x24] sm:$0xf]
        %v7830 = vld [vmem:[%s554 + $0x28] sm:$0xf]
        %v7831 = vld [vmem:[%s554 + $0x2c] sm:$0xf]
        %v7832 = vld [vmem:[%s554 + $0x30] sm:$0xf]
        %v7833 = vld [vmem:[%s554 + $0x34] sm:$0xf]
        %v7834 = vld [vmem:[%s554 + $0x38] sm:$0xf]
        %v7835 = vld [vmem:[%s554 + $0x3c] sm:$0xf]
        %v7836 = vld [vmem:[%s554 + $0x40] sm:$0xf]
        %v7837 = vld [vmem:[%s554 + $0x44] sm:$0xf]
        %v7838 = vld [vmem:[%s554 + $0x48] sm:$0xf]
        %v7839 = vld [vmem:[%s554 + $0x4c] sm:$0xf]
        %v7840 = vld [vmem:[%s554 + $0x50] sm:$0xf]
        %v7841 = vld [vmem:[%s554 + $0x54] sm:$0xf]
        %v7842 = vld [vmem:[%s554 + $0x58] sm:$0xf]
        %v7843 = vld [vmem:[%s554 + $0x5c] sm:$0xf]
        %v7844 = vld [vmem:[%s554 + $0x60] sm:$0xf]
        %v7845 = vld [vmem:[%s554 + $0x64] sm:$0xf]
        %v7846 = vld [vmem:[%s554 + $0x68] sm:$0xf]
        %v7847 = vld [vmem:[%s554 + $0x6c] sm:$0xf]
        %v7848 = vld [vmem:[%s554 + $0x70] sm:$0xf]
        %v7849 = vld [vmem:[%s554 + $0x74] sm:$0xf]
        %v7850 = vld [vmem:[%s554 + $0x78] sm:$0xf]
        %v7851 = vld [vmem:[%s554 + $0x7c] sm:$0xf]
        %v7852 = vunpack.c.l.bf16 %v7820
        %v7853 = vunpack.c.l.bf16 %v7821
        %v7854 = vunpack.c.l.bf16 %v7822
        %v7855 = vunpack.c.l.bf16 %v7823
        %v7856 = vunpack.c.l.bf16 %v7824
        %v7857 = vunpack.c.l.bf16 %v7825
        %v7858 = vunpack.c.l.bf16 %v7826
        %v7859 = vunpack.c.l.bf16 %v7827
        %v7860 = vunpack.c.l.bf16 %v7828
        %v7861 = vunpack.c.l.bf16 %v7829
        %v7862 = vunpack.c.l.bf16 %v7830
        %v7863 = vunpack.c.l.bf16 %v7831
        %v7864 = vunpack.c.l.bf16 %v7832
        %v7865 = vunpack.c.l.bf16 %v7833
        %v7866 = vunpack.c.l.bf16 %v7834
        %v7867 = vunpack.c.l.bf16 %v7835
        %v7868 = vunpack.c.l.bf16 %v7836
        %v7869 = vunpack.c.l.bf16 %v7837
        %v7870 = vunpack.c.l.bf16 %v7838
        %v7871 = vunpack.c.l.bf16 %v7839
        %v7872 = vunpack.c.l.bf16 %v7840
        %v7873 = vunpack.c.l.bf16 %v7841
        %v7874 = vunpack.c.l.bf16 %v7842
        %v7875 = vunpack.c.l.bf16 %v7843
        %v7876 = vunpack.c.l.bf16 %v7844
        %v7877 = vunpack.c.l.bf16 %v7845
        %v7878 = vunpack.c.l.bf16 %v7846
        %v7879 = vunpack.c.l.bf16 %v7847
        %v7880 = vunpack.c.l.bf16 %v7848
        %v7881 = vunpack.c.l.bf16 %v7849
        %v7882 = vunpack.c.l.bf16 %v7850
        %v7883 = vunpack.c.l.bf16 %v7851
        %v7884 = vadd.f32 %v7741, %v7852
        %v7885 = vadd.f32 %v7743, %v7853
        %v7886 = vadd.f32 %v7746, %v7854
        %v7887 = vadd.f32 %v7748, %v7855
        %v7888 = vadd.f32 %v7751, %v7856
        %v7889 = vadd.f32 %v7753, %v7857
        %v7890 = vadd.f32 %v7756, %v7858
        %v7891 = vadd.f32 %v7758, %v7859
        %v7892 = vadd.f32 %v7761, %v7860
        %v7893 = vadd.f32 %v7763, %v7861
        %v7894 = vadd.f32 %v7766, %v7862
        %v7895 = vadd.f32 %v7768, %v7863
        %v7896 = vadd.f32 %v7771, %v7864
        %v7897 = vadd.f32 %v7773, %v7865
        %v7898 = vadd.f32 %v7776, %v7866
        %v7899 = vadd.f32 %v7778, %v7867
        %v7900 = vadd.f32 %v7781, %v7868
        %v7901 = vadd.f32 %v7783, %v7869
        %v7902 = vadd.f32 %v7786, %v7870
        %v7903 = vadd.f32 %v7788, %v7871
        %v7904 = vadd.f32 %v7791, %v7872
        %v7905 = vadd.f32 %v7793, %v7873
        %v7906 = vadd.f32 %v7796, %v7874
        %v7907 = vadd.f32 %v7798, %v7875
        %v7908 = vadd.f32 %v7801, %v7876
        %v7909 = vadd.f32 %v7803, %v7877
        %v7910 = vadd.f32 %v7806, %v7878
        %v7911 = vadd.f32 %v7808, %v7879
        %v7912 = vadd.f32 %v7811, %v7880
        %v7913 = vadd.f32 %v7813, %v7881
        %v7914 = vadd.f32 %v7816, %v7882
        %v7915 = vadd.f32 %v7818, %v7883
        %v7916 = vmax.f32 %v7884, 0.0
        %v7917 = vmax.f32 %v7885, 0.0
        %v7918 = vmax.f32 %v7886, 0.0
        %v7919 = vmax.f32 %v7887, 0.0
        %v7920 = vmax.f32 %v7888, 0.0
        %v7921 = vmax.f32 %v7889, 0.0
        %v7922 = vmax.f32 %v7890, 0.0
        %v7923 = vmax.f32 %v7891, 0.0
        %v7924 = vmax.f32 %v7892, 0.0
        %v7925 = vmax.f32 %v7893, 0.0
        %v7926 = vmax.f32 %v7894, 0.0
        %v7927 = vmax.f32 %v7895, 0.0
        %v7928 = vmax.f32 %v7896, 0.0
        %v7929 = vmax.f32 %v7897, 0.0
        %v7930 = vmax.f32 %v7898, 0.0
        %v7931 = vmax.f32 %v7899, 0.0
        %v7932 = vmax.f32 %v7900, 0.0
        %v7933 = vmax.f32 %v7901, 0.0
        %v7934 = vmax.f32 %v7902, 0.0
        %v7935 = vmax.f32 %v7903, 0.0
        %v7936 = vmax.f32 %v7904, 0.0
        %v7937 = vmax.f32 %v7905, 0.0
        %v7938 = vmax.f32 %v7906, 0.0
        %v7939 = vmax.f32 %v7907, 0.0
        %v7940 = vmax.f32 %v7908, 0.0
        %v7941 = vmax.f32 %v7909, 0.0
        %v7942 = vmax.f32 %v7910, 0.0
        %v7943 = vmax.f32 %v7911, 0.0
        %v7944 = vmax.f32 %v7912, 0.0
        %v7945 = vmax.f32 %v7913, 0.0
        %v7946 = vmax.f32 %v7914, 0.0
        %v7947 = vmax.f32 %v7915, 0.0
        %v7948 = vpack.c.bf16 %v7916, %v7916
        %v7949 = vpack.c.bf16 %v7917, %v7917
        %v7950 = vpack.c.bf16 %v7918, %v7918
        %v7951 = vpack.c.bf16 %v7919, %v7919
        %v7952 = vpack.c.bf16 %v7920, %v7920
        %v7953 = vpack.c.bf16 %v7921, %v7921
        %v7954 = vpack.c.bf16 %v7922, %v7922
        %v7955 = vpack.c.bf16 %v7923, %v7923
        %v7956 = vpack.c.bf16 %v7924, %v7924
        %v7957 = vpack.c.bf16 %v7925, %v7925
        %v7958 = vpack.c.bf16 %v7926, %v7926
        %v7959 = vpack.c.bf16 %v7927, %v7927
        %v7960 = vpack.c.bf16 %v7928, %v7928
        %v7961 = vpack.c.bf16 %v7929, %v7929
        %v7962 = vpack.c.bf16 %v7930, %v7930
        %v7963 = vpack.c.bf16 %v7931, %v7931
        %v7964 = vpack.c.bf16 %v7932, %v7932
        %v7965 = vpack.c.bf16 %v7933, %v7933
        %v7966 = vpack.c.bf16 %v7934, %v7934
        %v7967 = vpack.c.bf16 %v7935, %v7935
        %v7968 = vpack.c.bf16 %v7936, %v7936
        %v7969 = vpack.c.bf16 %v7937, %v7937
        %v7970 = vpack.c.bf16 %v7938, %v7938
        %v7971 = vpack.c.bf16 %v7939, %v7939
        %v7972 = vpack.c.bf16 %v7940, %v7940
        %v7973 = vpack.c.bf16 %v7941, %v7941
        %v7974 = vpack.c.bf16 %v7942, %v7942
        %v7975 = vpack.c.bf16 %v7943, %v7943
        %v7976 = vpack.c.bf16 %v7944, %v7944
        %v7977 = vpack.c.bf16 %v7945, %v7945
        %v7978 = vpack.c.bf16 %v7946, %v7946
        %v7979 = vpack.c.bf16 %v7947, %v7947
        %7980 = vst [vmem:[%s545] sm:$0xf] %v7948
        %7981 = vst [vmem:[%s545 + $0x4] sm:$0xf] %v7949
        %7982 = vst [vmem:[%s545 + $0x8] sm:$0xf] %v7950
        %7983 = vst [vmem:[%s545 + $0xc] sm:$0xf] %v7951
        %7984 = vst [vmem:[%s545 + $0x10] sm:$0xf] %v7952
        %7985 = vst [vmem:[%s545 + $0x14] sm:$0xf] %v7953
        %7986 = vst [vmem:[%s545 + $0x18] sm:$0xf] %v7954
        %7987 = vst [vmem:[%s545 + $0x1c] sm:$0xf] %v7955
        %7988 = vst [vmem:[%s545 + $0x20] sm:$0xf] %v7956
        %7989 = vst [vmem:[%s545 + $0x24] sm:$0xf] %v7957
        %7990 = vst [vmem:[%s545 + $0x28] sm:$0xf] %v7958
        %7991 = vst [vmem:[%s545 + $0x2c] sm:$0xf] %v7959
        %7992 = vst [vmem:[%s545 + $0x30] sm:$0xf] %v7960
        %7993 = vst [vmem:[%s545 + $0x34] sm:$0xf] %v7961
        %7994 = vst [vmem:[%s545 + $0x38] sm:$0xf] %v7962
        %7995 = vst [vmem:[%s545 + $0x3c] sm:$0xf] %v7963
        %7996 = vst [vmem:[%s545 + $0x40] sm:$0xf] %v7964
        %7997 = vst [vmem:[%s545 + $0x44] sm:$0xf] %v7965
        %7998 = vst [vmem:[%s545 + $0x48] sm:$0xf] %v7966
        %7999 = vst [vmem:[%s545 + $0x4c] sm:$0xf] %v7967
        %8000 = vst [vmem:[%s545 + $0x50] sm:$0xf] %v7968
        %8001 = vst [vmem:[%s545 + $0x54] sm:$0xf] %v7969
        %8002 = vst [vmem:[%s545 + $0x58] sm:$0xf] %v7970
        %8003 = vst [vmem:[%s545 + $0x5c] sm:$0xf] %v7971
        %8004 = vst [vmem:[%s545 + $0x60] sm:$0xf] %v7972
        %8005 = vst [vmem:[%s545 + $0x64] sm:$0xf] %v7973
        %8006 = vst [vmem:[%s545 + $0x68] sm:$0xf] %v7974
        %8007 = vst [vmem:[%s545 + $0x6c] sm:$0xf] %v7975
        %8008 = vst [vmem:[%s545 + $0x70] sm:$0xf] %v7976
        %8009 = vst [vmem:[%s545 + $0x74] sm:$0xf] %v7977
        %8010 = vst [vmem:[%s545 + $0x78] sm:$0xf] %v7978
        %8011 = vst [vmem:[%s545 + $0x7c] sm:$0xf] %v7979
        %s8012 = sand.u32 %s306, 1
        %s8013 = scalar_lea.sflag [#allocation6], %s8012
        %s8014 = sand.u32 %s306, 1
        %s8015 = smul.addr %s8014, 128
        %s8016 = scalar_lea.vmem [#allocation13], %s8015
        // Predicated region
        $region101: #{tpu_custom_call.1} parent=63 // pred_check
          %p8017 = pneg %p316
        $region102: #{tpu_custom_call.1} parent=63 // pred_check_branch
          %8019 = sbr.rel (%p8017) target = $region104
        $region103: #{tpu_custom_call.1} parent=63 // pred_region
          %s8020 = smul.u32 32, %s37
          %8022 = vsyncadd %s8013, 0
          %s8023 = smul.addr %s36, 32
          %s8024 = sadd.s32 %s8020, %s8023
          %s8025 = smul.addr %s8024, 4
          %s8026 = scalar_lea.hbm %s11, %s8025
          %s8027 = sshll.u32 %s8016, 4
          %s8028 = int_to_ptr.vmem [resolvable:$true] %s8027
          %s8029 = sshll.u32 %s8026, 4
          %s8030 = int_to_ptr.hbm [resolvable:$true] %s8029
          %8035 = dma.vmem_to_hbm [thread:$0]  %s8028, 2048, %s8030, %s8013, 64, 64, 4
        $region104: #{tpu_custom_call.1} parent=63 // pred_fallthru
          _
      $region64: #{tpu_custom_call.1} parent=5 // pred_fallthru
        _
      %p8036 = scmp.le.s32.totalorder 2, %s27
      // Predicated region
      $region105: #{tpu_custom_call.1} parent=5 // pred_check
        %p8037 = pneg %p8036
      $region106: #{tpu_custom_call.1} parent=5 // pred_check_branch
        %8039 = sbr.rel (%p8037) target = $region108
      $region107: #{tpu_custom_call.1} parent=5 // pred_region
        %s8040 = ssub.s32 %s27, 2
        // Predicated region
        $region109: #{tpu_custom_call.1} parent=107 // pred_check
          %p8041 = pneg %p322
        $region110: #{tpu_custom_call.1} parent=107 // pred_check_branch
          %8043 = sbr.rel (%p8041) target = $region112
        $region111: #{tpu_custom_call.1} parent=107 // pred_region
          %s8044 = sand.u32 %s307, 1
          %s8045 = scalar_lea.sflag [#allocation6], %s8044
          %s8046 = sand.u32 %s307, 1
          %s8047 = smul.addr %s8046, 128
          %s8048 = scalar_lea.vmem [#allocation13], %s8047
          %8050 = dma.done %s8045, 2048
        $region112: #{tpu_custom_call.1} parent=107 // pred_fallthru
          _
      $region108: #{tpu_custom_call.1} parent=5 // pred_fallthru
        _
    $region6: #{tpu_custom_call.1} parent=1 // loop_footer
      %s31 = sadd.s32 1, %s27
    $region7: #{tpu_custom_call.1} parent=1 // loop_footer_branch
      %26 = sbr.rel target = $region3
    $region8: #{tpu_custom_call.1} parent=1 // loop_exit
      _
    %8051 = vsyncpa [#allocation5], 1
    %s8052 = scalar_lea.sflag [#allocation5], 1
    %8053 = vsyncpa %s8052, 1
    %8054 = vsyncpa [#allocation8], 1
    %s8055 = scalar_lea.sflag [#allocation8], 1
    %8056 = vsyncpa %s8055, 1
    %8057 = vsyncpa [#allocation11], 1
    %8058 = vsyncpa [#allocation6], 1
    %s8059 = scalar_lea.sflag [#allocation6], 1
    %8060 = vsyncpa %s8059, 1

</llo_original>
